<compile_context>
chip_gen: v6e
topology: v6e:2x2x1
jax: 0.10.0
libtpu: 0.0.40
codegen_flags: <defaults>
</compile_context>

<pallas_src>
import math
import functools

import jax
import jax.numpy as jnp
from jax.experimental import pallas as pl
from jax.experimental.pallas import tpu as pltpu

EPS = 1e-5  # nn.LayerNorm default


# ----------------------------- kernel-side math -----------------------------

def _layer_norm(x, g, b):
    """x: (L, D) f32, g/b: (1, D) f32."""
    mu = jnp.mean(x, axis=-1, keepdims=True)
    var = jnp.mean(jnp.square(x - mu), axis=-1, keepdims=True)
    return (x - mu) * jax.lax.rsqrt(var + EPS) * g + b


def _mha_block(x_q, x_kv, wqkv_ref, bqkv_ref, wo_ref, bo_ref, nhead):
    """nn.MultiheadAttention (eval, no masks) on one batch element.

    x_q:  (Lq, D) f32 queries source, x_kv: (Lkv, D) f32 key/value source.
    wqkv_ref: (3, H, D, hd) bf16  -- input-major (pre-transposed); q pre-scaled by 1/sqrt(hd)
    bqkv_ref: (3, H, 1, hd) f32   -- q bias pre-scaled
    wo_ref:   (H, hd, D)    bf16  -- out_proj weight, split by head, input-major
    bo_ref:   (1, D)        f32
    """
    lq, d = x_q.shape
    xq = x_q.astype(jnp.bfloat16)
    xkv = x_kv.astype(jnp.bfloat16)

    acc = jnp.zeros((lq, d), jnp.float32)
    for h in range(nhead):  # static unroll; every op below is a clean 2-D MXU matmul
        q = jnp.dot(xq, wqkv_ref[0, h], preferred_element_type=jnp.float32) + bqkv_ref[0, h]
        k = jnp.dot(xkv, wqkv_ref[1, h], preferred_element_type=jnp.float32) + bqkv_ref[1, h]
        v = jnp.dot(xkv, wqkv_ref[2, h], preferred_element_type=jnp.float32) + bqkv_ref[2, h]

        # scores = q @ k^T without materializing a transpose: contract last axes.
        s = jax.lax.dot_general(
            q.astype(jnp.bfloat16), k.astype(jnp.bfloat16),
            (((1,), (1,)), ((), ())),
            preferred_element_type=jnp.float32)               # (Lq, Lkv)

        s = s - jnp.max(s, axis=-1, keepdims=True)
        p = jnp.exp(s)
        p = p * pl.reciprocal(jnp.sum(p, axis=-1, keepdims=True), approx=True)

        o = jnp.dot(p.astype(jnp.bfloat16), v.astype(jnp.bfloat16),
                    preferred_element_type=jnp.float32)       # (Lq, hd)

        # head merge fused into the output projection: acc += o_h @ Wo_h
        acc = acc + jnp.dot(o.astype(jnp.bfloat16), wo_ref[h],
                            preferred_element_type=jnp.float32)

    return acc + bo_ref[...]


def _decoder_layer_kernel(tgt_ref, mem_ref,
                          n1g_ref, n1b_ref, n2g_ref, n2b_ref, n3g_ref, n3b_ref,
                          sa_wqkv_ref, sa_bqkv_ref, sa_wo_ref, sa_bo_ref,
                          ca_wqkv_ref, ca_bqkv_ref, ca_wo_ref, ca_bo_ref,
                          w1_ref, b1_ref, w2_ref, b2_ref,
                          out_ref, *, nhead):
    x = tgt_ref[...]          # (T, D) f32 -- one batch element
    mem = mem_ref[...]        # (S, D) f32

    # --- self-attention block (dropout1 = identity in eval) ---
    t2 = _layer_norm(x, n1g_ref[...], n1b_ref[...])
    x = x + _mha_block(t2, t2, sa_wqkv_ref, sa_bqkv_ref, sa_wo_ref, sa_bo_ref, nhead)

    # --- cross-attention block (dropout2 = identity in eval) ---
    t2 = _layer_norm(x, n2g_ref[...], n2b_ref[...])
    x = x + _mha_block(t2, mem, ca_wqkv_ref, ca_bqkv_ref, ca_wo_ref, ca_bo_ref, nhead)

    # --- feed-forward block (dropout / dropout3 = identity in eval) ---
    t2 = _layer_norm(x, n3g_ref[...], n3b_ref[...])
    h = jnp.dot(t2.astype(jnp.bfloat16), w1_ref[...],
                preferred_element_type=jnp.float32) + b1_ref[...]
    h = jnp.maximum(h, 0.0)   # F.relu
    f = jnp.dot(h.astype(jnp.bfloat16), w2_ref[...],
                preferred_element_type=jnp.float32) + b2_ref[...]

    out_ref[...] = (x + f).astype(out_ref.dtype)


# ------------------------- wrapper / weight preparation ----------------------

def _prepare_params(params, nhead):
    """Re-lay out PyTorch-convention weights once, outside the kernel."""
    D = params["sa_wo"].shape[0]
    hd = D // nhead
    scale = 1.0 / math.sqrt(hd)

    def prep_attn(prefix):
        w_in = params[prefix + "_wi"].astype(jnp.float32)            # (3D, D)  (out, in)
        b_in = params[prefix + "_bi"].reshape(3 * D).astype(jnp.float32)
        w_out = params[prefix + "_wo"].astype(jnp.float32)           # (D, D)
        b_out = params[prefix + "_bo"].reshape(1, D).astype(jnp.float32)

        w_qkv = w_in.reshape(3, D, D)                    # (3, D_out, D_in)
        w_qkv = jnp.transpose(w_qkv, (0, 2, 1))          # (3, D_in, D_out)  (pre-transposed)
        w_qkv = w_qkv.reshape(3, D, nhead, hd)
        w_qkv = jnp.transpose(w_qkv, (0, 2, 1, 3))       # (3, H, D_in, hd)
        b_qkv = b_in.reshape(3, nhead, 1, hd)            # (3, H, 1, hd)
        w_qkv = w_qkv.at[0].multiply(scale)              # fold 1/sqrt(hd) into q
        b_qkv = b_qkv.at[0].multiply(scale)

        w_o = jnp.transpose(w_out).reshape(nhead, hd, D)  # (H, hd, D_out)
        return (w_qkv.astype(jnp.bfloat16), b_qkv,
                w_o.astype(jnp.bfloat16), b_out)

    sa = prep_attn("sa")
    ca = prep_attn("ca")
    w1 = jnp.transpose(params["l1w"]).astype(jnp.bfloat16)           # (D, FF)
    b1 = params["l1b"].reshape(1, -1).astype(jnp.float32)
    w2 = jnp.transpose(params["l2w"]).astype(jnp.bfloat16)           # (FF, D)
    b2 = params["l2b"].reshape(1, -1).astype(jnp.float32)
    norms = tuple(params[k].reshape(1, -1).astype(jnp.float32)
                  for k in ("n1g", "n1b", "n2g", "n2b", "n3g", "n3b"))
    return norms + sa + ca + (w1, b1, w2, b2)


@functools.partial(jax.jit, static_argnames=("nhead",))
def transformer_decoder_layer(tgt_tbd, mem_sbd, params, *, nhead):
    """tgt_tbd: (T, B, D), mem_sbd: (S, B, D) -- PyTorch seq-first layout."""
    T, B, D = tgt_tbd.shape
    S = mem_sbd.shape[0]
    FF = params["l1w"].shape[0]
    H = nhead

    prepped = _prepare_params(params, nhead)

    # Free, layout-preserving reshape: batch b lives in lanes [b*D, (b+1)*D).
    # The BlockSpec below picks that 128-lane slab directly, so no (T,B,D)<->(B,T,D)
    # transpose / extra HBM round trip is needed on either side of the kernel.
    tgt2d = tgt_tbd.reshape(T, B * D)
    mem2d = mem_sbd.reshape(S, B * D)

    act_specs = [
        pl.BlockSpec((T, D), lambda b: (0, b)),
        pl.BlockSpec((S, D), lambda b: (0, b)),
    ]
    param_specs = [pl.BlockSpec(p.shape, lambda b, n=p.ndim: (0,) * n)
                   for p in prepped]

    # Advisory cost estimate so XLA schedules surrounding ops around the kernel.
    def attn_flops(lq, lkv):
        return (2 * lq * D * D            # q projection
                + 2 * 2 * lkv * D * D     # k, v projections
                + 2 * 2 * lq * lkv * D    # scores + weighted values (all heads)
                + 2 * lq * D * D)         # output projection
    flops = B * (attn_flops(T, T) + attn_flops(T, S) + 2 * 2 * T * D * FF)
    transcendentals = B * H * (T * T + T * S)
    bytes_accessed = 4 * (tgt2d.size + mem2d.size + T * B * D) + sum(
        int(p.size) * p.dtype.itemsize for p in prepped)

    out2d = pl.pallas_call(
        functools.partial(_decoder_layer_kernel, nhead=nhead),
        out_shape=jax.ShapeDtypeStruct((T, B * D), jnp.float32),
        grid=(B,),
        in_specs=act_specs + param_specs,
        out_specs=pl.BlockSpec((T, D), lambda b: (0, b)),
        compiler_params=pltpu.CompilerParams(
            dimension_semantics=("parallel",)),       # both v7x TensorCores busy
        cost_estimate=pl.CostEstimate(
            flops=int(flops),
            transcendentals=int(transcendentals),
            bytes_accessed=int(bytes_accessed)),
    )(tgt2d, mem2d, *prepped)

    return out2d.reshape(T, B, D)


# ------------------------- pure-JAX f32 reference ----------------------------

def _ref_forward(tgt, mem, params, nhead):
    """f32 reference mirroring PyTorch TransformerDecoderLayer (eval, no masks)."""
    D = tgt.shape[-1]
    hd = D // nhead

    def layer_norm(x, g, b):
        mu = jnp.mean(x, axis=-1, keepdims=True)
        var = jnp.mean(jnp.square(x - mu), axis=-1, keepdims=True)
        return (x - mu) / jnp.sqrt(var + EPS) * g + b

    def mha(q_in, kv_in, w_in, b_in, w_out, b_out):
        Lq, Bn, _ = q_in.shape
        Lk = kv_in.shape[0]
        b_in = b_in.reshape(3 * D)
        q = q_in @ w_in[:D].T + b_in[:D]
        k = kv_in @ w_in[D:2 * D].T + b_in[D:2 * D]
        v = kv_in @ w_in[2 * D:].T + b_in[2 * D:]

        def split(x, L):
            return x.reshape(L, Bn, nhead, hd).transpose(1, 2, 0, 3)   # (B,H,L,hd)

        qh, kh, vh = split(q, Lq), split(k, Lk), split(v, Lk)
        s = jnp.einsum("bhqd,bhkd->bhqk", qh, kh) / math.sqrt(hd)
        p = jax.nn.softmax(s, axis=-1)
        o = jnp.einsum("bhqk,bhkd->bhqd", p, vh)
        o = o.transpose(2, 0, 1, 3).reshape(Lq, Bn, D)
        return o @ w_out.T + b_out[0]

    x = tgt
    t2 = layer_norm(x, params["n1g"][0], params["n1b"][0])
    x = x + mha(t2, t2, params["sa_wi"], params["sa_bi"], params["sa_wo"], params["sa_bo"])
    t2 = layer_norm(x, params["n2g"][0], params["n2b"][0])
    x = x + mha(t2, mem, params["ca_wi"], params["ca_bi"], params["ca_wo"], params["ca_bo"])
    t2 = layer_norm(x, params["n3g"][0], params["n3b"][0])
    h = jnp.maximum(t2 @ params["l1w"].T + params["l1b"][0], 0.0)
    x = x + (h @ params["l2w"].T + params["l2b"][0])
    return x


# ----------------------------------- main ------------------------------------

def _make_params(key, d_model, nhead, dim_ff):
    keys = jax.random.split(key, 18)
    s = 0.1

    def rnd(i, shape):
        return s * jax.random.normal(keys[i], shape, jnp.float32)

    return {
        "n1g": 1.0 + rnd(0, (1, d_model)), "n1b": rnd(1, (1, d_model)),
        "n2g": 1.0 + rnd(2, (1, d_model)), "n2b": rnd(3, (1, d_model)),
        "n3g": 1.0 + rnd(4, (1, d_model)), "n3b": rnd(5, (1, d_model)),
        "sa_wi": rnd(6, (3 * d_model, d_model)), "sa_bi": rnd(7, (1, 3 * d_model)),
        "sa_wo": rnd(8, (d_model, d_model)),     "sa_bo": rnd(9, (1, d_model)),
        "ca_wi": rnd(10, (3 * d_model, d_model)), "ca_bi": rnd(11, (1, 3 * d_model)),
        "ca_wo": rnd(12, (d_model, d_model)),     "ca_bo": rnd(13, (1, d_model)),
        "l1w": rnd(14, (dim_ff, d_model)), "l1b": rnd(15, (1, dim_ff)),
        "l2w": rnd(16, (d_model, dim_ff)), "l2b": rnd(17, (1, d_model)),
    }


if __name__ == "__main__":
    T, S, B = 8, 16, 2
    D_MODEL, NHEAD, DIM_FF = 128, 8, 256     # lane-dense: multiples of 128

    key = jax.random.PRNGKey(0)
    k_tgt, k_mem, k_par = jax.random.split(key, 3)

    tgt = jax.random.normal(k_tgt, (T, B, D_MODEL), jnp.float32)      # (T, B, D)
    memory = jax.random.normal(k_mem, (S, B, D_MODEL), jnp.float32)   # (S, B, D)
    params = _make_params(k_par, D_MODEL, NHEAD, DIM_FF)

    out = transformer_decoder_layer(tgt, memory, params, nhead=NHEAD)
    out = jax.block_until_ready(out)

    ref = _ref_forward(tgt, memory, params, NHEAD)
    assert out.shape == (T, B, D_MODEL)
    # Kernel runs bf16 matmuls (f32 accum) + approx softmax reciprocal; the
    # reference is pure f32, so compare with a mixed-precision tolerance.
    assert jnp.allclose(out, ref, atol=1e-1, rtol=1e-1), "mismatch vs JAX reference"

    print("KERNEL_OK")
</pallas_src>

<mosaic_0001>
module attributes {stable_mosaic.version = 11 : i64} {
  func.func @_decoder_layer_kernel(%arg0: i32, %arg1: memref<8x128xf32, #tpu.memory_space<vmem>>, %arg2: memref<16x128xf32, #tpu.memory_space<vmem>>, %arg3: memref<1x128xf32, #tpu.memory_space<vmem>>, %arg4: memref<1x128xf32, #tpu.memory_space<vmem>>, %arg5: memref<1x128xf32, #tpu.memory_space<vmem>>, %arg6: memref<1x128xf32, #tpu.memory_space<vmem>>, %arg7: memref<1x128xf32, #tpu.memory_space<vmem>>, %arg8: memref<1x128xf32, #tpu.memory_space<vmem>>, %arg9: memref<3x8x128x16xbf16, #tpu.memory_space<vmem>>, %arg10: memref<3x8x1x16xf32, #tpu.memory_space<vmem>>, %arg11: memref<8x16x128xbf16, #tpu.memory_space<vmem>>, %arg12: memref<1x128xf32, #tpu.memory_space<vmem>>, %arg13: memref<3x8x128x16xbf16, #tpu.memory_space<vmem>>, %arg14: memref<3x8x1x16xf32, #tpu.memory_space<vmem>>, %arg15: memref<8x16x128xbf16, #tpu.memory_space<vmem>>, %arg16: memref<1x128xf32, #tpu.memory_space<vmem>>, %arg17: memref<128x256xbf16, #tpu.memory_space<vmem>>, %arg18: memref<1x256xf32, #tpu.memory_space<vmem>>, %arg19: memref<256x128xbf16, #tpu.memory_space<vmem>>, %arg20: memref<1x128xf32, #tpu.memory_space<vmem>>, %arg21: memref<8x128xf32, #tpu.memory_space<vmem>>) attributes {dimension_semantics = [#tpu.dimension_semantics<parallel>], iteration_bounds = array<i64: 2>, scalar_prefetch = 0 : i64, scratch_operands = 0 : i64, tpu.core_type = #tpu.core_type<tc>, window_params = [{transform_indices = @transform_0, window_bounds = array<i64: 8, 128>}, {transform_indices = @transform_1, window_bounds = array<i64: 16, 128>}, {pipeline_mode = #tpu.pipeline_mode<synchronous>, transform_indices = @transform_2, window_bounds = array<i64: 1, 128>}, {pipeline_mode = #tpu.pipeline_mode<synchronous>, transform_indices = @transform_3, window_bounds = array<i64: 1, 128>}, {pipeline_mode = #tpu.pipeline_mode<synchronous>, transform_indices = @transform_4, window_bounds = array<i64: 1, 128>}, {pipeline_mode = #tpu.pipeline_mode<synchronous>, transform_indices = @transform_5, window_bounds = array<i64: 1, 128>}, {pipeline_mode = #tpu.pipeline_mode<synchronous>, transform_indices = @transform_6, window_bounds = array<i64: 1, 128>}, {pipeline_mode = #tpu.pipeline_mode<synchronous>, transform_indices = @transform_7, window_bounds = array<i64: 1, 128>}, {pipeline_mode = #tpu.pipeline_mode<synchronous>, transform_indices = @transform_8, window_bounds = array<i64: 3, 8, 128, 16>}, {pipeline_mode = #tpu.pipeline_mode<synchronous>, transform_indices = @transform_9, window_bounds = array<i64: 3, 8, 1, 16>}, {pipeline_mode = #tpu.pipeline_mode<synchronous>, transform_indices = @transform_10, window_bounds = array<i64: 8, 16, 128>}, {pipeline_mode = #tpu.pipeline_mode<synchronous>, transform_indices = @transform_11, window_bounds = array<i64: 1, 128>}, {pipeline_mode = #tpu.pipeline_mode<synchronous>, transform_indices = @transform_12, window_bounds = array<i64: 3, 8, 128, 16>}, {pipeline_mode = #tpu.pipeline_mode<synchronous>, transform_indices = @transform_13, window_bounds = array<i64: 3, 8, 1, 16>}, {pipeline_mode = #tpu.pipeline_mode<synchronous>, transform_indices = @transform_14, window_bounds = array<i64: 8, 16, 128>}, {pipeline_mode = #tpu.pipeline_mode<synchronous>, transform_indices = @transform_15, window_bounds = array<i64: 1, 128>}, {pipeline_mode = #tpu.pipeline_mode<synchronous>, transform_indices = @transform_16, window_bounds = array<i64: 128, 256>}, {pipeline_mode = #tpu.pipeline_mode<synchronous>, transform_indices = @transform_17, window_bounds = array<i64: 1, 256>}, {pipeline_mode = #tpu.pipeline_mode<synchronous>, transform_indices = @transform_18, window_bounds = array<i64: 256, 128>}, {pipeline_mode = #tpu.pipeline_mode<synchronous>, transform_indices = @transform_19, window_bounds = array<i64: 1, 128>}, {transform_indices = @transform_20, window_bounds = array<i64: 8, 128>}]} {
    %c0 = arith.constant 0 : index
    %c0_0 = arith.constant 0 : index
    %0 = vector.load %arg1[%c0, %c0_0] : memref<8x128xf32, #tpu.memory_space<vmem>>, vector<8x128xf32>
    %c0_1 = arith.constant 0 : index
    %c0_2 = arith.constant 0 : index
    %1 = vector.load %arg2[%c0_1, %c0_2] : memref<16x128xf32, #tpu.memory_space<vmem>>, vector<16x128xf32>
    %c0_3 = arith.constant 0 : index
    %c0_4 = arith.constant 0 : index
    %2 = vector.load %arg3[%c0_3, %c0_4] : memref<1x128xf32, #tpu.memory_space<vmem>>, vector<1x128xf32>
    %c0_5 = arith.constant 0 : index
    %c0_6 = arith.constant 0 : index
    %3 = vector.load %arg4[%c0_5, %c0_6] : memref<1x128xf32, #tpu.memory_space<vmem>>, vector<1x128xf32>
    %cst = arith.constant dense<0.000000e+00> : vector<8xf32>
    %4 = vector.multi_reduction <add>, %0, %cst [1] : vector<8x128xf32> to vector<8xf32>
    %5 = vector.shape_cast %4 : vector<8xf32> to vector<8x1xf32>
    %cst_7 = arith.constant 1.280000e+02 : f32
    %6 = vector.broadcast %cst_7 : f32 to vector<8x1xf32>
    %7 = arith.divf %5, %6 : vector<8x1xf32>
    %8 = vector.broadcast %7 : vector<8x1xf32> to vector<8x128xf32>
    %9 = arith.subf %0, %8 : vector<8x128xf32>
    %10 = arith.mulf %9, %9 : vector<8x128xf32>
    %cst_8 = arith.constant dense<0.000000e+00> : vector<8xf32>
    %11 = vector.multi_reduction <add>, %10, %cst_8 [1] : vector<8x128xf32> to vector<8xf32>
    %12 = vector.shape_cast %11 : vector<8xf32> to vector<8x1xf32>
    %cst_9 = arith.constant 1.280000e+02 : f32
    %13 = vector.broadcast %cst_9 : f32 to vector<8x1xf32>
    %14 = arith.divf %12, %13 : vector<8x1xf32>
    %15 = vector.broadcast %7 : vector<8x1xf32> to vector<8x128xf32>
    %16 = arith.subf %0, %15 : vector<8x128xf32>
    %cst_10 = arith.constant 9.99999974E-6 : f32
    %17 = vector.broadcast %cst_10 : f32 to vector<8x1xf32>
    %18 = arith.addf %14, %17 : vector<8x1xf32>
    %19 = math.rsqrt %18 : vector<8x1xf32>
    %20 = vector.broadcast %19 : vector<8x1xf32> to vector<8x128xf32>
    %21 = arith.mulf %16, %20 : vector<8x128xf32>
    %22 = vector.broadcast %2 : vector<1x128xf32> to vector<8x128xf32>
    %23 = arith.mulf %21, %22 : vector<8x128xf32>
    %24 = vector.broadcast %3 : vector<1x128xf32> to vector<8x128xf32>
    %25 = arith.addf %23, %24 : vector<8x128xf32>
    %26 = arith.truncf %25 : vector<8x128xf32> to vector<8x128xbf16>
    %27 = arith.truncf %25 : vector<8x128xf32> to vector<8x128xbf16>
    %cst_11 = arith.constant 0.000000e+00 : f32
    %28 = vector.broadcast %cst_11 : f32 to vector<8x128xf32>
    %c0_12 = arith.constant 0 : index
    %c0_13 = arith.constant 0 : index
    %c0_14 = arith.constant 0 : index
    %c0_15 = arith.constant 0 : index
    %29 = vector.load %arg9[%c0_12, %c0_13, %c0_14, %c0_15] : memref<3x8x128x16xbf16, #tpu.memory_space<vmem>>, vector<1x1x128x16xbf16>
    %30 = vector.shape_cast %29 : vector<1x1x128x16xbf16> to vector<128x16xbf16>
    %cst_16 = arith.constant dense<0.000000e+00> : vector<8x16xf32>
    %31 = tpu.matmul %26, %30, %cst_16 {dimension_numbers = #tpu.dot_dimension_numbers<[1], [0], [0], [1], [0, 0, 1, 1], [], []>} : vector<8x128xbf16>, vector<128x16xbf16>, vector<8x16xf32> -> vector<8x16xf32>
    %c0_17 = arith.constant 0 : index
    %c0_18 = arith.constant 0 : index
    %c0_19 = arith.constant 0 : index
    %c0_20 = arith.constant 0 : index
    %32 = vector.load %arg10[%c0_17, %c0_18, %c0_19, %c0_20] : memref<3x8x1x16xf32, #tpu.memory_space<vmem>>, vector<1x1x1x16xf32>
    %33 = vector.shape_cast %32 : vector<1x1x1x16xf32> to vector<1x16xf32>
    %34 = vector.broadcast %33 : vector<1x16xf32> to vector<8x16xf32>
    %35 = arith.addf %31, %34 : vector<8x16xf32>
    %c1 = arith.constant 1 : index
    %c0_21 = arith.constant 0 : index
    %c0_22 = arith.constant 0 : index
    %c0_23 = arith.constant 0 : index
    %36 = vector.load %arg9[%c1, %c0_21, %c0_22, %c0_23] : memref<3x8x128x16xbf16, #tpu.memory_space<vmem>>, vector<1x1x128x16xbf16>
    %37 = vector.shape_cast %36 : vector<1x1x128x16xbf16> to vector<128x16xbf16>
    %cst_24 = arith.constant dense<0.000000e+00> : vector<8x16xf32>
    %38 = tpu.matmul %27, %37, %cst_24 {dimension_numbers = #tpu.dot_dimension_numbers<[1], [0], [0], [1], [0, 0, 1, 1], [], []>} : vector<8x128xbf16>, vector<128x16xbf16>, vector<8x16xf32> -> vector<8x16xf32>
    %c1_25 = arith.constant 1 : index
    %c0_26 = arith.constant 0 : index
    %c0_27 = arith.constant 0 : index
    %c0_28 = arith.constant 0 : index
    %39 = vector.load %arg10[%c1_25, %c0_26, %c0_27, %c0_28] : memref<3x8x1x16xf32, #tpu.memory_space<vmem>>, vector<1x1x1x16xf32>
    %40 = vector.shape_cast %39 : vector<1x1x1x16xf32> to vector<1x16xf32>
    %41 = vector.broadcast %40 : vector<1x16xf32> to vector<8x16xf32>
    %42 = arith.addf %38, %41 : vector<8x16xf32>
    %c2 = arith.constant 2 : index
    %c0_29 = arith.constant 0 : index
    %c0_30 = arith.constant 0 : index
    %c0_31 = arith.constant 0 : index
    %43 = vector.load %arg9[%c2, %c0_29, %c0_30, %c0_31] : memref<3x8x128x16xbf16, #tpu.memory_space<vmem>>, vector<1x1x128x16xbf16>
    %44 = vector.shape_cast %43 : vector<1x1x128x16xbf16> to vector<128x16xbf16>
    %cst_32 = arith.constant dense<0.000000e+00> : vector<8x16xf32>
    %45 = tpu.matmul %27, %44, %cst_32 {dimension_numbers = #tpu.dot_dimension_numbers<[1], [0], [0], [1], [0, 0, 1, 1], [], []>} : vector<8x128xbf16>, vector<128x16xbf16>, vector<8x16xf32> -> vector<8x16xf32>
    %c2_33 = arith.constant 2 : index
    %c0_34 = arith.constant 0 : index
    %c0_35 = arith.constant 0 : index
    %c0_36 = arith.constant 0 : index
    %46 = vector.load %arg10[%c2_33, %c0_34, %c0_35, %c0_36] : memref<3x8x1x16xf32, #tpu.memory_space<vmem>>, vector<1x1x1x16xf32>
    %47 = vector.shape_cast %46 : vector<1x1x1x16xf32> to vector<1x16xf32>
    %48 = vector.broadcast %47 : vector<1x16xf32> to vector<8x16xf32>
    %49 = arith.addf %45, %48 : vector<8x16xf32>
    %50 = arith.truncf %35 : vector<8x16xf32> to vector<8x16xbf16>
    %51 = arith.truncf %42 : vector<8x16xf32> to vector<8x16xbf16>
    %cst_37 = arith.constant dense<0.000000e+00> : vector<8x8xf32>
    %52 = tpu.matmul %50, %51, %cst_37 {dimension_numbers = #tpu.dot_dimension_numbers<[1], [1], [0], [0], [0, 0, 1, 0], [], []>} : vector<8x16xbf16>, vector<8x16xbf16>, vector<8x8xf32> -> vector<8x8xf32>
    %cst_38 = arith.constant dense<0xFF800000> : vector<8xf32>
    %53 = vector.multi_reduction <maximumf>, %52, %cst_38 [1] : vector<8x8xf32> to vector<8xf32>
    %54 = vector.shape_cast %53 : vector<8xf32> to vector<8x1xf32>
    %55 = vector.broadcast %54 : vector<8x1xf32> to vector<8x8xf32>
    %56 = arith.subf %52, %55 : vector<8x8xf32>
    %57 = math.exp %56 : vector<8x8xf32>
    %cst_39 = arith.constant dense<0.000000e+00> : vector<8xf32>
    %58 = vector.multi_reduction <add>, %57, %cst_39 [1] : vector<8x8xf32> to vector<8xf32>
    %59 = vector.shape_cast %58 : vector<8xf32> to vector<8x1xf32>
    %60 = tpu.reciprocal %59 {approx = true} : vector<8x1xf32> -> vector<8x1xf32>
    %61 = vector.broadcast %60 : vector<8x1xf32> to vector<8x8xf32>
    %62 = arith.mulf %57, %61 : vector<8x8xf32>
    %63 = arith.truncf %62 : vector<8x8xf32> to vector<8x8xbf16>
    %64 = arith.truncf %49 : vector<8x16xf32> to vector<8x16xbf16>
    %cst_40 = arith.constant dense<0.000000e+00> : vector<8x16xf32>
    %65 = tpu.matmul %63, %64, %cst_40 {dimension_numbers = #tpu.dot_dimension_numbers<[1], [0], [0], [1], [0, 0, 1, 1], [], []>} : vector<8x8xbf16>, vector<8x16xbf16>, vector<8x16xf32> -> vector<8x16xf32>
    %66 = arith.truncf %65 : vector<8x16xf32> to vector<8x16xbf16>
    %c0_41 = arith.constant 0 : index
    %c0_42 = arith.constant 0 : index
    %c0_43 = arith.constant 0 : index
    %67 = vector.load %arg11[%c0_41, %c0_42, %c0_43] : memref<8x16x128xbf16, #tpu.memory_space<vmem>>, vector<1x16x128xbf16>
    %68 = vector.shape_cast %67 : vector<1x16x128xbf16> to vector<16x128xbf16>
    %cst_44 = arith.constant dense<0.000000e+00> : vector<8x128xf32>
    %69 = tpu.matmul %66, %68, %cst_44 {dimension_numbers = #tpu.dot_dimension_numbers<[1], [0], [0], [1], [0, 0, 1, 1], [], []>} : vector<8x16xbf16>, vector<16x128xbf16>, vector<8x128xf32> -> vector<8x128xf32>
    %70 = arith.addf %28, %69 : vector<8x128xf32>
    %c0_45 = arith.constant 0 : index
    %c1_46 = arith.constant 1 : index
    %c0_47 = arith.constant 0 : index
    %c0_48 = arith.constant 0 : index
    %71 = vector.load %arg9[%c0_45, %c1_46, %c0_47, %c0_48] : memref<3x8x128x16xbf16, #tpu.memory_space<vmem>>, vector<1x1x128x16xbf16>
    %72 = vector.shape_cast %71 : vector<1x1x128x16xbf16> to vector<128x16xbf16>
    %cst_49 = arith.constant dense<0.000000e+00> : vector<8x16xf32>
    %73 = tpu.matmul %26, %72, %cst_49 {dimension_numbers = #tpu.dot_dimension_numbers<[1], [0], [0], [1], [0, 0, 1, 1], [], []>} : vector<8x128xbf16>, vector<128x16xbf16>, vector<8x16xf32> -> vector<8x16xf32>
    %c0_50 = arith.constant 0 : index
    %c1_51 = arith.constant 1 : index
    %c0_52 = arith.constant 0 : index
    %c0_53 = arith.constant 0 : index
    %74 = vector.load %arg10[%c0_50, %c1_51, %c0_52, %c0_53] : memref<3x8x1x16xf32, #tpu.memory_space<vmem>>, vector<1x1x1x16xf32>
    %75 = vector.shape_cast %74 : vector<1x1x1x16xf32> to vector<1x16xf32>
    %76 = vector.broadcast %75 : vector<1x16xf32> to vector<8x16xf32>
    %77 = arith.addf %73, %76 : vector<8x16xf32>
    %c1_54 = arith.constant 1 : index
    %c1_55 = arith.constant 1 : index
    %c0_56 = arith.constant 0 : index
    %c0_57 = arith.constant 0 : index
    %78 = vector.load %arg9[%c1_54, %c1_55, %c0_56, %c0_57] : memref<3x8x128x16xbf16, #tpu.memory_space<vmem>>, vector<1x1x128x16xbf16>
    %79 = vector.shape_cast %78 : vector<1x1x128x16xbf16> to vector<128x16xbf16>
    %cst_58 = arith.constant dense<0.000000e+00> : vector<8x16xf32>
    %80 = tpu.matmul %27, %79, %cst_58 {dimension_numbers = #tpu.dot_dimension_numbers<[1], [0], [0], [1], [0, 0, 1, 1], [], []>} : vector<8x128xbf16>, vector<128x16xbf16>, vector<8x16xf32> -> vector<8x16xf32>
    %c1_59 = arith.constant 1 : index
    %c1_60 = arith.constant 1 : index
    %c0_61 = arith.constant 0 : index
    %c0_62 = arith.constant 0 : index
    %81 = vector.load %arg10[%c1_59, %c1_60, %c0_61, %c0_62] : memref<3x8x1x16xf32, #tpu.memory_space<vmem>>, vector<1x1x1x16xf32>
    %82 = vector.shape_cast %81 : vector<1x1x1x16xf32> to vector<1x16xf32>
    %83 = vector.broadcast %82 : vector<1x16xf32> to vector<8x16xf32>
    %84 = arith.addf %80, %83 : vector<8x16xf32>
    %c2_63 = arith.constant 2 : index
    %c1_64 = arith.constant 1 : index
    %c0_65 = arith.constant 0 : index
    %c0_66 = arith.constant 0 : index
    %85 = vector.load %arg9[%c2_63, %c1_64, %c0_65, %c0_66] : memref<3x8x128x16xbf16, #tpu.memory_space<vmem>>, vector<1x1x128x16xbf16>
    %86 = vector.shape_cast %85 : vector<1x1x128x16xbf16> to vector<128x16xbf16>
    %cst_67 = arith.constant dense<0.000000e+00> : vector<8x16xf32>
    %87 = tpu.matmul %27, %86, %cst_67 {dimension_numbers = #tpu.dot_dimension_numbers<[1], [0], [0], [1], [0, 0, 1, 1], [], []>} : vector<8x128xbf16>, vector<128x16xbf16>, vector<8x16xf32> -> vector<8x16xf32>
    %c2_68 = arith.constant 2 : index
    %c1_69 = arith.constant 1 : index
    %c0_70 = arith.constant 0 : index
    %c0_71 = arith.constant 0 : index
    %88 = vector.load %arg10[%c2_68, %c1_69, %c0_70, %c0_71] : memref<3x8x1x16xf32, #tpu.memory_space<vmem>>, vector<1x1x1x16xf32>
    %89 = vector.shape_cast %88 : vector<1x1x1x16xf32> to vector<1x16xf32>
    %90 = vector.broadcast %89 : vector<1x16xf32> to vector<8x16xf32>
    %91 = arith.addf %87, %90 : vector<8x16xf32>
    %92 = arith.truncf %77 : vector<8x16xf32> to vector<8x16xbf16>
    %93 = arith.truncf %84 : vector<8x16xf32> to vector<8x16xbf16>
    %cst_72 = arith.constant dense<0.000000e+00> : vector<8x8xf32>
    %94 = tpu.matmul %92, %93, %cst_72 {dimension_numbers = #tpu.dot_dimension_numbers<[1], [1], [0], [0], [0, 0, 1, 0], [], []>} : vector<8x16xbf16>, vector<8x16xbf16>, vector<8x8xf32> -> vector<8x8xf32>
    %cst_73 = arith.constant dense<0xFF800000> : vector<8xf32>
    %95 = vector.multi_reduction <maximumf>, %94, %cst_73 [1] : vector<8x8xf32> to vector<8xf32>
    %96 = vector.shape_cast %95 : vector<8xf32> to vector<8x1xf32>
    %97 = vector.broadcast %96 : vector<8x1xf32> to vector<8x8xf32>
    %98 = arith.subf %94, %97 : vector<8x8xf32>
    %99 = math.exp %98 : vector<8x8xf32>
    %cst_74 = arith.constant dense<0.000000e+00> : vector<8xf32>
    %100 = vector.multi_reduction <add>, %99, %cst_74 [1] : vector<8x8xf32> to vector<8xf32>
    %101 = vector.shape_cast %100 : vector<8xf32> to vector<8x1xf32>
    %102 = tpu.reciprocal %101 {approx = true} : vector<8x1xf32> -> vector<8x1xf32>
    %103 = vector.broadcast %102 : vector<8x1xf32> to vector<8x8xf32>
    %104 = arith.mulf %99, %103 : vector<8x8xf32>
    %105 = arith.truncf %104 : vector<8x8xf32> to vector<8x8xbf16>
    %106 = arith.truncf %91 : vector<8x16xf32> to vector<8x16xbf16>
    %cst_75 = arith.constant dense<0.000000e+00> : vector<8x16xf32>
    %107 = tpu.matmul %105, %106, %cst_75 {dimension_numbers = #tpu.dot_dimension_numbers<[1], [0], [0], [1], [0, 0, 1, 1], [], []>} : vector<8x8xbf16>, vector<8x16xbf16>, vector<8x16xf32> -> vector<8x16xf32>
    %108 = arith.truncf %107 : vector<8x16xf32> to vector<8x16xbf16>
    %c1_76 = arith.constant 1 : index
    %c0_77 = arith.constant 0 : index
    %c0_78 = arith.constant 0 : index
    %109 = vector.load %arg11[%c1_76, %c0_77, %c0_78] : memref<8x16x128xbf16, #tpu.memory_space<vmem>>, vector<1x16x128xbf16>
    %110 = vector.shape_cast %109 : vector<1x16x128xbf16> to vector<16x128xbf16>
    %cst_79 = arith.constant dense<0.000000e+00> : vector<8x128xf32>
    %111 = tpu.matmul %108, %110, %cst_79 {dimension_numbers = #tpu.dot_dimension_numbers<[1], [0], [0], [1], [0, 0, 1, 1], [], []>} : vector<8x16xbf16>, vector<16x128xbf16>, vector<8x128xf32> -> vector<8x128xf32>
    %112 = arith.addf %70, %111 : vector<8x128xf32>
    %c0_80 = arith.constant 0 : index
    %c2_81 = arith.constant 2 : index
    %c0_82 = arith.constant 0 : index
    %c0_83 = arith.constant 0 : index
    %113 = vector.load %arg9[%c0_80, %c2_81, %c0_82, %c0_83] : memref<3x8x128x16xbf16, #tpu.memory_space<vmem>>, vector<1x1x128x16xbf16>
    %114 = vector.shape_cast %113 : vector<1x1x128x16xbf16> to vector<128x16xbf16>
    %cst_84 = arith.constant dense<0.000000e+00> : vector<8x16xf32>
    %115 = tpu.matmul %26, %114, %cst_84 {dimension_numbers = #tpu.dot_dimension_numbers<[1], [0], [0], [1], [0, 0, 1, 1], [], []>} : vector<8x128xbf16>, vector<128x16xbf16>, vector<8x16xf32> -> vector<8x16xf32>
    %c0_85 = arith.constant 0 : index
    %c2_86 = arith.constant 2 : index
    %c0_87 = arith.constant 0 : index
    %c0_88 = arith.constant 0 : index
    %116 = vector.load %arg10[%c0_85, %c2_86, %c0_87, %c0_88] : memref<3x8x1x16xf32, #tpu.memory_space<vmem>>, vector<1x1x1x16xf32>
    %117 = vector.shape_cast %116 : vector<1x1x1x16xf32> to vector<1x16xf32>
    %118 = vector.broadcast %117 : vector<1x16xf32> to vector<8x16xf32>
    %119 = arith.addf %115, %118 : vector<8x16xf32>
    %c1_89 = arith.constant 1 : index
    %c2_90 = arith.constant 2 : index
    %c0_91 = arith.constant 0 : index
    %c0_92 = arith.constant 0 : index
    %120 = vector.load %arg9[%c1_89, %c2_90, %c0_91, %c0_92] : memref<3x8x128x16xbf16, #tpu.memory_space<vmem>>, vector<1x1x128x16xbf16>
    %121 = vector.shape_cast %120 : vector<1x1x128x16xbf16> to vector<128x16xbf16>
    %cst_93 = arith.constant dense<0.000000e+00> : vector<8x16xf32>
    %122 = tpu.matmul %27, %121, %cst_93 {dimension_numbers = #tpu.dot_dimension_numbers<[1], [0], [0], [1], [0, 0, 1, 1], [], []>} : vector<8x128xbf16>, vector<128x16xbf16>, vector<8x16xf32> -> vector<8x16xf32>
    %c1_94 = arith.constant 1 : index
    %c2_95 = arith.constant 2 : index
    %c0_96 = arith.constant 0 : index
    %c0_97 = arith.constant 0 : index
    %123 = vector.load %arg10[%c1_94, %c2_95, %c0_96, %c0_97] : memref<3x8x1x16xf32, #tpu.memory_space<vmem>>, vector<1x1x1x16xf32>
    %124 = vector.shape_cast %123 : vector<1x1x1x16xf32> to vector<1x16xf32>
    %125 = vector.broadcast %124 : vector<1x16xf32> to vector<8x16xf32>
    %126 = arith.addf %122, %125 : vector<8x16xf32>
    %c2_98 = arith.constant 2 : index
    %c2_99 = arith.constant 2 : index
    %c0_100 = arith.constant 0 : index
    %c0_101 = arith.constant 0 : index
    %127 = vector.load %arg9[%c2_98, %c2_99, %c0_100, %c0_101] : memref<3x8x128x16xbf16, #tpu.memory_space<vmem>>, vector<1x1x128x16xbf16>
    %128 = vector.shape_cast %127 : vector<1x1x128x16xbf16> to vector<128x16xbf16>
    %cst_102 = arith.constant dense<0.000000e+00> : vector<8x16xf32>
    %129 = tpu.matmul %27, %128, %cst_102 {dimension_numbers = #tpu.dot_dimension_numbers<[1], [0], [0], [1], [0, 0, 1, 1], [], []>} : vector<8x128xbf16>, vector<128x16xbf16>, vector<8x16xf32> -> vector<8x16xf32>
    %c2_103 = arith.constant 2 : index
    %c2_104 = arith.constant 2 : index
    %c0_105 = arith.constant 0 : index
    %c0_106 = arith.constant 0 : index
    %130 = vector.load %arg10[%c2_103, %c2_104, %c0_105, %c0_106] : memref<3x8x1x16xf32, #tpu.memory_space<vmem>>, vector<1x1x1x16xf32>
    %131 = vector.shape_cast %130 : vector<1x1x1x16xf32> to vector<1x16xf32>
    %132 = vector.broadcast %131 : vector<1x16xf32> to vector<8x16xf32>
    %133 = arith.addf %129, %132 : vector<8x16xf32>
    %134 = arith.truncf %119 : vector<8x16xf32> to vector<8x16xbf16>
    %135 = arith.truncf %126 : vector<8x16xf32> to vector<8x16xbf16>
    %cst_107 = arith.constant dense<0.000000e+00> : vector<8x8xf32>
    %136 = tpu.matmul %134, %135, %cst_107 {dimension_numbers = #tpu.dot_dimension_numbers<[1], [1], [0], [0], [0, 0, 1, 0], [], []>} : vector<8x16xbf16>, vector<8x16xbf16>, vector<8x8xf32> -> vector<8x8xf32>
    %cst_108 = arith.constant dense<0xFF800000> : vector<8xf32>
    %137 = vector.multi_reduction <maximumf>, %136, %cst_108 [1] : vector<8x8xf32> to vector<8xf32>
    %138 = vector.shape_cast %137 : vector<8xf32> to vector<8x1xf32>
    %139 = vector.broadcast %138 : vector<8x1xf32> to vector<8x8xf32>
    %140 = arith.subf %136, %139 : vector<8x8xf32>
    %141 = math.exp %140 : vector<8x8xf32>
    %cst_109 = arith.constant dense<0.000000e+00> : vector<8xf32>
    %142 = vector.multi_reduction <add>, %141, %cst_109 [1] : vector<8x8xf32> to vector<8xf32>
    %143 = vector.shape_cast %142 : vector<8xf32> to vector<8x1xf32>
    %144 = tpu.reciprocal %143 {approx = true} : vector<8x1xf32> -> vector<8x1xf32>
    %145 = vector.broadcast %144 : vector<8x1xf32> to vector<8x8xf32>
    %146 = arith.mulf %141, %145 : vector<8x8xf32>
    %147 = arith.truncf %146 : vector<8x8xf32> to vector<8x8xbf16>
    %148 = arith.truncf %133 : vector<8x16xf32> to vector<8x16xbf16>
    %cst_110 = arith.constant dense<0.000000e+00> : vector<8x16xf32>
    %149 = tpu.matmul %147, %148, %cst_110 {dimension_numbers = #tpu.dot_dimension_numbers<[1], [0], [0], [1], [0, 0, 1, 1], [], []>} : vector<8x8xbf16>, vector<8x16xbf16>, vector<8x16xf32> -> vector<8x16xf32>
    %150 = arith.truncf %149 : vector<8x16xf32> to vector<8x16xbf16>
    %c2_111 = arith.constant 2 : index
    %c0_112 = arith.constant 0 : index
    %c0_113 = arith.constant 0 : index
    %151 = vector.load %arg11[%c2_111, %c0_112, %c0_113] : memref<8x16x128xbf16, #tpu.memory_space<vmem>>, vector<1x16x128xbf16>
    %152 = vector.shape_cast %151 : vector<1x16x128xbf16> to vector<16x128xbf16>
    %cst_114 = arith.constant dense<0.000000e+00> : vector<8x128xf32>
    %153 = tpu.matmul %150, %152, %cst_114 {dimension_numbers = #tpu.dot_dimension_numbers<[1], [0], [0], [1], [0, 0, 1, 1], [], []>} : vector<8x16xbf16>, vector<16x128xbf16>, vector<8x128xf32> -> vector<8x128xf32>
    %154 = arith.addf %112, %153 : vector<8x128xf32>
    %c0_115 = arith.constant 0 : index
    %c3 = arith.constant 3 : index
    %c0_116 = arith.constant 0 : index
    %c0_117 = arith.constant 0 : index
    %155 = vector.load %arg9[%c0_115, %c3, %c0_116, %c0_117] : memref<3x8x128x16xbf16, #tpu.memory_space<vmem>>, vector<1x1x128x16xbf16>
    %156 = vector.shape_cast %155 : vector<1x1x128x16xbf16> to vector<128x16xbf16>
    %cst_118 = arith.constant dense<0.000000e+00> : vector<8x16xf32>
    %157 = tpu.matmul %26, %156, %cst_118 {dimension_numbers = #tpu.dot_dimension_numbers<[1], [0], [0], [1], [0, 0, 1, 1], [], []>} : vector<8x128xbf16>, vector<128x16xbf16>, vector<8x16xf32> -> vector<8x16xf32>
    %c0_119 = arith.constant 0 : index
    %c3_120 = arith.constant 3 : index
    %c0_121 = arith.constant 0 : index
    %c0_122 = arith.constant 0 : index
    %158 = vector.load %arg10[%c0_119, %c3_120, %c0_121, %c0_122] : memref<3x8x1x16xf32, #tpu.memory_space<vmem>>, vector<1x1x1x16xf32>
    %159 = vector.shape_cast %158 : vector<1x1x1x16xf32> to vector<1x16xf32>
    %160 = vector.broadcast %159 : vector<1x16xf32> to vector<8x16xf32>
    %161 = arith.addf %157, %160 : vector<8x16xf32>
    %c1_123 = arith.constant 1 : index
    %c3_124 = arith.constant 3 : index
    %c0_125 = arith.constant 0 : index
    %c0_126 = arith.constant 0 : index
    %162 = vector.load %arg9[%c1_123, %c3_124, %c0_125, %c0_126] : memref<3x8x128x16xbf16, #tpu.memory_space<vmem>>, vector<1x1x128x16xbf16>
    %163 = vector.shape_cast %162 : vector<1x1x128x16xbf16> to vector<128x16xbf16>
    %cst_127 = arith.constant dense<0.000000e+00> : vector<8x16xf32>
    %164 = tpu.matmul %27, %163, %cst_127 {dimension_numbers = #tpu.dot_dimension_numbers<[1], [0], [0], [1], [0, 0, 1, 1], [], []>} : vector<8x128xbf16>, vector<128x16xbf16>, vector<8x16xf32> -> vector<8x16xf32>
    %c1_128 = arith.constant 1 : index
    %c3_129 = arith.constant 3 : index
    %c0_130 = arith.constant 0 : index
    %c0_131 = arith.constant 0 : index
    %165 = vector.load %arg10[%c1_128, %c3_129, %c0_130, %c0_131] : memref<3x8x1x16xf32, #tpu.memory_space<vmem>>, vector<1x1x1x16xf32>
    %166 = vector.shape_cast %165 : vector<1x1x1x16xf32> to vector<1x16xf32>
    %167 = vector.broadcast %166 : vector<1x16xf32> to vector<8x16xf32>
    %168 = arith.addf %164, %167 : vector<8x16xf32>
    %c2_132 = arith.constant 2 : index
    %c3_133 = arith.constant 3 : index
    %c0_134 = arith.constant 0 : index
    %c0_135 = arith.constant 0 : index
    %169 = vector.load %arg9[%c2_132, %c3_133, %c0_134, %c0_135] : memref<3x8x128x16xbf16, #tpu.memory_space<vmem>>, vector<1x1x128x16xbf16>
    %170 = vector.shape_cast %169 : vector<1x1x128x16xbf16> to vector<128x16xbf16>
    %cst_136 = arith.constant dense<0.000000e+00> : vector<8x16xf32>
    %171 = tpu.matmul %27, %170, %cst_136 {dimension_numbers = #tpu.dot_dimension_numbers<[1], [0], [0], [1], [0, 0, 1, 1], [], []>} : vector<8x128xbf16>, vector<128x16xbf16>, vector<8x16xf32> -> vector<8x16xf32>
    %c2_137 = arith.constant 2 : index
    %c3_138 = arith.constant 3 : index
    %c0_139 = arith.constant 0 : index
    %c0_140 = arith.constant 0 : index
    %172 = vector.load %arg10[%c2_137, %c3_138, %c0_139, %c0_140] : memref<3x8x1x16xf32, #tpu.memory_space<vmem>>, vector<1x1x1x16xf32>
    %173 = vector.shape_cast %172 : vector<1x1x1x16xf32> to vector<1x16xf32>
    %174 = vector.broadcast %173 : vector<1x16xf32> to vector<8x16xf32>
    %175 = arith.addf %171, %174 : vector<8x16xf32>
    %176 = arith.truncf %161 : vector<8x16xf32> to vector<8x16xbf16>
    %177 = arith.truncf %168 : vector<8x16xf32> to vector<8x16xbf16>
    %cst_141 = arith.constant dense<0.000000e+00> : vector<8x8xf32>
    %178 = tpu.matmul %176, %177, %cst_141 {dimension_numbers = #tpu.dot_dimension_numbers<[1], [1], [0], [0], [0, 0, 1, 0], [], []>} : vector<8x16xbf16>, vector<8x16xbf16>, vector<8x8xf32> -> vector<8x8xf32>
    %cst_142 = arith.constant dense<0xFF800000> : vector<8xf32>
    %179 = vector.multi_reduction <maximumf>, %178, %cst_142 [1] : vector<8x8xf32> to vector<8xf32>
    %180 = vector.shape_cast %179 : vector<8xf32> to vector<8x1xf32>
    %181 = vector.broadcast %180 : vector<8x1xf32> to vector<8x8xf32>
    %182 = arith.subf %178, %181 : vector<8x8xf32>
    %183 = math.exp %182 : vector<8x8xf32>
    %cst_143 = arith.constant dense<0.000000e+00> : vector<8xf32>
    %184 = vector.multi_reduction <add>, %183, %cst_143 [1] : vector<8x8xf32> to vector<8xf32>
    %185 = vector.shape_cast %184 : vector<8xf32> to vector<8x1xf32>
    %186 = tpu.reciprocal %185 {approx = true} : vector<8x1xf32> -> vector<8x1xf32>
    %187 = vector.broadcast %186 : vector<8x1xf32> to vector<8x8xf32>
    %188 = arith.mulf %183, %187 : vector<8x8xf32>
    %189 = arith.truncf %188 : vector<8x8xf32> to vector<8x8xbf16>
    %190 = arith.truncf %175 : vector<8x16xf32> to vector<8x16xbf16>
    %cst_144 = arith.constant dense<0.000000e+00> : vector<8x16xf32>
    %191 = tpu.matmul %189, %190, %cst_144 {dimension_numbers = #tpu.dot_dimension_numbers<[1], [0], [0], [1], [0, 0, 1, 1], [], []>} : vector<8x8xbf16>, vector<8x16xbf16>, vector<8x16xf32> -> vector<8x16xf32>
    %192 = arith.truncf %191 : vector<8x16xf32> to vector<8x16xbf16>
    %c3_145 = arith.constant 3 : index
    %c0_146 = arith.constant 0 : index
    %c0_147 = arith.constant 0 : index
    %193 = vector.load %arg11[%c3_145, %c0_146, %c0_147] : memref<8x16x128xbf16, #tpu.memory_space<vmem>>, vector<1x16x128xbf16>
    %194 = vector.shape_cast %193 : vector<1x16x128xbf16> to vector<16x128xbf16>
    %cst_148 = arith.constant dense<0.000000e+00> : vector<8x128xf32>
    %195 = tpu.matmul %192, %194, %cst_148 {dimension_numbers = #tpu.dot_dimension_numbers<[1], [0], [0], [1], [0, 0, 1, 1], [], []>} : vector<8x16xbf16>, vector<16x128xbf16>, vector<8x128xf32> -> vector<8x128xf32>
    %196 = arith.addf %154, %195 : vector<8x128xf32>
    %c0_149 = arith.constant 0 : index
    %c4 = arith.constant 4 : index
    %c0_150 = arith.constant 0 : index
    %c0_151 = arith.constant 0 : index
    %197 = vector.load %arg9[%c0_149, %c4, %c0_150, %c0_151] : memref<3x8x128x16xbf16, #tpu.memory_space<vmem>>, vector<1x1x128x16xbf16>
    %198 = vector.shape_cast %197 : vector<1x1x128x16xbf16> to vector<128x16xbf16>
    %cst_152 = arith.constant dense<0.000000e+00> : vector<8x16xf32>
    %199 = tpu.matmul %26, %198, %cst_152 {dimension_numbers = #tpu.dot_dimension_numbers<[1], [0], [0], [1], [0, 0, 1, 1], [], []>} : vector<8x128xbf16>, vector<128x16xbf16>, vector<8x16xf32> -> vector<8x16xf32>
    %c0_153 = arith.constant 0 : index
    %c4_154 = arith.constant 4 : index
    %c0_155 = arith.constant 0 : index
    %c0_156 = arith.constant 0 : index
    %200 = vector.load %arg10[%c0_153, %c4_154, %c0_155, %c0_156] : memref<3x8x1x16xf32, #tpu.memory_space<vmem>>, vector<1x1x1x16xf32>
    %201 = vector.shape_cast %200 : vector<1x1x1x16xf32> to vector<1x16xf32>
    %202 = vector.broadcast %201 : vector<1x16xf32> to vector<8x16xf32>
    %203 = arith.addf %199, %202 : vector<8x16xf32>
    %c1_157 = arith.constant 1 : index
    %c4_158 = arith.constant 4 : index
    %c0_159 = arith.constant 0 : index
    %c0_160 = arith.constant 0 : index
    %204 = vector.load %arg9[%c1_157, %c4_158, %c0_159, %c0_160] : memref<3x8x128x16xbf16, #tpu.memory_space<vmem>>, vector<1x1x128x16xbf16>
    %205 = vector.shape_cast %204 : vector<1x1x128x16xbf16> to vector<128x16xbf16>
    %cst_161 = arith.constant dense<0.000000e+00> : vector<8x16xf32>
    %206 = tpu.matmul %27, %205, %cst_161 {dimension_numbers = #tpu.dot_dimension_numbers<[1], [0], [0], [1], [0, 0, 1, 1], [], []>} : vector<8x128xbf16>, vector<128x16xbf16>, vector<8x16xf32> -> vector<8x16xf32>
    %c1_162 = arith.constant 1 : index
    %c4_163 = arith.constant 4 : index
    %c0_164 = arith.constant 0 : index
    %c0_165 = arith.constant 0 : index
    %207 = vector.load %arg10[%c1_162, %c4_163, %c0_164, %c0_165] : memref<3x8x1x16xf32, #tpu.memory_space<vmem>>, vector<1x1x1x16xf32>
    %208 = vector.shape_cast %207 : vector<1x1x1x16xf32> to vector<1x16xf32>
    %209 = vector.broadcast %208 : vector<1x16xf32> to vector<8x16xf32>
    %210 = arith.addf %206, %209 : vector<8x16xf32>
    %c2_166 = arith.constant 2 : index
    %c4_167 = arith.constant 4 : index
    %c0_168 = arith.constant 0 : index
    %c0_169 = arith.constant 0 : index
    %211 = vector.load %arg9[%c2_166, %c4_167, %c0_168, %c0_169] : memref<3x8x128x16xbf16, #tpu.memory_space<vmem>>, vector<1x1x128x16xbf16>
    %212 = vector.shape_cast %211 : vector<1x1x128x16xbf16> to vector<128x16xbf16>
    %cst_170 = arith.constant dense<0.000000e+00> : vector<8x16xf32>
    %213 = tpu.matmul %27, %212, %cst_170 {dimension_numbers = #tpu.dot_dimension_numbers<[1], [0], [0], [1], [0, 0, 1, 1], [], []>} : vector<8x128xbf16>, vector<128x16xbf16>, vector<8x16xf32> -> vector<8x16xf32>
    %c2_171 = arith.constant 2 : index
    %c4_172 = arith.constant 4 : index
    %c0_173 = arith.constant 0 : index
    %c0_174 = arith.constant 0 : index
    %214 = vector.load %arg10[%c2_171, %c4_172, %c0_173, %c0_174] : memref<3x8x1x16xf32, #tpu.memory_space<vmem>>, vector<1x1x1x16xf32>
    %215 = vector.shape_cast %214 : vector<1x1x1x16xf32> to vector<1x16xf32>
    %216 = vector.broadcast %215 : vector<1x16xf32> to vector<8x16xf32>
    %217 = arith.addf %213, %216 : vector<8x16xf32>
    %218 = arith.truncf %203 : vector<8x16xf32> to vector<8x16xbf16>
    %219 = arith.truncf %210 : vector<8x16xf32> to vector<8x16xbf16>
    %cst_175 = arith.constant dense<0.000000e+00> : vector<8x8xf32>
    %220 = tpu.matmul %218, %219, %cst_175 {dimension_numbers = #tpu.dot_dimension_numbers<[1], [1], [0], [0], [0, 0, 1, 0], [], []>} : vector<8x16xbf16>, vector<8x16xbf16>, vector<8x8xf32> -> vector<8x8xf32>
    %cst_176 = arith.constant dense<0xFF800000> : vector<8xf32>
    %221 = vector.multi_reduction <maximumf>, %220, %cst_176 [1] : vector<8x8xf32> to vector<8xf32>
    %222 = vector.shape_cast %221 : vector<8xf32> to vector<8x1xf32>
    %223 = vector.broadcast %222 : vector<8x1xf32> to vector<8x8xf32>
    %224 = arith.subf %220, %223 : vector<8x8xf32>
    %225 = math.exp %224 : vector<8x8xf32>
    %cst_177 = arith.constant dense<0.000000e+00> : vector<8xf32>
    %226 = vector.multi_reduction <add>, %225, %cst_177 [1] : vector<8x8xf32> to vector<8xf32>
    %227 = vector.shape_cast %226 : vector<8xf32> to vector<8x1xf32>
    %228 = tpu.reciprocal %227 {approx = true} : vector<8x1xf32> -> vector<8x1xf32>
    %229 = vector.broadcast %228 : vector<8x1xf32> to vector<8x8xf32>
    %230 = arith.mulf %225, %229 : vector<8x8xf32>
    %231 = arith.truncf %230 : vector<8x8xf32> to vector<8x8xbf16>
    %232 = arith.truncf %217 : vector<8x16xf32> to vector<8x16xbf16>
    %cst_178 = arith.constant dense<0.000000e+00> : vector<8x16xf32>
    %233 = tpu.matmul %231, %232, %cst_178 {dimension_numbers = #tpu.dot_dimension_numbers<[1], [0], [0], [1], [0, 0, 1, 1], [], []>} : vector<8x8xbf16>, vector<8x16xbf16>, vector<8x16xf32> -> vector<8x16xf32>
    %234 = arith.truncf %233 : vector<8x16xf32> to vector<8x16xbf16>
    %c4_179 = arith.constant 4 : index
    %c0_180 = arith.constant 0 : index
    %c0_181 = arith.constant 0 : index
    %235 = vector.load %arg11[%c4_179, %c0_180, %c0_181] : memref<8x16x128xbf16, #tpu.memory_space<vmem>>, vector<1x16x128xbf16>
    %236 = vector.shape_cast %235 : vector<1x16x128xbf16> to vector<16x128xbf16>
    %cst_182 = arith.constant dense<0.000000e+00> : vector<8x128xf32>
    %237 = tpu.matmul %234, %236, %cst_182 {dimension_numbers = #tpu.dot_dimension_numbers<[1], [0], [0], [1], [0, 0, 1, 1], [], []>} : vector<8x16xbf16>, vector<16x128xbf16>, vector<8x128xf32> -> vector<8x128xf32>
    %238 = arith.addf %196, %237 : vector<8x128xf32>
    %c0_183 = arith.constant 0 : index
    %c5 = arith.constant 5 : index
    %c0_184 = arith.constant 0 : index
    %c0_185 = arith.constant 0 : index
    %239 = vector.load %arg9[%c0_183, %c5, %c0_184, %c0_185] : memref<3x8x128x16xbf16, #tpu.memory_space<vmem>>, vector<1x1x128x16xbf16>
    %240 = vector.shape_cast %239 : vector<1x1x128x16xbf16> to vector<128x16xbf16>
    %cst_186 = arith.constant dense<0.000000e+00> : vector<8x16xf32>
    %241 = tpu.matmul %26, %240, %cst_186 {dimension_numbers = #tpu.dot_dimension_numbers<[1], [0], [0], [1], [0, 0, 1, 1], [], []>} : vector<8x128xbf16>, vector<128x16xbf16>, vector<8x16xf32> -> vector<8x16xf32>
    %c0_187 = arith.constant 0 : index
    %c5_188 = arith.constant 5 : index
    %c0_189 = arith.constant 0 : index
    %c0_190 = arith.constant 0 : index
    %242 = vector.load %arg10[%c0_187, %c5_188, %c0_189, %c0_190] : memref<3x8x1x16xf32, #tpu.memory_space<vmem>>, vector<1x1x1x16xf32>
    %243 = vector.shape_cast %242 : vector<1x1x1x16xf32> to vector<1x16xf32>
    %244 = vector.broadcast %243 : vector<1x16xf32> to vector<8x16xf32>
    %245 = arith.addf %241, %244 : vector<8x16xf32>
    %c1_191 = arith.constant 1 : index
    %c5_192 = arith.constant 5 : index
    %c0_193 = arith.constant 0 : index
    %c0_194 = arith.constant 0 : index
    %246 = vector.load %arg9[%c1_191, %c5_192, %c0_193, %c0_194] : memref<3x8x128x16xbf16, #tpu.memory_space<vmem>>, vector<1x1x128x16xbf16>
    %247 = vector.shape_cast %246 : vector<1x1x128x16xbf16> to vector<128x16xbf16>
    %cst_195 = arith.constant dense<0.000000e+00> : vector<8x16xf32>
    %248 = tpu.matmul %27, %247, %cst_195 {dimension_numbers = #tpu.dot_dimension_numbers<[1], [0], [0], [1], [0, 0, 1, 1], [], []>} : vector<8x128xbf16>, vector<128x16xbf16>, vector<8x16xf32> -> vector<8x16xf32>
    %c1_196 = arith.constant 1 : index
    %c5_197 = arith.constant 5 : index
    %c0_198 = arith.constant 0 : index
    %c0_199 = arith.constant 0 : index
    %249 = vector.load %arg10[%c1_196, %c5_197, %c0_198, %c0_199] : memref<3x8x1x16xf32, #tpu.memory_space<vmem>>, vector<1x1x1x16xf32>
    %250 = vector.shape_cast %249 : vector<1x1x1x16xf32> to vector<1x16xf32>
    %251 = vector.broadcast %250 : vector<1x16xf32> to vector<8x16xf32>
    %252 = arith.addf %248, %251 : vector<8x16xf32>
    %c2_200 = arith.constant 2 : index
    %c5_201 = arith.constant 5 : index
    %c0_202 = arith.constant 0 : index
    %c0_203 = arith.constant 0 : index
    %253 = vector.load %arg9[%c2_200, %c5_201, %c0_202, %c0_203] : memref<3x8x128x16xbf16, #tpu.memory_space<vmem>>, vector<1x1x128x16xbf16>
    %254 = vector.shape_cast %253 : vector<1x1x128x16xbf16> to vector<128x16xbf16>
    %cst_204 = arith.constant dense<0.000000e+00> : vector<8x16xf32>
    %255 = tpu.matmul %27, %254, %cst_204 {dimension_numbers = #tpu.dot_dimension_numbers<[1], [0], [0], [1], [0, 0, 1, 1], [], []>} : vector<8x128xbf16>, vector<128x16xbf16>, vector<8x16xf32> -> vector<8x16xf32>
    %c2_205 = arith.constant 2 : index
    %c5_206 = arith.constant 5 : index
    %c0_207 = arith.constant 0 : index
    %c0_208 = arith.constant 0 : index
    %256 = vector.load %arg10[%c2_205, %c5_206, %c0_207, %c0_208] : memref<3x8x1x16xf32, #tpu.memory_space<vmem>>, vector<1x1x1x16xf32>
    %257 = vector.shape_cast %256 : vector<1x1x1x16xf32> to vector<1x16xf32>
    %258 = vector.broadcast %257 : vector<1x16xf32> to vector<8x16xf32>
    %259 = arith.addf %255, %258 : vector<8x16xf32>
    %260 = arith.truncf %245 : vector<8x16xf32> to vector<8x16xbf16>
    %261 = arith.truncf %252 : vector<8x16xf32> to vector<8x16xbf16>
    %cst_209 = arith.constant dense<0.000000e+00> : vector<8x8xf32>
    %262 = tpu.matmul %260, %261, %cst_209 {dimension_numbers = #tpu.dot_dimension_numbers<[1], [1], [0], [0], [0, 0, 1, 0], [], []>} : vector<8x16xbf16>, vector<8x16xbf16>, vector<8x8xf32> -> vector<8x8xf32>
    %cst_210 = arith.constant dense<0xFF800000> : vector<8xf32>
    %263 = vector.multi_reduction <maximumf>, %262, %cst_210 [1] : vector<8x8xf32> to vector<8xf32>
    %264 = vector.shape_cast %263 : vector<8xf32> to vector<8x1xf32>
    %265 = vector.broadcast %264 : vector<8x1xf32> to vector<8x8xf32>
    %266 = arith.subf %262, %265 : vector<8x8xf32>
    %267 = math.exp %266 : vector<8x8xf32>
    %cst_211 = arith.constant dense<0.000000e+00> : vector<8xf32>
    %268 = vector.multi_reduction <add>, %267, %cst_211 [1] : vector<8x8xf32> to vector<8xf32>
    %269 = vector.shape_cast %268 : vector<8xf32> to vector<8x1xf32>
    %270 = tpu.reciprocal %269 {approx = true} : vector<8x1xf32> -> vector<8x1xf32>
    %271 = vector.broadcast %270 : vector<8x1xf32> to vector<8x8xf32>
    %272 = arith.mulf %267, %271 : vector<8x8xf32>
    %273 = arith.truncf %272 : vector<8x8xf32> to vector<8x8xbf16>
    %274 = arith.truncf %259 : vector<8x16xf32> to vector<8x16xbf16>
    %cst_212 = arith.constant dense<0.000000e+00> : vector<8x16xf32>
    %275 = tpu.matmul %273, %274, %cst_212 {dimension_numbers = #tpu.dot_dimension_numbers<[1], [0], [0], [1], [0, 0, 1, 1], [], []>} : vector<8x8xbf16>, vector<8x16xbf16>, vector<8x16xf32> -> vector<8x16xf32>
    %276 = arith.truncf %275 : vector<8x16xf32> to vector<8x16xbf16>
    %c5_213 = arith.constant 5 : index
    %c0_214 = arith.constant 0 : index
    %c0_215 = arith.constant 0 : index
    %277 = vector.load %arg11[%c5_213, %c0_214, %c0_215] : memref<8x16x128xbf16, #tpu.memory_space<vmem>>, vector<1x16x128xbf16>
    %278 = vector.shape_cast %277 : vector<1x16x128xbf16> to vector<16x128xbf16>
    %cst_216 = arith.constant dense<0.000000e+00> : vector<8x128xf32>
    %279 = tpu.matmul %276, %278, %cst_216 {dimension_numbers = #tpu.dot_dimension_numbers<[1], [0], [0], [1], [0, 0, 1, 1], [], []>} : vector<8x16xbf16>, vector<16x128xbf16>, vector<8x128xf32> -> vector<8x128xf32>
    %280 = arith.addf %238, %279 : vector<8x128xf32>
    %c0_217 = arith.constant 0 : index
    %c6 = arith.constant 6 : index
    %c0_218 = arith.constant 0 : index
    %c0_219 = arith.constant 0 : index
    %281 = vector.load %arg9[%c0_217, %c6, %c0_218, %c0_219] : memref<3x8x128x16xbf16, #tpu.memory_space<vmem>>, vector<1x1x128x16xbf16>
    %282 = vector.shape_cast %281 : vector<1x1x128x16xbf16> to vector<128x16xbf16>
    %cst_220 = arith.constant dense<0.000000e+00> : vector<8x16xf32>
    %283 = tpu.matmul %26, %282, %cst_220 {dimension_numbers = #tpu.dot_dimension_numbers<[1], [0], [0], [1], [0, 0, 1, 1], [], []>} : vector<8x128xbf16>, vector<128x16xbf16>, vector<8x16xf32> -> vector<8x16xf32>
    %c0_221 = arith.constant 0 : index
    %c6_222 = arith.constant 6 : index
    %c0_223 = arith.constant 0 : index
    %c0_224 = arith.constant 0 : index
    %284 = vector.load %arg10[%c0_221, %c6_222, %c0_223, %c0_224] : memref<3x8x1x16xf32, #tpu.memory_space<vmem>>, vector<1x1x1x16xf32>
    %285 = vector.shape_cast %284 : vector<1x1x1x16xf32> to vector<1x16xf32>
    %286 = vector.broadcast %285 : vector<1x16xf32> to vector<8x16xf32>
    %287 = arith.addf %283, %286 : vector<8x16xf32>
    %c1_225 = arith.constant 1 : index
    %c6_226 = arith.constant 6 : index
    %c0_227 = arith.constant 0 : index
    %c0_228 = arith.constant 0 : index
    %288 = vector.load %arg9[%c1_225, %c6_226, %c0_227, %c0_228] : memref<3x8x128x16xbf16, #tpu.memory_space<vmem>>, vector<1x1x128x16xbf16>
    %289 = vector.shape_cast %288 : vector<1x1x128x16xbf16> to vector<128x16xbf16>
    %cst_229 = arith.constant dense<0.000000e+00> : vector<8x16xf32>
    %290 = tpu.matmul %27, %289, %cst_229 {dimension_numbers = #tpu.dot_dimension_numbers<[1], [0], [0], [1], [0, 0, 1, 1], [], []>} : vector<8x128xbf16>, vector<128x16xbf16>, vector<8x16xf32> -> vector<8x16xf32>
    %c1_230 = arith.constant 1 : index
    %c6_231 = arith.constant 6 : index
    %c0_232 = arith.constant 0 : index
    %c0_233 = arith.constant 0 : index
    %291 = vector.load %arg10[%c1_230, %c6_231, %c0_232, %c0_233] : memref<3x8x1x16xf32, #tpu.memory_space<vmem>>, vector<1x1x1x16xf32>
    %292 = vector.shape_cast %291 : vector<1x1x1x16xf32> to vector<1x16xf32>
    %293 = vector.broadcast %292 : vector<1x16xf32> to vector<8x16xf32>
    %294 = arith.addf %290, %293 : vector<8x16xf32>
    %c2_234 = arith.constant 2 : index
    %c6_235 = arith.constant 6 : index
    %c0_236 = arith.constant 0 : index
    %c0_237 = arith.constant 0 : index
    %295 = vector.load %arg9[%c2_234, %c6_235, %c0_236, %c0_237] : memref<3x8x128x16xbf16, #tpu.memory_space<vmem>>, vector<1x1x128x16xbf16>
    %296 = vector.shape_cast %295 : vector<1x1x128x16xbf16> to vector<128x16xbf16>
    %cst_238 = arith.constant dense<0.000000e+00> : vector<8x16xf32>
    %297 = tpu.matmul %27, %296, %cst_238 {dimension_numbers = #tpu.dot_dimension_numbers<[1], [0], [0], [1], [0, 0, 1, 1], [], []>} : vector<8x128xbf16>, vector<128x16xbf16>, vector<8x16xf32> -> vector<8x16xf32>
    %c2_239 = arith.constant 2 : index
    %c6_240 = arith.constant 6 : index
    %c0_241 = arith.constant 0 : index
    %c0_242 = arith.constant 0 : index
    %298 = vector.load %arg10[%c2_239, %c6_240, %c0_241, %c0_242] : memref<3x8x1x16xf32, #tpu.memory_space<vmem>>, vector<1x1x1x16xf32>
    %299 = vector.shape_cast %298 : vector<1x1x1x16xf32> to vector<1x16xf32>
    %300 = vector.broadcast %299 : vector<1x16xf32> to vector<8x16xf32>
    %301 = arith.addf %297, %300 : vector<8x16xf32>
    %302 = arith.truncf %287 : vector<8x16xf32> to vector<8x16xbf16>
    %303 = arith.truncf %294 : vector<8x16xf32> to vector<8x16xbf16>
    %cst_243 = arith.constant dense<0.000000e+00> : vector<8x8xf32>
    %304 = tpu.matmul %302, %303, %cst_243 {dimension_numbers = #tpu.dot_dimension_numbers<[1], [1], [0], [0], [0, 0, 1, 0], [], []>} : vector<8x16xbf16>, vector<8x16xbf16>, vector<8x8xf32> -> vector<8x8xf32>
    %cst_244 = arith.constant dense<0xFF800000> : vector<8xf32>
    %305 = vector.multi_reduction <maximumf>, %304, %cst_244 [1] : vector<8x8xf32> to vector<8xf32>
    %306 = vector.shape_cast %305 : vector<8xf32> to vector<8x1xf32>
    %307 = vector.broadcast %306 : vector<8x1xf32> to vector<8x8xf32>
    %308 = arith.subf %304, %307 : vector<8x8xf32>
    %309 = math.exp %308 : vector<8x8xf32>
    %cst_245 = arith.constant dense<0.000000e+00> : vector<8xf32>
    %310 = vector.multi_reduction <add>, %309, %cst_245 [1] : vector<8x8xf32> to vector<8xf32>
    %311 = vector.shape_cast %310 : vector<8xf32> to vector<8x1xf32>
    %312 = tpu.reciprocal %311 {approx = true} : vector<8x1xf32> -> vector<8x1xf32>
    %313 = vector.broadcast %312 : vector<8x1xf32> to vector<8x8xf32>
    %314 = arith.mulf %309, %313 : vector<8x8xf32>
    %315 = arith.truncf %314 : vector<8x8xf32> to vector<8x8xbf16>
    %316 = arith.truncf %301 : vector<8x16xf32> to vector<8x16xbf16>
    %cst_246 = arith.constant dense<0.000000e+00> : vector<8x16xf32>
    %317 = tpu.matmul %315, %316, %cst_246 {dimension_numbers = #tpu.dot_dimension_numbers<[1], [0], [0], [1], [0, 0, 1, 1], [], []>} : vector<8x8xbf16>, vector<8x16xbf16>, vector<8x16xf32> -> vector<8x16xf32>
    %318 = arith.truncf %317 : vector<8x16xf32> to vector<8x16xbf16>
    %c6_247 = arith.constant 6 : index
    %c0_248 = arith.constant 0 : index
    %c0_249 = arith.constant 0 : index
    %319 = vector.load %arg11[%c6_247, %c0_248, %c0_249] : memref<8x16x128xbf16, #tpu.memory_space<vmem>>, vector<1x16x128xbf16>
    %320 = vector.shape_cast %319 : vector<1x16x128xbf16> to vector<16x128xbf16>
    %cst_250 = arith.constant dense<0.000000e+00> : vector<8x128xf32>
    %321 = tpu.matmul %318, %320, %cst_250 {dimension_numbers = #tpu.dot_dimension_numbers<[1], [0], [0], [1], [0, 0, 1, 1], [], []>} : vector<8x16xbf16>, vector<16x128xbf16>, vector<8x128xf32> -> vector<8x128xf32>
    %322 = arith.addf %280, %321 : vector<8x128xf32>
    %c0_251 = arith.constant 0 : index
    %c7 = arith.constant 7 : index
    %c0_252 = arith.constant 0 : index
    %c0_253 = arith.constant 0 : index
    %323 = vector.load %arg9[%c0_251, %c7, %c0_252, %c0_253] : memref<3x8x128x16xbf16, #tpu.memory_space<vmem>>, vector<1x1x128x16xbf16>
    %324 = vector.shape_cast %323 : vector<1x1x128x16xbf16> to vector<128x16xbf16>
    %cst_254 = arith.constant dense<0.000000e+00> : vector<8x16xf32>
    %325 = tpu.matmul %26, %324, %cst_254 {dimension_numbers = #tpu.dot_dimension_numbers<[1], [0], [0], [1], [0, 0, 1, 1], [], []>} : vector<8x128xbf16>, vector<128x16xbf16>, vector<8x16xf32> -> vector<8x16xf32>
    %c0_255 = arith.constant 0 : index
    %c7_256 = arith.constant 7 : index
    %c0_257 = arith.constant 0 : index
    %c0_258 = arith.constant 0 : index
    %326 = vector.load %arg10[%c0_255, %c7_256, %c0_257, %c0_258] : memref<3x8x1x16xf32, #tpu.memory_space<vmem>>, vector<1x1x1x16xf32>
    %327 = vector.shape_cast %326 : vector<1x1x1x16xf32> to vector<1x16xf32>
    %328 = vector.broadcast %327 : vector<1x16xf32> to vector<8x16xf32>
    %329 = arith.addf %325, %328 : vector<8x16xf32>
    %c1_259 = arith.constant 1 : index
    %c7_260 = arith.constant 7 : index
    %c0_261 = arith.constant 0 : index
    %c0_262 = arith.constant 0 : index
    %330 = vector.load %arg9[%c1_259, %c7_260, %c0_261, %c0_262] : memref<3x8x128x16xbf16, #tpu.memory_space<vmem>>, vector<1x1x128x16xbf16>
    %331 = vector.shape_cast %330 : vector<1x1x128x16xbf16> to vector<128x16xbf16>
    %cst_263 = arith.constant dense<0.000000e+00> : vector<8x16xf32>
    %332 = tpu.matmul %27, %331, %cst_263 {dimension_numbers = #tpu.dot_dimension_numbers<[1], [0], [0], [1], [0, 0, 1, 1], [], []>} : vector<8x128xbf16>, vector<128x16xbf16>, vector<8x16xf32> -> vector<8x16xf32>
    %c1_264 = arith.constant 1 : index
    %c7_265 = arith.constant 7 : index
    %c0_266 = arith.constant 0 : index
    %c0_267 = arith.constant 0 : index
    %333 = vector.load %arg10[%c1_264, %c7_265, %c0_266, %c0_267] : memref<3x8x1x16xf32, #tpu.memory_space<vmem>>, vector<1x1x1x16xf32>
    %334 = vector.shape_cast %333 : vector<1x1x1x16xf32> to vector<1x16xf32>
    %335 = vector.broadcast %334 : vector<1x16xf32> to vector<8x16xf32>
    %336 = arith.addf %332, %335 : vector<8x16xf32>
    %c2_268 = arith.constant 2 : index
    %c7_269 = arith.constant 7 : index
    %c0_270 = arith.constant 0 : index
    %c0_271 = arith.constant 0 : index
    %337 = vector.load %arg9[%c2_268, %c7_269, %c0_270, %c0_271] : memref<3x8x128x16xbf16, #tpu.memory_space<vmem>>, vector<1x1x128x16xbf16>
    %338 = vector.shape_cast %337 : vector<1x1x128x16xbf16> to vector<128x16xbf16>
    %cst_272 = arith.constant dense<0.000000e+00> : vector<8x16xf32>
    %339 = tpu.matmul %27, %338, %cst_272 {dimension_numbers = #tpu.dot_dimension_numbers<[1], [0], [0], [1], [0, 0, 1, 1], [], []>} : vector<8x128xbf16>, vector<128x16xbf16>, vector<8x16xf32> -> vector<8x16xf32>
    %c2_273 = arith.constant 2 : index
    %c7_274 = arith.constant 7 : index
    %c0_275 = arith.constant 0 : index
    %c0_276 = arith.constant 0 : index
    %340 = vector.load %arg10[%c2_273, %c7_274, %c0_275, %c0_276] : memref<3x8x1x16xf32, #tpu.memory_space<vmem>>, vector<1x1x1x16xf32>
    %341 = vector.shape_cast %340 : vector<1x1x1x16xf32> to vector<1x16xf32>
    %342 = vector.broadcast %341 : vector<1x16xf32> to vector<8x16xf32>
    %343 = arith.addf %339, %342 : vector<8x16xf32>
    %344 = arith.truncf %329 : vector<8x16xf32> to vector<8x16xbf16>
    %345 = arith.truncf %336 : vector<8x16xf32> to vector<8x16xbf16>
    %cst_277 = arith.constant dense<0.000000e+00> : vector<8x8xf32>
    %346 = tpu.matmul %344, %345, %cst_277 {dimension_numbers = #tpu.dot_dimension_numbers<[1], [1], [0], [0], [0, 0, 1, 0], [], []>} : vector<8x16xbf16>, vector<8x16xbf16>, vector<8x8xf32> -> vector<8x8xf32>
    %cst_278 = arith.constant dense<0xFF800000> : vector<8xf32>
    %347 = vector.multi_reduction <maximumf>, %346, %cst_278 [1] : vector<8x8xf32> to vector<8xf32>
    %348 = vector.shape_cast %347 : vector<8xf32> to vector<8x1xf32>
    %349 = vector.broadcast %348 : vector<8x1xf32> to vector<8x8xf32>
    %350 = arith.subf %346, %349 : vector<8x8xf32>
    %351 = math.exp %350 : vector<8x8xf32>
    %cst_279 = arith.constant dense<0.000000e+00> : vector<8xf32>
    %352 = vector.multi_reduction <add>, %351, %cst_279 [1] : vector<8x8xf32> to vector<8xf32>
    %353 = vector.shape_cast %352 : vector<8xf32> to vector<8x1xf32>
    %354 = tpu.reciprocal %353 {approx = true} : vector<8x1xf32> -> vector<8x1xf32>
    %355 = vector.broadcast %354 : vector<8x1xf32> to vector<8x8xf32>
    %356 = arith.mulf %351, %355 : vector<8x8xf32>
    %357 = arith.truncf %356 : vector<8x8xf32> to vector<8x8xbf16>
    %358 = arith.truncf %343 : vector<8x16xf32> to vector<8x16xbf16>
    %cst_280 = arith.constant dense<0.000000e+00> : vector<8x16xf32>
    %359 = tpu.matmul %357, %358, %cst_280 {dimension_numbers = #tpu.dot_dimension_numbers<[1], [0], [0], [1], [0, 0, 1, 1], [], []>} : vector<8x8xbf16>, vector<8x16xbf16>, vector<8x16xf32> -> vector<8x16xf32>
    %360 = arith.truncf %359 : vector<8x16xf32> to vector<8x16xbf16>
    %c7_281 = arith.constant 7 : index
    %c0_282 = arith.constant 0 : index
    %c0_283 = arith.constant 0 : index
    %361 = vector.load %arg11[%c7_281, %c0_282, %c0_283] : memref<8x16x128xbf16, #tpu.memory_space<vmem>>, vector<1x16x128xbf16>
    %362 = vector.shape_cast %361 : vector<1x16x128xbf16> to vector<16x128xbf16>
    %cst_284 = arith.constant dense<0.000000e+00> : vector<8x128xf32>
    %363 = tpu.matmul %360, %362, %cst_284 {dimension_numbers = #tpu.dot_dimension_numbers<[1], [0], [0], [1], [0, 0, 1, 1], [], []>} : vector<8x16xbf16>, vector<16x128xbf16>, vector<8x128xf32> -> vector<8x128xf32>
    %364 = arith.addf %322, %363 : vector<8x128xf32>
    %c0_285 = arith.constant 0 : index
    %c0_286 = arith.constant 0 : index
    %365 = vector.load %arg12[%c0_285, %c0_286] : memref<1x128xf32, #tpu.memory_space<vmem>>, vector<1x128xf32>
    %366 = vector.broadcast %365 : vector<1x128xf32> to vector<8x128xf32>
    %367 = arith.addf %364, %366 : vector<8x128xf32>
    %368 = arith.addf %0, %367 : vector<8x128xf32>
    %c0_287 = arith.constant 0 : index
    %c0_288 = arith.constant 0 : index
    %369 = vector.load %arg5[%c0_287, %c0_288] : memref<1x128xf32, #tpu.memory_space<vmem>>, vector<1x128xf32>
    %c0_289 = arith.constant 0 : index
    %c0_290 = arith.constant 0 : index
    %370 = vector.load %arg6[%c0_289, %c0_290] : memref<1x128xf32, #tpu.memory_space<vmem>>, vector<1x128xf32>
    %cst_291 = arith.constant dense<0.000000e+00> : vector<8xf32>
    %371 = vector.multi_reduction <add>, %368, %cst_291 [1] : vector<8x128xf32> to vector<8xf32>
    %372 = vector.shape_cast %371 : vector<8xf32> to vector<8x1xf32>
    %cst_292 = arith.constant 1.280000e+02 : f32
    %373 = vector.broadcast %cst_292 : f32 to vector<8x1xf32>
    %374 = arith.divf %372, %373 : vector<8x1xf32>
    %375 = vector.broadcast %374 : vector<8x1xf32> to vector<8x128xf32>
    %376 = arith.subf %368, %375 : vector<8x128xf32>
    %377 = arith.mulf %376, %376 : vector<8x128xf32>
    %cst_293 = arith.constant dense<0.000000e+00> : vector<8xf32>
    %378 = vector.multi_reduction <add>, %377, %cst_293 [1] : vector<8x128xf32> to vector<8xf32>
    %379 = vector.shape_cast %378 : vector<8xf32> to vector<8x1xf32>
    %cst_294 = arith.constant 1.280000e+02 : f32
    %380 = vector.broadcast %cst_294 : f32 to vector<8x1xf32>
    %381 = arith.divf %379, %380 : vector<8x1xf32>
    %382 = vector.broadcast %374 : vector<8x1xf32> to vector<8x128xf32>
    %383 = arith.subf %368, %382 : vector<8x128xf32>
    %cst_295 = arith.constant 9.99999974E-6 : f32
    %384 = vector.broadcast %cst_295 : f32 to vector<8x1xf32>
    %385 = arith.addf %381, %384 : vector<8x1xf32>
    %386 = math.rsqrt %385 : vector<8x1xf32>
    %387 = vector.broadcast %386 : vector<8x1xf32> to vector<8x128xf32>
    %388 = arith.mulf %383, %387 : vector<8x128xf32>
    %389 = vector.broadcast %369 : vector<1x128xf32> to vector<8x128xf32>
    %390 = arith.mulf %388, %389 : vector<8x128xf32>
    %391 = vector.broadcast %370 : vector<1x128xf32> to vector<8x128xf32>
    %392 = arith.addf %390, %391 : vector<8x128xf32>
    %393 = arith.truncf %392 : vector<8x128xf32> to vector<8x128xbf16>
    %394 = arith.truncf %1 : vector<16x128xf32> to vector<16x128xbf16>
    %cst_296 = arith.constant 0.000000e+00 : f32
    %395 = vector.broadcast %cst_296 : f32 to vector<8x128xf32>
    %c0_297 = arith.constant 0 : index
    %c0_298 = arith.constant 0 : index
    %c0_299 = arith.constant 0 : index
    %c0_300 = arith.constant 0 : index
    %396 = vector.load %arg13[%c0_297, %c0_298, %c0_299, %c0_300] : memref<3x8x128x16xbf16, #tpu.memory_space<vmem>>, vector<1x1x128x16xbf16>
    %397 = vector.shape_cast %396 : vector<1x1x128x16xbf16> to vector<128x16xbf16>
    %cst_301 = arith.constant dense<0.000000e+00> : vector<8x16xf32>
    %398 = tpu.matmul %393, %397, %cst_301 {dimension_numbers = #tpu.dot_dimension_numbers<[1], [0], [0], [1], [0, 0, 1, 1], [], []>} : vector<8x128xbf16>, vector<128x16xbf16>, vector<8x16xf32> -> vector<8x16xf32>
    %c0_302 = arith.constant 0 : index
    %c0_303 = arith.constant 0 : index
    %c0_304 = arith.constant 0 : index
    %c0_305 = arith.constant 0 : index
    %399 = vector.load %arg14[%c0_302, %c0_303, %c0_304, %c0_305] : memref<3x8x1x16xf32, #tpu.memory_space<vmem>>, vector<1x1x1x16xf32>
    %400 = vector.shape_cast %399 : vector<1x1x1x16xf32> to vector<1x16xf32>
    %401 = vector.broadcast %400 : vector<1x16xf32> to vector<8x16xf32>
    %402 = arith.addf %398, %401 : vector<8x16xf32>
    %c1_306 = arith.constant 1 : index
    %c0_307 = arith.constant 0 : index
    %c0_308 = arith.constant 0 : index
    %c0_309 = arith.constant 0 : index
    %403 = vector.load %arg13[%c1_306, %c0_307, %c0_308, %c0_309] : memref<3x8x128x16xbf16, #tpu.memory_space<vmem>>, vector<1x1x128x16xbf16>
    %404 = vector.shape_cast %403 : vector<1x1x128x16xbf16> to vector<128x16xbf16>
    %cst_310 = arith.constant dense<0.000000e+00> : vector<16x16xf32>
    %405 = tpu.matmul %394, %404, %cst_310 {dimension_numbers = #tpu.dot_dimension_numbers<[1], [0], [0], [1], [0, 0, 1, 1], [], []>} : vector<16x128xbf16>, vector<128x16xbf16>, vector<16x16xf32> -> vector<16x16xf32>
    %c1_311 = arith.constant 1 : index
    %c0_312 = arith.constant 0 : index
    %c0_313 = arith.constant 0 : index
    %c0_314 = arith.constant 0 : index
    %406 = vector.load %arg14[%c1_311, %c0_312, %c0_313, %c0_314] : memref<3x8x1x16xf32, #tpu.memory_space<vmem>>, vector<1x1x1x16xf32>
    %407 = vector.shape_cast %406 : vector<1x1x1x16xf32> to vector<1x16xf32>
    %408 = vector.broadcast %407 : vector<1x16xf32> to vector<16x16xf32>
    %409 = arith.addf %405, %408 : vector<16x16xf32>
    %c2_315 = arith.constant 2 : index
    %c0_316 = arith.constant 0 : index
    %c0_317 = arith.constant 0 : index
    %c0_318 = arith.constant 0 : index
    %410 = vector.load %arg13[%c2_315, %c0_316, %c0_317, %c0_318] : memref<3x8x128x16xbf16, #tpu.memory_space<vmem>>, vector<1x1x128x16xbf16>
    %411 = vector.shape_cast %410 : vector<1x1x128x16xbf16> to vector<128x16xbf16>
    %cst_319 = arith.constant dense<0.000000e+00> : vector<16x16xf32>
    %412 = tpu.matmul %394, %411, %cst_319 {dimension_numbers = #tpu.dot_dimension_numbers<[1], [0], [0], [1], [0, 0, 1, 1], [], []>} : vector<16x128xbf16>, vector<128x16xbf16>, vector<16x16xf32> -> vector<16x16xf32>
    %c2_320 = arith.constant 2 : index
    %c0_321 = arith.constant 0 : index
    %c0_322 = arith.constant 0 : index
    %c0_323 = arith.constant 0 : index
    %413 = vector.load %arg14[%c2_320, %c0_321, %c0_322, %c0_323] : memref<3x8x1x16xf32, #tpu.memory_space<vmem>>, vector<1x1x1x16xf32>
    %414 = vector.shape_cast %413 : vector<1x1x1x16xf32> to vector<1x16xf32>
    %415 = vector.broadcast %414 : vector<1x16xf32> to vector<16x16xf32>
    %416 = arith.addf %412, %415 : vector<16x16xf32>
    %417 = arith.truncf %402 : vector<8x16xf32> to vector<8x16xbf16>
    %418 = arith.truncf %409 : vector<16x16xf32> to vector<16x16xbf16>
    %cst_324 = arith.constant dense<0.000000e+00> : vector<8x16xf32>
    %419 = tpu.matmul %417, %418, %cst_324 {dimension_numbers = #tpu.dot_dimension_numbers<[1], [1], [0], [0], [0, 0, 1, 0], [], []>} : vector<8x16xbf16>, vector<16x16xbf16>, vector<8x16xf32> -> vector<8x16xf32>
    %cst_325 = arith.constant dense<0xFF800000> : vector<8xf32>
    %420 = vector.multi_reduction <maximumf>, %419, %cst_325 [1] : vector<8x16xf32> to vector<8xf32>
    %421 = vector.shape_cast %420 : vector<8xf32> to vector<8x1xf32>
    %422 = vector.broadcast %421 : vector<8x1xf32> to vector<8x16xf32>
    %423 = arith.subf %419, %422 : vector<8x16xf32>
    %424 = math.exp %423 : vector<8x16xf32>
    %cst_326 = arith.constant dense<0.000000e+00> : vector<8xf32>
    %425 = vector.multi_reduction <add>, %424, %cst_326 [1] : vector<8x16xf32> to vector<8xf32>
    %426 = vector.shape_cast %425 : vector<8xf32> to vector<8x1xf32>
    %427 = tpu.reciprocal %426 {approx = true} : vector<8x1xf32> -> vector<8x1xf32>
    %428 = vector.broadcast %427 : vector<8x1xf32> to vector<8x16xf32>
    %429 = arith.mulf %424, %428 : vector<8x16xf32>
    %430 = arith.truncf %429 : vector<8x16xf32> to vector<8x16xbf16>
    %431 = arith.truncf %416 : vector<16x16xf32> to vector<16x16xbf16>
    %cst_327 = arith.constant dense<0.000000e+00> : vector<8x16xf32>
    %432 = tpu.matmul %430, %431, %cst_327 {dimension_numbers = #tpu.dot_dimension_numbers<[1], [0], [0], [1], [0, 0, 1, 1], [], []>} : vector<8x16xbf16>, vector<16x16xbf16>, vector<8x16xf32> -> vector<8x16xf32>
    %433 = arith.truncf %432 : vector<8x16xf32> to vector<8x16xbf16>
    %c0_328 = arith.constant 0 : index
    %c0_329 = arith.constant 0 : index
    %c0_330 = arith.constant 0 : index
    %434 = vector.load %arg15[%c0_328, %c0_329, %c0_330] : memref<8x16x128xbf16, #tpu.memory_space<vmem>>, vector<1x16x128xbf16>
    %435 = vector.shape_cast %434 : vector<1x16x128xbf16> to vector<16x128xbf16>
    %cst_331 = arith.constant dense<0.000000e+00> : vector<8x128xf32>
    %436 = tpu.matmul %433, %435, %cst_331 {dimension_numbers = #tpu.dot_dimension_numbers<[1], [0], [0], [1], [0, 0, 1, 1], [], []>} : vector<8x16xbf16>, vector<16x128xbf16>, vector<8x128xf32> -> vector<8x128xf32>
    %437 = arith.addf %395, %436 : vector<8x128xf32>
    %c0_332 = arith.constant 0 : index
    %c1_333 = arith.constant 1 : index
    %c0_334 = arith.constant 0 : index
    %c0_335 = arith.constant 0 : index
    %438 = vector.load %arg13[%c0_332, %c1_333, %c0_334, %c0_335] : memref<3x8x128x16xbf16, #tpu.memory_space<vmem>>, vector<1x1x128x16xbf16>
    %439 = vector.shape_cast %438 : vector<1x1x128x16xbf16> to vector<128x16xbf16>
    %cst_336 = arith.constant dense<0.000000e+00> : vector<8x16xf32>
    %440 = tpu.matmul %393, %439, %cst_336 {dimension_numbers = #tpu.dot_dimension_numbers<[1], [0], [0], [1], [0, 0, 1, 1], [], []>} : vector<8x128xbf16>, vector<128x16xbf16>, vector<8x16xf32> -> vector<8x16xf32>
    %c0_337 = arith.constant 0 : index
    %c1_338 = arith.constant 1 : index
    %c0_339 = arith.constant 0 : index
    %c0_340 = arith.constant 0 : index
    %441 = vector.load %arg14[%c0_337, %c1_338, %c0_339, %c0_340] : memref<3x8x1x16xf32, #tpu.memory_space<vmem>>, vector<1x1x1x16xf32>
    %442 = vector.shape_cast %441 : vector<1x1x1x16xf32> to vector<1x16xf32>
    %443 = vector.broadcast %442 : vector<1x16xf32> to vector<8x16xf32>
    %444 = arith.addf %440, %443 : vector<8x16xf32>
    %c1_341 = arith.constant 1 : index
    %c1_342 = arith.constant 1 : index
    %c0_343 = arith.constant 0 : index
    %c0_344 = arith.constant 0 : index
    %445 = vector.load %arg13[%c1_341, %c1_342, %c0_343, %c0_344] : memref<3x8x128x16xbf16, #tpu.memory_space<vmem>>, vector<1x1x128x16xbf16>
    %446 = vector.shape_cast %445 : vector<1x1x128x16xbf16> to vector<128x16xbf16>
    %cst_345 = arith.constant dense<0.000000e+00> : vector<16x16xf32>
    %447 = tpu.matmul %394, %446, %cst_345 {dimension_numbers = #tpu.dot_dimension_numbers<[1], [0], [0], [1], [0, 0, 1, 1], [], []>} : vector<16x128xbf16>, vector<128x16xbf16>, vector<16x16xf32> -> vector<16x16xf32>
    %c1_346 = arith.constant 1 : index
    %c1_347 = arith.constant 1 : index
    %c0_348 = arith.constant 0 : index
    %c0_349 = arith.constant 0 : index
    %448 = vector.load %arg14[%c1_346, %c1_347, %c0_348, %c0_349] : memref<3x8x1x16xf32, #tpu.memory_space<vmem>>, vector<1x1x1x16xf32>
    %449 = vector.shape_cast %448 : vector<1x1x1x16xf32> to vector<1x16xf32>
    %450 = vector.broadcast %449 : vector<1x16xf32> to vector<16x16xf32>
    %451 = arith.addf %447, %450 : vector<16x16xf32>
    %c2_350 = arith.constant 2 : index
    %c1_351 = arith.constant 1 : index
    %c0_352 = arith.constant 0 : index
    %c0_353 = arith.constant 0 : index
    %452 = vector.load %arg13[%c2_350, %c1_351, %c0_352, %c0_353] : memref<3x8x128x16xbf16, #tpu.memory_space<vmem>>, vector<1x1x128x16xbf16>
    %453 = vector.shape_cast %452 : vector<1x1x128x16xbf16> to vector<128x16xbf16>
    %cst_354 = arith.constant dense<0.000000e+00> : vector<16x16xf32>
    %454 = tpu.matmul %394, %453, %cst_354 {dimension_numbers = #tpu.dot_dimension_numbers<[1], [0], [0], [1], [0, 0, 1, 1], [], []>} : vector<16x128xbf16>, vector<128x16xbf16>, vector<16x16xf32> -> vector<16x16xf32>
    %c2_355 = arith.constant 2 : index
    %c1_356 = arith.constant 1 : index
    %c0_357 = arith.constant 0 : index
    %c0_358 = arith.constant 0 : index
    %455 = vector.load %arg14[%c2_355, %c1_356, %c0_357, %c0_358] : memref<3x8x1x16xf32, #tpu.memory_space<vmem>>, vector<1x1x1x16xf32>
    %456 = vector.shape_cast %455 : vector<1x1x1x16xf32> to vector<1x16xf32>
    %457 = vector.broadcast %456 : vector<1x16xf32> to vector<16x16xf32>
    %458 = arith.addf %454, %457 : vector<16x16xf32>
    %459 = arith.truncf %444 : vector<8x16xf32> to vector<8x16xbf16>
    %460 = arith.truncf %451 : vector<16x16xf32> to vector<16x16xbf16>
    %cst_359 = arith.constant dense<0.000000e+00> : vector<8x16xf32>
    %461 = tpu.matmul %459, %460, %cst_359 {dimension_numbers = #tpu.dot_dimension_numbers<[1], [1], [0], [0], [0, 0, 1, 0], [], []>} : vector<8x16xbf16>, vector<16x16xbf16>, vector<8x16xf32> -> vector<8x16xf32>
    %cst_360 = arith.constant dense<0xFF800000> : vector<8xf32>
    %462 = vector.multi_reduction <maximumf>, %461, %cst_360 [1] : vector<8x16xf32> to vector<8xf32>
    %463 = vector.shape_cast %462 : vector<8xf32> to vector<8x1xf32>
    %464 = vector.broadcast %463 : vector<8x1xf32> to vector<8x16xf32>
    %465 = arith.subf %461, %464 : vector<8x16xf32>
    %466 = math.exp %465 : vector<8x16xf32>
    %cst_361 = arith.constant dense<0.000000e+00> : vector<8xf32>
    %467 = vector.multi_reduction <add>, %466, %cst_361 [1] : vector<8x16xf32> to vector<8xf32>
    %468 = vector.shape_cast %467 : vector<8xf32> to vector<8x1xf32>
    %469 = tpu.reciprocal %468 {approx = true} : vector<8x1xf32> -> vector<8x1xf32>
    %470 = vector.broadcast %469 : vector<8x1xf32> to vector<8x16xf32>
    %471 = arith.mulf %466, %470 : vector<8x16xf32>
    %472 = arith.truncf %471 : vector<8x16xf32> to vector<8x16xbf16>
    %473 = arith.truncf %458 : vector<16x16xf32> to vector<16x16xbf16>
    %cst_362 = arith.constant dense<0.000000e+00> : vector<8x16xf32>
    %474 = tpu.matmul %472, %473, %cst_362 {dimension_numbers = #tpu.dot_dimension_numbers<[1], [0], [0], [1], [0, 0, 1, 1], [], []>} : vector<8x16xbf16>, vector<16x16xbf16>, vector<8x16xf32> -> vector<8x16xf32>
    %475 = arith.truncf %474 : vector<8x16xf32> to vector<8x16xbf16>
    %c1_363 = arith.constant 1 : index
    %c0_364 = arith.constant 0 : index
    %c0_365 = arith.constant 0 : index
    %476 = vector.load %arg15[%c1_363, %c0_364, %c0_365] : memref<8x16x128xbf16, #tpu.memory_space<vmem>>, vector<1x16x128xbf16>
    %477 = vector.shape_cast %476 : vector<1x16x128xbf16> to vector<16x128xbf16>
    %cst_366 = arith.constant dense<0.000000e+00> : vector<8x128xf32>
    %478 = tpu.matmul %475, %477, %cst_366 {dimension_numbers = #tpu.dot_dimension_numbers<[1], [0], [0], [1], [0, 0, 1, 1], [], []>} : vector<8x16xbf16>, vector<16x128xbf16>, vector<8x128xf32> -> vector<8x128xf32>
    %479 = arith.addf %437, %478 : vector<8x128xf32>
    %c0_367 = arith.constant 0 : index
    %c2_368 = arith.constant 2 : index
    %c0_369 = arith.constant 0 : index
    %c0_370 = arith.constant 0 : index
    %480 = vector.load %arg13[%c0_367, %c2_368, %c0_369, %c0_370] : memref<3x8x128x16xbf16, #tpu.memory_space<vmem>>, vector<1x1x128x16xbf16>
    %481 = vector.shape_cast %480 : vector<1x1x128x16xbf16> to vector<128x16xbf16>
    %cst_371 = arith.constant dense<0.000000e+00> : vector<8x16xf32>
    %482 = tpu.matmul %393, %481, %cst_371 {dimension_numbers = #tpu.dot_dimension_numbers<[1], [0], [0], [1], [0, 0, 1, 1], [], []>} : vector<8x128xbf16>, vector<128x16xbf16>, vector<8x16xf32> -> vector<8x16xf32>
    %c0_372 = arith.constant 0 : index
    %c2_373 = arith.constant 2 : index
    %c0_374 = arith.constant 0 : index
    %c0_375 = arith.constant 0 : index
    %483 = vector.load %arg14[%c0_372, %c2_373, %c0_374, %c0_375] : memref<3x8x1x16xf32, #tpu.memory_space<vmem>>, vector<1x1x1x16xf32>
    %484 = vector.shape_cast %483 : vector<1x1x1x16xf32> to vector<1x16xf32>
    %485 = vector.broadcast %484 : vector<1x16xf32> to vector<8x16xf32>
    %486 = arith.addf %482, %485 : vector<8x16xf32>
    %c1_376 = arith.constant 1 : index
    %c2_377 = arith.constant 2 : index
    %c0_378 = arith.constant 0 : index
    %c0_379 = arith.constant 0 : index
    %487 = vector.load %arg13[%c1_376, %c2_377, %c0_378, %c0_379] : memref<3x8x128x16xbf16, #tpu.memory_space<vmem>>, vector<1x1x128x16xbf16>
    %488 = vector.shape_cast %487 : vector<1x1x128x16xbf16> to vector<128x16xbf16>
    %cst_380 = arith.constant dense<0.000000e+00> : vector<16x16xf32>
    %489 = tpu.matmul %394, %488, %cst_380 {dimension_numbers = #tpu.dot_dimension_numbers<[1], [0], [0], [1], [0, 0, 1, 1], [], []>} : vector<16x128xbf16>, vector<128x16xbf16>, vector<16x16xf32> -> vector<16x16xf32>
    %c1_381 = arith.constant 1 : index
    %c2_382 = arith.constant 2 : index
    %c0_383 = arith.constant 0 : index
    %c0_384 = arith.constant 0 : index
    %490 = vector.load %arg14[%c1_381, %c2_382, %c0_383, %c0_384] : memref<3x8x1x16xf32, #tpu.memory_space<vmem>>, vector<1x1x1x16xf32>
    %491 = vector.shape_cast %490 : vector<1x1x1x16xf32> to vector<1x16xf32>
    %492 = vector.broadcast %491 : vector<1x16xf32> to vector<16x16xf32>
    %493 = arith.addf %489, %492 : vector<16x16xf32>
    %c2_385 = arith.constant 2 : index
    %c2_386 = arith.constant 2 : index
    %c0_387 = arith.constant 0 : index
    %c0_388 = arith.constant 0 : index
    %494 = vector.load %arg13[%c2_385, %c2_386, %c0_387, %c0_388] : memref<3x8x128x16xbf16, #tpu.memory_space<vmem>>, vector<1x1x128x16xbf16>
    %495 = vector.shape_cast %494 : vector<1x1x128x16xbf16> to vector<128x16xbf16>
    %cst_389 = arith.constant dense<0.000000e+00> : vector<16x16xf32>
    %496 = tpu.matmul %394, %495, %cst_389 {dimension_numbers = #tpu.dot_dimension_numbers<[1], [0], [0], [1], [0, 0, 1, 1], [], []>} : vector<16x128xbf16>, vector<128x16xbf16>, vector<16x16xf32> -> vector<16x16xf32>
    %c2_390 = arith.constant 2 : index
    %c2_391 = arith.constant 2 : index
    %c0_392 = arith.constant 0 : index
    %c0_393 = arith.constant 0 : index
    %497 = vector.load %arg14[%c2_390, %c2_391, %c0_392, %c0_393] : memref<3x8x1x16xf32, #tpu.memory_space<vmem>>, vector<1x1x1x16xf32>
    %498 = vector.shape_cast %497 : vector<1x1x1x16xf32> to vector<1x16xf32>
    %499 = vector.broadcast %498 : vector<1x16xf32> to vector<16x16xf32>
    %500 = arith.addf %496, %499 : vector<16x16xf32>
    %501 = arith.truncf %486 : vector<8x16xf32> to vector<8x16xbf16>
    %502 = arith.truncf %493 : vector<16x16xf32> to vector<16x16xbf16>
    %cst_394 = arith.constant dense<0.000000e+00> : vector<8x16xf32>
    %503 = tpu.matmul %501, %502, %cst_394 {dimension_numbers = #tpu.dot_dimension_numbers<[1], [1], [0], [0], [0, 0, 1, 0], [], []>} : vector<8x16xbf16>, vector<16x16xbf16>, vector<8x16xf32> -> vector<8x16xf32>
    %cst_395 = arith.constant dense<0xFF800000> : vector<8xf32>
    %504 = vector.multi_reduction <maximumf>, %503, %cst_395 [1] : vector<8x16xf32> to vector<8xf32>
    %505 = vector.shape_cast %504 : vector<8xf32> to vector<8x1xf32>
    %506 = vector.broadcast %505 : vector<8x1xf32> to vector<8x16xf32>
    %507 = arith.subf %503, %506 : vector<8x16xf32>
    %508 = math.exp %507 : vector<8x16xf32>
    %cst_396 = arith.constant dense<0.000000e+00> : vector<8xf32>
    %509 = vector.multi_reduction <add>, %508, %cst_396 [1] : vector<8x16xf32> to vector<8xf32>
    %510 = vector.shape_cast %509 : vector<8xf32> to vector<8x1xf32>
    %511 = tpu.reciprocal %510 {approx = true} : vector<8x1xf32> -> vector<8x1xf32>
    %512 = vector.broadcast %511 : vector<8x1xf32> to vector<8x16xf32>
    %513 = arith.mulf %508, %512 : vector<8x16xf32>
    %514 = arith.truncf %513 : vector<8x16xf32> to vector<8x16xbf16>
    %515 = arith.truncf %500 : vector<16x16xf32> to vector<16x16xbf16>
    %cst_397 = arith.constant dense<0.000000e+00> : vector<8x16xf32>
    %516 = tpu.matmul %514, %515, %cst_397 {dimension_numbers = #tpu.dot_dimension_numbers<[1], [0], [0], [1], [0, 0, 1, 1], [], []>} : vector<8x16xbf16>, vector<16x16xbf16>, vector<8x16xf32> -> vector<8x16xf32>
    %517 = arith.truncf %516 : vector<8x16xf32> to vector<8x16xbf16>
    %c2_398 = arith.constant 2 : index
    %c0_399 = arith.constant 0 : index
    %c0_400 = arith.constant 0 : index
    %518 = vector.load %arg15[%c2_398, %c0_399, %c0_400] : memref<8x16x128xbf16, #tpu.memory_space<vmem>>, vector<1x16x128xbf16>
    %519 = vector.shape_cast %518 : vector<1x16x128xbf16> to vector<16x128xbf16>
    %cst_401 = arith.constant dense<0.000000e+00> : vector<8x128xf32>
    %520 = tpu.matmul %517, %519, %cst_401 {dimension_numbers = #tpu.dot_dimension_numbers<[1], [0], [0], [1], [0, 0, 1, 1], [], []>} : vector<8x16xbf16>, vector<16x128xbf16>, vector<8x128xf32> -> vector<8x128xf32>
    %521 = arith.addf %479, %520 : vector<8x128xf32>
    %c0_402 = arith.constant 0 : index
    %c3_403 = arith.constant 3 : index
    %c0_404 = arith.constant 0 : index
    %c0_405 = arith.constant 0 : index
    %522 = vector.load %arg13[%c0_402, %c3_403, %c0_404, %c0_405] : memref<3x8x128x16xbf16, #tpu.memory_space<vmem>>, vector<1x1x128x16xbf16>
    %523 = vector.shape_cast %522 : vector<1x1x128x16xbf16> to vector<128x16xbf16>
    %cst_406 = arith.constant dense<0.000000e+00> : vector<8x16xf32>
    %524 = tpu.matmul %393, %523, %cst_406 {dimension_numbers = #tpu.dot_dimension_numbers<[1], [0], [0], [1], [0, 0, 1, 1], [], []>} : vector<8x128xbf16>, vector<128x16xbf16>, vector<8x16xf32> -> vector<8x16xf32>
    %c0_407 = arith.constant 0 : index
    %c3_408 = arith.constant 3 : index
    %c0_409 = arith.constant 0 : index
    %c0_410 = arith.constant 0 : index
    %525 = vector.load %arg14[%c0_407, %c3_408, %c0_409, %c0_410] : memref<3x8x1x16xf32, #tpu.memory_space<vmem>>, vector<1x1x1x16xf32>
    %526 = vector.shape_cast %525 : vector<1x1x1x16xf32> to vector<1x16xf32>
    %527 = vector.broadcast %526 : vector<1x16xf32> to vector<8x16xf32>
    %528 = arith.addf %524, %527 : vector<8x16xf32>
    %c1_411 = arith.constant 1 : index
    %c3_412 = arith.constant 3 : index
    %c0_413 = arith.constant 0 : index
    %c0_414 = arith.constant 0 : index
    %529 = vector.load %arg13[%c1_411, %c3_412, %c0_413, %c0_414] : memref<3x8x128x16xbf16, #tpu.memory_space<vmem>>, vector<1x1x128x16xbf16>
    %530 = vector.shape_cast %529 : vector<1x1x128x16xbf16> to vector<128x16xbf16>
    %cst_415 = arith.constant dense<0.000000e+00> : vector<16x16xf32>
    %531 = tpu.matmul %394, %530, %cst_415 {dimension_numbers = #tpu.dot_dimension_numbers<[1], [0], [0], [1], [0, 0, 1, 1], [], []>} : vector<16x128xbf16>, vector<128x16xbf16>, vector<16x16xf32> -> vector<16x16xf32>
    %c1_416 = arith.constant 1 : index
    %c3_417 = arith.constant 3 : index
    %c0_418 = arith.constant 0 : index
    %c0_419 = arith.constant 0 : index
    %532 = vector.load %arg14[%c1_416, %c3_417, %c0_418, %c0_419] : memref<3x8x1x16xf32, #tpu.memory_space<vmem>>, vector<1x1x1x16xf32>
    %533 = vector.shape_cast %532 : vector<1x1x1x16xf32> to vector<1x16xf32>
    %534 = vector.broadcast %533 : vector<1x16xf32> to vector<16x16xf32>
    %535 = arith.addf %531, %534 : vector<16x16xf32>
    %c2_420 = arith.constant 2 : index
    %c3_421 = arith.constant 3 : index
    %c0_422 = arith.constant 0 : index
    %c0_423 = arith.constant 0 : index
    %536 = vector.load %arg13[%c2_420, %c3_421, %c0_422, %c0_423] : memref<3x8x128x16xbf16, #tpu.memory_space<vmem>>, vector<1x1x128x16xbf16>
    %537 = vector.shape_cast %536 : vector<1x1x128x16xbf16> to vector<128x16xbf16>
    %cst_424 = arith.constant dense<0.000000e+00> : vector<16x16xf32>
    %538 = tpu.matmul %394, %537, %cst_424 {dimension_numbers = #tpu.dot_dimension_numbers<[1], [0], [0], [1], [0, 0, 1, 1], [], []>} : vector<16x128xbf16>, vector<128x16xbf16>, vector<16x16xf32> -> vector<16x16xf32>
    %c2_425 = arith.constant 2 : index
    %c3_426 = arith.constant 3 : index
    %c0_427 = arith.constant 0 : index
    %c0_428 = arith.constant 0 : index
    %539 = vector.load %arg14[%c2_425, %c3_426, %c0_427, %c0_428] : memref<3x8x1x16xf32, #tpu.memory_space<vmem>>, vector<1x1x1x16xf32>
    %540 = vector.shape_cast %539 : vector<1x1x1x16xf32> to vector<1x16xf32>
    %541 = vector.broadcast %540 : vector<1x16xf32> to vector<16x16xf32>
    %542 = arith.addf %538, %541 : vector<16x16xf32>
    %543 = arith.truncf %528 : vector<8x16xf32> to vector<8x16xbf16>
    %544 = arith.truncf %535 : vector<16x16xf32> to vector<16x16xbf16>
    %cst_429 = arith.constant dense<0.000000e+00> : vector<8x16xf32>
    %545 = tpu.matmul %543, %544, %cst_429 {dimension_numbers = #tpu.dot_dimension_numbers<[1], [1], [0], [0], [0, 0, 1, 0], [], []>} : vector<8x16xbf16>, vector<16x16xbf16>, vector<8x16xf32> -> vector<8x16xf32>
    %cst_430 = arith.constant dense<0xFF800000> : vector<8xf32>
    %546 = vector.multi_reduction <maximumf>, %545, %cst_430 [1] : vector<8x16xf32> to vector<8xf32>
    %547 = vector.shape_cast %546 : vector<8xf32> to vector<8x1xf32>
    %548 = vector.broadcast %547 : vector<8x1xf32> to vector<8x16xf32>
    %549 = arith.subf %545, %548 : vector<8x16xf32>
    %550 = math.exp %549 : vector<8x16xf32>
    %cst_431 = arith.constant dense<0.000000e+00> : vector<8xf32>
    %551 = vector.multi_reduction <add>, %550, %cst_431 [1] : vector<8x16xf32> to vector<8xf32>
    %552 = vector.shape_cast %551 : vector<8xf32> to vector<8x1xf32>
    %553 = tpu.reciprocal %552 {approx = true} : vector<8x1xf32> -> vector<8x1xf32>
    %554 = vector.broadcast %553 : vector<8x1xf32> to vector<8x16xf32>
    %555 = arith.mulf %550, %554 : vector<8x16xf32>
    %556 = arith.truncf %555 : vector<8x16xf32> to vector<8x16xbf16>
    %557 = arith.truncf %542 : vector<16x16xf32> to vector<16x16xbf16>
    %cst_432 = arith.constant dense<0.000000e+00> : vector<8x16xf32>
    %558 = tpu.matmul %556, %557, %cst_432 {dimension_numbers = #tpu.dot_dimension_numbers<[1], [0], [0], [1], [0, 0, 1, 1], [], []>} : vector<8x16xbf16>, vector<16x16xbf16>, vector<8x16xf32> -> vector<8x16xf32>
    %559 = arith.truncf %558 : vector<8x16xf32> to vector<8x16xbf16>
    %c3_433 = arith.constant 3 : index
    %c0_434 = arith.constant 0 : index
    %c0_435 = arith.constant 0 : index
    %560 = vector.load %arg15[%c3_433, %c0_434, %c0_435] : memref<8x16x128xbf16, #tpu.memory_space<vmem>>, vector<1x16x128xbf16>
    %561 = vector.shape_cast %560 : vector<1x16x128xbf16> to vector<16x128xbf16>
    %cst_436 = arith.constant dense<0.000000e+00> : vector<8x128xf32>
    %562 = tpu.matmul %559, %561, %cst_436 {dimension_numbers = #tpu.dot_dimension_numbers<[1], [0], [0], [1], [0, 0, 1, 1], [], []>} : vector<8x16xbf16>, vector<16x128xbf16>, vector<8x128xf32> -> vector<8x128xf32>
    %563 = arith.addf %521, %562 : vector<8x128xf32>
    %c0_437 = arith.constant 0 : index
    %c4_438 = arith.constant 4 : index
    %c0_439 = arith.constant 0 : index
    %c0_440 = arith.constant 0 : index
    %564 = vector.load %arg13[%c0_437, %c4_438, %c0_439, %c0_440] : memref<3x8x128x16xbf16, #tpu.memory_space<vmem>>, vector<1x1x128x16xbf16>
    %565 = vector.shape_cast %564 : vector<1x1x128x16xbf16> to vector<128x16xbf16>
    %cst_441 = arith.constant dense<0.000000e+00> : vector<8x16xf32>
    %566 = tpu.matmul %393, %565, %cst_441 {dimension_numbers = #tpu.dot_dimension_numbers<[1], [0], [0], [1], [0, 0, 1, 1], [], []>} : vector<8x128xbf16>, vector<128x16xbf16>, vector<8x16xf32> -> vector<8x16xf32>
    %c0_442 = arith.constant 0 : index
    %c4_443 = arith.constant 4 : index
    %c0_444 = arith.constant 0 : index
    %c0_445 = arith.constant 0 : index
    %567 = vector.load %arg14[%c0_442, %c4_443, %c0_444, %c0_445] : memref<3x8x1x16xf32, #tpu.memory_space<vmem>>, vector<1x1x1x16xf32>
    %568 = vector.shape_cast %567 : vector<1x1x1x16xf32> to vector<1x16xf32>
    %569 = vector.broadcast %568 : vector<1x16xf32> to vector<8x16xf32>
    %570 = arith.addf %566, %569 : vector<8x16xf32>
    %c1_446 = arith.constant 1 : index
    %c4_447 = arith.constant 4 : index
    %c0_448 = arith.constant 0 : index
    %c0_449 = arith.constant 0 : index
    %571 = vector.load %arg13[%c1_446, %c4_447, %c0_448, %c0_449] : memref<3x8x128x16xbf16, #tpu.memory_space<vmem>>, vector<1x1x128x16xbf16>
    %572 = vector.shape_cast %571 : vector<1x1x128x16xbf16> to vector<128x16xbf16>
    %cst_450 = arith.constant dense<0.000000e+00> : vector<16x16xf32>
    %573 = tpu.matmul %394, %572, %cst_450 {dimension_numbers = #tpu.dot_dimension_numbers<[1], [0], [0], [1], [0, 0, 1, 1], [], []>} : vector<16x128xbf16>, vector<128x16xbf16>, vector<16x16xf32> -> vector<16x16xf32>
    %c1_451 = arith.constant 1 : index
    %c4_452 = arith.constant 4 : index
    %c0_453 = arith.constant 0 : index
    %c0_454 = arith.constant 0 : index
    %574 = vector.load %arg14[%c1_451, %c4_452, %c0_453, %c0_454] : memref<3x8x1x16xf32, #tpu.memory_space<vmem>>, vector<1x1x1x16xf32>
    %575 = vector.shape_cast %574 : vector<1x1x1x16xf32> to vector<1x16xf32>
    %576 = vector.broadcast %575 : vector<1x16xf32> to vector<16x16xf32>
    %577 = arith.addf %573, %576 : vector<16x16xf32>
    %c2_455 = arith.constant 2 : index
    %c4_456 = arith.constant 4 : index
    %c0_457 = arith.constant 0 : index
    %c0_458 = arith.constant 0 : index
    %578 = vector.load %arg13[%c2_455, %c4_456, %c0_457, %c0_458] : memref<3x8x128x16xbf16, #tpu.memory_space<vmem>>, vector<1x1x128x16xbf16>
    %579 = vector.shape_cast %578 : vector<1x1x128x16xbf16> to vector<128x16xbf16>
    %cst_459 = arith.constant dense<0.000000e+00> : vector<16x16xf32>
    %580 = tpu.matmul %394, %579, %cst_459 {dimension_numbers = #tpu.dot_dimension_numbers<[1], [0], [0], [1], [0, 0, 1, 1], [], []>} : vector<16x128xbf16>, vector<128x16xbf16>, vector<16x16xf32> -> vector<16x16xf32>
    %c2_460 = arith.constant 2 : index
    %c4_461 = arith.constant 4 : index
    %c0_462 = arith.constant 0 : index
    %c0_463 = arith.constant 0 : index
    %581 = vector.load %arg14[%c2_460, %c4_461, %c0_462, %c0_463] : memref<3x8x1x16xf32, #tpu.memory_space<vmem>>, vector<1x1x1x16xf32>
    %582 = vector.shape_cast %581 : vector<1x1x1x16xf32> to vector<1x16xf32>
    %583 = vector.broadcast %582 : vector<1x16xf32> to vector<16x16xf32>
    %584 = arith.addf %580, %583 : vector<16x16xf32>
    %585 = arith.truncf %570 : vector<8x16xf32> to vector<8x16xbf16>
    %586 = arith.truncf %577 : vector<16x16xf32> to vector<16x16xbf16>
    %cst_464 = arith.constant dense<0.000000e+00> : vector<8x16xf32>
    %587 = tpu.matmul %585, %586, %cst_464 {dimension_numbers = #tpu.dot_dimension_numbers<[1], [1], [0], [0], [0, 0, 1, 0], [], []>} : vector<8x16xbf16>, vector<16x16xbf16>, vector<8x16xf32> -> vector<8x16xf32>
    %cst_465 = arith.constant dense<0xFF800000> : vector<8xf32>
    %588 = vector.multi_reduction <maximumf>, %587, %cst_465 [1] : vector<8x16xf32> to vector<8xf32>
    %589 = vector.shape_cast %588 : vector<8xf32> to vector<8x1xf32>
    %590 = vector.broadcast %589 : vector<8x1xf32> to vector<8x16xf32>
    %591 = arith.subf %587, %590 : vector<8x16xf32>
    %592 = math.exp %591 : vector<8x16xf32>
    %cst_466 = arith.constant dense<0.000000e+00> : vector<8xf32>
    %593 = vector.multi_reduction <add>, %592, %cst_466 [1] : vector<8x16xf32> to vector<8xf32>
    %594 = vector.shape_cast %593 : vector<8xf32> to vector<8x1xf32>
    %595 = tpu.reciprocal %594 {approx = true} : vector<8x1xf32> -> vector<8x1xf32>
    %596 = vector.broadcast %595 : vector<8x1xf32> to vector<8x16xf32>
    %597 = arith.mulf %592, %596 : vector<8x16xf32>
    %598 = arith.truncf %597 : vector<8x16xf32> to vector<8x16xbf16>
    %599 = arith.truncf %584 : vector<16x16xf32> to vector<16x16xbf16>
    %cst_467 = arith.constant dense<0.000000e+00> : vector<8x16xf32>
    %600 = tpu.matmul %598, %599, %cst_467 {dimension_numbers = #tpu.dot_dimension_numbers<[1], [0], [0], [1], [0, 0, 1, 1], [], []>} : vector<8x16xbf16>, vector<16x16xbf16>, vector<8x16xf32> -> vector<8x16xf32>
    %601 = arith.truncf %600 : vector<8x16xf32> to vector<8x16xbf16>
    %c4_468 = arith.constant 4 : index
    %c0_469 = arith.constant 0 : index
    %c0_470 = arith.constant 0 : index
    %602 = vector.load %arg15[%c4_468, %c0_469, %c0_470] : memref<8x16x128xbf16, #tpu.memory_space<vmem>>, vector<1x16x128xbf16>
    %603 = vector.shape_cast %602 : vector<1x16x128xbf16> to vector<16x128xbf16>
    %cst_471 = arith.constant dense<0.000000e+00> : vector<8x128xf32>
    %604 = tpu.matmul %601, %603, %cst_471 {dimension_numbers = #tpu.dot_dimension_numbers<[1], [0], [0], [1], [0, 0, 1, 1], [], []>} : vector<8x16xbf16>, vector<16x128xbf16>, vector<8x128xf32> -> vector<8x128xf32>
    %605 = arith.addf %563, %604 : vector<8x128xf32>
    %c0_472 = arith.constant 0 : index
    %c5_473 = arith.constant 5 : index
    %c0_474 = arith.constant 0 : index
    %c0_475 = arith.constant 0 : index
    %606 = vector.load %arg13[%c0_472, %c5_473, %c0_474, %c0_475] : memref<3x8x128x16xbf16, #tpu.memory_space<vmem>>, vector<1x1x128x16xbf16>
    %607 = vector.shape_cast %606 : vector<1x1x128x16xbf16> to vector<128x16xbf16>
    %cst_476 = arith.constant dense<0.000000e+00> : vector<8x16xf32>
    %608 = tpu.matmul %393, %607, %cst_476 {dimension_numbers = #tpu.dot_dimension_numbers<[1], [0], [0], [1], [0, 0, 1, 1], [], []>} : vector<8x128xbf16>, vector<128x16xbf16>, vector<8x16xf32> -> vector<8x16xf32>
    %c0_477 = arith.constant 0 : index
    %c5_478 = arith.constant 5 : index
    %c0_479 = arith.constant 0 : index
    %c0_480 = arith.constant 0 : index
    %609 = vector.load %arg14[%c0_477, %c5_478, %c0_479, %c0_480] : memref<3x8x1x16xf32, #tpu.memory_space<vmem>>, vector<1x1x1x16xf32>
    %610 = vector.shape_cast %609 : vector<1x1x1x16xf32> to vector<1x16xf32>
    %611 = vector.broadcast %610 : vector<1x16xf32> to vector<8x16xf32>
    %612 = arith.addf %608, %611 : vector<8x16xf32>
    %c1_481 = arith.constant 1 : index
    %c5_482 = arith.constant 5 : index
    %c0_483 = arith.constant 0 : index
    %c0_484 = arith.constant 0 : index
    %613 = vector.load %arg13[%c1_481, %c5_482, %c0_483, %c0_484] : memref<3x8x128x16xbf16, #tpu.memory_space<vmem>>, vector<1x1x128x16xbf16>
    %614 = vector.shape_cast %613 : vector<1x1x128x16xbf16> to vector<128x16xbf16>
    %cst_485 = arith.constant dense<0.000000e+00> : vector<16x16xf32>
    %615 = tpu.matmul %394, %614, %cst_485 {dimension_numbers = #tpu.dot_dimension_numbers<[1], [0], [0], [1], [0, 0, 1, 1], [], []>} : vector<16x128xbf16>, vector<128x16xbf16>, vector<16x16xf32> -> vector<16x16xf32>
    %c1_486 = arith.constant 1 : index
    %c5_487 = arith.constant 5 : index
    %c0_488 = arith.constant 0 : index
    %c0_489 = arith.constant 0 : index
    %616 = vector.load %arg14[%c1_486, %c5_487, %c0_488, %c0_489] : memref<3x8x1x16xf32, #tpu.memory_space<vmem>>, vector<1x1x1x16xf32>
    %617 = vector.shape_cast %616 : vector<1x1x1x16xf32> to vector<1x16xf32>
    %618 = vector.broadcast %617 : vector<1x16xf32> to vector<16x16xf32>
    %619 = arith.addf %615, %618 : vector<16x16xf32>
    %c2_490 = arith.constant 2 : index
    %c5_491 = arith.constant 5 : index
    %c0_492 = arith.constant 0 : index
    %c0_493 = arith.constant 0 : index
    %620 = vector.load %arg13[%c2_490, %c5_491, %c0_492, %c0_493] : memref<3x8x128x16xbf16, #tpu.memory_space<vmem>>, vector<1x1x128x16xbf16>
    %621 = vector.shape_cast %620 : vector<1x1x128x16xbf16> to vector<128x16xbf16>
    %cst_494 = arith.constant dense<0.000000e+00> : vector<16x16xf32>
    %622 = tpu.matmul %394, %621, %cst_494 {dimension_numbers = #tpu.dot_dimension_numbers<[1], [0], [0], [1], [0, 0, 1, 1], [], []>} : vector<16x128xbf16>, vector<128x16xbf16>, vector<16x16xf32> -> vector<16x16xf32>
    %c2_495 = arith.constant 2 : index
    %c5_496 = arith.constant 5 : index
    %c0_497 = arith.constant 0 : index
    %c0_498 = arith.constant 0 : index
    %623 = vector.load %arg14[%c2_495, %c5_496, %c0_497, %c0_498] : memref<3x8x1x16xf32, #tpu.memory_space<vmem>>, vector<1x1x1x16xf32>
    %624 = vector.shape_cast %623 : vector<1x1x1x16xf32> to vector<1x16xf32>
    %625 = vector.broadcast %624 : vector<1x16xf32> to vector<16x16xf32>
    %626 = arith.addf %622, %625 : vector<16x16xf32>
    %627 = arith.truncf %612 : vector<8x16xf32> to vector<8x16xbf16>
    %628 = arith.truncf %619 : vector<16x16xf32> to vector<16x16xbf16>
    %cst_499 = arith.constant dense<0.000000e+00> : vector<8x16xf32>
    %629 = tpu.matmul %627, %628, %cst_499 {dimension_numbers = #tpu.dot_dimension_numbers<[1], [1], [0], [0], [0, 0, 1, 0], [], []>} : vector<8x16xbf16>, vector<16x16xbf16>, vector<8x16xf32> -> vector<8x16xf32>
    %cst_500 = arith.constant dense<0xFF800000> : vector<8xf32>
    %630 = vector.multi_reduction <maximumf>, %629, %cst_500 [1] : vector<8x16xf32> to vector<8xf32>
    %631 = vector.shape_cast %630 : vector<8xf32> to vector<8x1xf32>
    %632 = vector.broadcast %631 : vector<8x1xf32> to vector<8x16xf32>
    %633 = arith.subf %629, %632 : vector<8x16xf32>
    %634 = math.exp %633 : vector<8x16xf32>
    %cst_501 = arith.constant dense<0.000000e+00> : vector<8xf32>
    %635 = vector.multi_reduction <add>, %634, %cst_501 [1] : vector<8x16xf32> to vector<8xf32>
    %636 = vector.shape_cast %635 : vector<8xf32> to vector<8x1xf32>
    %637 = tpu.reciprocal %636 {approx = true} : vector<8x1xf32> -> vector<8x1xf32>
    %638 = vector.broadcast %637 : vector<8x1xf32> to vector<8x16xf32>
    %639 = arith.mulf %634, %638 : vector<8x16xf32>
    %640 = arith.truncf %639 : vector<8x16xf32> to vector<8x16xbf16>
    %641 = arith.truncf %626 : vector<16x16xf32> to vector<16x16xbf16>
    %cst_502 = arith.constant dense<0.000000e+00> : vector<8x16xf32>
    %642 = tpu.matmul %640, %641, %cst_502 {dimension_numbers = #tpu.dot_dimension_numbers<[1], [0], [0], [1], [0, 0, 1, 1], [], []>} : vector<8x16xbf16>, vector<16x16xbf16>, vector<8x16xf32> -> vector<8x16xf32>
    %643 = arith.truncf %642 : vector<8x16xf32> to vector<8x16xbf16>
    %c5_503 = arith.constant 5 : index
    %c0_504 = arith.constant 0 : index
    %c0_505 = arith.constant 0 : index
    %644 = vector.load %arg15[%c5_503, %c0_504, %c0_505] : memref<8x16x128xbf16, #tpu.memory_space<vmem>>, vector<1x16x128xbf16>
    %645 = vector.shape_cast %644 : vector<1x16x128xbf16> to vector<16x128xbf16>
    %cst_506 = arith.constant dense<0.000000e+00> : vector<8x128xf32>
    %646 = tpu.matmul %643, %645, %cst_506 {dimension_numbers = #tpu.dot_dimension_numbers<[1], [0], [0], [1], [0, 0, 1, 1], [], []>} : vector<8x16xbf16>, vector<16x128xbf16>, vector<8x128xf32> -> vector<8x128xf32>
    %647 = arith.addf %605, %646 : vector<8x128xf32>
    %c0_507 = arith.constant 0 : index
    %c6_508 = arith.constant 6 : index
    %c0_509 = arith.constant 0 : index
    %c0_510 = arith.constant 0 : index
    %648 = vector.load %arg13[%c0_507, %c6_508, %c0_509, %c0_510] : memref<3x8x128x16xbf16, #tpu.memory_space<vmem>>, vector<1x1x128x16xbf16>
    %649 = vector.shape_cast %648 : vector<1x1x128x16xbf16> to vector<128x16xbf16>
    %cst_511 = arith.constant dense<0.000000e+00> : vector<8x16xf32>
    %650 = tpu.matmul %393, %649, %cst_511 {dimension_numbers = #tpu.dot_dimension_numbers<[1], [0], [0], [1], [0, 0, 1, 1], [], []>} : vector<8x128xbf16>, vector<128x16xbf16>, vector<8x16xf32> -> vector<8x16xf32>
    %c0_512 = arith.constant 0 : index
    %c6_513 = arith.constant 6 : index
    %c0_514 = arith.constant 0 : index
    %c0_515 = arith.constant 0 : index
    %651 = vector.load %arg14[%c0_512, %c6_513, %c0_514, %c0_515] : memref<3x8x1x16xf32, #tpu.memory_space<vmem>>, vector<1x1x1x16xf32>
    %652 = vector.shape_cast %651 : vector<1x1x1x16xf32> to vector<1x16xf32>
    %653 = vector.broadcast %652 : vector<1x16xf32> to vector<8x16xf32>
    %654 = arith.addf %650, %653 : vector<8x16xf32>
    %c1_516 = arith.constant 1 : index
    %c6_517 = arith.constant 6 : index
    %c0_518 = arith.constant 0 : index
    %c0_519 = arith.constant 0 : index
    %655 = vector.load %arg13[%c1_516, %c6_517, %c0_518, %c0_519] : memref<3x8x128x16xbf16, #tpu.memory_space<vmem>>, vector<1x1x128x16xbf16>
    %656 = vector.shape_cast %655 : vector<1x1x128x16xbf16> to vector<128x16xbf16>
    %cst_520 = arith.constant dense<0.000000e+00> : vector<16x16xf32>
    %657 = tpu.matmul %394, %656, %cst_520 {dimension_numbers = #tpu.dot_dimension_numbers<[1], [0], [0], [1], [0, 0, 1, 1], [], []>} : vector<16x128xbf16>, vector<128x16xbf16>, vector<16x16xf32> -> vector<16x16xf32>
    %c1_521 = arith.constant 1 : index
    %c6_522 = arith.constant 6 : index
    %c0_523 = arith.constant 0 : index
    %c0_524 = arith.constant 0 : index
    %658 = vector.load %arg14[%c1_521, %c6_522, %c0_523, %c0_524] : memref<3x8x1x16xf32, #tpu.memory_space<vmem>>, vector<1x1x1x16xf32>
    %659 = vector.shape_cast %658 : vector<1x1x1x16xf32> to vector<1x16xf32>
    %660 = vector.broadcast %659 : vector<1x16xf32> to vector<16x16xf32>
    %661 = arith.addf %657, %660 : vector<16x16xf32>
    %c2_525 = arith.constant 2 : index
    %c6_526 = arith.constant 6 : index
    %c0_527 = arith.constant 0 : index
    %c0_528 = arith.constant 0 : index
    %662 = vector.load %arg13[%c2_525, %c6_526, %c0_527, %c0_528] : memref<3x8x128x16xbf16, #tpu.memory_space<vmem>>, vector<1x1x128x16xbf16>
    %663 = vector.shape_cast %662 : vector<1x1x128x16xbf16> to vector<128x16xbf16>
    %cst_529 = arith.constant dense<0.000000e+00> : vector<16x16xf32>
    %664 = tpu.matmul %394, %663, %cst_529 {dimension_numbers = #tpu.dot_dimension_numbers<[1], [0], [0], [1], [0, 0, 1, 1], [], []>} : vector<16x128xbf16>, vector<128x16xbf16>, vector<16x16xf32> -> vector<16x16xf32>
    %c2_530 = arith.constant 2 : index
    %c6_531 = arith.constant 6 : index
    %c0_532 = arith.constant 0 : index
    %c0_533 = arith.constant 0 : index
    %665 = vector.load %arg14[%c2_530, %c6_531, %c0_532, %c0_533] : memref<3x8x1x16xf32, #tpu.memory_space<vmem>>, vector<1x1x1x16xf32>
    %666 = vector.shape_cast %665 : vector<1x1x1x16xf32> to vector<1x16xf32>
    %667 = vector.broadcast %666 : vector<1x16xf32> to vector<16x16xf32>
    %668 = arith.addf %664, %667 : vector<16x16xf32>
    %669 = arith.truncf %654 : vector<8x16xf32> to vector<8x16xbf16>
    %670 = arith.truncf %661 : vector<16x16xf32> to vector<16x16xbf16>
    %cst_534 = arith.constant dense<0.000000e+00> : vector<8x16xf32>
    %671 = tpu.matmul %669, %670, %cst_534 {dimension_numbers = #tpu.dot_dimension_numbers<[1], [1], [0], [0], [0, 0, 1, 0], [], []>} : vector<8x16xbf16>, vector<16x16xbf16>, vector<8x16xf32> -> vector<8x16xf32>
    %cst_535 = arith.constant dense<0xFF800000> : vector<8xf32>
    %672 = vector.multi_reduction <maximumf>, %671, %cst_535 [1] : vector<8x16xf32> to vector<8xf32>
    %673 = vector.shape_cast %672 : vector<8xf32> to vector<8x1xf32>
    %674 = vector.broadcast %673 : vector<8x1xf32> to vector<8x16xf32>
    %675 = arith.subf %671, %674 : vector<8x16xf32>
    %676 = math.exp %675 : vector<8x16xf32>
    %cst_536 = arith.constant dense<0.000000e+00> : vector<8xf32>
    %677 = vector.multi_reduction <add>, %676, %cst_536 [1] : vector<8x16xf32> to vector<8xf32>
    %678 = vector.shape_cast %677 : vector<8xf32> to vector<8x1xf32>
    %679 = tpu.reciprocal %678 {approx = true} : vector<8x1xf32> -> vector<8x1xf32>
    %680 = vector.broadcast %679 : vector<8x1xf32> to vector<8x16xf32>
    %681 = arith.mulf %676, %680 : vector<8x16xf32>
    %682 = arith.truncf %681 : vector<8x16xf32> to vector<8x16xbf16>
    %683 = arith.truncf %668 : vector<16x16xf32> to vector<16x16xbf16>
    %cst_537 = arith.constant dense<0.000000e+00> : vector<8x16xf32>
    %684 = tpu.matmul %682, %683, %cst_537 {dimension_numbers = #tpu.dot_dimension_numbers<[1], [0], [0], [1], [0, 0, 1, 1], [], []>} : vector<8x16xbf16>, vector<16x16xbf16>, vector<8x16xf32> -> vector<8x16xf32>
    %685 = arith.truncf %684 : vector<8x16xf32> to vector<8x16xbf16>
    %c6_538 = arith.constant 6 : index
    %c0_539 = arith.constant 0 : index
    %c0_540 = arith.constant 0 : index
    %686 = vector.load %arg15[%c6_538, %c0_539, %c0_540] : memref<8x16x128xbf16, #tpu.memory_space<vmem>>, vector<1x16x128xbf16>
    %687 = vector.shape_cast %686 : vector<1x16x128xbf16> to vector<16x128xbf16>
    %cst_541 = arith.constant dense<0.000000e+00> : vector<8x128xf32>
    %688 = tpu.matmul %685, %687, %cst_541 {dimension_numbers = #tpu.dot_dimension_numbers<[1], [0], [0], [1], [0, 0, 1, 1], [], []>} : vector<8x16xbf16>, vector<16x128xbf16>, vector<8x128xf32> -> vector<8x128xf32>
    %689 = arith.addf %647, %688 : vector<8x128xf32>
    %c0_542 = arith.constant 0 : index
    %c7_543 = arith.constant 7 : index
    %c0_544 = arith.constant 0 : index
    %c0_545 = arith.constant 0 : index
    %690 = vector.load %arg13[%c0_542, %c7_543, %c0_544, %c0_545] : memref<3x8x128x16xbf16, #tpu.memory_space<vmem>>, vector<1x1x128x16xbf16>
    %691 = vector.shape_cast %690 : vector<1x1x128x16xbf16> to vector<128x16xbf16>
    %cst_546 = arith.constant dense<0.000000e+00> : vector<8x16xf32>
    %692 = tpu.matmul %393, %691, %cst_546 {dimension_numbers = #tpu.dot_dimension_numbers<[1], [0], [0], [1], [0, 0, 1, 1], [], []>} : vector<8x128xbf16>, vector<128x16xbf16>, vector<8x16xf32> -> vector<8x16xf32>
    %c0_547 = arith.constant 0 : index
    %c7_548 = arith.constant 7 : index
    %c0_549 = arith.constant 0 : index
    %c0_550 = arith.constant 0 : index
    %693 = vector.load %arg14[%c0_547, %c7_548, %c0_549, %c0_550] : memref<3x8x1x16xf32, #tpu.memory_space<vmem>>, vector<1x1x1x16xf32>
    %694 = vector.shape_cast %693 : vector<1x1x1x16xf32> to vector<1x16xf32>
    %695 = vector.broadcast %694 : vector<1x16xf32> to vector<8x16xf32>
    %696 = arith.addf %692, %695 : vector<8x16xf32>
    %c1_551 = arith.constant 1 : index
    %c7_552 = arith.constant 7 : index
    %c0_553 = arith.constant 0 : index
    %c0_554 = arith.constant 0 : index
    %697 = vector.load %arg13[%c1_551, %c7_552, %c0_553, %c0_554] : memref<3x8x128x16xbf16, #tpu.memory_space<vmem>>, vector<1x1x128x16xbf16>
    %698 = vector.shape_cast %697 : vector<1x1x128x16xbf16> to vector<128x16xbf16>
    %cst_555 = arith.constant dense<0.000000e+00> : vector<16x16xf32>
    %699 = tpu.matmul %394, %698, %cst_555 {dimension_numbers = #tpu.dot_dimension_numbers<[1], [0], [0], [1], [0, 0, 1, 1], [], []>} : vector<16x128xbf16>, vector<128x16xbf16>, vector<16x16xf32> -> vector<16x16xf32>
    %c1_556 = arith.constant 1 : index
    %c7_557 = arith.constant 7 : index
    %c0_558 = arith.constant 0 : index
    %c0_559 = arith.constant 0 : index
    %700 = vector.load %arg14[%c1_556, %c7_557, %c0_558, %c0_559] : memref<3x8x1x16xf32, #tpu.memory_space<vmem>>, vector<1x1x1x16xf32>
    %701 = vector.shape_cast %700 : vector<1x1x1x16xf32> to vector<1x16xf32>
    %702 = vector.broadcast %701 : vector<1x16xf32> to vector<16x16xf32>
    %703 = arith.addf %699, %702 : vector<16x16xf32>
    %c2_560 = arith.constant 2 : index
    %c7_561 = arith.constant 7 : index
    %c0_562 = arith.constant 0 : index
    %c0_563 = arith.constant 0 : index
    %704 = vector.load %arg13[%c2_560, %c7_561, %c0_562, %c0_563] : memref<3x8x128x16xbf16, #tpu.memory_space<vmem>>, vector<1x1x128x16xbf16>
    %705 = vector.shape_cast %704 : vector<1x1x128x16xbf16> to vector<128x16xbf16>
    %cst_564 = arith.constant dense<0.000000e+00> : vector<16x16xf32>
    %706 = tpu.matmul %394, %705, %cst_564 {dimension_numbers = #tpu.dot_dimension_numbers<[1], [0], [0], [1], [0, 0, 1, 1], [], []>} : vector<16x128xbf16>, vector<128x16xbf16>, vector<16x16xf32> -> vector<16x16xf32>
    %c2_565 = arith.constant 2 : index
    %c7_566 = arith.constant 7 : index
    %c0_567 = arith.constant 0 : index
    %c0_568 = arith.constant 0 : index
    %707 = vector.load %arg14[%c2_565, %c7_566, %c0_567, %c0_568] : memref<3x8x1x16xf32, #tpu.memory_space<vmem>>, vector<1x1x1x16xf32>
    %708 = vector.shape_cast %707 : vector<1x1x1x16xf32> to vector<1x16xf32>
    %709 = vector.broadcast %708 : vector<1x16xf32> to vector<16x16xf32>
    %710 = arith.addf %706, %709 : vector<16x16xf32>
    %711 = arith.truncf %696 : vector<8x16xf32> to vector<8x16xbf16>
    %712 = arith.truncf %703 : vector<16x16xf32> to vector<16x16xbf16>
    %cst_569 = arith.constant dense<0.000000e+00> : vector<8x16xf32>
    %713 = tpu.matmul %711, %712, %cst_569 {dimension_numbers = #tpu.dot_dimension_numbers<[1], [1], [0], [0], [0, 0, 1, 0], [], []>} : vector<8x16xbf16>, vector<16x16xbf16>, vector<8x16xf32> -> vector<8x16xf32>
    %cst_570 = arith.constant dense<0xFF800000> : vector<8xf32>
    %714 = vector.multi_reduction <maximumf>, %713, %cst_570 [1] : vector<8x16xf32> to vector<8xf32>
    %715 = vector.shape_cast %714 : vector<8xf32> to vector<8x1xf32>
    %716 = vector.broadcast %715 : vector<8x1xf32> to vector<8x16xf32>
    %717 = arith.subf %713, %716 : vector<8x16xf32>
    %718 = math.exp %717 : vector<8x16xf32>
    %cst_571 = arith.constant dense<0.000000e+00> : vector<8xf32>
    %719 = vector.multi_reduction <add>, %718, %cst_571 [1] : vector<8x16xf32> to vector<8xf32>
    %720 = vector.shape_cast %719 : vector<8xf32> to vector<8x1xf32>
    %721 = tpu.reciprocal %720 {approx = true} : vector<8x1xf32> -> vector<8x1xf32>
    %722 = vector.broadcast %721 : vector<8x1xf32> to vector<8x16xf32>
    %723 = arith.mulf %718, %722 : vector<8x16xf32>
    %724 = arith.truncf %723 : vector<8x16xf32> to vector<8x16xbf16>
    %725 = arith.truncf %710 : vector<16x16xf32> to vector<16x16xbf16>
    %cst_572 = arith.constant dense<0.000000e+00> : vector<8x16xf32>
    %726 = tpu.matmul %724, %725, %cst_572 {dimension_numbers = #tpu.dot_dimension_numbers<[1], [0], [0], [1], [0, 0, 1, 1], [], []>} : vector<8x16xbf16>, vector<16x16xbf16>, vector<8x16xf32> -> vector<8x16xf32>
    %727 = arith.truncf %726 : vector<8x16xf32> to vector<8x16xbf16>
    %c7_573 = arith.constant 7 : index
    %c0_574 = arith.constant 0 : index
    %c0_575 = arith.constant 0 : index
    %728 = vector.load %arg15[%c7_573, %c0_574, %c0_575] : memref<8x16x128xbf16, #tpu.memory_space<vmem>>, vector<1x16x128xbf16>
    %729 = vector.shape_cast %728 : vector<1x16x128xbf16> to vector<16x128xbf16>
    %cst_576 = arith.constant dense<0.000000e+00> : vector<8x128xf32>
    %730 = tpu.matmul %727, %729, %cst_576 {dimension_numbers = #tpu.dot_dimension_numbers<[1], [0], [0], [1], [0, 0, 1, 1], [], []>} : vector<8x16xbf16>, vector<16x128xbf16>, vector<8x128xf32> -> vector<8x128xf32>
    %731 = arith.addf %689, %730 : vector<8x128xf32>
    %c0_577 = arith.constant 0 : index
    %c0_578 = arith.constant 0 : index
    %732 = vector.load %arg16[%c0_577, %c0_578] : memref<1x128xf32, #tpu.memory_space<vmem>>, vector<1x128xf32>
    %733 = vector.broadcast %732 : vector<1x128xf32> to vector<8x128xf32>
    %734 = arith.addf %731, %733 : vector<8x128xf32>
    %735 = arith.addf %368, %734 : vector<8x128xf32>
    %c0_579 = arith.constant 0 : index
    %c0_580 = arith.constant 0 : index
    %736 = vector.load %arg7[%c0_579, %c0_580] : memref<1x128xf32, #tpu.memory_space<vmem>>, vector<1x128xf32>
    %c0_581 = arith.constant 0 : index
    %c0_582 = arith.constant 0 : index
    %737 = vector.load %arg8[%c0_581, %c0_582] : memref<1x128xf32, #tpu.memory_space<vmem>>, vector<1x128xf32>
    %cst_583 = arith.constant dense<0.000000e+00> : vector<8xf32>
    %738 = vector.multi_reduction <add>, %735, %cst_583 [1] : vector<8x128xf32> to vector<8xf32>
    %739 = vector.shape_cast %738 : vector<8xf32> to vector<8x1xf32>
    %cst_584 = arith.constant 1.280000e+02 : f32
    %740 = vector.broadcast %cst_584 : f32 to vector<8x1xf32>
    %741 = arith.divf %739, %740 : vector<8x1xf32>
    %742 = vector.broadcast %741 : vector<8x1xf32> to vector<8x128xf32>
    %743 = arith.subf %735, %742 : vector<8x128xf32>
    %744 = arith.mulf %743, %743 : vector<8x128xf32>
    %cst_585 = arith.constant dense<0.000000e+00> : vector<8xf32>
    %745 = vector.multi_reduction <add>, %744, %cst_585 [1] : vector<8x128xf32> to vector<8xf32>
    %746 = vector.shape_cast %745 : vector<8xf32> to vector<8x1xf32>
    %cst_586 = arith.constant 1.280000e+02 : f32
    %747 = vector.broadcast %cst_586 : f32 to vector<8x1xf32>
    %748 = arith.divf %746, %747 : vector<8x1xf32>
    %749 = vector.broadcast %741 : vector<8x1xf32> to vector<8x128xf32>
    %750 = arith.subf %735, %749 : vector<8x128xf32>
    %cst_587 = arith.constant 9.99999974E-6 : f32
    %751 = vector.broadcast %cst_587 : f32 to vector<8x1xf32>
    %752 = arith.addf %748, %751 : vector<8x1xf32>
    %753 = math.rsqrt %752 : vector<8x1xf32>
    %754 = vector.broadcast %753 : vector<8x1xf32> to vector<8x128xf32>
    %755 = arith.mulf %750, %754 : vector<8x128xf32>
    %756 = vector.broadcast %736 : vector<1x128xf32> to vector<8x128xf32>
    %757 = arith.mulf %755, %756 : vector<8x128xf32>
    %758 = vector.broadcast %737 : vector<1x128xf32> to vector<8x128xf32>
    %759 = arith.addf %757, %758 : vector<8x128xf32>
    %760 = arith.truncf %759 : vector<8x128xf32> to vector<8x128xbf16>
    %c0_588 = arith.constant 0 : index
    %c0_589 = arith.constant 0 : index
    %761 = vector.load %arg17[%c0_588, %c0_589] : memref<128x256xbf16, #tpu.memory_space<vmem>>, vector<128x256xbf16>
    %cst_590 = arith.constant dense<0.000000e+00> : vector<8x256xf32>
    %762 = tpu.matmul %760, %761, %cst_590 {dimension_numbers = #tpu.dot_dimension_numbers<[1], [0], [0], [1], [0, 0, 1, 1], [], []>} : vector<8x128xbf16>, vector<128x256xbf16>, vector<8x256xf32> -> vector<8x256xf32>
    %c0_591 = arith.constant 0 : index
    %c0_592 = arith.constant 0 : index
    %763 = vector.load %arg18[%c0_591, %c0_592] : memref<1x256xf32, #tpu.memory_space<vmem>>, vector<1x256xf32>
    %764 = vector.broadcast %763 : vector<1x256xf32> to vector<8x256xf32>
    %765 = arith.addf %762, %764 : vector<8x256xf32>
    %cst_593 = arith.constant 0.000000e+00 : f32
    %766 = vector.broadcast %cst_593 : f32 to vector<8x256xf32>
    %767 = arith.maximumf %765, %766 : vector<8x256xf32>
    %768 = arith.truncf %767 : vector<8x256xf32> to vector<8x256xbf16>
    %c0_594 = arith.constant 0 : index
    %c0_595 = arith.constant 0 : index
    %769 = vector.load %arg19[%c0_594, %c0_595] : memref<256x128xbf16, #tpu.memory_space<vmem>>, vector<256x128xbf16>
    %cst_596 = arith.constant dense<0.000000e+00> : vector<8x128xf32>
    %770 = tpu.matmul %768, %769, %cst_596 {dimension_numbers = #tpu.dot_dimension_numbers<[1], [0], [0], [1], [0, 0, 1, 1], [], []>} : vector<8x256xbf16>, vector<256x128xbf16>, vector<8x128xf32> -> vector<8x128xf32>
    %c0_597 = arith.constant 0 : index
    %c0_598 = arith.constant 0 : index
    %771 = vector.load %arg20[%c0_597, %c0_598] : memref<1x128xf32, #tpu.memory_space<vmem>>, vector<1x128xf32>
    %772 = vector.broadcast %771 : vector<1x128xf32> to vector<8x128xf32>
    %773 = arith.addf %770, %772 : vector<8x128xf32>
    %774 = arith.addf %735, %773 : vector<8x128xf32>
    %c0_599 = arith.constant 0 : index
    %c0_600 = arith.constant 0 : index
    %775 = vector.load %arg21[%c0_599, %c0_600] : memref<8x128xf32, #tpu.memory_space<vmem>>, vector<8x128xf32>
    tpu.vector_store %arg21[%c0_599, %c0_600], %774 {strides = array<i32>} : memref<8x128xf32, #tpu.memory_space<vmem>>, vector<8x128xf32>,
    return
  }
  func.func @transform_0(%arg0: i32) -> (i32, i32) {
    %c0_i32 = arith.constant 0 : i32
    %c0_i32_0 = arith.constant 0 : i32
    return %c0_i32, %arg0 : i32, i32
  }
  func.func @transform_1(%arg0: i32) -> (i32, i32) {
    %c0_i32 = arith.constant 0 : i32
    %c0_i32_0 = arith.constant 0 : i32
    return %c0_i32, %arg0 : i32, i32
  }
  func.func @transform_2(%arg0: i32) -> (i32, i32) {
    %c0_i32 = arith.constant 0 : i32
    %c0_i32_0 = arith.constant 0 : i32
    %c0_i32_1 = arith.constant 0 : i32
    return %c0_i32, %c0_i32_0 : i32, i32
  }
  func.func @transform_3(%arg0: i32) -> (i32, i32) {
    %c0_i32 = arith.constant 0 : i32
    %c0_i32_0 = arith.constant 0 : i32
    %c0_i32_1 = arith.constant 0 : i32
    return %c0_i32, %c0_i32_0 : i32, i32
  }
  func.func @transform_4(%arg0: i32) -> (i32, i32) {
    %c0_i32 = arith.constant 0 : i32
    %c0_i32_0 = arith.constant 0 : i32
    %c0_i32_1 = arith.constant 0 : i32
    return %c0_i32, %c0_i32_0 : i32, i32
  }
  func.func @transform_5(%arg0: i32) -> (i32, i32) {
    %c0_i32 = arith.constant 0 : i32
    %c0_i32_0 = arith.constant 0 : i32
    %c0_i32_1 = arith.constant 0 : i32
    return %c0_i32, %c0_i32_0 : i32, i32
  }
  func.func @transform_6(%arg0: i32) -> (i32, i32) {
    %c0_i32 = arith.constant 0 : i32
    %c0_i32_0 = arith.constant 0 : i32
    %c0_i32_1 = arith.constant 0 : i32
    return %c0_i32, %c0_i32_0 : i32, i32
  }
  func.func @transform_7(%arg0: i32) -> (i32, i32) {
    %c0_i32 = arith.constant 0 : i32
    %c0_i32_0 = arith.constant 0 : i32
    %c0_i32_1 = arith.constant 0 : i32
    return %c0_i32, %c0_i32_0 : i32, i32
  }
  func.func @transform_8(%arg0: i32) -> (i32, i32, i32, i32) {
    %c0_i32 = arith.constant 0 : i32
    %c0_i32_0 = arith.constant 0 : i32
    %c0_i32_1 = arith.constant 0 : i32
    %c0_i32_2 = arith.constant 0 : i32
    %c0_i32_3 = arith.constant 0 : i32
    return %c0_i32, %c0_i32_0, %c0_i32_1, %c0_i32_2 : i32, i32, i32, i32
  }
  func.func @transform_9(%arg0: i32) -> (i32, i32, i32, i32) {
    %c0_i32 = arith.constant 0 : i32
    %c0_i32_0 = arith.constant 0 : i32
    %c0_i32_1 = arith.constant 0 : i32
    %c0_i32_2 = arith.constant 0 : i32
    %c0_i32_3 = arith.constant 0 : i32
    return %c0_i32, %c0_i32_0, %c0_i32_1, %c0_i32_2 : i32, i32, i32, i32
  }
  func.func @transform_10(%arg0: i32) -> (i32, i32, i32) {
    %c0_i32 = arith.constant 0 : i32
    %c0_i32_0 = arith.constant 0 : i32
    %c0_i32_1 = arith.constant 0 : i32
    %c0_i32_2 = arith.constant 0 : i32
    return %c0_i32, %c0_i32_0, %c0_i32_1 : i32, i32, i32
  }
  func.func @transform_11(%arg0: i32) -> (i32, i32) {
    %c0_i32 = arith.constant 0 : i32
    %c0_i32_0 = arith.constant 0 : i32
    %c0_i32_1 = arith.constant 0 : i32
    return %c0_i32, %c0_i32_0 : i32, i32
  }
  func.func @transform_12(%arg0: i32) -> (i32, i32, i32, i32) {
    %c0_i32 = arith.constant 0 : i32
    %c0_i32_0 = arith.constant 0 : i32
    %c0_i32_1 = arith.constant 0 : i32
    %c0_i32_2 = arith.constant 0 : i32
    %c0_i32_3 = arith.constant 0 : i32
    return %c0_i32, %c0_i32_0, %c0_i32_1, %c0_i32_2 : i32, i32, i32, i32
  }
  func.func @transform_13(%arg0: i32) -> (i32, i32, i32, i32) {
    %c0_i32 = arith.constant 0 : i32
    %c0_i32_0 = arith.constant 0 : i32
    %c0_i32_1 = arith.constant 0 : i32
    %c0_i32_2 = arith.constant 0 : i32
    %c0_i32_3 = arith.constant 0 : i32
    return %c0_i32, %c0_i32_0, %c0_i32_1, %c0_i32_2 : i32, i32, i32, i32
  }
  func.func @transform_14(%arg0: i32) -> (i32, i32, i32) {
    %c0_i32 = arith.constant 0 : i32
    %c0_i32_0 = arith.constant 0 : i32
    %c0_i32_1 = arith.constant 0 : i32
    %c0_i32_2 = arith.constant 0 : i32
    return %c0_i32, %c0_i32_0, %c0_i32_1 : i32, i32, i32
  }
  func.func @transform_15(%arg0: i32) -> (i32, i32) {
    %c0_i32 = arith.constant 0 : i32
    %c0_i32_0 = arith.constant 0 : i32
    %c0_i32_1 = arith.constant 0 : i32
    return %c0_i32, %c0_i32_0 : i32, i32
  }
  func.func @transform_16(%arg0: i32) -> (i32, i32) {
    %c0_i32 = arith.constant 0 : i32
    %c0_i32_0 = arith.constant 0 : i32
    %c0_i32_1 = arith.constant 0 : i32
    return %c0_i32, %c0_i32_0 : i32, i32
  }
  func.func @transform_17(%arg0: i32) -> (i32, i32) {
    %c0_i32 = arith.constant 0 : i32
    %c0_i32_0 = arith.constant 0 : i32
    %c0_i32_1 = arith.constant 0 : i32
    return %c0_i32, %c0_i32_0 : i32, i32
  }
  func.func @transform_18(%arg0: i32) -> (i32, i32) {
    %c0_i32 = arith.constant 0 : i32
    %c0_i32_0 = arith.constant 0 : i32
    %c0_i32_1 = arith.constant 0 : i32
    return %c0_i32, %c0_i32_0 : i32, i32
  }
  func.func @transform_19(%arg0: i32) -> (i32, i32) {
    %c0_i32 = arith.constant 0 : i32
    %c0_i32_0 = arith.constant 0 : i32
    %c0_i32_1 = arith.constant 0 : i32
    return %c0_i32, %c0_i32_0 : i32, i32
  }
  func.func @transform_20(%arg0: i32) -> (i32, i32) {
    %c0_i32 = arith.constant 0 : i32
    %c0_i32_0 = arith.constant 0 : i32
    return %c0_i32, %arg0 : i32, i32
  }
}

</mosaic_0001>

<llo_original>
// kernel: transformer_decoder_layer.1
$region0: #{transformer_decoder_layer.1}
  #allocation0 [shape = 'u32[]', space=smem, size = 0x4, offset = 0x4, fixed_abs, tag = 'smem constant byte address 0x4 - core index']
  #allocation1 [shape = 'u32[144,128]{1,0:T(1,128)}', space=vmem, size = 0x12000, scoped, tag = 'internal scratch']
  %s0 = inlined_call_operand.vmem [shape: f32[8,256], index: 0, kind: input, shape index: {}]
  %s1 = inlined_call_operand.vmem [shape: f32[16,256], index: 1, kind: input, shape index: {}]
  %s2 = inlined_call_operand.vmem [shape: f32[1,128], index: 2, kind: input, shape index: {}]
  %s3 = inlined_call_operand.vmem [shape: f32[1,128], index: 3, kind: input, shape index: {}]
  %s4 = inlined_call_operand.vmem [shape: f32[1,128], index: 4, kind: input, shape index: {}]
  %s5 = inlined_call_operand.vmem [shape: f32[1,128], index: 5, kind: input, shape index: {}]
  %s6 = inlined_call_operand.vmem [shape: f32[1,128], index: 6, kind: input, shape index: {}]
  %s7 = inlined_call_operand.vmem [shape: f32[1,128], index: 7, kind: input, shape index: {}]
  %s8 = inlined_call_operand.vmem [shape: bf16[3,8,128,16], index: 8, kind: input, shape index: {}]
  %s9 = inlined_call_operand.vmem [shape: f32[3,8,1,16], index: 9, kind: input, shape index: {}]
  %s10 = inlined_call_operand.vmem [shape: bf16[8,16,128], index: 10, kind: input, shape index: {}]
  %s11 = inlined_call_operand.vmem [shape: f32[1,128], index: 11, kind: input, shape index: {}]
  %s12 = inlined_call_operand.vmem [shape: bf16[3,8,128,16], index: 12, kind: input, shape index: {}]
  %s13 = inlined_call_operand.vmem [shape: f32[3,8,1,16], index: 13, kind: input, shape index: {}]
  %s14 = inlined_call_operand.vmem [shape: bf16[8,16,128], index: 14, kind: input, shape index: {}]
  %s15 = inlined_call_operand.vmem [shape: f32[1,128], index: 15, kind: input, shape index: {}]
  %s16 = inlined_call_operand.vmem [shape: bf16[128,256], index: 16, kind: input, shape index: {}]
  %s17 = inlined_call_operand.vmem [shape: f32[1,256], index: 17, kind: input, shape index: {}]
  %s18 = inlined_call_operand.vmem [shape: bf16[256,128], index: 18, kind: input, shape index: {}]
  %s19 = inlined_call_operand.vmem [shape: f32[1,128], index: 19, kind: input, shape index: {}]
  %s20 = inlined_call_operand.vmem [shape: f32[8,256], index: 20, kind: output, shape index: {}]
  %s21 = sld [smem:[#allocation0]]
  $region151: #{transformer_decoder_layer.1} parent=0
    _
  %s23 = ssub.s32 1, %s21
  %s24 = scalar_select 0, %s23, %s21
  $region1: #{transformer_decoder_layer.1} parent=0
    #allocation2 [shape = 'u8[16384]{0}', space=vmem, size = 0x4000, scoped, tag = 'input window, operand 1']
    loop: start=0, step=1, limit=4
    $region2: #{transformer_decoder_layer.1} parent=1 // loop_pre_header
      _
    $region3: #{transformer_decoder_layer.1} parent=1 // loop_header
      %s26 = sphi 0, %s30
      %p27 = scmp.ge.s32.totalorder %s26, 4
      %s36 = sphi 0, %s38
      %s39 = sphi 0, %s36
      %s40 = sphi 0, %s39
      %s56 = sphi 0, %s40
      %s62 = sphi 0, %s64
      %s65 = sphi 0, %s62
      %s66 = sphi 0, %s65
      %s82 = sphi 0, %s66
      %s86 = sphi 0, %s86
      %s88 = sphi 0, %s86
      %s89 = sphi 0, %s88
      %s103 = sphi 0, %s89
      %s107 = sphi 0, %s107
      %s109 = sphi 0, %s107
      %s110 = sphi 0, %s109
      %s124 = sphi 0, %s110
      %s128 = sphi 0, %s128
      %s130 = sphi 0, %s128
      %s131 = sphi 0, %s130
      %s145 = sphi 0, %s131
      %s149 = sphi 0, %s149
      %s151 = sphi 0, %s149
      %s152 = sphi 0, %s151
      %s166 = sphi 0, %s152
      %s170 = sphi 0, %s170
      %s172 = sphi 0, %s170
      %s173 = sphi 0, %s172
      %s187 = sphi 0, %s173
      %s191 = sphi 0, %s191
      %s193 = sphi 0, %s191
      %s194 = sphi 0, %s193
      %s208 = sphi 0, %s194
      %s212 = sphi 0, %s212
      %s214 = sphi 0, %s212
      %s215 = sphi 0, %s214
      %s229 = sphi 0, %s215
      %s233 = sphi 0, %s233
      %s235 = sphi 0, %s233
      %s236 = sphi 0, %s235
      %s250 = sphi 0, %s236
      %s254 = sphi 0, %s254
      %s256 = sphi 0, %s254
      %s257 = sphi 0, %s256
      %s271 = sphi 0, %s257
      %s275 = sphi 0, %s275
      %s277 = sphi 0, %s275
      %s278 = sphi 0, %s277
      %s292 = sphi 0, %s278
      %s296 = sphi 0, %s296
      %s298 = sphi 0, %s296
      %s299 = sphi 0, %s298
      %s313 = sphi 0, %s299
      %s317 = sphi 0, %s317
      %s319 = sphi 0, %s317
      %s320 = sphi 0, %s319
      %s334 = sphi 0, %s320
      %s338 = sphi 0, %s338
      %s340 = sphi 0, %s338
      %s341 = sphi 0, %s340
      %s355 = sphi 0, %s341
      %s359 = sphi 0, %s359
      %s361 = sphi 0, %s359
      %s362 = sphi 0, %s361
      %s376 = sphi 0, %s362
      %s380 = sphi 0, %s380
      %s382 = sphi 0, %s380
      %s383 = sphi 0, %s382
      %s397 = sphi 0, %s383
      %s401 = sphi 0, %s401
      %s403 = sphi 0, %s401
      %s404 = sphi 0, %s403
      %s418 = sphi 0, %s404
      %s422 = sphi 0, %s422
      %s424 = sphi 0, %s422
      %s425 = sphi 0, %s424
      %s439 = sphi 0, %s425
      %s443 = sphi 0, %s443
      %s445 = sphi 0, %s443
      %s446 = sphi 0, %s445
      %s460 = sphi 0, %s446
      %s466 = sphi 0, %s468
      %s469 = sphi 0, %s466
      %s470 = sphi 0, %s469
      %s486 = sphi 0, %s470
    $region4: #{transformer_decoder_layer.1} parent=1 // loop_header_branch
      %29 = sbr.rel (%p27) target = $region8
    $region5: #{transformer_decoder_layer.1} parent=1 // loop_body
      %s31 = ssub.s32 %s26, 1
      %s32 = ssub.s32 %s26, 2
      %s33 = sadd.s32 %s26, 1
      %s34 = ssub.s32 %s26, %s33
      %p35 = scmp.eq.s32.totalorder %s34, 0
      %s37 = sadd.s32 %s36, 1
      %s38 = scalar_select %p35, %s36, %s37
      %p41 = pneg %p35
      %p42 = scmp.eq.s32.totalorder %s26, 1
      %p43 = por %p41, %p42
      %p44 = scmp.ne.s32.totalorder %s36, %s39
      %p45 = scmp.eq.s32.totalorder %s26, 0
      %p46 = por %p44, %p45
      %p47 = scmp.ne.s32.totalorder %s36, %s39
      %p48 = scmp.eq.s32.totalorder %s31, 1
      %p49 = por %p47, %p48
      %p50 = scmp.ne.s32.totalorder %s39, %s40
      %p51 = scmp.eq.s32.totalorder %s31, 0
      %p52 = por %p50, %p51
      %p53 = scmp.ne.s32.totalorder %s39, %s40
      %p54 = scmp.eq.s32.totalorder %s32, 1
      %p55 = por %p53, %p54
      %p57 = scmp.ne.s32.totalorder %s40, %s56
      %p58 = scmp.eq.s32.totalorder %s32, 0
      %p59 = por %p57, %p58
      %s60 = ssub.s32 %s26, %s33
      %p61 = scmp.eq.s32.totalorder %s60, 0
      %s63 = sadd.s32 %s62, 1
      %s64 = scalar_select %p61, %s62, %s63
      %p67 = pneg %p61
      %p68 = scmp.eq.s32.totalorder %s26, 1
      %p69 = por %p67, %p68
      %p70 = scmp.ne.s32.totalorder %s62, %s65
      %p71 = scmp.eq.s32.totalorder %s26, 0
      %p72 = por %p70, %p71
      %p73 = scmp.ne.s32.totalorder %s62, %s65
      %p74 = scmp.eq.s32.totalorder %s31, 1
      %p75 = por %p73, %p74
      %p76 = scmp.ne.s32.totalorder %s65, %s66
      %p77 = scmp.eq.s32.totalorder %s31, 0
      %p78 = por %p76, %p77
      %p79 = scmp.ne.s32.totalorder %s65, %s66
      %p80 = scmp.eq.s32.totalorder %s32, 1
      %p81 = por %p79, %p80
      %p83 = scmp.ne.s32.totalorder %s66, %s82
      %p84 = scmp.eq.s32.totalorder %s32, 0
      %p85 = por %p83, %p84
      %s87 = sadd.s32 %s86, 1
      %p90 = scmp.eq.s32.totalorder %s26, 1
      %p91 = scmp.ne.s32.totalorder %s86, %s88
      %p92 = scmp.eq.s32.totalorder %s26, 0
      %p93 = por %p91, %p92
      %p94 = scmp.ne.s32.totalorder %s86, %s88
      %p95 = scmp.eq.s32.totalorder %s31, 1
      %p96 = por %p94, %p95
      %p97 = scmp.ne.s32.totalorder %s88, %s89
      %p98 = scmp.eq.s32.totalorder %s31, 0
      %p99 = por %p97, %p98
      %p100 = scmp.ne.s32.totalorder %s88, %s89
      %p101 = scmp.eq.s32.totalorder %s32, 1
      %p102 = por %p100, %p101
      %p104 = scmp.ne.s32.totalorder %s89, %s103
      %p105 = scmp.eq.s32.totalorder %s32, 0
      %p106 = por %p104, %p105
      %s108 = sadd.s32 %s107, 1
      %p111 = scmp.eq.s32.totalorder %s26, 1
      %p112 = scmp.ne.s32.totalorder %s107, %s109
      %p113 = scmp.eq.s32.totalorder %s26, 0
      %p114 = por %p112, %p113
      %p115 = scmp.ne.s32.totalorder %s107, %s109
      %p116 = scmp.eq.s32.totalorder %s31, 1
      %p117 = por %p115, %p116
      %p118 = scmp.ne.s32.totalorder %s109, %s110
      %p119 = scmp.eq.s32.totalorder %s31, 0
      %p120 = por %p118, %p119
      %p121 = scmp.ne.s32.totalorder %s109, %s110
      %p122 = scmp.eq.s32.totalorder %s32, 1
      %p123 = por %p121, %p122
      %p125 = scmp.ne.s32.totalorder %s110, %s124
      %p126 = scmp.eq.s32.totalorder %s32, 0
      %p127 = por %p125, %p126
      %s129 = sadd.s32 %s128, 1
      %p132 = scmp.eq.s32.totalorder %s26, 1
      %p133 = scmp.ne.s32.totalorder %s128, %s130
      %p134 = scmp.eq.s32.totalorder %s26, 0
      %p135 = por %p133, %p134
      %p136 = scmp.ne.s32.totalorder %s128, %s130
      %p137 = scmp.eq.s32.totalorder %s31, 1
      %p138 = por %p136, %p137
      %p139 = scmp.ne.s32.totalorder %s130, %s131
      %p140 = scmp.eq.s32.totalorder %s31, 0
      %p141 = por %p139, %p140
      %p142 = scmp.ne.s32.totalorder %s130, %s131
      %p143 = scmp.eq.s32.totalorder %s32, 1
      %p144 = por %p142, %p143
      %p146 = scmp.ne.s32.totalorder %s131, %s145
      %p147 = scmp.eq.s32.totalorder %s32, 0
      %p148 = por %p146, %p147
      %s150 = sadd.s32 %s149, 1
      %p153 = scmp.eq.s32.totalorder %s26, 1
      %p154 = scmp.ne.s32.totalorder %s149, %s151
      %p155 = scmp.eq.s32.totalorder %s26, 0
      %p156 = por %p154, %p155
      %p157 = scmp.ne.s32.totalorder %s149, %s151
      %p158 = scmp.eq.s32.totalorder %s31, 1
      %p159 = por %p157, %p158
      %p160 = scmp.ne.s32.totalorder %s151, %s152
      %p161 = scmp.eq.s32.totalorder %s31, 0
      %p162 = por %p160, %p161
      %p163 = scmp.ne.s32.totalorder %s151, %s152
      %p164 = scmp.eq.s32.totalorder %s32, 1
      %p165 = por %p163, %p164
      %p167 = scmp.ne.s32.totalorder %s152, %s166
      %p168 = scmp.eq.s32.totalorder %s32, 0
      %p169 = por %p167, %p168
      %s171 = sadd.s32 %s170, 1
      %p174 = scmp.eq.s32.totalorder %s26, 1
      %p175 = scmp.ne.s32.totalorder %s170, %s172
      %p176 = scmp.eq.s32.totalorder %s26, 0
      %p177 = por %p175, %p176
      %p178 = scmp.ne.s32.totalorder %s170, %s172
      %p179 = scmp.eq.s32.totalorder %s31, 1
      %p180 = por %p178, %p179
      %p181 = scmp.ne.s32.totalorder %s172, %s173
      %p182 = scmp.eq.s32.totalorder %s31, 0
      %p183 = por %p181, %p182
      %p184 = scmp.ne.s32.totalorder %s172, %s173
      %p185 = scmp.eq.s32.totalorder %s32, 1
      %p186 = por %p184, %p185
      %p188 = scmp.ne.s32.totalorder %s173, %s187
      %p189 = scmp.eq.s32.totalorder %s32, 0
      %p190 = por %p188, %p189
      %s192 = sadd.s32 %s191, 1
      %p195 = scmp.eq.s32.totalorder %s26, 1
      %p196 = scmp.ne.s32.totalorder %s191, %s193
      %p197 = scmp.eq.s32.totalorder %s26, 0
      %p198 = por %p196, %p197
      %p199 = scmp.ne.s32.totalorder %s191, %s193
      %p200 = scmp.eq.s32.totalorder %s31, 1
      %p201 = por %p199, %p200
      %p202 = scmp.ne.s32.totalorder %s193, %s194
      %p203 = scmp.eq.s32.totalorder %s31, 0
      %p204 = por %p202, %p203
      %p205 = scmp.ne.s32.totalorder %s193, %s194
      %p206 = scmp.eq.s32.totalorder %s32, 1
      %p207 = por %p205, %p206
      %p209 = scmp.ne.s32.totalorder %s194, %s208
      %p210 = scmp.eq.s32.totalorder %s32, 0
      %p211 = por %p209, %p210
      %s213 = sadd.s32 %s212, 1
      %p216 = scmp.eq.s32.totalorder %s26, 1
      %p217 = scmp.ne.s32.totalorder %s212, %s214
      %p218 = scmp.eq.s32.totalorder %s26, 0
      %p219 = por %p217, %p218
      %p220 = scmp.ne.s32.totalorder %s212, %s214
      %p221 = scmp.eq.s32.totalorder %s31, 1
      %p222 = por %p220, %p221
      %p223 = scmp.ne.s32.totalorder %s214, %s215
      %p224 = scmp.eq.s32.totalorder %s31, 0
      %p225 = por %p223, %p224
      %p226 = scmp.ne.s32.totalorder %s214, %s215
      %p227 = scmp.eq.s32.totalorder %s32, 1
      %p228 = por %p226, %p227
      %p230 = scmp.ne.s32.totalorder %s215, %s229
      %p231 = scmp.eq.s32.totalorder %s32, 0
      %p232 = por %p230, %p231
      %s234 = sadd.s32 %s233, 1
      %p237 = scmp.eq.s32.totalorder %s26, 1
      %p238 = scmp.ne.s32.totalorder %s233, %s235
      %p239 = scmp.eq.s32.totalorder %s26, 0
      %p240 = por %p238, %p239
      %p241 = scmp.ne.s32.totalorder %s233, %s235
      %p242 = scmp.eq.s32.totalorder %s31, 1
      %p243 = por %p241, %p242
      %p244 = scmp.ne.s32.totalorder %s235, %s236
      %p245 = scmp.eq.s32.totalorder %s31, 0
      %p246 = por %p244, %p245
      %p247 = scmp.ne.s32.totalorder %s235, %s236
      %p248 = scmp.eq.s32.totalorder %s32, 1
      %p249 = por %p247, %p248
      %p251 = scmp.ne.s32.totalorder %s236, %s250
      %p252 = scmp.eq.s32.totalorder %s32, 0
      %p253 = por %p251, %p252
      %s255 = sadd.s32 %s254, 1
      %p258 = scmp.eq.s32.totalorder %s26, 1
      %p259 = scmp.ne.s32.totalorder %s254, %s256
      %p260 = scmp.eq.s32.totalorder %s26, 0
      %p261 = por %p259, %p260
      %p262 = scmp.ne.s32.totalorder %s254, %s256
      %p263 = scmp.eq.s32.totalorder %s31, 1
      %p264 = por %p262, %p263
      %p265 = scmp.ne.s32.totalorder %s256, %s257
      %p266 = scmp.eq.s32.totalorder %s31, 0
      %p267 = por %p265, %p266
      %p268 = scmp.ne.s32.totalorder %s256, %s257
      %p269 = scmp.eq.s32.totalorder %s32, 1
      %p270 = por %p268, %p269
      %p272 = scmp.ne.s32.totalorder %s257, %s271
      %p273 = scmp.eq.s32.totalorder %s32, 0
      %p274 = por %p272, %p273
      %s276 = sadd.s32 %s275, 1
      %p279 = scmp.eq.s32.totalorder %s26, 1
      %p280 = scmp.ne.s32.totalorder %s275, %s277
      %p281 = scmp.eq.s32.totalorder %s26, 0
      %p282 = por %p280, %p281
      %p283 = scmp.ne.s32.totalorder %s275, %s277
      %p284 = scmp.eq.s32.totalorder %s31, 1
      %p285 = por %p283, %p284
      %p286 = scmp.ne.s32.totalorder %s277, %s278
      %p287 = scmp.eq.s32.totalorder %s31, 0
      %p288 = por %p286, %p287
      %p289 = scmp.ne.s32.totalorder %s277, %s278
      %p290 = scmp.eq.s32.totalorder %s32, 1
      %p291 = por %p289, %p290
      %p293 = scmp.ne.s32.totalorder %s278, %s292
      %p294 = scmp.eq.s32.totalorder %s32, 0
      %p295 = por %p293, %p294
      %s297 = sadd.s32 %s296, 1
      %p300 = scmp.eq.s32.totalorder %s26, 1
      %p301 = scmp.ne.s32.totalorder %s296, %s298
      %p302 = scmp.eq.s32.totalorder %s26, 0
      %p303 = por %p301, %p302
      %p304 = scmp.ne.s32.totalorder %s296, %s298
      %p305 = scmp.eq.s32.totalorder %s31, 1
      %p306 = por %p304, %p305
      %p307 = scmp.ne.s32.totalorder %s298, %s299
      %p308 = scmp.eq.s32.totalorder %s31, 0
      %p309 = por %p307, %p308
      %p310 = scmp.ne.s32.totalorder %s298, %s299
      %p311 = scmp.eq.s32.totalorder %s32, 1
      %p312 = por %p310, %p311
      %p314 = scmp.ne.s32.totalorder %s299, %s313
      %p315 = scmp.eq.s32.totalorder %s32, 0
      %p316 = por %p314, %p315
      %s318 = sadd.s32 %s317, 1
      %p321 = scmp.eq.s32.totalorder %s26, 1
      %p322 = scmp.ne.s32.totalorder %s317, %s319
      %p323 = scmp.eq.s32.totalorder %s26, 0
      %p324 = por %p322, %p323
      %p325 = scmp.ne.s32.totalorder %s317, %s319
      %p326 = scmp.eq.s32.totalorder %s31, 1
      %p327 = por %p325, %p326
      %p328 = scmp.ne.s32.totalorder %s319, %s320
      %p329 = scmp.eq.s32.totalorder %s31, 0
      %p330 = por %p328, %p329
      %p331 = scmp.ne.s32.totalorder %s319, %s320
      %p332 = scmp.eq.s32.totalorder %s32, 1
      %p333 = por %p331, %p332
      %p335 = scmp.ne.s32.totalorder %s320, %s334
      %p336 = scmp.eq.s32.totalorder %s32, 0
      %p337 = por %p335, %p336
      %s339 = sadd.s32 %s338, 1
      %p342 = scmp.eq.s32.totalorder %s26, 1
      %p343 = scmp.ne.s32.totalorder %s338, %s340
      %p344 = scmp.eq.s32.totalorder %s26, 0
      %p345 = por %p343, %p344
      %p346 = scmp.ne.s32.totalorder %s338, %s340
      %p347 = scmp.eq.s32.totalorder %s31, 1
      %p348 = por %p346, %p347
      %p349 = scmp.ne.s32.totalorder %s340, %s341
      %p350 = scmp.eq.s32.totalorder %s31, 0
      %p351 = por %p349, %p350
      %p352 = scmp.ne.s32.totalorder %s340, %s341
      %p353 = scmp.eq.s32.totalorder %s32, 1
      %p354 = por %p352, %p353
      %p356 = scmp.ne.s32.totalorder %s341, %s355
      %p357 = scmp.eq.s32.totalorder %s32, 0
      %p358 = por %p356, %p357
      %s360 = sadd.s32 %s359, 1
      %p363 = scmp.eq.s32.totalorder %s26, 1
      %p364 = scmp.ne.s32.totalorder %s359, %s361
      %p365 = scmp.eq.s32.totalorder %s26, 0
      %p366 = por %p364, %p365
      %p367 = scmp.ne.s32.totalorder %s359, %s361
      %p368 = scmp.eq.s32.totalorder %s31, 1
      %p369 = por %p367, %p368
      %p370 = scmp.ne.s32.totalorder %s361, %s362
      %p371 = scmp.eq.s32.totalorder %s31, 0
      %p372 = por %p370, %p371
      %p373 = scmp.ne.s32.totalorder %s361, %s362
      %p374 = scmp.eq.s32.totalorder %s32, 1
      %p375 = por %p373, %p374
      %p377 = scmp.ne.s32.totalorder %s362, %s376
      %p378 = scmp.eq.s32.totalorder %s32, 0
      %p379 = por %p377, %p378
      %s381 = sadd.s32 %s380, 1
      %p384 = scmp.eq.s32.totalorder %s26, 1
      %p385 = scmp.ne.s32.totalorder %s380, %s382
      %p386 = scmp.eq.s32.totalorder %s26, 0
      %p387 = por %p385, %p386
      %p388 = scmp.ne.s32.totalorder %s380, %s382
      %p389 = scmp.eq.s32.totalorder %s31, 1
      %p390 = por %p388, %p389
      %p391 = scmp.ne.s32.totalorder %s382, %s383
      %p392 = scmp.eq.s32.totalorder %s31, 0
      %p393 = por %p391, %p392
      %p394 = scmp.ne.s32.totalorder %s382, %s383
      %p395 = scmp.eq.s32.totalorder %s32, 1
      %p396 = por %p394, %p395
      %p398 = scmp.ne.s32.totalorder %s383, %s397
      %p399 = scmp.eq.s32.totalorder %s32, 0
      %p400 = por %p398, %p399
      %s402 = sadd.s32 %s401, 1
      %p405 = scmp.eq.s32.totalorder %s26, 1
      %p406 = scmp.ne.s32.totalorder %s401, %s403
      %p407 = scmp.eq.s32.totalorder %s26, 0
      %p408 = por %p406, %p407
      %p409 = scmp.ne.s32.totalorder %s401, %s403
      %p410 = scmp.eq.s32.totalorder %s31, 1
      %p411 = por %p409, %p410
      %p412 = scmp.ne.s32.totalorder %s403, %s404
      %p413 = scmp.eq.s32.totalorder %s31, 0
      %p414 = por %p412, %p413
      %p415 = scmp.ne.s32.totalorder %s403, %s404
      %p416 = scmp.eq.s32.totalorder %s32, 1
      %p417 = por %p415, %p416
      %p419 = scmp.ne.s32.totalorder %s404, %s418
      %p420 = scmp.eq.s32.totalorder %s32, 0
      %p421 = por %p419, %p420
      %s423 = sadd.s32 %s422, 1
      %p426 = scmp.eq.s32.totalorder %s26, 1
      %p427 = scmp.ne.s32.totalorder %s422, %s424
      %p428 = scmp.eq.s32.totalorder %s26, 0
      %p429 = por %p427, %p428
      %p430 = scmp.ne.s32.totalorder %s422, %s424
      %p431 = scmp.eq.s32.totalorder %s31, 1
      %p432 = por %p430, %p431
      %p433 = scmp.ne.s32.totalorder %s424, %s425
      %p434 = scmp.eq.s32.totalorder %s31, 0
      %p435 = por %p433, %p434
      %p436 = scmp.ne.s32.totalorder %s424, %s425
      %p437 = scmp.eq.s32.totalorder %s32, 1
      %p438 = por %p436, %p437
      %p440 = scmp.ne.s32.totalorder %s425, %s439
      %p441 = scmp.eq.s32.totalorder %s32, 0
      %p442 = por %p440, %p441
      %s444 = sadd.s32 %s443, 1
      %p447 = scmp.eq.s32.totalorder %s26, 1
      %p448 = scmp.ne.s32.totalorder %s443, %s445
      %p449 = scmp.eq.s32.totalorder %s26, 0
      %p450 = por %p448, %p449
      %p451 = scmp.ne.s32.totalorder %s443, %s445
      %p452 = scmp.eq.s32.totalorder %s31, 1
      %p453 = por %p451, %p452
      %p454 = scmp.ne.s32.totalorder %s445, %s446
      %p455 = scmp.eq.s32.totalorder %s31, 0
      %p456 = por %p454, %p455
      %p457 = scmp.ne.s32.totalorder %s445, %s446
      %p458 = scmp.eq.s32.totalorder %s32, 1
      %p459 = por %p457, %p458
      %p461 = scmp.ne.s32.totalorder %s446, %s460
      %p462 = scmp.eq.s32.totalorder %s32, 0
      %p463 = por %p461, %p462
      %s464 = ssub.s32 %s26, %s33
      %p465 = scmp.eq.s32.totalorder %s464, 0
      %s467 = sadd.s32 %s466, 1
      %s468 = scalar_select %p465, %s466, %s467
      %p471 = pneg %p465
      %p472 = scmp.eq.s32.totalorder %s26, 1
      %p473 = por %p471, %p472
      %p474 = scmp.ne.s32.totalorder %s466, %s469
      %p475 = scmp.eq.s32.totalorder %s26, 0
      %p476 = por %p474, %p475
      %p477 = scmp.ne.s32.totalorder %s466, %s469
      %p478 = scmp.eq.s32.totalorder %s31, 1
      %p479 = por %p477, %p478
      %p480 = scmp.ne.s32.totalorder %s469, %s470
      %p481 = scmp.eq.s32.totalorder %s31, 0
      %p482 = por %p480, %p481
      %p483 = scmp.ne.s32.totalorder %s469, %s470
      %p484 = scmp.eq.s32.totalorder %s32, 1
      %p485 = por %p483, %p484
      %p487 = scmp.ne.s32.totalorder %s470, %s486
      %p488 = scmp.eq.s32.totalorder %s32, 0
      %p489 = por %p487, %p488
      %p490 = scmp.le.s32.totalorder 1, %s26
      %p491 = scmp.lt.s32.totalorder %s26, 3
      %p492 = pnand %p490, %p491
      %p493 = pneg %p492
      // Predicated region
      $region9: #{transformer_decoder_layer.1} parent=5 // pred_check
        _
      $region10: #{transformer_decoder_layer.1} parent=5 // pred_check_branch
        %495 = sbr.rel (%p492) target = $region12
      $region11: #{transformer_decoder_layer.1} parent=5 // pred_region
        %s496 = ssub.s32 %s26, 1
        // Predicated region
        $region13: #{transformer_decoder_layer.1} parent=11 // pred_check
          %p497 = pneg %p99
        $region14: #{transformer_decoder_layer.1} parent=11 // pred_check_branch
          %499 = sbr.rel (%p497) target = $region16
        $region15: #{transformer_decoder_layer.1} parent=11 // pred_region
          _
        $region16: #{transformer_decoder_layer.1} parent=11 // pred_fallthru
          _
        // Predicated region
        $region17: #{transformer_decoder_layer.1} parent=11 // pred_check
          %p500 = pneg %p120
        $region18: #{transformer_decoder_layer.1} parent=11 // pred_check_branch
          %502 = sbr.rel (%p500) target = $region20
        $region19: #{transformer_decoder_layer.1} parent=11 // pred_region
          _
        $region20: #{transformer_decoder_layer.1} parent=11 // pred_fallthru
          _
        // Predicated region
        $region21: #{transformer_decoder_layer.1} parent=11 // pred_check
          %p503 = pneg %p141
        $region22: #{transformer_decoder_layer.1} parent=11 // pred_check_branch
          %505 = sbr.rel (%p503) target = $region24
        $region23: #{transformer_decoder_layer.1} parent=11 // pred_region
          _
        $region24: #{transformer_decoder_layer.1} parent=11 // pred_fallthru
          _
        // Predicated region
        $region25: #{transformer_decoder_layer.1} parent=11 // pred_check
          %p506 = pneg %p162
        $region26: #{transformer_decoder_layer.1} parent=11 // pred_check_branch
          %508 = sbr.rel (%p506) target = $region28
        $region27: #{transformer_decoder_layer.1} parent=11 // pred_region
          _
        $region28: #{transformer_decoder_layer.1} parent=11 // pred_fallthru
          _
        // Predicated region
        $region29: #{transformer_decoder_layer.1} parent=11 // pred_check
          %p509 = pneg %p183
        $region30: #{transformer_decoder_layer.1} parent=11 // pred_check_branch
          %511 = sbr.rel (%p509) target = $region32
        $region31: #{transformer_decoder_layer.1} parent=11 // pred_region
          _
        $region32: #{transformer_decoder_layer.1} parent=11 // pred_fallthru
          _
        // Predicated region
        $region33: #{transformer_decoder_layer.1} parent=11 // pred_check
          %p512 = pneg %p204
        $region34: #{transformer_decoder_layer.1} parent=11 // pred_check_branch
          %514 = sbr.rel (%p512) target = $region36
        $region35: #{transformer_decoder_layer.1} parent=11 // pred_region
          _
        $region36: #{transformer_decoder_layer.1} parent=11 // pred_fallthru
          _
        // Predicated region
        $region37: #{transformer_decoder_layer.1} parent=11 // pred_check
          %p515 = pneg %p225
        $region38: #{transformer_decoder_layer.1} parent=11 // pred_check_branch
          %517 = sbr.rel (%p515) target = $region40
        $region39: #{transformer_decoder_layer.1} parent=11 // pred_region
          _
        $region40: #{transformer_decoder_layer.1} parent=11 // pred_fallthru
          _
        // Predicated region
        $region41: #{transformer_decoder_layer.1} parent=11 // pred_check
          %p518 = pneg %p246
        $region42: #{transformer_decoder_layer.1} parent=11 // pred_check_branch
          %520 = sbr.rel (%p518) target = $region44
        $region43: #{transformer_decoder_layer.1} parent=11 // pred_region
          _
        $region44: #{transformer_decoder_layer.1} parent=11 // pred_fallthru
          _
        // Predicated region
        $region45: #{transformer_decoder_layer.1} parent=11 // pred_check
          %p521 = pneg %p267
        $region46: #{transformer_decoder_layer.1} parent=11 // pred_check_branch
          %523 = sbr.rel (%p521) target = $region48
        $region47: #{transformer_decoder_layer.1} parent=11 // pred_region
          _
        $region48: #{transformer_decoder_layer.1} parent=11 // pred_fallthru
          _
        // Predicated region
        $region49: #{transformer_decoder_layer.1} parent=11 // pred_check
          %p524 = pneg %p288
        $region50: #{transformer_decoder_layer.1} parent=11 // pred_check_branch
          %526 = sbr.rel (%p524) target = $region52
        $region51: #{transformer_decoder_layer.1} parent=11 // pred_region
          _
        $region52: #{transformer_decoder_layer.1} parent=11 // pred_fallthru
          _
        // Predicated region
        $region53: #{transformer_decoder_layer.1} parent=11 // pred_check
          %p527 = pneg %p309
        $region54: #{transformer_decoder_layer.1} parent=11 // pred_check_branch
          %529 = sbr.rel (%p527) target = $region56
        $region55: #{transformer_decoder_layer.1} parent=11 // pred_region
          _
        $region56: #{transformer_decoder_layer.1} parent=11 // pred_fallthru
          _
        // Predicated region
        $region57: #{transformer_decoder_layer.1} parent=11 // pred_check
          %p530 = pneg %p330
        $region58: #{transformer_decoder_layer.1} parent=11 // pred_check_branch
          %532 = sbr.rel (%p530) target = $region60
        $region59: #{transformer_decoder_layer.1} parent=11 // pred_region
          _
        $region60: #{transformer_decoder_layer.1} parent=11 // pred_fallthru
          _
        // Predicated region
        $region61: #{transformer_decoder_layer.1} parent=11 // pred_check
          %p533 = pneg %p351
        $region62: #{transformer_decoder_layer.1} parent=11 // pred_check_branch
          %535 = sbr.rel (%p533) target = $region64
        $region63: #{transformer_decoder_layer.1} parent=11 // pred_region
          _
        $region64: #{transformer_decoder_layer.1} parent=11 // pred_fallthru
          _
        // Predicated region
        $region65: #{transformer_decoder_layer.1} parent=11 // pred_check
          %p536 = pneg %p372
        $region66: #{transformer_decoder_layer.1} parent=11 // pred_check_branch
          %538 = sbr.rel (%p536) target = $region68
        $region67: #{transformer_decoder_layer.1} parent=11 // pred_region
          _
        $region68: #{transformer_decoder_layer.1} parent=11 // pred_fallthru
          _
        // Predicated region
        $region69: #{transformer_decoder_layer.1} parent=11 // pred_check
          %p539 = pneg %p393
        $region70: #{transformer_decoder_layer.1} parent=11 // pred_check_branch
          %541 = sbr.rel (%p539) target = $region72
        $region71: #{transformer_decoder_layer.1} parent=11 // pred_region
          _
        $region72: #{transformer_decoder_layer.1} parent=11 // pred_fallthru
          _
        // Predicated region
        $region73: #{transformer_decoder_layer.1} parent=11 // pred_check
          %p542 = pneg %p414
        $region74: #{transformer_decoder_layer.1} parent=11 // pred_check_branch
          %544 = sbr.rel (%p542) target = $region76
        $region75: #{transformer_decoder_layer.1} parent=11 // pred_region
          _
        $region76: #{transformer_decoder_layer.1} parent=11 // pred_fallthru
          _
        // Predicated region
        $region77: #{transformer_decoder_layer.1} parent=11 // pred_check
          %p545 = pneg %p435
        $region78: #{transformer_decoder_layer.1} parent=11 // pred_check_branch
          %547 = sbr.rel (%p545) target = $region80
        $region79: #{transformer_decoder_layer.1} parent=11 // pred_region
          _
        $region80: #{transformer_decoder_layer.1} parent=11 // pred_fallthru
          _
        // Predicated region
        $region81: #{transformer_decoder_layer.1} parent=11 // pred_check
          %p548 = pneg %p456
        $region82: #{transformer_decoder_layer.1} parent=11 // pred_check_branch
          %550 = sbr.rel (%p548) target = $region84
        $region83: #{transformer_decoder_layer.1} parent=11 // pred_region
          _
        $region84: #{transformer_decoder_layer.1} parent=11 // pred_fallthru
          _
      $region12: #{transformer_decoder_layer.1} parent=5 // pred_fallthru
        _
      %p551 = scmp.lt.s32.totalorder %s26, 2
      // Predicated region
      $region85: #{transformer_decoder_layer.1} parent=5 // pred_check
        %p552 = pneg %p551
      $region86: #{transformer_decoder_layer.1} parent=5 // pred_check_branch
        %554 = sbr.rel (%p552) target = $region88
      $region87: #{transformer_decoder_layer.1} parent=5 // pred_region
        // Predicated region
        $region89: #{transformer_decoder_layer.1} parent=87 // pred_check
          %p555 = pneg %p46
        $region90: #{transformer_decoder_layer.1} parent=87 // pred_check_branch
          %557 = sbr.rel (%p555) target = $region92
        $region91: #{transformer_decoder_layer.1} parent=87 // pred_region
          %p558 = scmp.lt.s32.totalorder %s26, 1
          %s559 = scalar_select %p558, %s26, 1
          %s560 = smul.addr %s559, 8
          %s561 = scalar_lea.vmem %s0, %s560
        $region92: #{transformer_decoder_layer.1} parent=87 // pred_fallthru
          _
        // Predicated region
        $region93: #{transformer_decoder_layer.1} parent=87 // pred_check
          %p562 = pneg %p72
        $region94: #{transformer_decoder_layer.1} parent=87 // pred_check_branch
          %564 = sbr.rel (%p562) target = $region96
        $region95: #{transformer_decoder_layer.1} parent=87 // pred_region
          %s565 = sand.u32 %s62, 1
          %s566 = sand.u32 %s62, 1
          %s567 = smul.addr %s566, 16
          %s568 = scalar_lea.vmem [#allocation2], %s567
          %s569 = smul.addr %s26, 8
          %s570 = scalar_lea.vmem %s1, %s569
          // Predicated region
          $region97: #{transformer_decoder_layer.1} parent=95 // pred_check
            _
          $region98: #{transformer_decoder_layer.1} parent=95 // pred_check_branch
            %572 = sbr.rel (0) target = $region100
          $region99: #{transformer_decoder_layer.1} parent=95 // pred_region
            // Predicated region
            $region101: #{transformer_decoder_layer.1} parent=99 // pred_check
              _
            $region102: #{transformer_decoder_layer.1} parent=99 // pred_check_branch
              %574 = sbr.rel (0) target = $region104
            $region103: #{transformer_decoder_layer.1} parent=99 // pred_region
              // Predicated region
              $region116: #{transformer_decoder_layer.1} parent=103 // pred_check
                _
              $region117: #{transformer_decoder_layer.1} parent=103 // pred_check_branch
                %592 = sbr.rel (0) target = $region119
              $region118: #{transformer_decoder_layer.1} parent=103 // pred_region
                loop: start=0, step=1, limit=1
                $region120: #{transformer_decoder_layer.1} parent=118 // loop_pre_header
                  _
                $region121: #{transformer_decoder_layer.1} parent=118 // loop_header
                  %s594 = sphi 0, %s598
                  %p595 = scmp.ge.s32.totalorder %s594, 1
                  %s599 = sphi %s570, %s570
                  %s600 = sphi %s568, %s568
                $region122: #{transformer_decoder_layer.1} parent=118 // loop_header_branch
                  %597 = sbr.rel (%p595) target = $region126
                $region123: #{transformer_decoder_layer.1} parent=118 // loop_body
                  %v601 = vld [vmem:[%s599] sm:$0xff]
                  %602 = vst [vmem:[%s600] sm:$0xff] %v601
                  %v603 = vld [vmem:[%s599 + $0x10] sm:$0xff]
                  %604 = vst [vmem:[%s600 + $0x8] sm:$0xff] %v603
                $region124: #{transformer_decoder_layer.1} parent=118 // loop_footer
                  %s598 = sadd.s32 1, %s594
                $region125: #{transformer_decoder_layer.1} parent=118 // loop_footer_branch
                  %593 = sbr.rel target = $region121
                $region126: #{transformer_decoder_layer.1} parent=118 // loop_exit
                  _
              $region119: #{transformer_decoder_layer.1} parent=103 // pred_fallthru
                _
              // Predicated region
              $region127: #{transformer_decoder_layer.1} parent=103 // pred_check
                _
              $region128: #{transformer_decoder_layer.1} parent=103 // pred_check_branch
                %606 = sbr.rel target = $region130
              $region129: #{transformer_decoder_layer.1} parent=103 // pred_region
                _
              $region130: #{transformer_decoder_layer.1} parent=103 // pred_fallthru
                _
            $region104: #{transformer_decoder_layer.1} parent=99 // pred_fallthru
              _
            // Predicated region
            $region105: #{transformer_decoder_layer.1} parent=99 // pred_check
              _
            $region106: #{transformer_decoder_layer.1} parent=99 // pred_check_branch
              %576 = sbr.rel target = $region108
            $region107: #{transformer_decoder_layer.1} parent=99 // pred_region
              %s578 = ssub.s32 256, 1
              loop: start=0, step=1, limit=1
              $region109: #{transformer_decoder_layer.1} parent=107 // loop_pre_header
                _
              $region110: #{transformer_decoder_layer.1} parent=107 // loop_header
                %s580 = sphi 0, %s584
                %p581 = scmp.ge.s32.totalorder %s580, 1
                %s585 = sphi %s570, %s570
                %s586 = sphi %s568, %s568
              $region111: #{transformer_decoder_layer.1} parent=107 // loop_header_branch
                %583 = sbr.rel (%p581) target = $region115
              $region112: #{transformer_decoder_layer.1} parent=107 // loop_body
                %v587 = vld [vmem:[%s585] sm:%s578]
                %588 = vst [vmem:[%s586] sm:%s578] %v587
                %v589 = vld [vmem:[%s585 + $0x10] sm:%s578]
                %590 = vst [vmem:[%s586 + $0x8] sm:%s578] %v589
              $region113: #{transformer_decoder_layer.1} parent=107 // loop_footer
                %s584 = sadd.s32 1, %s580
              $region114: #{transformer_decoder_layer.1} parent=107 // loop_footer_branch
                %579 = sbr.rel target = $region110
              $region115: #{transformer_decoder_layer.1} parent=107 // loop_exit
                _
            $region108: #{transformer_decoder_layer.1} parent=99 // pred_fallthru
              _
          $region100: #{transformer_decoder_layer.1} parent=95 // pred_fallthru
            _
          %607 = vnop
        $region96: #{transformer_decoder_layer.1} parent=87 // pred_fallthru
          _
      $region88: #{transformer_decoder_layer.1} parent=5 // pred_fallthru
        _
      %p608 = scmp.le.s32.totalorder 1, %s26
      %p609 = scmp.lt.s32.totalorder %s26, 3
      %p610 = pnand %p608, %p609
      %p611 = pneg %p610
      // Predicated region
      $region131: #{transformer_decoder_layer.1} parent=5 // pred_check
        _
      $region132: #{transformer_decoder_layer.1} parent=5 // pred_check_branch
        %613 = sbr.rel (%p610) target = $region134
      $region133: #{transformer_decoder_layer.1} parent=5 // pred_region
        %s614 = ssub.s32 %s26, 1
        %s615 = sand.u32 %s65, 1
        %s616 = sand.u32 %s65, 1
        %s617 = smul.addr %s616, 16
        %s618 = scalar_lea.vmem [#allocation2], %s617
        // Predicated region
        $region135: #{transformer_decoder_layer.1} parent=133 // pred_check
          %p619 = pneg %p78
        $region136: #{transformer_decoder_layer.1} parent=133 // pred_check_branch
          %621 = sbr.rel (%p619) target = $region138
        $region137: #{transformer_decoder_layer.1} parent=133 // pred_region
          _
        $region138: #{transformer_decoder_layer.1} parent=133 // pred_fallthru
          _
        %p622 = scmp.lt.s32.totalorder %s31, 1
        %s623 = scalar_select %p622, %s31, 1
        %s624 = smul.addr %s623, 8
        %s625 = scalar_lea.vmem %s0, %s624
        %p626 = pneg %p52
        %p627 = pneg %p49
        %s628 = sand.u32 %s65, 1
        %s629 = sand.u32 %s65, 1
        %s630 = smul.addr %s629, 16
        %s631 = scalar_lea.vmem [#allocation2], %s630
        %p632 = pneg %p78
        %p633 = pneg %p75
        %p634 = pneg %p99
        %p635 = pneg %p96
        %p636 = pneg %p120
        %p637 = pneg %p117
        %p638 = pneg %p141
        %p639 = pneg %p138
        %p640 = pneg %p162
        %p641 = pneg %p159
        %p642 = pneg %p183
        %p643 = pneg %p180
        %p644 = pneg %p204
        %p645 = pneg %p201
        %p646 = pneg %p225
        %p647 = pneg %p222
        %p648 = pneg %p246
        %p649 = pneg %p243
        %p650 = pneg %p267
        %p651 = pneg %p264
        %p652 = pneg %p288
        %p653 = pneg %p285
        %p654 = pneg %p309
        %p655 = pneg %p306
        %p656 = pneg %p330
        %p657 = pneg %p327
        %p658 = pneg %p351
        %p659 = pneg %p348
        %p660 = pneg %p372
        %p661 = pneg %p369
        %p662 = pneg %p393
        %p663 = pneg %p390
        %p664 = pneg %p414
        %p665 = pneg %p411
        %p666 = pneg %p435
        %p667 = pneg %p432
        %p668 = pneg %p456
        %p669 = pneg %p453
        %p670 = pneg %p482
        %p671 = pneg %p479
        %p672 = scmp.lt.s32.totalorder %s31, 1
        %s673 = scalar_select %p672, %s31, 1
        %s674 = smul.addr %s673, 8
        %s675 = scalar_lea.vmem %s20, %s674
        %p676 = scmp.lt.s32.totalorder %s31, 1
        %s677 = scalar_select %p676, %s31, 1
        %s678 = smul.addr %s677, 8
        %s679 = scalar_lea.vmem %s0, %s678
        %p680 = scmp.lt.s32.totalorder %s31, 1
        %s681 = scalar_select %p680, %s31, 1
        %s682 = smul.addr %s681, 8
        %s683 = scalar_lea.vmem %s20, %s682
        %v685 = vld [vmem:[%s679] sm:$0xff]
        %v686 = vld [vmem:[%s618] sm:$0xff]
        %v687 = vld [vmem:[%s618 + $0x8] sm:$0xff]
        %v688 = vld [vmem:[%s2] sm:$0x1]
        %v689 = vld [vmem:[%s3] sm:$0x1]
        %690 = vadd.xlane.f32.xlu0 %v685
        %v691 = vpop.xlane.xlu0 %690
        %v692 = vrcp.pop 128.0
        %v693 = vmul.f32 %v691, %v692
        %v694 = vsub.f32 %v685, %v693
        %v695 = vmul.f32 %v694, %v694
        %696 = vadd.xlane.f32.xlu0 %v695
        %v697 = vpop.xlane.xlu0 %696
        %v698 = vmul.f32 %v697, %v692
        %v699 = vadd.f32 %v698, 1e-05
        %v700 = vrsqrt.pop %v699
        %v701 = vmul.f32 %v694, %v700
        %v703 = vlaneseq
        %v704 = vshrl.u32 %v703, 7
        %v705 = vsub.s32 0, %v704
        %v706 = vrot.slane %v688, %v705
        %v708 = vmul.f32 %v701, %v706
        %v710 = vlaneseq
        %v711 = vshrl.u32 %v710, 7
        %v712 = vsub.s32 0, %v711
        %v713 = vrot.slane %v689, %v712
        %v715 = vadd.f32 %v708, %v713
        %v716 = vpack.c.bf16 %v715, %v715
        %v717 = vld [vmem:[%s8] sm:$0xf]
        %v718 = vld [vmem:[%s8 + $0x4] sm:$0xf]
        %v719 = vld [vmem:[%s8 + $0x8] sm:$0xf]
        %v720 = vld [vmem:[%s8 + $0xc] sm:$0xf]
        %v721 = vld [vmem:[%s8 + $0x10] sm:$0xf]
        %v722 = vld [vmem:[%s8 + $0x14] sm:$0xf]
        %v723 = vld [vmem:[%s8 + $0x18] sm:$0xf]
        %v724 = vld [vmem:[%s8 + $0x1c] sm:$0xf]
        %v725 = vld [vmem:[%s8 + $0x20] sm:$0xf]
        %v726 = vld [vmem:[%s8 + $0x24] sm:$0xf]
        %v727 = vld [vmem:[%s8 + $0x28] sm:$0xf]
        %v728 = vld [vmem:[%s8 + $0x2c] sm:$0xf]
        %v729 = vld [vmem:[%s8 + $0x30] sm:$0xf]
        %v730 = vld [vmem:[%s8 + $0x34] sm:$0xf]
        %v731 = vld [vmem:[%s8 + $0x38] sm:$0xf]
        %v732 = vld [vmem:[%s8 + $0x3c] sm:$0xf]
        %v733 = vld [vmem:[%s9] sm:$0x1]
        %v735 = vlaneseq
        %v736 = vshrl.u32 %v735, 7
        %v737 = vsub.s32 0, %v736
        %v738 = vrot.slane %v733, %v737
        %v756 = vunpack.c.l.b16 %v717
        %v757 = vunpack.c.l.b16 %v718
        %v758 = vunpack.c.l.b16 %v719
        %v759 = vunpack.c.l.b16 %v720
        %v760 = vunpack.c.l.b16 %v721
        %v761 = vunpack.c.l.b16 %v722
        %v762 = vunpack.c.l.b16 %v723
        %v763 = vunpack.c.l.b16 %v724
        %v764 = vunpack.c.l.b16 %v725
        %v765 = vunpack.c.l.b16 %v726
        %v766 = vunpack.c.l.b16 %v727
        %v767 = vunpack.c.l.b16 %v728
        %v768 = vunpack.c.l.b16 %v729
        %v769 = vunpack.c.l.b16 %v730
        %v770 = vunpack.c.l.b16 %v731
        %v771 = vunpack.c.l.b16 %v732
        %v772 = vpack.c.b16 %v757, %v756
        %v773 = vpack.c.b16 %v759, %v758
        %v774 = vpack.c.b16 %v761, %v760
        %v775 = vpack.c.b16 %v763, %v762
        %v776 = vpack.c.b16 %v765, %v764
        %v777 = vpack.c.b16 %v767, %v766
        %v778 = vpack.c.b16 %v769, %v768
        %v779 = vpack.c.b16 %v771, %v770
        %788 = vmatprep.subr.bf16.mxu0 0
        %789 = vmatpush1.bf16.msra.mxu0 %v779
        %790 = vmatprep.subr.bf16.mxu0 0
        %791 = vmatpush1.bf16.msra.mxu0 %v778
        %792 = vmatprep.subr.bf16.mxu0 0
        %793 = vmatpush1.bf16.msra.mxu0 %v777
        %794 = vmatprep.subr.bf16.mxu0 0
        %795 = vmatpush1.bf16.msra.mxu0 %v776
        %796 = vmatprep.subr.bf16.mxu0 0
        %797 = vmatpush1.bf16.msra.mxu0 %v775
        %798 = vmatprep.subr.bf16.mxu0 0
        %799 = vmatpush1.bf16.msra.mxu0 %v774
        %800 = vmatprep.subr.bf16.mxu0 0
        %801 = vmatpush1.bf16.msra.mxu0 %v773
        %802 = vmatprep.subr.bf16.mxu0 0
        %803 = vmatpush1.bf16.msra.mxu0 %v772
        %804 = vmatprep.subr.bf16.mxu0 0
        %805 = vmatpush2.bf16.msra.mxu0 0
        %806 = vmatprep.subr.bf16.mxu0 0
        %807 = vmatpush2.bf16.msra.mxu0 0
        %808 = vmatprep.subr.bf16.mxu0 0
        %809 = vmatpush2.bf16.msra.mxu0 0
        %810 = vmatprep.subr.bf16.mxu0 0
        %811 = vmatpush2.bf16.msra.mxu0 0
        %812 = vmatprep.subr.bf16.mxu0 0
        %813 = vmatpush2.bf16.msra.mxu0 0
        %814 = vmatprep.subr.bf16.mxu0 0
        %815 = vmatpush2.bf16.msra.mxu0 0
        %816 = vmatprep.subr.bf16.mxu0 0
        %817 = vmatpush2.bf16.msra.mxu0 0
        %818 = vmatprep.subr.bf16.mxu0 0
        %819 = vmatpush2.bf16.msra.mxu0 0
        %820 = vmatprep.mubr.bf16.mxu0 0
        %821 = vmatmul.mubr.bf16.gmra.mxu0 %v716
        %v822 = vpop.f32.mrf.mxu0
        %v823 = vadd.f32 %v738, %v822
        %v824 = vpop.f32.mrf.mxu0
        %v825 = vpop.f32.mrf.mxu0
        %v826 = vpop.f32.mrf.mxu0
        %827 = vdwg.mxu0
        %s828 = scalar_lea.vmem %s8, 512
        %v829 = vld [vmem:[%s828] sm:$0xf]
        %v830 = vld [vmem:[%s828 + $0x4] sm:$0xf]
        %v831 = vld [vmem:[%s828 + $0x8] sm:$0xf]
        %v832 = vld [vmem:[%s828 + $0xc] sm:$0xf]
        %v833 = vld [vmem:[%s828 + $0x10] sm:$0xf]
        %v834 = vld [vmem:[%s828 + $0x14] sm:$0xf]
        %v835 = vld [vmem:[%s828 + $0x18] sm:$0xf]
        %v836 = vld [vmem:[%s828 + $0x1c] sm:$0xf]
        %v837 = vld [vmem:[%s828 + $0x20] sm:$0xf]
        %v838 = vld [vmem:[%s828 + $0x24] sm:$0xf]
        %v839 = vld [vmem:[%s828 + $0x28] sm:$0xf]
        %v840 = vld [vmem:[%s828 + $0x2c] sm:$0xf]
        %v841 = vld [vmem:[%s828 + $0x30] sm:$0xf]
        %v842 = vld [vmem:[%s828 + $0x34] sm:$0xf]
        %v843 = vld [vmem:[%s828 + $0x38] sm:$0xf]
        %v844 = vld [vmem:[%s828 + $0x3c] sm:$0xf]
        %s845 = scalar_lea.vmem %s9, 8
        %v846 = vld [vmem:[%s845] sm:$0x1]
        %v848 = vlaneseq
        %v849 = vshrl.u32 %v848, 7
        %v850 = vsub.s32 0, %v849
        %v851 = vrot.slane %v846, %v850
        %v869 = vunpack.c.l.b16 %v829
        %v870 = vunpack.c.l.b16 %v830
        %v871 = vunpack.c.l.b16 %v831
        %v872 = vunpack.c.l.b16 %v832
        %v873 = vunpack.c.l.b16 %v833
        %v874 = vunpack.c.l.b16 %v834
        %v875 = vunpack.c.l.b16 %v835
        %v876 = vunpack.c.l.b16 %v836
        %v877 = vunpack.c.l.b16 %v837
        %v878 = vunpack.c.l.b16 %v838
        %v879 = vunpack.c.l.b16 %v839
        %v880 = vunpack.c.l.b16 %v840
        %v881 = vunpack.c.l.b16 %v841
        %v882 = vunpack.c.l.b16 %v842
        %v883 = vunpack.c.l.b16 %v843
        %v884 = vunpack.c.l.b16 %v844
        %v885 = vpack.c.b16 %v870, %v869
        %v886 = vpack.c.b16 %v872, %v871
        %v887 = vpack.c.b16 %v874, %v873
        %v888 = vpack.c.b16 %v876, %v875
        %v889 = vpack.c.b16 %v878, %v877
        %v890 = vpack.c.b16 %v880, %v879
        %v891 = vpack.c.b16 %v882, %v881
        %v892 = vpack.c.b16 %v884, %v883
        %901 = vmatprep.subr.bf16.mxu0 0
        %902 = vmatpush1.bf16.msra.mxu0 %v892
        %903 = vmatprep.subr.bf16.mxu0 0
        %904 = vmatpush1.bf16.msra.mxu0 %v891
        %905 = vmatprep.subr.bf16.mxu0 0
        %906 = vmatpush1.bf16.msra.mxu0 %v890
        %907 = vmatprep.subr.bf16.mxu0 0
        %908 = vmatpush1.bf16.msra.mxu0 %v889
        %909 = vmatprep.subr.bf16.mxu0 0
        %910 = vmatpush1.bf16.msra.mxu0 %v888
        %911 = vmatprep.subr.bf16.mxu0 0
        %912 = vmatpush1.bf16.msra.mxu0 %v887
        %913 = vmatprep.subr.bf16.mxu0 0
        %914 = vmatpush1.bf16.msra.mxu0 %v886
        %915 = vmatprep.subr.bf16.mxu0 0
        %916 = vmatpush1.bf16.msra.mxu0 %v885
        %917 = vmatprep.subr.bf16.mxu0 0
        %918 = vmatpush2.bf16.msra.mxu0 0
        %919 = vmatprep.subr.bf16.mxu0 0
        %920 = vmatpush2.bf16.msra.mxu0 0
        %921 = vmatprep.subr.bf16.mxu0 0
        %922 = vmatpush2.bf16.msra.mxu0 0
        %923 = vmatprep.subr.bf16.mxu0 0
        %924 = vmatpush2.bf16.msra.mxu0 0
        %925 = vmatprep.subr.bf16.mxu0 0
        %926 = vmatpush2.bf16.msra.mxu0 0
        %927 = vmatprep.subr.bf16.mxu0 0
        %928 = vmatpush2.bf16.msra.mxu0 0
        %929 = vmatprep.subr.bf16.mxu0 0
        %930 = vmatpush2.bf16.msra.mxu0 0
        %931 = vmatprep.subr.bf16.mxu0 0
        %932 = vmatpush2.bf16.msra.mxu0 0
        %933 = vmatprep.mubr.bf16.mxu0 0
        %934 = vmatmul.mubr.bf16.gmra.mxu0 %v716
        %v935 = vpop.f32.mrf.mxu0
        %v936 = vadd.f32 %v851, %v935
        %v937 = vpop.f32.mrf.mxu0
        %v938 = vpop.f32.mrf.mxu0
        %v939 = vpop.f32.mrf.mxu0
        %940 = vdwg.mxu0
        %s941 = scalar_lea.vmem %s8, 1024
        %v942 = vld [vmem:[%s941] sm:$0xf]
        %v943 = vld [vmem:[%s941 + $0x4] sm:$0xf]
        %v944 = vld [vmem:[%s941 + $0x8] sm:$0xf]
        %v945 = vld [vmem:[%s941 + $0xc] sm:$0xf]
        %v946 = vld [vmem:[%s941 + $0x10] sm:$0xf]
        %v947 = vld [vmem:[%s941 + $0x14] sm:$0xf]
        %v948 = vld [vmem:[%s941 + $0x18] sm:$0xf]
        %v949 = vld [vmem:[%s941 + $0x1c] sm:$0xf]
        %v950 = vld [vmem:[%s941 + $0x20] sm:$0xf]
        %v951 = vld [vmem:[%s941 + $0x24] sm:$0xf]
        %v952 = vld [vmem:[%s941 + $0x28] sm:$0xf]
        %v953 = vld [vmem:[%s941 + $0x2c] sm:$0xf]
        %v954 = vld [vmem:[%s941 + $0x30] sm:$0xf]
        %v955 = vld [vmem:[%s941 + $0x34] sm:$0xf]
        %v956 = vld [vmem:[%s941 + $0x38] sm:$0xf]
        %v957 = vld [vmem:[%s941 + $0x3c] sm:$0xf]
        %s958 = scalar_lea.vmem %s9, 16
        %v959 = vld [vmem:[%s958] sm:$0x1]
        %v961 = vlaneseq
        %v962 = vshrl.u32 %v961, 7
        %v963 = vsub.s32 0, %v962
        %v964 = vrot.slane %v959, %v963
        %v982 = vunpack.c.l.b16 %v942
        %v983 = vunpack.c.l.b16 %v943
        %v984 = vunpack.c.l.b16 %v944
        %v985 = vunpack.c.l.b16 %v945
        %v986 = vunpack.c.l.b16 %v946
        %v987 = vunpack.c.l.b16 %v947
        %v988 = vunpack.c.l.b16 %v948
        %v989 = vunpack.c.l.b16 %v949
        %v990 = vunpack.c.l.b16 %v950
        %v991 = vunpack.c.l.b16 %v951
        %v992 = vunpack.c.l.b16 %v952
        %v993 = vunpack.c.l.b16 %v953
        %v994 = vunpack.c.l.b16 %v954
        %v995 = vunpack.c.l.b16 %v955
        %v996 = vunpack.c.l.b16 %v956
        %v997 = vunpack.c.l.b16 %v957
        %v998 = vpack.c.b16 %v983, %v982
        %v999 = vpack.c.b16 %v985, %v984
        %v1000 = vpack.c.b16 %v987, %v986
        %v1001 = vpack.c.b16 %v989, %v988
        %v1002 = vpack.c.b16 %v991, %v990
        %v1003 = vpack.c.b16 %v993, %v992
        %v1004 = vpack.c.b16 %v995, %v994
        %v1005 = vpack.c.b16 %v997, %v996
        %1014 = vmatprep.subr.bf16.mxu0 0
        %1015 = vmatpush1.bf16.msra.mxu0 %v1005
        %1016 = vmatprep.subr.bf16.mxu0 0
        %1017 = vmatpush1.bf16.msra.mxu0 %v1004
        %1018 = vmatprep.subr.bf16.mxu0 0
        %1019 = vmatpush1.bf16.msra.mxu0 %v1003
        %1020 = vmatprep.subr.bf16.mxu0 0
        %1021 = vmatpush1.bf16.msra.mxu0 %v1002
        %1022 = vmatprep.subr.bf16.mxu0 0
        %1023 = vmatpush1.bf16.msra.mxu0 %v1001
        %1024 = vmatprep.subr.bf16.mxu0 0
        %1025 = vmatpush1.bf16.msra.mxu0 %v1000
        %1026 = vmatprep.subr.bf16.mxu0 0
        %1027 = vmatpush1.bf16.msra.mxu0 %v999
        %1028 = vmatprep.subr.bf16.mxu0 0
        %1029 = vmatpush1.bf16.msra.mxu0 %v998
        %1030 = vmatprep.subr.bf16.mxu0 0
        %1031 = vmatpush2.bf16.msra.mxu0 0
        %1032 = vmatprep.subr.bf16.mxu0 0
        %1033 = vmatpush2.bf16.msra.mxu0 0
        %1034 = vmatprep.subr.bf16.mxu0 0
        %1035 = vmatpush2.bf16.msra.mxu0 0
        %1036 = vmatprep.subr.bf16.mxu0 0
        %1037 = vmatpush2.bf16.msra.mxu0 0
        %1038 = vmatprep.subr.bf16.mxu0 0
        %1039 = vmatpush2.bf16.msra.mxu0 0
        %1040 = vmatprep.subr.bf16.mxu0 0
        %1041 = vmatpush2.bf16.msra.mxu0 0
        %1042 = vmatprep.subr.bf16.mxu0 0
        %1043 = vmatpush2.bf16.msra.mxu0 0
        %1044 = vmatprep.subr.bf16.mxu0 0
        %1045 = vmatpush2.bf16.msra.mxu0 0
        %1046 = vmatprep.mubr.bf16.mxu0 0
        %1047 = vmatmul.mubr.bf16.gmra.mxu0 %v716
        %v1048 = vpop.f32.mrf.mxu0
        %v1049 = vadd.f32 %v964, %v1048
        %v1050 = vpop.f32.mrf.mxu0
        %v1051 = vpop.f32.mrf.mxu0
        %v1052 = vpop.f32.mrf.mxu0
        %1053 = vdwg.mxu0
        %v1054 = vpack.c.bf16 %v823, %v823
        %v1055 = vpack.c.bf16 %v936, %v936
        %vm1056 = vcmask 130048
        %v1058 = vsel %vm1056, %v1054, 0
        %v1061 = vsel %vm1056, %v1055, 0
        %1063 = vmatprep.subr.bf16.mxu0 0
        %1064 = vmatpush1.bf16.xpose.msra.mxu0 0
        %1065 = vmatprep.subr.bf16.mxu0 0
        %1066 = vmatpush1.bf16.xpose.msra.mxu0 0
        %1067 = vmatprep.subr.bf16.mxu0 0
        %1068 = vmatpush1.bf16.xpose.msra.mxu0 0
        %1069 = vmatprep.subr.bf16.mxu0 0
        %1070 = vmatpush1.bf16.xpose.msra.mxu0 0
        %1071 = vmatprep.subr.bf16.mxu0 0
        %1072 = vmatpush1.bf16.xpose.msra.mxu0 0
        %1073 = vmatprep.subr.bf16.mxu0 0
        %1074 = vmatpush1.bf16.xpose.msra.mxu0 0
        %1075 = vmatprep.subr.bf16.mxu0 0
        %1076 = vmatpush1.bf16.xpose.msra.mxu0 0
        %1077 = vmatprep.subr.bf16.mxu0 0
        %1078 = vmatpush1.bf16.xpose.msra.mxu0 %v1061
        %1079 = vmatprep.subr.bf16.mxu0 0
        %1080 = vmatpush2.bf16.xpose.msra.mxu0 0
        %1081 = vmatprep.subr.bf16.mxu0 0
        %1082 = vmatpush2.bf16.xpose.msra.mxu0 0
        %1083 = vmatprep.subr.bf16.mxu0 0
        %1084 = vmatpush2.bf16.xpose.msra.mxu0 0
        %1085 = vmatprep.subr.bf16.mxu0 0
        %1086 = vmatpush2.bf16.xpose.msra.mxu0 0
        %1087 = vmatprep.subr.bf16.mxu0 0
        %1088 = vmatpush2.bf16.xpose.msra.mxu0 0
        %1089 = vmatprep.subr.bf16.mxu0 0
        %1090 = vmatpush2.bf16.xpose.msra.mxu0 0
        %1091 = vmatprep.subr.bf16.mxu0 0
        %1092 = vmatpush2.bf16.xpose.msra.mxu0 0
        %1093 = vmatprep.subr.bf16.mxu0 0
        %1094 = vmatpush2.bf16.xpose.msra.mxu0 0
        %1095 = vmatprep.mubr.bf16.mxu0 0
        %1096 = vmatmul.mubr.bf16.gmra.mxu0 %v1058
        %v1097 = vpop.f32.mrf.mxu0
        %v1098 = vadd.f32 0.0, %v1097
        %v1099 = vpop.f32.mrf.mxu0
        %v1100 = vpop.f32.mrf.mxu0
        %v1101 = vpop.f32.mrf.mxu0
        %1102 = vdwg.mxu0
        %vm1103 = vcmask 64512
        %v1104 = vsel %vm1103, %v1098, -inf
        %1105 = vmax.xlane.f32.xlu0 %v1104
        %v1106 = vpop.xlane.xlu0 %1105
        %v1107 = vsub.f32 %v1098, %v1106
        %v1108 = vmul.f32 %v1107, 1.442695
        %v1109 = vpow.pop %v1108
        %v1110 = vsel %vm1103, %v1109, 0.0
        %1111 = vadd.xlane.f32.xlu0 %v1110
        %v1112 = vpop.xlane.xlu0 %1111
        %v1113 = vrcp.pop %v1112
        %v1114 = vmul.f32 %v1109, %v1113
        %v1115 = vpack.c.bf16 %v1114, %v1114
        %v1116 = vpack.c.bf16 %v1049, %v1049
        %v1118 = vsel %vm1103, %v1115, 0
        %vm1120 = vcmask 1043456
        %v1122 = vsel %vm1120, %v1116, 0
        %1124 = vmatprep.subr.bf16.mxu0 0
        %1125 = vmatpush1.bf16.msra.mxu0 0
        %1126 = vmatprep.subr.bf16.mxu0 0
        %1127 = vmatpush1.bf16.msra.mxu0 0
        %1128 = vmatprep.subr.bf16.mxu0 0
        %1129 = vmatpush1.bf16.msra.mxu0 0
        %1130 = vmatprep.subr.bf16.mxu0 0
        %1131 = vmatpush1.bf16.msra.mxu0 0
        %1132 = vmatprep.subr.bf16.mxu0 0
        %1133 = vmatpush1.bf16.msra.mxu0 0
        %1134 = vmatprep.subr.bf16.mxu0 0
        %1135 = vmatpush1.bf16.msra.mxu0 0
        %1136 = vmatprep.subr.bf16.mxu0 0
        %1137 = vmatpush1.bf16.msra.mxu0 0
        %1138 = vmatprep.subr.bf16.mxu0 0
        %1139 = vmatpush1.bf16.msra.mxu0 %v1122
        %1140 = vmatprep.subr.bf16.mxu0 0
        %1141 = vmatpush2.bf16.msra.mxu0 0
        %1142 = vmatprep.subr.bf16.mxu0 0
        %1143 = vmatpush2.bf16.msra.mxu0 0
        %1144 = vmatprep.subr.bf16.mxu0 0
        %1145 = vmatpush2.bf16.msra.mxu0 0
        %1146 = vmatprep.subr.bf16.mxu0 0
        %1147 = vmatpush2.bf16.msra.mxu0 0
        %1148 = vmatprep.subr.bf16.mxu0 0
        %1149 = vmatpush2.bf16.msra.mxu0 0
        %1150 = vmatprep.subr.bf16.mxu0 0
        %1151 = vmatpush2.bf16.msra.mxu0 0
        %1152 = vmatprep.subr.bf16.mxu0 0
        %1153 = vmatpush2.bf16.msra.mxu0 0
        %1154 = vmatprep.subr.bf16.mxu0 0
        %1155 = vmatpush2.bf16.msra.mxu0 0
        %1156 = vmatprep.mubr.bf16.mxu0 0
        %1157 = vmatmul.mubr.bf16.gmra.mxu0 %v1118
        %v1158 = vpop.f32.mrf.mxu0
        %v1159 = vadd.f32 0.0, %v1158
        %v1160 = vpop.f32.mrf.mxu0
        %v1161 = vpop.f32.mrf.mxu0
        %v1162 = vpop.f32.mrf.mxu0
        %1163 = vdwg.mxu0
        %v1164 = vpack.c.bf16 %v1159, %v1159
        %v1165 = vld [vmem:[%s10] sm:$0xf]
        %v1166 = vld [vmem:[%s10 + $0x4] sm:$0xf]
        %s1167 = scalar_lea.vmem %s8, 64
        %v1168 = vld [vmem:[%s1167] sm:$0xf]
        %v1169 = vld [vmem:[%s1167 + $0x4] sm:$0xf]
        %v1170 = vld [vmem:[%s1167 + $0x8] sm:$0xf]
        %v1171 = vld [vmem:[%s1167 + $0xc] sm:$0xf]
        %v1172 = vld [vmem:[%s1167 + $0x10] sm:$0xf]
        %v1173 = vld [vmem:[%s1167 + $0x14] sm:$0xf]
        %v1174 = vld [vmem:[%s1167 + $0x18] sm:$0xf]
        %v1175 = vld [vmem:[%s1167 + $0x1c] sm:$0xf]
        %v1176 = vld [vmem:[%s1167 + $0x20] sm:$0xf]
        %v1177 = vld [vmem:[%s1167 + $0x24] sm:$0xf]
        %v1178 = vld [vmem:[%s1167 + $0x28] sm:$0xf]
        %v1179 = vld [vmem:[%s1167 + $0x2c] sm:$0xf]
        %v1180 = vld [vmem:[%s1167 + $0x30] sm:$0xf]
        %v1181 = vld [vmem:[%s1167 + $0x34] sm:$0xf]
        %v1182 = vld [vmem:[%s1167 + $0x38] sm:$0xf]
        %v1183 = vld [vmem:[%s1167 + $0x3c] sm:$0xf]
        %s1184 = scalar_lea.vmem %s9, 1
        %v1185 = vld [vmem:[%s1184] sm:$0x1]
        %v1187 = vlaneseq
        %v1188 = vshrl.u32 %v1187, 7
        %v1189 = vsub.s32 0, %v1188
        %v1190 = vrot.slane %v1185, %v1189
        %v1208 = vunpack.c.l.b16 %v1168
        %v1209 = vunpack.c.l.b16 %v1169
        %v1210 = vunpack.c.l.b16 %v1170
        %v1211 = vunpack.c.l.b16 %v1171
        %v1212 = vunpack.c.l.b16 %v1172
        %v1213 = vunpack.c.l.b16 %v1173
        %v1214 = vunpack.c.l.b16 %v1174
        %v1215 = vunpack.c.l.b16 %v1175
        %v1216 = vunpack.c.l.b16 %v1176
        %v1217 = vunpack.c.l.b16 %v1177
        %v1218 = vunpack.c.l.b16 %v1178
        %v1219 = vunpack.c.l.b16 %v1179
        %v1220 = vunpack.c.l.b16 %v1180
        %v1221 = vunpack.c.l.b16 %v1181
        %v1222 = vunpack.c.l.b16 %v1182
        %v1223 = vunpack.c.l.b16 %v1183
        %v1224 = vpack.c.b16 %v1209, %v1208
        %v1225 = vpack.c.b16 %v1211, %v1210
        %v1226 = vpack.c.b16 %v1213, %v1212
        %v1227 = vpack.c.b16 %v1215, %v1214
        %v1228 = vpack.c.b16 %v1217, %v1216
        %v1229 = vpack.c.b16 %v1219, %v1218
        %v1230 = vpack.c.b16 %v1221, %v1220
        %v1231 = vpack.c.b16 %v1223, %v1222
        %1240 = vmatprep.subr.bf16.mxu0 0
        %1241 = vmatpush1.bf16.msra.mxu0 %v1231
        %1242 = vmatprep.subr.bf16.mxu0 0
        %1243 = vmatpush1.bf16.msra.mxu0 %v1230
        %1244 = vmatprep.subr.bf16.mxu0 0
        %1245 = vmatpush1.bf16.msra.mxu0 %v1229
        %1246 = vmatprep.subr.bf16.mxu0 0
        %1247 = vmatpush1.bf16.msra.mxu0 %v1228
        %1248 = vmatprep.subr.bf16.mxu0 0
        %1249 = vmatpush1.bf16.msra.mxu0 %v1227
        %1250 = vmatprep.subr.bf16.mxu0 0
        %1251 = vmatpush1.bf16.msra.mxu0 %v1226
        %1252 = vmatprep.subr.bf16.mxu0 0
        %1253 = vmatpush1.bf16.msra.mxu0 %v1225
        %1254 = vmatprep.subr.bf16.mxu0 0
        %1255 = vmatpush1.bf16.msra.mxu0 %v1224
        %1256 = vmatprep.subr.bf16.mxu0 0
        %1257 = vmatpush2.bf16.msra.mxu0 0
        %1258 = vmatprep.subr.bf16.mxu0 0
        %1259 = vmatpush2.bf16.msra.mxu0 0
        %1260 = vmatprep.subr.bf16.mxu0 0
        %1261 = vmatpush2.bf16.msra.mxu0 0
        %1262 = vmatprep.subr.bf16.mxu0 0
        %1263 = vmatpush2.bf16.msra.mxu0 0
        %1264 = vmatprep.subr.bf16.mxu0 0
        %1265 = vmatpush2.bf16.msra.mxu0 0
        %1266 = vmatprep.subr.bf16.mxu0 0
        %1267 = vmatpush2.bf16.msra.mxu0 0
        %1268 = vmatprep.subr.bf16.mxu0 0
        %1269 = vmatpush2.bf16.msra.mxu0 0
        %1270 = vmatprep.subr.bf16.mxu0 0
        %1271 = vmatpush2.bf16.msra.mxu0 0
        %1272 = vmatprep.mubr.bf16.mxu0 0
        %1273 = vmatmul.mubr.bf16.gmra.mxu0 %v716
        %v1274 = vpop.f32.mrf.mxu0
        %v1275 = vadd.f32 %v1190, %v1274
        %v1276 = vpop.f32.mrf.mxu0
        %v1277 = vpop.f32.mrf.mxu0
        %v1278 = vpop.f32.mrf.mxu0
        %1279 = vdwg.mxu0
        %s1280 = scalar_lea.vmem %s8, 576
        %v1281 = vld [vmem:[%s1280] sm:$0xf]
        %v1282 = vld [vmem:[%s1280 + $0x4] sm:$0xf]
        %v1283 = vld [vmem:[%s1280 + $0x8] sm:$0xf]
        %v1284 = vld [vmem:[%s1280 + $0xc] sm:$0xf]
        %v1285 = vld [vmem:[%s1280 + $0x10] sm:$0xf]
        %v1286 = vld [vmem:[%s1280 + $0x14] sm:$0xf]
        %v1287 = vld [vmem:[%s1280 + $0x18] sm:$0xf]
        %v1288 = vld [vmem:[%s1280 + $0x1c] sm:$0xf]
        %v1289 = vld [vmem:[%s1280 + $0x20] sm:$0xf]
        %v1290 = vld [vmem:[%s1280 + $0x24] sm:$0xf]
        %v1291 = vld [vmem:[%s1280 + $0x28] sm:$0xf]
        %v1292 = vld [vmem:[%s1280 + $0x2c] sm:$0xf]
        %v1293 = vld [vmem:[%s1280 + $0x30] sm:$0xf]
        %v1294 = vld [vmem:[%s1280 + $0x34] sm:$0xf]
        %v1295 = vld [vmem:[%s1280 + $0x38] sm:$0xf]
        %v1296 = vld [vmem:[%s1280 + $0x3c] sm:$0xf]
        %s1297 = scalar_lea.vmem %s9, 9
        %v1298 = vld [vmem:[%s1297] sm:$0x1]
        %v1300 = vlaneseq
        %v1301 = vshrl.u32 %v1300, 7
        %v1302 = vsub.s32 0, %v1301
        %v1303 = vrot.slane %v1298, %v1302
        %v1321 = vunpack.c.l.b16 %v1281
        %v1322 = vunpack.c.l.b16 %v1282
        %v1323 = vunpack.c.l.b16 %v1283
        %v1324 = vunpack.c.l.b16 %v1284
        %v1325 = vunpack.c.l.b16 %v1285
        %v1326 = vunpack.c.l.b16 %v1286
        %v1327 = vunpack.c.l.b16 %v1287
        %v1328 = vunpack.c.l.b16 %v1288
        %v1329 = vunpack.c.l.b16 %v1289
        %v1330 = vunpack.c.l.b16 %v1290
        %v1331 = vunpack.c.l.b16 %v1291
        %v1332 = vunpack.c.l.b16 %v1292
        %v1333 = vunpack.c.l.b16 %v1293
        %v1334 = vunpack.c.l.b16 %v1294
        %v1335 = vunpack.c.l.b16 %v1295
        %v1336 = vunpack.c.l.b16 %v1296
        %v1337 = vpack.c.b16 %v1322, %v1321
        %v1338 = vpack.c.b16 %v1324, %v1323
        %v1339 = vpack.c.b16 %v1326, %v1325
        %v1340 = vpack.c.b16 %v1328, %v1327
        %v1341 = vpack.c.b16 %v1330, %v1329
        %v1342 = vpack.c.b16 %v1332, %v1331
        %v1343 = vpack.c.b16 %v1334, %v1333
        %v1344 = vpack.c.b16 %v1336, %v1335
        %1353 = vmatprep.subr.bf16.mxu0 0
        %1354 = vmatpush1.bf16.msra.mxu0 %v1344
        %1355 = vmatprep.subr.bf16.mxu0 0
        %1356 = vmatpush1.bf16.msra.mxu0 %v1343
        %1357 = vmatprep.subr.bf16.mxu0 0
        %1358 = vmatpush1.bf16.msra.mxu0 %v1342
        %1359 = vmatprep.subr.bf16.mxu0 0
        %1360 = vmatpush1.bf16.msra.mxu0 %v1341
        %1361 = vmatprep.subr.bf16.mxu0 0
        %1362 = vmatpush1.bf16.msra.mxu0 %v1340
        %1363 = vmatprep.subr.bf16.mxu0 0
        %1364 = vmatpush1.bf16.msra.mxu0 %v1339
        %1365 = vmatprep.subr.bf16.mxu0 0
        %1366 = vmatpush1.bf16.msra.mxu0 %v1338
        %1367 = vmatprep.subr.bf16.mxu0 0
        %1368 = vmatpush1.bf16.msra.mxu0 %v1337
        %1369 = vmatprep.subr.bf16.mxu0 0
        %1370 = vmatpush2.bf16.msra.mxu0 0
        %1371 = vmatprep.subr.bf16.mxu0 0
        %1372 = vmatpush2.bf16.msra.mxu0 0
        %1373 = vmatprep.subr.bf16.mxu0 0
        %1374 = vmatpush2.bf16.msra.mxu0 0
        %1375 = vmatprep.subr.bf16.mxu0 0
        %1376 = vmatpush2.bf16.msra.mxu0 0
        %1377 = vmatprep.subr.bf16.mxu0 0
        %1378 = vmatpush2.bf16.msra.mxu0 0
        %1379 = vmatprep.subr.bf16.mxu0 0
        %1380 = vmatpush2.bf16.msra.mxu0 0
        %1381 = vmatprep.subr.bf16.mxu0 0
        %1382 = vmatpush2.bf16.msra.mxu0 0
        %1383 = vmatprep.subr.bf16.mxu0 0
        %1384 = vmatpush2.bf16.msra.mxu0 0
        %1385 = vmatprep.mubr.bf16.mxu0 0
        %1386 = vmatmul.mubr.bf16.gmra.mxu0 %v716
        %v1387 = vpop.f32.mrf.mxu0
        %v1388 = vadd.f32 %v1303, %v1387
        %v1389 = vpop.f32.mrf.mxu0
        %v1390 = vpop.f32.mrf.mxu0
        %v1391 = vpop.f32.mrf.mxu0
        %1392 = vdwg.mxu0
        %s1393 = scalar_lea.vmem %s8, 1088
        %v1394 = vld [vmem:[%s1393] sm:$0xf]
        %v1395 = vld [vmem:[%s1393 + $0x4] sm:$0xf]
        %v1396 = vld [vmem:[%s1393 + $0x8] sm:$0xf]
        %v1397 = vld [vmem:[%s1393 + $0xc] sm:$0xf]
        %v1398 = vld [vmem:[%s1393 + $0x10] sm:$0xf]
        %v1399 = vld [vmem:[%s1393 + $0x14] sm:$0xf]
        %v1400 = vld [vmem:[%s1393 + $0x18] sm:$0xf]
        %v1401 = vld [vmem:[%s1393 + $0x1c] sm:$0xf]
        %v1402 = vld [vmem:[%s1393 + $0x20] sm:$0xf]
        %v1403 = vld [vmem:[%s1393 + $0x24] sm:$0xf]
        %v1404 = vld [vmem:[%s1393 + $0x28] sm:$0xf]
        %v1405 = vld [vmem:[%s1393 + $0x2c] sm:$0xf]
        %v1406 = vld [vmem:[%s1393 + $0x30] sm:$0xf]
        %v1407 = vld [vmem:[%s1393 + $0x34] sm:$0xf]
        %v1408 = vld [vmem:[%s1393 + $0x38] sm:$0xf]
        %v1409 = vld [vmem:[%s1393 + $0x3c] sm:$0xf]
        %s1410 = scalar_lea.vmem %s9, 17
        %v1411 = vld [vmem:[%s1410] sm:$0x1]
        %v1413 = vlaneseq
        %v1414 = vshrl.u32 %v1413, 7
        %v1415 = vsub.s32 0, %v1414
        %v1416 = vrot.slane %v1411, %v1415
        %v1434 = vunpack.c.l.b16 %v1394
        %v1435 = vunpack.c.l.b16 %v1395
        %v1436 = vunpack.c.l.b16 %v1396
        %v1437 = vunpack.c.l.b16 %v1397
        %v1438 = vunpack.c.l.b16 %v1398
        %v1439 = vunpack.c.l.b16 %v1399
        %v1440 = vunpack.c.l.b16 %v1400
        %v1441 = vunpack.c.l.b16 %v1401
        %v1442 = vunpack.c.l.b16 %v1402
        %v1443 = vunpack.c.l.b16 %v1403
        %v1444 = vunpack.c.l.b16 %v1404
        %v1445 = vunpack.c.l.b16 %v1405
        %v1446 = vunpack.c.l.b16 %v1406
        %v1447 = vunpack.c.l.b16 %v1407
        %v1448 = vunpack.c.l.b16 %v1408
        %v1449 = vunpack.c.l.b16 %v1409
        %v1450 = vpack.c.b16 %v1435, %v1434
        %v1451 = vpack.c.b16 %v1437, %v1436
        %v1452 = vpack.c.b16 %v1439, %v1438
        %v1453 = vpack.c.b16 %v1441, %v1440
        %v1454 = vpack.c.b16 %v1443, %v1442
        %v1455 = vpack.c.b16 %v1445, %v1444
        %v1456 = vpack.c.b16 %v1447, %v1446
        %v1457 = vpack.c.b16 %v1449, %v1448
        %1466 = vmatprep.subr.bf16.mxu0 0
        %1467 = vmatpush1.bf16.msra.mxu0 %v1457
        %1468 = vmatprep.subr.bf16.mxu0 0
        %1469 = vmatpush1.bf16.msra.mxu0 %v1456
        %1470 = vmatprep.subr.bf16.mxu0 0
        %1471 = vmatpush1.bf16.msra.mxu0 %v1455
        %1472 = vmatprep.subr.bf16.mxu0 0
        %1473 = vmatpush1.bf16.msra.mxu0 %v1454
        %1474 = vmatprep.subr.bf16.mxu0 0
        %1475 = vmatpush1.bf16.msra.mxu0 %v1453
        %1476 = vmatprep.subr.bf16.mxu0 0
        %1477 = vmatpush1.bf16.msra.mxu0 %v1452
        %1478 = vmatprep.subr.bf16.mxu0 0
        %1479 = vmatpush1.bf16.msra.mxu0 %v1451
        %1480 = vmatprep.subr.bf16.mxu0 0
        %1481 = vmatpush1.bf16.msra.mxu0 %v1450
        %1482 = vmatprep.subr.bf16.mxu0 0
        %1483 = vmatpush2.bf16.msra.mxu0 0
        %1484 = vmatprep.subr.bf16.mxu0 0
        %1485 = vmatpush2.bf16.msra.mxu0 0
        %1486 = vmatprep.subr.bf16.mxu0 0
        %1487 = vmatpush2.bf16.msra.mxu0 0
        %1488 = vmatprep.subr.bf16.mxu0 0
        %1489 = vmatpush2.bf16.msra.mxu0 0
        %1490 = vmatprep.subr.bf16.mxu0 0
        %1491 = vmatpush2.bf16.msra.mxu0 0
        %1492 = vmatprep.subr.bf16.mxu0 0
        %1493 = vmatpush2.bf16.msra.mxu0 0
        %1494 = vmatprep.subr.bf16.mxu0 0
        %1495 = vmatpush2.bf16.msra.mxu0 0
        %1496 = vmatprep.subr.bf16.mxu0 0
        %1497 = vmatpush2.bf16.msra.mxu0 0
        %1498 = vmatprep.mubr.bf16.mxu0 0
        %1499 = vmatmul.mubr.bf16.gmra.mxu0 %v716
        %v1500 = vpop.f32.mrf.mxu0
        %v1501 = vadd.f32 %v1416, %v1500
        %v1502 = vpop.f32.mrf.mxu0
        %v1503 = vpop.f32.mrf.mxu0
        %v1504 = vpop.f32.mrf.mxu0
        %1505 = vdwg.mxu0
        %v1506 = vpack.c.bf16 %v1275, %v1275
        %v1507 = vpack.c.bf16 %v1388, %v1388
        %v1509 = vsel %vm1056, %v1506, 0
        %v1512 = vsel %vm1056, %v1507, 0
        %1514 = vmatprep.subr.bf16.mxu0 0
        %1515 = vmatpush1.bf16.xpose.msra.mxu0 0
        %1516 = vmatprep.subr.bf16.mxu0 0
        %1517 = vmatpush1.bf16.xpose.msra.mxu0 0
        %1518 = vmatprep.subr.bf16.mxu0 0
        %1519 = vmatpush1.bf16.xpose.msra.mxu0 0
        %1520 = vmatprep.subr.bf16.mxu0 0
        %1521 = vmatpush1.bf16.xpose.msra.mxu0 0
        %1522 = vmatprep.subr.bf16.mxu0 0
        %1523 = vmatpush1.bf16.xpose.msra.mxu0 0
        %1524 = vmatprep.subr.bf16.mxu0 0
        %1525 = vmatpush1.bf16.xpose.msra.mxu0 0
        %1526 = vmatprep.subr.bf16.mxu0 0
        %1527 = vmatpush1.bf16.xpose.msra.mxu0 0
        %1528 = vmatprep.subr.bf16.mxu0 0
        %1529 = vmatpush1.bf16.xpose.msra.mxu0 %v1512
        %1530 = vmatprep.subr.bf16.mxu0 0
        %1531 = vmatpush2.bf16.xpose.msra.mxu0 0
        %1532 = vmatprep.subr.bf16.mxu0 0
        %1533 = vmatpush2.bf16.xpose.msra.mxu0 0
        %1534 = vmatprep.subr.bf16.mxu0 0
        %1535 = vmatpush2.bf16.xpose.msra.mxu0 0
        %1536 = vmatprep.subr.bf16.mxu0 0
        %1537 = vmatpush2.bf16.xpose.msra.mxu0 0
        %1538 = vmatprep.subr.bf16.mxu0 0
        %1539 = vmatpush2.bf16.xpose.msra.mxu0 0
        %1540 = vmatprep.subr.bf16.mxu0 0
        %1541 = vmatpush2.bf16.xpose.msra.mxu0 0
        %1542 = vmatprep.subr.bf16.mxu0 0
        %1543 = vmatpush2.bf16.xpose.msra.mxu0 0
        %1544 = vmatprep.subr.bf16.mxu0 0
        %1545 = vmatpush2.bf16.xpose.msra.mxu0 0
        %1546 = vmatprep.mubr.bf16.mxu0 0
        %1547 = vmatmul.mubr.bf16.gmra.mxu0 %v1509
        %v1548 = vpop.f32.mrf.mxu0
        %v1549 = vadd.f32 0.0, %v1548
        %v1550 = vpop.f32.mrf.mxu0
        %v1551 = vpop.f32.mrf.mxu0
        %v1552 = vpop.f32.mrf.mxu0
        %1553 = vdwg.mxu0
        %v1554 = vsel %vm1103, %v1549, -inf
        %1555 = vmax.xlane.f32.xlu0 %v1554
        %v1556 = vpop.xlane.xlu0 %1555
        %v1557 = vsub.f32 %v1549, %v1556
        %v1558 = vmul.f32 %v1557, 1.442695
        %v1559 = vpow.pop %v1558
        %v1560 = vsel %vm1103, %v1559, 0.0
        %1561 = vadd.xlane.f32.xlu0 %v1560
        %v1562 = vpop.xlane.xlu0 %1561
        %v1563 = vrcp.pop %v1562
        %v1564 = vmul.f32 %v1559, %v1563
        %v1565 = vpack.c.bf16 %v1564, %v1564
        %v1566 = vpack.c.bf16 %v1501, %v1501
        %v1568 = vsel %vm1103, %v1565, 0
        %v1571 = vsel %vm1120, %v1566, 0
        %1573 = vmatprep.subr.bf16.mxu0 0
        %1574 = vmatpush1.bf16.msra.mxu0 0
        %1575 = vmatprep.subr.bf16.mxu0 0
        %1576 = vmatpush1.bf16.msra.mxu0 0
        %1577 = vmatprep.subr.bf16.mxu0 0
        %1578 = vmatpush1.bf16.msra.mxu0 0
        %1579 = vmatprep.subr.bf16.mxu0 0
        %1580 = vmatpush1.bf16.msra.mxu0 0
        %1581 = vmatprep.subr.bf16.mxu0 0
        %1582 = vmatpush1.bf16.msra.mxu0 0
        %1583 = vmatprep.subr.bf16.mxu0 0
        %1584 = vmatpush1.bf16.msra.mxu0 0
        %1585 = vmatprep.subr.bf16.mxu0 0
        %1586 = vmatpush1.bf16.msra.mxu0 0
        %1587 = vmatprep.subr.bf16.mxu0 0
        %1588 = vmatpush1.bf16.msra.mxu0 %v1571
        %1589 = vmatprep.subr.bf16.mxu0 0
        %1590 = vmatpush2.bf16.msra.mxu0 0
        %1591 = vmatprep.subr.bf16.mxu0 0
        %1592 = vmatpush2.bf16.msra.mxu0 0
        %1593 = vmatprep.subr.bf16.mxu0 0
        %1594 = vmatpush2.bf16.msra.mxu0 0
        %1595 = vmatprep.subr.bf16.mxu0 0
        %1596 = vmatpush2.bf16.msra.mxu0 0
        %1597 = vmatprep.subr.bf16.mxu0 0
        %1598 = vmatpush2.bf16.msra.mxu0 0
        %1599 = vmatprep.subr.bf16.mxu0 0
        %1600 = vmatpush2.bf16.msra.mxu0 0
        %1601 = vmatprep.subr.bf16.mxu0 0
        %1602 = vmatpush2.bf16.msra.mxu0 0
        %1603 = vmatprep.subr.bf16.mxu0 0
        %1604 = vmatpush2.bf16.msra.mxu0 0
        %1605 = vmatprep.mubr.bf16.mxu0 0
        %1606 = vmatmul.mubr.bf16.gmra.mxu0 %v1568
        %v1607 = vpop.f32.mrf.mxu0
        %v1608 = vadd.f32 0.0, %v1607
        %v1609 = vpop.f32.mrf.mxu0
        %v1610 = vpop.f32.mrf.mxu0
        %v1611 = vpop.f32.mrf.mxu0
        %1612 = vdwg.mxu0
        %v1613 = vpack.c.bf16 %v1608, %v1608
        %s1614 = scalar_lea.vmem %s10, 8
        %v1615 = vld [vmem:[%s1614] sm:$0xf]
        %v1616 = vld [vmem:[%s1614 + $0x4] sm:$0xf]
        %v1619 = vunpack.c.l.b16 %v1615
        %v1620 = vunpack.c.l.b16 %v1616
        %v1621 = vpack.c.b16 %v1620, %v1619
        %v1624 = vsel %vm1056, %v1613, 0
        %1626 = vmatprep.subr.bf16.mxu0 0
        %1627 = vmatpush1.bf16.msra.mxu0 0
        %1628 = vmatprep.subr.bf16.mxu0 0
        %1629 = vmatpush1.bf16.msra.mxu0 0
        %1630 = vmatprep.subr.bf16.mxu0 0
        %1631 = vmatpush1.bf16.msra.mxu0 0
        %1632 = vmatprep.subr.bf16.mxu0 0
        %1633 = vmatpush1.bf16.msra.mxu0 0
        %1634 = vmatprep.subr.bf16.mxu0 0
        %1635 = vmatpush1.bf16.msra.mxu0 0
        %1636 = vmatprep.subr.bf16.mxu0 0
        %1637 = vmatpush1.bf16.msra.mxu0 0
        %1638 = vmatprep.subr.bf16.mxu0 0
        %1639 = vmatpush1.bf16.msra.mxu0 0
        %1640 = vmatprep.subr.bf16.mxu0 0
        %1641 = vmatpush1.bf16.msra.mxu0 %v1621
        %1642 = vmatprep.subr.bf16.mxu0 0
        %1643 = vmatpush2.bf16.msra.mxu0 0
        %1644 = vmatprep.subr.bf16.mxu0 0
        %1645 = vmatpush2.bf16.msra.mxu0 0
        %1646 = vmatprep.subr.bf16.mxu0 0
        %1647 = vmatpush2.bf16.msra.mxu0 0
        %1648 = vmatprep.subr.bf16.mxu0 0
        %1649 = vmatpush2.bf16.msra.mxu0 0
        %1650 = vmatprep.subr.bf16.mxu0 0
        %1651 = vmatpush2.bf16.msra.mxu0 0
        %1652 = vmatprep.subr.bf16.mxu0 0
        %1653 = vmatpush2.bf16.msra.mxu0 0
        %1654 = vmatprep.subr.bf16.mxu0 0
        %1655 = vmatpush2.bf16.msra.mxu0 0
        %1656 = vmatprep.subr.bf16.mxu0 0
        %1657 = vmatpush2.bf16.msra.mxu0 0
        %1658 = vmatprep.mubr.bf16.mxu0 0
        %1659 = vmatmul.mubr.bf16.gmra.mxu0 %v1624
        %v1660 = vpop.f32.mrf.mxu0
        %v1661 = vadd.f32 0.0, %v1660
        %v1662 = vpop.f32.mrf.mxu0
        %v1663 = vpop.f32.mrf.mxu0
        %v1664 = vpop.f32.mrf.mxu0
        %1665 = vdwg.mxu0
        %v1668 = vunpack.c.l.b16 %v1165
        %v1669 = vunpack.c.l.b16 %v1166
        %v1670 = vpack.c.b16 %v1669, %v1668
        %v1673 = vsel %vm1056, %v1164, 0
        %1675 = vmatprep.subr.bf16.mxu0 0
        %1676 = vmatpush1.bf16.msra.mxu0 0
        %1677 = vmatprep.subr.bf16.mxu0 0
        %1678 = vmatpush1.bf16.msra.mxu0 0
        %1679 = vmatprep.subr.bf16.mxu0 0
        %1680 = vmatpush1.bf16.msra.mxu0 0
        %1681 = vmatprep.subr.bf16.mxu0 0
        %1682 = vmatpush1.bf16.msra.mxu0 0
        %1683 = vmatprep.subr.bf16.mxu0 0
        %1684 = vmatpush1.bf16.msra.mxu0 0
        %1685 = vmatprep.subr.bf16.mxu0 0
        %1686 = vmatpush1.bf16.msra.mxu0 0
        %1687 = vmatprep.subr.bf16.mxu0 0
        %1688 = vmatpush1.bf16.msra.mxu0 0
        %1689 = vmatprep.subr.bf16.mxu0 0
        %1690 = vmatpush1.bf16.msra.mxu0 %v1670
        %1691 = vmatprep.subr.bf16.mxu0 0
        %1692 = vmatpush2.bf16.msra.mxu0 0
        %1693 = vmatprep.subr.bf16.mxu0 0
        %1694 = vmatpush2.bf16.msra.mxu0 0
        %1695 = vmatprep.subr.bf16.mxu0 0
        %1696 = vmatpush2.bf16.msra.mxu0 0
        %1697 = vmatprep.subr.bf16.mxu0 0
        %1698 = vmatpush2.bf16.msra.mxu0 0
        %1699 = vmatprep.subr.bf16.mxu0 0
        %1700 = vmatpush2.bf16.msra.mxu0 0
        %1701 = vmatprep.subr.bf16.mxu0 0
        %1702 = vmatpush2.bf16.msra.mxu0 0
        %1703 = vmatprep.subr.bf16.mxu0 0
        %1704 = vmatpush2.bf16.msra.mxu0 0
        %1705 = vmatprep.subr.bf16.mxu0 0
        %1706 = vmatpush2.bf16.msra.mxu0 0
        %1707 = vmatprep.mubr.bf16.mxu0 0
        %1708 = vmatmul.mubr.bf16.gmra.mxu0 %v1673
        %v1709 = vpop.f32.mrf.mxu0
        %v1710 = vadd.f32 %v1661, %v1709
        %v1711 = vpop.f32.mrf.mxu0
        %v1712 = vpop.f32.mrf.mxu0
        %v1713 = vpop.f32.mrf.mxu0
        %1714 = vdwg.mxu0
        %s1715 = scalar_lea.vmem %s8, 128
        %v1716 = vld [vmem:[%s1715] sm:$0xf]
        %v1717 = vld [vmem:[%s1715 + $0x4] sm:$0xf]
        %v1718 = vld [vmem:[%s1715 + $0x8] sm:$0xf]
        %v1719 = vld [vmem:[%s1715 + $0xc] sm:$0xf]
        %v1720 = vld [vmem:[%s1715 + $0x10] sm:$0xf]
        %v1721 = vld [vmem:[%s1715 + $0x14] sm:$0xf]
        %v1722 = vld [vmem:[%s1715 + $0x18] sm:$0xf]
        %v1723 = vld [vmem:[%s1715 + $0x1c] sm:$0xf]
        %v1724 = vld [vmem:[%s1715 + $0x20] sm:$0xf]
        %v1725 = vld [vmem:[%s1715 + $0x24] sm:$0xf]
        %v1726 = vld [vmem:[%s1715 + $0x28] sm:$0xf]
        %v1727 = vld [vmem:[%s1715 + $0x2c] sm:$0xf]
        %v1728 = vld [vmem:[%s1715 + $0x30] sm:$0xf]
        %v1729 = vld [vmem:[%s1715 + $0x34] sm:$0xf]
        %v1730 = vld [vmem:[%s1715 + $0x38] sm:$0xf]
        %v1731 = vld [vmem:[%s1715 + $0x3c] sm:$0xf]
        %s1732 = scalar_lea.vmem %s9, 2
        %v1733 = vld [vmem:[%s1732] sm:$0x1]
        %v1735 = vlaneseq
        %v1736 = vshrl.u32 %v1735, 7
        %v1737 = vsub.s32 0, %v1736
        %v1738 = vrot.slane %v1733, %v1737
        %v1756 = vunpack.c.l.b16 %v1716
        %v1757 = vunpack.c.l.b16 %v1717
        %v1758 = vunpack.c.l.b16 %v1718
        %v1759 = vunpack.c.l.b16 %v1719
        %v1760 = vunpack.c.l.b16 %v1720
        %v1761 = vunpack.c.l.b16 %v1721
        %v1762 = vunpack.c.l.b16 %v1722
        %v1763 = vunpack.c.l.b16 %v1723
        %v1764 = vunpack.c.l.b16 %v1724
        %v1765 = vunpack.c.l.b16 %v1725
        %v1766 = vunpack.c.l.b16 %v1726
        %v1767 = vunpack.c.l.b16 %v1727
        %v1768 = vunpack.c.l.b16 %v1728
        %v1769 = vunpack.c.l.b16 %v1729
        %v1770 = vunpack.c.l.b16 %v1730
        %v1771 = vunpack.c.l.b16 %v1731
        %v1772 = vpack.c.b16 %v1757, %v1756
        %v1773 = vpack.c.b16 %v1759, %v1758
        %v1774 = vpack.c.b16 %v1761, %v1760
        %v1775 = vpack.c.b16 %v1763, %v1762
        %v1776 = vpack.c.b16 %v1765, %v1764
        %v1777 = vpack.c.b16 %v1767, %v1766
        %v1778 = vpack.c.b16 %v1769, %v1768
        %v1779 = vpack.c.b16 %v1771, %v1770
        %1788 = vmatprep.subr.bf16.mxu0 0
        %1789 = vmatpush1.bf16.msra.mxu0 %v1779
        %1790 = vmatprep.subr.bf16.mxu0 0
        %1791 = vmatpush1.bf16.msra.mxu0 %v1778
        %1792 = vmatprep.subr.bf16.mxu0 0
        %1793 = vmatpush1.bf16.msra.mxu0 %v1777
        %1794 = vmatprep.subr.bf16.mxu0 0
        %1795 = vmatpush1.bf16.msra.mxu0 %v1776
        %1796 = vmatprep.subr.bf16.mxu0 0
        %1797 = vmatpush1.bf16.msra.mxu0 %v1775
        %1798 = vmatprep.subr.bf16.mxu0 0
        %1799 = vmatpush1.bf16.msra.mxu0 %v1774
        %1800 = vmatprep.subr.bf16.mxu0 0
        %1801 = vmatpush1.bf16.msra.mxu0 %v1773
        %1802 = vmatprep.subr.bf16.mxu0 0
        %1803 = vmatpush1.bf16.msra.mxu0 %v1772
        %1804 = vmatprep.subr.bf16.mxu0 0
        %1805 = vmatpush2.bf16.msra.mxu0 0
        %1806 = vmatprep.subr.bf16.mxu0 0
        %1807 = vmatpush2.bf16.msra.mxu0 0
        %1808 = vmatprep.subr.bf16.mxu0 0
        %1809 = vmatpush2.bf16.msra.mxu0 0
        %1810 = vmatprep.subr.bf16.mxu0 0
        %1811 = vmatpush2.bf16.msra.mxu0 0
        %1812 = vmatprep.subr.bf16.mxu0 0
        %1813 = vmatpush2.bf16.msra.mxu0 0
        %1814 = vmatprep.subr.bf16.mxu0 0
        %1815 = vmatpush2.bf16.msra.mxu0 0
        %1816 = vmatprep.subr.bf16.mxu0 0
        %1817 = vmatpush2.bf16.msra.mxu0 0
        %1818 = vmatprep.subr.bf16.mxu0 0
        %1819 = vmatpush2.bf16.msra.mxu0 0
        %1820 = vmatprep.mubr.bf16.mxu0 0
        %1821 = vmatmul.mubr.bf16.gmra.mxu0 %v716
        %v1822 = vpop.f32.mrf.mxu0
        %v1823 = vadd.f32 %v1738, %v1822
        %v1824 = vpop.f32.mrf.mxu0
        %v1825 = vpop.f32.mrf.mxu0
        %v1826 = vpop.f32.mrf.mxu0
        %1827 = vdwg.mxu0
        %s1828 = scalar_lea.vmem %s8, 640
        %v1829 = vld [vmem:[%s1828] sm:$0xf]
        %v1830 = vld [vmem:[%s1828 + $0x4] sm:$0xf]
        %v1831 = vld [vmem:[%s1828 + $0x8] sm:$0xf]
        %v1832 = vld [vmem:[%s1828 + $0xc] sm:$0xf]
        %v1833 = vld [vmem:[%s1828 + $0x10] sm:$0xf]
        %v1834 = vld [vmem:[%s1828 + $0x14] sm:$0xf]
        %v1835 = vld [vmem:[%s1828 + $0x18] sm:$0xf]
        %v1836 = vld [vmem:[%s1828 + $0x1c] sm:$0xf]
        %v1837 = vld [vmem:[%s1828 + $0x20] sm:$0xf]
        %v1838 = vld [vmem:[%s1828 + $0x24] sm:$0xf]
        %v1839 = vld [vmem:[%s1828 + $0x28] sm:$0xf]
        %v1840 = vld [vmem:[%s1828 + $0x2c] sm:$0xf]
        %v1841 = vld [vmem:[%s1828 + $0x30] sm:$0xf]
        %v1842 = vld [vmem:[%s1828 + $0x34] sm:$0xf]
        %v1843 = vld [vmem:[%s1828 + $0x38] sm:$0xf]
        %v1844 = vld [vmem:[%s1828 + $0x3c] sm:$0xf]
        %s1845 = scalar_lea.vmem %s9, 10
        %v1846 = vld [vmem:[%s1845] sm:$0x1]
        %v1848 = vlaneseq
        %v1849 = vshrl.u32 %v1848, 7
        %v1850 = vsub.s32 0, %v1849
        %v1851 = vrot.slane %v1846, %v1850
        %v1869 = vunpack.c.l.b16 %v1829
        %v1870 = vunpack.c.l.b16 %v1830
        %v1871 = vunpack.c.l.b16 %v1831
        %v1872 = vunpack.c.l.b16 %v1832
        %v1873 = vunpack.c.l.b16 %v1833
        %v1874 = vunpack.c.l.b16 %v1834
        %v1875 = vunpack.c.l.b16 %v1835
        %v1876 = vunpack.c.l.b16 %v1836
        %v1877 = vunpack.c.l.b16 %v1837
        %v1878 = vunpack.c.l.b16 %v1838
        %v1879 = vunpack.c.l.b16 %v1839
        %v1880 = vunpack.c.l.b16 %v1840
        %v1881 = vunpack.c.l.b16 %v1841
        %v1882 = vunpack.c.l.b16 %v1842
        %v1883 = vunpack.c.l.b16 %v1843
        %v1884 = vunpack.c.l.b16 %v1844
        %v1885 = vpack.c.b16 %v1870, %v1869
        %v1886 = vpack.c.b16 %v1872, %v1871
        %v1887 = vpack.c.b16 %v1874, %v1873
        %v1888 = vpack.c.b16 %v1876, %v1875
        %v1889 = vpack.c.b16 %v1878, %v1877
        %v1890 = vpack.c.b16 %v1880, %v1879
        %v1891 = vpack.c.b16 %v1882, %v1881
        %v1892 = vpack.c.b16 %v1884, %v1883
        %1901 = vmatprep.subr.bf16.mxu0 0
        %1902 = vmatpush1.bf16.msra.mxu0 %v1892
        %1903 = vmatprep.subr.bf16.mxu0 0
        %1904 = vmatpush1.bf16.msra.mxu0 %v1891
        %1905 = vmatprep.subr.bf16.mxu0 0
        %1906 = vmatpush1.bf16.msra.mxu0 %v1890
        %1907 = vmatprep.subr.bf16.mxu0 0
        %1908 = vmatpush1.bf16.msra.mxu0 %v1889
        %1909 = vmatprep.subr.bf16.mxu0 0
        %1910 = vmatpush1.bf16.msra.mxu0 %v1888
        %1911 = vmatprep.subr.bf16.mxu0 0
        %1912 = vmatpush1.bf16.msra.mxu0 %v1887
        %1913 = vmatprep.subr.bf16.mxu0 0
        %1914 = vmatpush1.bf16.msra.mxu0 %v1886
        %1915 = vmatprep.subr.bf16.mxu0 0
        %1916 = vmatpush1.bf16.msra.mxu0 %v1885
        %1917 = vmatprep.subr.bf16.mxu0 0
        %1918 = vmatpush2.bf16.msra.mxu0 0
        %1919 = vmatprep.subr.bf16.mxu0 0
        %1920 = vmatpush2.bf16.msra.mxu0 0
        %1921 = vmatprep.subr.bf16.mxu0 0
        %1922 = vmatpush2.bf16.msra.mxu0 0
        %1923 = vmatprep.subr.bf16.mxu0 0
        %1924 = vmatpush2.bf16.msra.mxu0 0
        %1925 = vmatprep.subr.bf16.mxu0 0
        %1926 = vmatpush2.bf16.msra.mxu0 0
        %1927 = vmatprep.subr.bf16.mxu0 0
        %1928 = vmatpush2.bf16.msra.mxu0 0
        %1929 = vmatprep.subr.bf16.mxu0 0
        %1930 = vmatpush2.bf16.msra.mxu0 0
        %1931 = vmatprep.subr.bf16.mxu0 0
        %1932 = vmatpush2.bf16.msra.mxu0 0
        %1933 = vmatprep.mubr.bf16.mxu0 0
        %1934 = vmatmul.mubr.bf16.gmra.mxu0 %v716
        %v1935 = vpop.f32.mrf.mxu0
        %v1936 = vadd.f32 %v1851, %v1935
        %v1937 = vpop.f32.mrf.mxu0
        %v1938 = vpop.f32.mrf.mxu0
        %v1939 = vpop.f32.mrf.mxu0
        %1940 = vdwg.mxu0
        %s1941 = scalar_lea.vmem %s8, 1152
        %v1942 = vld [vmem:[%s1941] sm:$0xf]
        %v1943 = vld [vmem:[%s1941 + $0x4] sm:$0xf]
        %v1944 = vld [vmem:[%s1941 + $0x8] sm:$0xf]
        %v1945 = vld [vmem:[%s1941 + $0xc] sm:$0xf]
        %v1946 = vld [vmem:[%s1941 + $0x10] sm:$0xf]
        %v1947 = vld [vmem:[%s1941 + $0x14] sm:$0xf]
        %v1948 = vld [vmem:[%s1941 + $0x18] sm:$0xf]
        %v1949 = vld [vmem:[%s1941 + $0x1c] sm:$0xf]
        %v1950 = vld [vmem:[%s1941 + $0x20] sm:$0xf]
        %v1951 = vld [vmem:[%s1941 + $0x24] sm:$0xf]
        %v1952 = vld [vmem:[%s1941 + $0x28] sm:$0xf]
        %v1953 = vld [vmem:[%s1941 + $0x2c] sm:$0xf]
        %v1954 = vld [vmem:[%s1941 + $0x30] sm:$0xf]
        %v1955 = vld [vmem:[%s1941 + $0x34] sm:$0xf]
        %v1956 = vld [vmem:[%s1941 + $0x38] sm:$0xf]
        %v1957 = vld [vmem:[%s1941 + $0x3c] sm:$0xf]
        %s1958 = scalar_lea.vmem %s9, 18
        %v1959 = vld [vmem:[%s1958] sm:$0x1]
        %v1961 = vlaneseq
        %v1962 = vshrl.u32 %v1961, 7
        %v1963 = vsub.s32 0, %v1962
        %v1964 = vrot.slane %v1959, %v1963
        %v1982 = vunpack.c.l.b16 %v1942
        %v1983 = vunpack.c.l.b16 %v1943
        %v1984 = vunpack.c.l.b16 %v1944
        %v1985 = vunpack.c.l.b16 %v1945
        %v1986 = vunpack.c.l.b16 %v1946
        %v1987 = vunpack.c.l.b16 %v1947
        %v1988 = vunpack.c.l.b16 %v1948
        %v1989 = vunpack.c.l.b16 %v1949
        %v1990 = vunpack.c.l.b16 %v1950
        %v1991 = vunpack.c.l.b16 %v1951
        %v1992 = vunpack.c.l.b16 %v1952
        %v1993 = vunpack.c.l.b16 %v1953
        %v1994 = vunpack.c.l.b16 %v1954
        %v1995 = vunpack.c.l.b16 %v1955
        %v1996 = vunpack.c.l.b16 %v1956
        %v1997 = vunpack.c.l.b16 %v1957
        %v1998 = vpack.c.b16 %v1983, %v1982
        %v1999 = vpack.c.b16 %v1985, %v1984
        %v2000 = vpack.c.b16 %v1987, %v1986
        %v2001 = vpack.c.b16 %v1989, %v1988
        %v2002 = vpack.c.b16 %v1991, %v1990
        %v2003 = vpack.c.b16 %v1993, %v1992
        %v2004 = vpack.c.b16 %v1995, %v1994
        %v2005 = vpack.c.b16 %v1997, %v1996
        %2014 = vmatprep.subr.bf16.mxu0 0
        %2015 = vmatpush1.bf16.msra.mxu0 %v2005
        %2016 = vmatprep.subr.bf16.mxu0 0
        %2017 = vmatpush1.bf16.msra.mxu0 %v2004
        %2018 = vmatprep.subr.bf16.mxu0 0
        %2019 = vmatpush1.bf16.msra.mxu0 %v2003
        %2020 = vmatprep.subr.bf16.mxu0 0
        %2021 = vmatpush1.bf16.msra.mxu0 %v2002
        %2022 = vmatprep.subr.bf16.mxu0 0
        %2023 = vmatpush1.bf16.msra.mxu0 %v2001
        %2024 = vmatprep.subr.bf16.mxu0 0
        %2025 = vmatpush1.bf16.msra.mxu0 %v2000
        %2026 = vmatprep.subr.bf16.mxu0 0
        %2027 = vmatpush1.bf16.msra.mxu0 %v1999
        %2028 = vmatprep.subr.bf16.mxu0 0
        %2029 = vmatpush1.bf16.msra.mxu0 %v1998
        %2030 = vmatprep.subr.bf16.mxu0 0
        %2031 = vmatpush2.bf16.msra.mxu0 0
        %2032 = vmatprep.subr.bf16.mxu0 0
        %2033 = vmatpush2.bf16.msra.mxu0 0
        %2034 = vmatprep.subr.bf16.mxu0 0
        %2035 = vmatpush2.bf16.msra.mxu0 0
        %2036 = vmatprep.subr.bf16.mxu0 0
        %2037 = vmatpush2.bf16.msra.mxu0 0
        %2038 = vmatprep.subr.bf16.mxu0 0
        %2039 = vmatpush2.bf16.msra.mxu0 0
        %2040 = vmatprep.subr.bf16.mxu0 0
        %2041 = vmatpush2.bf16.msra.mxu0 0
        %2042 = vmatprep.subr.bf16.mxu0 0
        %2043 = vmatpush2.bf16.msra.mxu0 0
        %2044 = vmatprep.subr.bf16.mxu0 0
        %2045 = vmatpush2.bf16.msra.mxu0 0
        %2046 = vmatprep.mubr.bf16.mxu0 0
        %2047 = vmatmul.mubr.bf16.gmra.mxu0 %v716
        %v2048 = vpop.f32.mrf.mxu0
        %v2049 = vadd.f32 %v1964, %v2048
        %v2050 = vpop.f32.mrf.mxu0
        %v2051 = vpop.f32.mrf.mxu0
        %v2052 = vpop.f32.mrf.mxu0
        %2053 = vdwg.mxu0
        %v2054 = vpack.c.bf16 %v1823, %v1823
        %v2055 = vpack.c.bf16 %v1936, %v1936
        %v2057 = vsel %vm1056, %v2054, 0
        %v2060 = vsel %vm1056, %v2055, 0
        %2062 = vmatprep.subr.bf16.mxu0 0
        %2063 = vmatpush1.bf16.xpose.msra.mxu0 0
        %2064 = vmatprep.subr.bf16.mxu0 0
        %2065 = vmatpush1.bf16.xpose.msra.mxu0 0
        %2066 = vmatprep.subr.bf16.mxu0 0
        %2067 = vmatpush1.bf16.xpose.msra.mxu0 0
        %2068 = vmatprep.subr.bf16.mxu0 0
        %2069 = vmatpush1.bf16.xpose.msra.mxu0 0
        %2070 = vmatprep.subr.bf16.mxu0 0
        %2071 = vmatpush1.bf16.xpose.msra.mxu0 0
        %2072 = vmatprep.subr.bf16.mxu0 0
        %2073 = vmatpush1.bf16.xpose.msra.mxu0 0
        %2074 = vmatprep.subr.bf16.mxu0 0
        %2075 = vmatpush1.bf16.xpose.msra.mxu0 0
        %2076 = vmatprep.subr.bf16.mxu0 0
        %2077 = vmatpush1.bf16.xpose.msra.mxu0 %v2060
        %2078 = vmatprep.subr.bf16.mxu0 0
        %2079 = vmatpush2.bf16.xpose.msra.mxu0 0
        %2080 = vmatprep.subr.bf16.mxu0 0
        %2081 = vmatpush2.bf16.xpose.msra.mxu0 0
        %2082 = vmatprep.subr.bf16.mxu0 0
        %2083 = vmatpush2.bf16.xpose.msra.mxu0 0
        %2084 = vmatprep.subr.bf16.mxu0 0
        %2085 = vmatpush2.bf16.xpose.msra.mxu0 0
        %2086 = vmatprep.subr.bf16.mxu0 0
        %2087 = vmatpush2.bf16.xpose.msra.mxu0 0
        %2088 = vmatprep.subr.bf16.mxu0 0
        %2089 = vmatpush2.bf16.xpose.msra.mxu0 0
        %2090 = vmatprep.subr.bf16.mxu0 0
        %2091 = vmatpush2.bf16.xpose.msra.mxu0 0
        %2092 = vmatprep.subr.bf16.mxu0 0
        %2093 = vmatpush2.bf16.xpose.msra.mxu0 0
        %2094 = vmatprep.mubr.bf16.mxu0 0
        %2095 = vmatmul.mubr.bf16.gmra.mxu0 %v2057
        %v2096 = vpop.f32.mrf.mxu0
        %v2097 = vadd.f32 0.0, %v2096
        %v2098 = vpop.f32.mrf.mxu0
        %v2099 = vpop.f32.mrf.mxu0
        %v2100 = vpop.f32.mrf.mxu0
        %2101 = vdwg.mxu0
        %v2102 = vsel %vm1103, %v2097, -inf
        %2103 = vmax.xlane.f32.xlu0 %v2102
        %v2104 = vpop.xlane.xlu0 %2103
        %v2105 = vsub.f32 %v2097, %v2104
        %v2106 = vmul.f32 %v2105, 1.442695
        %v2107 = vpow.pop %v2106
        %v2108 = vsel %vm1103, %v2107, 0.0
        %2109 = vadd.xlane.f32.xlu0 %v2108
        %v2110 = vpop.xlane.xlu0 %2109
        %v2111 = vrcp.pop %v2110
        %v2112 = vmul.f32 %v2107, %v2111
        %v2113 = vpack.c.bf16 %v2112, %v2112
        %v2114 = vpack.c.bf16 %v2049, %v2049
        %v2116 = vsel %vm1103, %v2113, 0
        %v2119 = vsel %vm1120, %v2114, 0
        %2121 = vmatprep.subr.bf16.mxu0 0
        %2122 = vmatpush1.bf16.msra.mxu0 0
        %2123 = vmatprep.subr.bf16.mxu0 0
        %2124 = vmatpush1.bf16.msra.mxu0 0
        %2125 = vmatprep.subr.bf16.mxu0 0
        %2126 = vmatpush1.bf16.msra.mxu0 0
        %2127 = vmatprep.subr.bf16.mxu0 0
        %2128 = vmatpush1.bf16.msra.mxu0 0
        %2129 = vmatprep.subr.bf16.mxu0 0
        %2130 = vmatpush1.bf16.msra.mxu0 0
        %2131 = vmatprep.subr.bf16.mxu0 0
        %2132 = vmatpush1.bf16.msra.mxu0 0
        %2133 = vmatprep.subr.bf16.mxu0 0
        %2134 = vmatpush1.bf16.msra.mxu0 0
        %2135 = vmatprep.subr.bf16.mxu0 0
        %2136 = vmatpush1.bf16.msra.mxu0 %v2119
        %2137 = vmatprep.subr.bf16.mxu0 0
        %2138 = vmatpush2.bf16.msra.mxu0 0
        %2139 = vmatprep.subr.bf16.mxu0 0
        %2140 = vmatpush2.bf16.msra.mxu0 0
        %2141 = vmatprep.subr.bf16.mxu0 0
        %2142 = vmatpush2.bf16.msra.mxu0 0
        %2143 = vmatprep.subr.bf16.mxu0 0
        %2144 = vmatpush2.bf16.msra.mxu0 0
        %2145 = vmatprep.subr.bf16.mxu0 0
        %2146 = vmatpush2.bf16.msra.mxu0 0
        %2147 = vmatprep.subr.bf16.mxu0 0
        %2148 = vmatpush2.bf16.msra.mxu0 0
        %2149 = vmatprep.subr.bf16.mxu0 0
        %2150 = vmatpush2.bf16.msra.mxu0 0
        %2151 = vmatprep.subr.bf16.mxu0 0
        %2152 = vmatpush2.bf16.msra.mxu0 0
        %2153 = vmatprep.mubr.bf16.mxu0 0
        %2154 = vmatmul.mubr.bf16.gmra.mxu0 %v2116
        %v2155 = vpop.f32.mrf.mxu0
        %v2156 = vadd.f32 0.0, %v2155
        %v2157 = vpop.f32.mrf.mxu0
        %v2158 = vpop.f32.mrf.mxu0
        %v2159 = vpop.f32.mrf.mxu0
        %2160 = vdwg.mxu0
        %v2161 = vpack.c.bf16 %v2156, %v2156
        %s2162 = scalar_lea.vmem %s10, 16
        %v2163 = vld [vmem:[%s2162] sm:$0xf]
        %v2164 = vld [vmem:[%s2162 + $0x4] sm:$0xf]
        %v2167 = vunpack.c.l.b16 %v2163
        %v2168 = vunpack.c.l.b16 %v2164
        %v2169 = vpack.c.b16 %v2168, %v2167
        %v2172 = vsel %vm1056, %v2161, 0
        %2174 = vmatprep.subr.bf16.mxu0 0
        %2175 = vmatpush1.bf16.msra.mxu0 0
        %2176 = vmatprep.subr.bf16.mxu0 0
        %2177 = vmatpush1.bf16.msra.mxu0 0
        %2178 = vmatprep.subr.bf16.mxu0 0
        %2179 = vmatpush1.bf16.msra.mxu0 0
        %2180 = vmatprep.subr.bf16.mxu0 0
        %2181 = vmatpush1.bf16.msra.mxu0 0
        %2182 = vmatprep.subr.bf16.mxu0 0
        %2183 = vmatpush1.bf16.msra.mxu0 0
        %2184 = vmatprep.subr.bf16.mxu0 0
        %2185 = vmatpush1.bf16.msra.mxu0 0
        %2186 = vmatprep.subr.bf16.mxu0 0
        %2187 = vmatpush1.bf16.msra.mxu0 0
        %2188 = vmatprep.subr.bf16.mxu0 0
        %2189 = vmatpush1.bf16.msra.mxu0 %v2169
        %2190 = vmatprep.subr.bf16.mxu0 0
        %2191 = vmatpush2.bf16.msra.mxu0 0
        %2192 = vmatprep.subr.bf16.mxu0 0
        %2193 = vmatpush2.bf16.msra.mxu0 0
        %2194 = vmatprep.subr.bf16.mxu0 0
        %2195 = vmatpush2.bf16.msra.mxu0 0
        %2196 = vmatprep.subr.bf16.mxu0 0
        %2197 = vmatpush2.bf16.msra.mxu0 0
        %2198 = vmatprep.subr.bf16.mxu0 0
        %2199 = vmatpush2.bf16.msra.mxu0 0
        %2200 = vmatprep.subr.bf16.mxu0 0
        %2201 = vmatpush2.bf16.msra.mxu0 0
        %2202 = vmatprep.subr.bf16.mxu0 0
        %2203 = vmatpush2.bf16.msra.mxu0 0
        %2204 = vmatprep.subr.bf16.mxu0 0
        %2205 = vmatpush2.bf16.msra.mxu0 0
        %2206 = vmatprep.mubr.bf16.mxu0 0
        %2207 = vmatmul.mubr.bf16.gmra.mxu0 %v2172
        %v2208 = vpop.f32.mrf.mxu0
        %v2209 = vadd.f32 0.0, %v2208
        %v2210 = vpop.f32.mrf.mxu0
        %v2211 = vpop.f32.mrf.mxu0
        %v2212 = vpop.f32.mrf.mxu0
        %2213 = vdwg.mxu0
        %v2214 = vadd.f32 %v1710, %v2209
        %s2215 = scalar_lea.vmem %s8, 192
        %v2216 = vld [vmem:[%s2215] sm:$0xf]
        %v2217 = vld [vmem:[%s2215 + $0x4] sm:$0xf]
        %v2218 = vld [vmem:[%s2215 + $0x8] sm:$0xf]
        %v2219 = vld [vmem:[%s2215 + $0xc] sm:$0xf]
        %v2220 = vld [vmem:[%s2215 + $0x10] sm:$0xf]
        %v2221 = vld [vmem:[%s2215 + $0x14] sm:$0xf]
        %v2222 = vld [vmem:[%s2215 + $0x18] sm:$0xf]
        %v2223 = vld [vmem:[%s2215 + $0x1c] sm:$0xf]
        %v2224 = vld [vmem:[%s2215 + $0x20] sm:$0xf]
        %v2225 = vld [vmem:[%s2215 + $0x24] sm:$0xf]
        %v2226 = vld [vmem:[%s2215 + $0x28] sm:$0xf]
        %v2227 = vld [vmem:[%s2215 + $0x2c] sm:$0xf]
        %v2228 = vld [vmem:[%s2215 + $0x30] sm:$0xf]
        %v2229 = vld [vmem:[%s2215 + $0x34] sm:$0xf]
        %v2230 = vld [vmem:[%s2215 + $0x38] sm:$0xf]
        %v2231 = vld [vmem:[%s2215 + $0x3c] sm:$0xf]
        %s2232 = scalar_lea.vmem %s9, 3
        %v2233 = vld [vmem:[%s2232] sm:$0x1]
        %v2235 = vlaneseq
        %v2236 = vshrl.u32 %v2235, 7
        %v2237 = vsub.s32 0, %v2236
        %v2238 = vrot.slane %v2233, %v2237
        %v2256 = vunpack.c.l.b16 %v2216
        %v2257 = vunpack.c.l.b16 %v2217
        %v2258 = vunpack.c.l.b16 %v2218
        %v2259 = vunpack.c.l.b16 %v2219
        %v2260 = vunpack.c.l.b16 %v2220
        %v2261 = vunpack.c.l.b16 %v2221
        %v2262 = vunpack.c.l.b16 %v2222
        %v2263 = vunpack.c.l.b16 %v2223
        %v2264 = vunpack.c.l.b16 %v2224
        %v2265 = vunpack.c.l.b16 %v2225
        %v2266 = vunpack.c.l.b16 %v2226
        %v2267 = vunpack.c.l.b16 %v2227
        %v2268 = vunpack.c.l.b16 %v2228
        %v2269 = vunpack.c.l.b16 %v2229
        %v2270 = vunpack.c.l.b16 %v2230
        %v2271 = vunpack.c.l.b16 %v2231
        %v2272 = vpack.c.b16 %v2257, %v2256
        %v2273 = vpack.c.b16 %v2259, %v2258
        %v2274 = vpack.c.b16 %v2261, %v2260
        %v2275 = vpack.c.b16 %v2263, %v2262
        %v2276 = vpack.c.b16 %v2265, %v2264
        %v2277 = vpack.c.b16 %v2267, %v2266
        %v2278 = vpack.c.b16 %v2269, %v2268
        %v2279 = vpack.c.b16 %v2271, %v2270
        %2288 = vmatprep.subr.bf16.mxu0 0
        %2289 = vmatpush1.bf16.msra.mxu0 %v2279
        %2290 = vmatprep.subr.bf16.mxu0 0
        %2291 = vmatpush1.bf16.msra.mxu0 %v2278
        %2292 = vmatprep.subr.bf16.mxu0 0
        %2293 = vmatpush1.bf16.msra.mxu0 %v2277
        %2294 = vmatprep.subr.bf16.mxu0 0
        %2295 = vmatpush1.bf16.msra.mxu0 %v2276
        %2296 = vmatprep.subr.bf16.mxu0 0
        %2297 = vmatpush1.bf16.msra.mxu0 %v2275
        %2298 = vmatprep.subr.bf16.mxu0 0
        %2299 = vmatpush1.bf16.msra.mxu0 %v2274
        %2300 = vmatprep.subr.bf16.mxu0 0
        %2301 = vmatpush1.bf16.msra.mxu0 %v2273
        %2302 = vmatprep.subr.bf16.mxu0 0
        %2303 = vmatpush1.bf16.msra.mxu0 %v2272
        %2304 = vmatprep.subr.bf16.mxu0 0
        %2305 = vmatpush2.bf16.msra.mxu0 0
        %2306 = vmatprep.subr.bf16.mxu0 0
        %2307 = vmatpush2.bf16.msra.mxu0 0
        %2308 = vmatprep.subr.bf16.mxu0 0
        %2309 = vmatpush2.bf16.msra.mxu0 0
        %2310 = vmatprep.subr.bf16.mxu0 0
        %2311 = vmatpush2.bf16.msra.mxu0 0
        %2312 = vmatprep.subr.bf16.mxu0 0
        %2313 = vmatpush2.bf16.msra.mxu0 0
        %2314 = vmatprep.subr.bf16.mxu0 0
        %2315 = vmatpush2.bf16.msra.mxu0 0
        %2316 = vmatprep.subr.bf16.mxu0 0
        %2317 = vmatpush2.bf16.msra.mxu0 0
        %2318 = vmatprep.subr.bf16.mxu0 0
        %2319 = vmatpush2.bf16.msra.mxu0 0
        %2320 = vmatprep.mubr.bf16.mxu0 0
        %2321 = vmatmul.mubr.bf16.gmra.mxu0 %v716
        %v2322 = vpop.f32.mrf.mxu0
        %v2323 = vadd.f32 %v2238, %v2322
        %v2324 = vpop.f32.mrf.mxu0
        %v2325 = vpop.f32.mrf.mxu0
        %v2326 = vpop.f32.mrf.mxu0
        %2327 = vdwg.mxu0
        %s2328 = scalar_lea.vmem %s8, 704
        %v2329 = vld [vmem:[%s2328] sm:$0xf]
        %v2330 = vld [vmem:[%s2328 + $0x4] sm:$0xf]
        %v2331 = vld [vmem:[%s2328 + $0x8] sm:$0xf]
        %v2332 = vld [vmem:[%s2328 + $0xc] sm:$0xf]
        %v2333 = vld [vmem:[%s2328 + $0x10] sm:$0xf]
        %v2334 = vld [vmem:[%s2328 + $0x14] sm:$0xf]
        %v2335 = vld [vmem:[%s2328 + $0x18] sm:$0xf]
        %v2336 = vld [vmem:[%s2328 + $0x1c] sm:$0xf]
        %v2337 = vld [vmem:[%s2328 + $0x20] sm:$0xf]
        %v2338 = vld [vmem:[%s2328 + $0x24] sm:$0xf]
        %v2339 = vld [vmem:[%s2328 + $0x28] sm:$0xf]
        %v2340 = vld [vmem:[%s2328 + $0x2c] sm:$0xf]
        %v2341 = vld [vmem:[%s2328 + $0x30] sm:$0xf]
        %v2342 = vld [vmem:[%s2328 + $0x34] sm:$0xf]
        %v2343 = vld [vmem:[%s2328 + $0x38] sm:$0xf]
        %v2344 = vld [vmem:[%s2328 + $0x3c] sm:$0xf]
        %s2345 = scalar_lea.vmem %s9, 11
        %v2346 = vld [vmem:[%s2345] sm:$0x1]
        %v2348 = vlaneseq
        %v2349 = vshrl.u32 %v2348, 7
        %v2350 = vsub.s32 0, %v2349
        %v2351 = vrot.slane %v2346, %v2350
        %v2369 = vunpack.c.l.b16 %v2329
        %v2370 = vunpack.c.l.b16 %v2330
        %v2371 = vunpack.c.l.b16 %v2331
        %v2372 = vunpack.c.l.b16 %v2332
        %v2373 = vunpack.c.l.b16 %v2333
        %v2374 = vunpack.c.l.b16 %v2334
        %v2375 = vunpack.c.l.b16 %v2335
        %v2376 = vunpack.c.l.b16 %v2336
        %v2377 = vunpack.c.l.b16 %v2337
        %v2378 = vunpack.c.l.b16 %v2338
        %v2379 = vunpack.c.l.b16 %v2339
        %v2380 = vunpack.c.l.b16 %v2340
        %v2381 = vunpack.c.l.b16 %v2341
        %v2382 = vunpack.c.l.b16 %v2342
        %v2383 = vunpack.c.l.b16 %v2343
        %v2384 = vunpack.c.l.b16 %v2344
        %v2385 = vpack.c.b16 %v2370, %v2369
        %v2386 = vpack.c.b16 %v2372, %v2371
        %v2387 = vpack.c.b16 %v2374, %v2373
        %v2388 = vpack.c.b16 %v2376, %v2375
        %v2389 = vpack.c.b16 %v2378, %v2377
        %v2390 = vpack.c.b16 %v2380, %v2379
        %v2391 = vpack.c.b16 %v2382, %v2381
        %v2392 = vpack.c.b16 %v2384, %v2383
        %2401 = vmatprep.subr.bf16.mxu0 0
        %2402 = vmatpush1.bf16.msra.mxu0 %v2392
        %2403 = vmatprep.subr.bf16.mxu0 0
        %2404 = vmatpush1.bf16.msra.mxu0 %v2391
        %2405 = vmatprep.subr.bf16.mxu0 0
        %2406 = vmatpush1.bf16.msra.mxu0 %v2390
        %2407 = vmatprep.subr.bf16.mxu0 0
        %2408 = vmatpush1.bf16.msra.mxu0 %v2389
        %2409 = vmatprep.subr.bf16.mxu0 0
        %2410 = vmatpush1.bf16.msra.mxu0 %v2388
        %2411 = vmatprep.subr.bf16.mxu0 0
        %2412 = vmatpush1.bf16.msra.mxu0 %v2387
        %2413 = vmatprep.subr.bf16.mxu0 0
        %2414 = vmatpush1.bf16.msra.mxu0 %v2386
        %2415 = vmatprep.subr.bf16.mxu0 0
        %2416 = vmatpush1.bf16.msra.mxu0 %v2385
        %2417 = vmatprep.subr.bf16.mxu0 0
        %2418 = vmatpush2.bf16.msra.mxu0 0
        %2419 = vmatprep.subr.bf16.mxu0 0
        %2420 = vmatpush2.bf16.msra.mxu0 0
        %2421 = vmatprep.subr.bf16.mxu0 0
        %2422 = vmatpush2.bf16.msra.mxu0 0
        %2423 = vmatprep.subr.bf16.mxu0 0
        %2424 = vmatpush2.bf16.msra.mxu0 0
        %2425 = vmatprep.subr.bf16.mxu0 0
        %2426 = vmatpush2.bf16.msra.mxu0 0
        %2427 = vmatprep.subr.bf16.mxu0 0
        %2428 = vmatpush2.bf16.msra.mxu0 0
        %2429 = vmatprep.subr.bf16.mxu0 0
        %2430 = vmatpush2.bf16.msra.mxu0 0
        %2431 = vmatprep.subr.bf16.mxu0 0
        %2432 = vmatpush2.bf16.msra.mxu0 0
        %2433 = vmatprep.mubr.bf16.mxu0 0
        %2434 = vmatmul.mubr.bf16.gmra.mxu0 %v716
        %v2435 = vpop.f32.mrf.mxu0
        %v2436 = vadd.f32 %v2351, %v2435
        %v2437 = vpop.f32.mrf.mxu0
        %v2438 = vpop.f32.mrf.mxu0
        %v2439 = vpop.f32.mrf.mxu0
        %2440 = vdwg.mxu0
        %s2441 = scalar_lea.vmem %s8, 1216
        %v2442 = vld [vmem:[%s2441] sm:$0xf]
        %v2443 = vld [vmem:[%s2441 + $0x4] sm:$0xf]
        %v2444 = vld [vmem:[%s2441 + $0x8] sm:$0xf]
        %v2445 = vld [vmem:[%s2441 + $0xc] sm:$0xf]
        %v2446 = vld [vmem:[%s2441 + $0x10] sm:$0xf]
        %v2447 = vld [vmem:[%s2441 + $0x14] sm:$0xf]
        %v2448 = vld [vmem:[%s2441 + $0x18] sm:$0xf]
        %v2449 = vld [vmem:[%s2441 + $0x1c] sm:$0xf]
        %v2450 = vld [vmem:[%s2441 + $0x20] sm:$0xf]
        %v2451 = vld [vmem:[%s2441 + $0x24] sm:$0xf]
        %v2452 = vld [vmem:[%s2441 + $0x28] sm:$0xf]
        %v2453 = vld [vmem:[%s2441 + $0x2c] sm:$0xf]
        %v2454 = vld [vmem:[%s2441 + $0x30] sm:$0xf]
        %v2455 = vld [vmem:[%s2441 + $0x34] sm:$0xf]
        %v2456 = vld [vmem:[%s2441 + $0x38] sm:$0xf]
        %v2457 = vld [vmem:[%s2441 + $0x3c] sm:$0xf]
        %s2458 = scalar_lea.vmem %s9, 19
        %v2459 = vld [vmem:[%s2458] sm:$0x1]
        %v2461 = vlaneseq
        %v2462 = vshrl.u32 %v2461, 7
        %v2463 = vsub.s32 0, %v2462
        %v2464 = vrot.slane %v2459, %v2463
        %v2482 = vunpack.c.l.b16 %v2442
        %v2483 = vunpack.c.l.b16 %v2443
        %v2484 = vunpack.c.l.b16 %v2444
        %v2485 = vunpack.c.l.b16 %v2445
        %v2486 = vunpack.c.l.b16 %v2446
        %v2487 = vunpack.c.l.b16 %v2447
        %v2488 = vunpack.c.l.b16 %v2448
        %v2489 = vunpack.c.l.b16 %v2449
        %v2490 = vunpack.c.l.b16 %v2450
        %v2491 = vunpack.c.l.b16 %v2451
        %v2492 = vunpack.c.l.b16 %v2452
        %v2493 = vunpack.c.l.b16 %v2453
        %v2494 = vunpack.c.l.b16 %v2454
        %v2495 = vunpack.c.l.b16 %v2455
        %v2496 = vunpack.c.l.b16 %v2456
        %v2497 = vunpack.c.l.b16 %v2457
        %v2498 = vpack.c.b16 %v2483, %v2482
        %v2499 = vpack.c.b16 %v2485, %v2484
        %v2500 = vpack.c.b16 %v2487, %v2486
        %v2501 = vpack.c.b16 %v2489, %v2488
        %v2502 = vpack.c.b16 %v2491, %v2490
        %v2503 = vpack.c.b16 %v2493, %v2492
        %v2504 = vpack.c.b16 %v2495, %v2494
        %v2505 = vpack.c.b16 %v2497, %v2496
        %2514 = vmatprep.subr.bf16.mxu0 0
        %2515 = vmatpush1.bf16.msra.mxu0 %v2505
        %2516 = vmatprep.subr.bf16.mxu0 0
        %2517 = vmatpush1.bf16.msra.mxu0 %v2504
        %2518 = vmatprep.subr.bf16.mxu0 0
        %2519 = vmatpush1.bf16.msra.mxu0 %v2503
        %2520 = vmatprep.subr.bf16.mxu0 0
        %2521 = vmatpush1.bf16.msra.mxu0 %v2502
        %2522 = vmatprep.subr.bf16.mxu0 0
        %2523 = vmatpush1.bf16.msra.mxu0 %v2501
        %2524 = vmatprep.subr.bf16.mxu0 0
        %2525 = vmatpush1.bf16.msra.mxu0 %v2500
        %2526 = vmatprep.subr.bf16.mxu0 0
        %2527 = vmatpush1.bf16.msra.mxu0 %v2499
        %2528 = vmatprep.subr.bf16.mxu0 0
        %2529 = vmatpush1.bf16.msra.mxu0 %v2498
        %2530 = vmatprep.subr.bf16.mxu0 0
        %2531 = vmatpush2.bf16.msra.mxu0 0
        %2532 = vmatprep.subr.bf16.mxu0 0
        %2533 = vmatpush2.bf16.msra.mxu0 0
        %2534 = vmatprep.subr.bf16.mxu0 0
        %2535 = vmatpush2.bf16.msra.mxu0 0
        %2536 = vmatprep.subr.bf16.mxu0 0
        %2537 = vmatpush2.bf16.msra.mxu0 0
        %2538 = vmatprep.subr.bf16.mxu0 0
        %2539 = vmatpush2.bf16.msra.mxu0 0
        %2540 = vmatprep.subr.bf16.mxu0 0
        %2541 = vmatpush2.bf16.msra.mxu0 0
        %2542 = vmatprep.subr.bf16.mxu0 0
        %2543 = vmatpush2.bf16.msra.mxu0 0
        %2544 = vmatprep.subr.bf16.mxu0 0
        %2545 = vmatpush2.bf16.msra.mxu0 0
        %2546 = vmatprep.mubr.bf16.mxu0 0
        %2547 = vmatmul.mubr.bf16.gmra.mxu0 %v716
        %v2548 = vpop.f32.mrf.mxu0
        %v2549 = vadd.f32 %v2464, %v2548
        %v2550 = vpop.f32.mrf.mxu0
        %v2551 = vpop.f32.mrf.mxu0
        %v2552 = vpop.f32.mrf.mxu0
        %2553 = vdwg.mxu0
        %v2554 = vpack.c.bf16 %v2323, %v2323
        %v2555 = vpack.c.bf16 %v2436, %v2436
        %v2557 = vsel %vm1056, %v2554, 0
        %v2560 = vsel %vm1056, %v2555, 0
        %2562 = vmatprep.subr.bf16.mxu0 0
        %2563 = vmatpush1.bf16.xpose.msra.mxu0 0
        %2564 = vmatprep.subr.bf16.mxu0 0
        %2565 = vmatpush1.bf16.xpose.msra.mxu0 0
        %2566 = vmatprep.subr.bf16.mxu0 0
        %2567 = vmatpush1.bf16.xpose.msra.mxu0 0
        %2568 = vmatprep.subr.bf16.mxu0 0
        %2569 = vmatpush1.bf16.xpose.msra.mxu0 0
        %2570 = vmatprep.subr.bf16.mxu0 0
        %2571 = vmatpush1.bf16.xpose.msra.mxu0 0
        %2572 = vmatprep.subr.bf16.mxu0 0
        %2573 = vmatpush1.bf16.xpose.msra.mxu0 0
        %2574 = vmatprep.subr.bf16.mxu0 0
        %2575 = vmatpush1.bf16.xpose.msra.mxu0 0
        %2576 = vmatprep.subr.bf16.mxu0 0
        %2577 = vmatpush1.bf16.xpose.msra.mxu0 %v2560
        %2578 = vmatprep.subr.bf16.mxu0 0
        %2579 = vmatpush2.bf16.xpose.msra.mxu0 0
        %2580 = vmatprep.subr.bf16.mxu0 0
        %2581 = vmatpush2.bf16.xpose.msra.mxu0 0
        %2582 = vmatprep.subr.bf16.mxu0 0
        %2583 = vmatpush2.bf16.xpose.msra.mxu0 0
        %2584 = vmatprep.subr.bf16.mxu0 0
        %2585 = vmatpush2.bf16.xpose.msra.mxu0 0
        %2586 = vmatprep.subr.bf16.mxu0 0
        %2587 = vmatpush2.bf16.xpose.msra.mxu0 0
        %2588 = vmatprep.subr.bf16.mxu0 0
        %2589 = vmatpush2.bf16.xpose.msra.mxu0 0
        %2590 = vmatprep.subr.bf16.mxu0 0
        %2591 = vmatpush2.bf16.xpose.msra.mxu0 0
        %2592 = vmatprep.subr.bf16.mxu0 0
        %2593 = vmatpush2.bf16.xpose.msra.mxu0 0
        %2594 = vmatprep.mubr.bf16.mxu0 0
        %2595 = vmatmul.mubr.bf16.gmra.mxu0 %v2557
        %v2596 = vpop.f32.mrf.mxu0
        %v2597 = vadd.f32 0.0, %v2596
        %v2598 = vpop.f32.mrf.mxu0
        %v2599 = vpop.f32.mrf.mxu0
        %v2600 = vpop.f32.mrf.mxu0
        %2601 = vdwg.mxu0
        %v2602 = vsel %vm1103, %v2597, -inf
        %2603 = vmax.xlane.f32.xlu0 %v2602
        %v2604 = vpop.xlane.xlu0 %2603
        %v2605 = vsub.f32 %v2597, %v2604
        %v2606 = vmul.f32 %v2605, 1.442695
        %v2607 = vpow.pop %v2606
        %v2608 = vsel %vm1103, %v2607, 0.0
        %2609 = vadd.xlane.f32.xlu0 %v2608
        %v2610 = vpop.xlane.xlu0 %2609
        %v2611 = vrcp.pop %v2610
        %v2612 = vmul.f32 %v2607, %v2611
        %v2613 = vpack.c.bf16 %v2612, %v2612
        %v2614 = vpack.c.bf16 %v2549, %v2549
        %v2616 = vsel %vm1103, %v2613, 0
        %v2619 = vsel %vm1120, %v2614, 0
        %2621 = vmatprep.subr.bf16.mxu0 0
        %2622 = vmatpush1.bf16.msra.mxu0 0
        %2623 = vmatprep.subr.bf16.mxu0 0
        %2624 = vmatpush1.bf16.msra.mxu0 0
        %2625 = vmatprep.subr.bf16.mxu0 0
        %2626 = vmatpush1.bf16.msra.mxu0 0
        %2627 = vmatprep.subr.bf16.mxu0 0
        %2628 = vmatpush1.bf16.msra.mxu0 0
        %2629 = vmatprep.subr.bf16.mxu0 0
        %2630 = vmatpush1.bf16.msra.mxu0 0
        %2631 = vmatprep.subr.bf16.mxu0 0
        %2632 = vmatpush1.bf16.msra.mxu0 0
        %2633 = vmatprep.subr.bf16.mxu0 0
        %2634 = vmatpush1.bf16.msra.mxu0 0
        %2635 = vmatprep.subr.bf16.mxu0 0
        %2636 = vmatpush1.bf16.msra.mxu0 %v2619
        %2637 = vmatprep.subr.bf16.mxu0 0
        %2638 = vmatpush2.bf16.msra.mxu0 0
        %2639 = vmatprep.subr.bf16.mxu0 0
        %2640 = vmatpush2.bf16.msra.mxu0 0
        %2641 = vmatprep.subr.bf16.mxu0 0
        %2642 = vmatpush2.bf16.msra.mxu0 0
        %2643 = vmatprep.subr.bf16.mxu0 0
        %2644 = vmatpush2.bf16.msra.mxu0 0
        %2645 = vmatprep.subr.bf16.mxu0 0
        %2646 = vmatpush2.bf16.msra.mxu0 0
        %2647 = vmatprep.subr.bf16.mxu0 0
        %2648 = vmatpush2.bf16.msra.mxu0 0
        %2649 = vmatprep.subr.bf16.mxu0 0
        %2650 = vmatpush2.bf16.msra.mxu0 0
        %2651 = vmatprep.subr.bf16.mxu0 0
        %2652 = vmatpush2.bf16.msra.mxu0 0
        %2653 = vmatprep.mubr.bf16.mxu0 0
        %2654 = vmatmul.mubr.bf16.gmra.mxu0 %v2616
        %v2655 = vpop.f32.mrf.mxu0
        %v2656 = vadd.f32 0.0, %v2655
        %v2657 = vpop.f32.mrf.mxu0
        %v2658 = vpop.f32.mrf.mxu0
        %v2659 = vpop.f32.mrf.mxu0
        %2660 = vdwg.mxu0
        %v2661 = vpack.c.bf16 %v2656, %v2656
        %s2662 = scalar_lea.vmem %s10, 24
        %v2663 = vld [vmem:[%s2662] sm:$0xf]
        %v2664 = vld [vmem:[%s2662 + $0x4] sm:$0xf]
        %v2667 = vunpack.c.l.b16 %v2663
        %v2668 = vunpack.c.l.b16 %v2664
        %v2669 = vpack.c.b16 %v2668, %v2667
        %v2672 = vsel %vm1056, %v2661, 0
        %2674 = vmatprep.subr.bf16.mxu0 0
        %2675 = vmatpush1.bf16.msra.mxu0 0
        %2676 = vmatprep.subr.bf16.mxu0 0
        %2677 = vmatpush1.bf16.msra.mxu0 0
        %2678 = vmatprep.subr.bf16.mxu0 0
        %2679 = vmatpush1.bf16.msra.mxu0 0
        %2680 = vmatprep.subr.bf16.mxu0 0
        %2681 = vmatpush1.bf16.msra.mxu0 0
        %2682 = vmatprep.subr.bf16.mxu0 0
        %2683 = vmatpush1.bf16.msra.mxu0 0
        %2684 = vmatprep.subr.bf16.mxu0 0
        %2685 = vmatpush1.bf16.msra.mxu0 0
        %2686 = vmatprep.subr.bf16.mxu0 0
        %2687 = vmatpush1.bf16.msra.mxu0 0
        %2688 = vmatprep.subr.bf16.mxu0 0
        %2689 = vmatpush1.bf16.msra.mxu0 %v2669
        %2690 = vmatprep.subr.bf16.mxu0 0
        %2691 = vmatpush2.bf16.msra.mxu0 0
        %2692 = vmatprep.subr.bf16.mxu0 0
        %2693 = vmatpush2.bf16.msra.mxu0 0
        %2694 = vmatprep.subr.bf16.mxu0 0
        %2695 = vmatpush2.bf16.msra.mxu0 0
        %2696 = vmatprep.subr.bf16.mxu0 0
        %2697 = vmatpush2.bf16.msra.mxu0 0
        %2698 = vmatprep.subr.bf16.mxu0 0
        %2699 = vmatpush2.bf16.msra.mxu0 0
        %2700 = vmatprep.subr.bf16.mxu0 0
        %2701 = vmatpush2.bf16.msra.mxu0 0
        %2702 = vmatprep.subr.bf16.mxu0 0
        %2703 = vmatpush2.bf16.msra.mxu0 0
        %2704 = vmatprep.subr.bf16.mxu0 0
        %2705 = vmatpush2.bf16.msra.mxu0 0
        %2706 = vmatprep.mubr.bf16.mxu0 0
        %2707 = vmatmul.mubr.bf16.gmra.mxu0 %v2672
        %v2708 = vpop.f32.mrf.mxu0
        %v2709 = vadd.f32 0.0, %v2708
        %v2710 = vpop.f32.mrf.mxu0
        %v2711 = vpop.f32.mrf.mxu0
        %v2712 = vpop.f32.mrf.mxu0
        %2713 = vdwg.mxu0
        %v2714 = vadd.f32 %v2214, %v2709
        %s2715 = scalar_lea.vmem %s8, 256
        %v2716 = vld [vmem:[%s2715] sm:$0xf]
        %v2717 = vld [vmem:[%s2715 + $0x4] sm:$0xf]
        %v2718 = vld [vmem:[%s2715 + $0x8] sm:$0xf]
        %v2719 = vld [vmem:[%s2715 + $0xc] sm:$0xf]
        %v2720 = vld [vmem:[%s2715 + $0x10] sm:$0xf]
        %v2721 = vld [vmem:[%s2715 + $0x14] sm:$0xf]
        %v2722 = vld [vmem:[%s2715 + $0x18] sm:$0xf]
        %v2723 = vld [vmem:[%s2715 + $0x1c] sm:$0xf]
        %v2724 = vld [vmem:[%s2715 + $0x20] sm:$0xf]
        %v2725 = vld [vmem:[%s2715 + $0x24] sm:$0xf]
        %v2726 = vld [vmem:[%s2715 + $0x28] sm:$0xf]
        %v2727 = vld [vmem:[%s2715 + $0x2c] sm:$0xf]
        %v2728 = vld [vmem:[%s2715 + $0x30] sm:$0xf]
        %v2729 = vld [vmem:[%s2715 + $0x34] sm:$0xf]
        %v2730 = vld [vmem:[%s2715 + $0x38] sm:$0xf]
        %v2731 = vld [vmem:[%s2715 + $0x3c] sm:$0xf]
        %s2732 = scalar_lea.vmem %s9, 4
        %v2733 = vld [vmem:[%s2732] sm:$0x1]
        %v2735 = vlaneseq
        %v2736 = vshrl.u32 %v2735, 7
        %v2737 = vsub.s32 0, %v2736
        %v2738 = vrot.slane %v2733, %v2737
        %v2756 = vunpack.c.l.b16 %v2716
        %v2757 = vunpack.c.l.b16 %v2717
        %v2758 = vunpack.c.l.b16 %v2718
        %v2759 = vunpack.c.l.b16 %v2719
        %v2760 = vunpack.c.l.b16 %v2720
        %v2761 = vunpack.c.l.b16 %v2721
        %v2762 = vunpack.c.l.b16 %v2722
        %v2763 = vunpack.c.l.b16 %v2723
        %v2764 = vunpack.c.l.b16 %v2724
        %v2765 = vunpack.c.l.b16 %v2725
        %v2766 = vunpack.c.l.b16 %v2726
        %v2767 = vunpack.c.l.b16 %v2727
        %v2768 = vunpack.c.l.b16 %v2728
        %v2769 = vunpack.c.l.b16 %v2729
        %v2770 = vunpack.c.l.b16 %v2730
        %v2771 = vunpack.c.l.b16 %v2731
        %v2772 = vpack.c.b16 %v2757, %v2756
        %v2773 = vpack.c.b16 %v2759, %v2758
        %v2774 = vpack.c.b16 %v2761, %v2760
        %v2775 = vpack.c.b16 %v2763, %v2762
        %v2776 = vpack.c.b16 %v2765, %v2764
        %v2777 = vpack.c.b16 %v2767, %v2766
        %v2778 = vpack.c.b16 %v2769, %v2768
        %v2779 = vpack.c.b16 %v2771, %v2770
        %2788 = vmatprep.subr.bf16.mxu0 0
        %2789 = vmatpush1.bf16.msra.mxu0 %v2779
        %2790 = vmatprep.subr.bf16.mxu0 0
        %2791 = vmatpush1.bf16.msra.mxu0 %v2778
        %2792 = vmatprep.subr.bf16.mxu0 0
        %2793 = vmatpush1.bf16.msra.mxu0 %v2777
        %2794 = vmatprep.subr.bf16.mxu0 0
        %2795 = vmatpush1.bf16.msra.mxu0 %v2776
        %2796 = vmatprep.subr.bf16.mxu0 0
        %2797 = vmatpush1.bf16.msra.mxu0 %v2775
        %2798 = vmatprep.subr.bf16.mxu0 0
        %2799 = vmatpush1.bf16.msra.mxu0 %v2774
        %2800 = vmatprep.subr.bf16.mxu0 0
        %2801 = vmatpush1.bf16.msra.mxu0 %v2773
        %2802 = vmatprep.subr.bf16.mxu0 0
        %2803 = vmatpush1.bf16.msra.mxu0 %v2772
        %2804 = vmatprep.subr.bf16.mxu0 0
        %2805 = vmatpush2.bf16.msra.mxu0 0
        %2806 = vmatprep.subr.bf16.mxu0 0
        %2807 = vmatpush2.bf16.msra.mxu0 0
        %2808 = vmatprep.subr.bf16.mxu0 0
        %2809 = vmatpush2.bf16.msra.mxu0 0
        %2810 = vmatprep.subr.bf16.mxu0 0
        %2811 = vmatpush2.bf16.msra.mxu0 0
        %2812 = vmatprep.subr.bf16.mxu0 0
        %2813 = vmatpush2.bf16.msra.mxu0 0
        %2814 = vmatprep.subr.bf16.mxu0 0
        %2815 = vmatpush2.bf16.msra.mxu0 0
        %2816 = vmatprep.subr.bf16.mxu0 0
        %2817 = vmatpush2.bf16.msra.mxu0 0
        %2818 = vmatprep.subr.bf16.mxu0 0
        %2819 = vmatpush2.bf16.msra.mxu0 0
        %2820 = vmatprep.mubr.bf16.mxu0 0
        %2821 = vmatmul.mubr.bf16.gmra.mxu0 %v716
        %v2822 = vpop.f32.mrf.mxu0
        %v2823 = vadd.f32 %v2738, %v2822
        %v2824 = vpop.f32.mrf.mxu0
        %v2825 = vpop.f32.mrf.mxu0
        %v2826 = vpop.f32.mrf.mxu0
        %2827 = vdwg.mxu0
        %s2828 = scalar_lea.vmem %s8, 768
        %v2829 = vld [vmem:[%s2828] sm:$0xf]
        %v2830 = vld [vmem:[%s2828 + $0x4] sm:$0xf]
        %v2831 = vld [vmem:[%s2828 + $0x8] sm:$0xf]
        %v2832 = vld [vmem:[%s2828 + $0xc] sm:$0xf]
        %v2833 = vld [vmem:[%s2828 + $0x10] sm:$0xf]
        %v2834 = vld [vmem:[%s2828 + $0x14] sm:$0xf]
        %v2835 = vld [vmem:[%s2828 + $0x18] sm:$0xf]
        %v2836 = vld [vmem:[%s2828 + $0x1c] sm:$0xf]
        %v2837 = vld [vmem:[%s2828 + $0x20] sm:$0xf]
        %v2838 = vld [vmem:[%s2828 + $0x24] sm:$0xf]
        %v2839 = vld [vmem:[%s2828 + $0x28] sm:$0xf]
        %v2840 = vld [vmem:[%s2828 + $0x2c] sm:$0xf]
        %v2841 = vld [vmem:[%s2828 + $0x30] sm:$0xf]
        %v2842 = vld [vmem:[%s2828 + $0x34] sm:$0xf]
        %v2843 = vld [vmem:[%s2828 + $0x38] sm:$0xf]
        %v2844 = vld [vmem:[%s2828 + $0x3c] sm:$0xf]
        %s2845 = scalar_lea.vmem %s9, 12
        %v2846 = vld [vmem:[%s2845] sm:$0x1]
        %v2848 = vlaneseq
        %v2849 = vshrl.u32 %v2848, 7
        %v2850 = vsub.s32 0, %v2849
        %v2851 = vrot.slane %v2846, %v2850
        %v2869 = vunpack.c.l.b16 %v2829
        %v2870 = vunpack.c.l.b16 %v2830
        %v2871 = vunpack.c.l.b16 %v2831
        %v2872 = vunpack.c.l.b16 %v2832
        %v2873 = vunpack.c.l.b16 %v2833
        %v2874 = vunpack.c.l.b16 %v2834
        %v2875 = vunpack.c.l.b16 %v2835
        %v2876 = vunpack.c.l.b16 %v2836
        %v2877 = vunpack.c.l.b16 %v2837
        %v2878 = vunpack.c.l.b16 %v2838
        %v2879 = vunpack.c.l.b16 %v2839
        %v2880 = vunpack.c.l.b16 %v2840
        %v2881 = vunpack.c.l.b16 %v2841
        %v2882 = vunpack.c.l.b16 %v2842
        %v2883 = vunpack.c.l.b16 %v2843
        %v2884 = vunpack.c.l.b16 %v2844
        %v2885 = vpack.c.b16 %v2870, %v2869
        %v2886 = vpack.c.b16 %v2872, %v2871
        %v2887 = vpack.c.b16 %v2874, %v2873
        %v2888 = vpack.c.b16 %v2876, %v2875
        %v2889 = vpack.c.b16 %v2878, %v2877
        %v2890 = vpack.c.b16 %v2880, %v2879
        %v2891 = vpack.c.b16 %v2882, %v2881
        %v2892 = vpack.c.b16 %v2884, %v2883
        %2901 = vmatprep.subr.bf16.mxu0 0
        %2902 = vmatpush1.bf16.msra.mxu0 %v2892
        %2903 = vmatprep.subr.bf16.mxu0 0
        %2904 = vmatpush1.bf16.msra.mxu0 %v2891
        %2905 = vmatprep.subr.bf16.mxu0 0
        %2906 = vmatpush1.bf16.msra.mxu0 %v2890
        %2907 = vmatprep.subr.bf16.mxu0 0
        %2908 = vmatpush1.bf16.msra.mxu0 %v2889
        %2909 = vmatprep.subr.bf16.mxu0 0
        %2910 = vmatpush1.bf16.msra.mxu0 %v2888
        %2911 = vmatprep.subr.bf16.mxu0 0
        %2912 = vmatpush1.bf16.msra.mxu0 %v2887
        %2913 = vmatprep.subr.bf16.mxu0 0
        %2914 = vmatpush1.bf16.msra.mxu0 %v2886
        %2915 = vmatprep.subr.bf16.mxu0 0
        %2916 = vmatpush1.bf16.msra.mxu0 %v2885
        %2917 = vmatprep.subr.bf16.mxu0 0
        %2918 = vmatpush2.bf16.msra.mxu0 0
        %2919 = vmatprep.subr.bf16.mxu0 0
        %2920 = vmatpush2.bf16.msra.mxu0 0
        %2921 = vmatprep.subr.bf16.mxu0 0
        %2922 = vmatpush2.bf16.msra.mxu0 0
        %2923 = vmatprep.subr.bf16.mxu0 0
        %2924 = vmatpush2.bf16.msra.mxu0 0
        %2925 = vmatprep.subr.bf16.mxu0 0
        %2926 = vmatpush2.bf16.msra.mxu0 0
        %2927 = vmatprep.subr.bf16.mxu0 0
        %2928 = vmatpush2.bf16.msra.mxu0 0
        %2929 = vmatprep.subr.bf16.mxu0 0
        %2930 = vmatpush2.bf16.msra.mxu0 0
        %2931 = vmatprep.subr.bf16.mxu0 0
        %2932 = vmatpush2.bf16.msra.mxu0 0
        %2933 = vmatprep.mubr.bf16.mxu0 0
        %2934 = vmatmul.mubr.bf16.gmra.mxu0 %v716
        %v2935 = vpop.f32.mrf.mxu0
        %v2936 = vadd.f32 %v2851, %v2935
        %v2937 = vpop.f32.mrf.mxu0
        %v2938 = vpop.f32.mrf.mxu0
        %v2939 = vpop.f32.mrf.mxu0
        %2940 = vdwg.mxu0
        %s2941 = scalar_lea.vmem %s8, 1280
        %v2942 = vld [vmem:[%s2941] sm:$0xf]
        %v2943 = vld [vmem:[%s2941 + $0x4] sm:$0xf]
        %v2944 = vld [vmem:[%s2941 + $0x8] sm:$0xf]
        %v2945 = vld [vmem:[%s2941 + $0xc] sm:$0xf]
        %v2946 = vld [vmem:[%s2941 + $0x10] sm:$0xf]
        %v2947 = vld [vmem:[%s2941 + $0x14] sm:$0xf]
        %v2948 = vld [vmem:[%s2941 + $0x18] sm:$0xf]
        %v2949 = vld [vmem:[%s2941 + $0x1c] sm:$0xf]
        %v2950 = vld [vmem:[%s2941 + $0x20] sm:$0xf]
        %v2951 = vld [vmem:[%s2941 + $0x24] sm:$0xf]
        %v2952 = vld [vmem:[%s2941 + $0x28] sm:$0xf]
        %v2953 = vld [vmem:[%s2941 + $0x2c] sm:$0xf]
        %v2954 = vld [vmem:[%s2941 + $0x30] sm:$0xf]
        %v2955 = vld [vmem:[%s2941 + $0x34] sm:$0xf]
        %v2956 = vld [vmem:[%s2941 + $0x38] sm:$0xf]
        %v2957 = vld [vmem:[%s2941 + $0x3c] sm:$0xf]
        %s2958 = scalar_lea.vmem %s9, 20
        %v2959 = vld [vmem:[%s2958] sm:$0x1]
        %v2961 = vlaneseq
        %v2962 = vshrl.u32 %v2961, 7
        %v2963 = vsub.s32 0, %v2962
        %v2964 = vrot.slane %v2959, %v2963
        %v2982 = vunpack.c.l.b16 %v2942
        %v2983 = vunpack.c.l.b16 %v2943
        %v2984 = vunpack.c.l.b16 %v2944
        %v2985 = vunpack.c.l.b16 %v2945
        %v2986 = vunpack.c.l.b16 %v2946
        %v2987 = vunpack.c.l.b16 %v2947
        %v2988 = vunpack.c.l.b16 %v2948
        %v2989 = vunpack.c.l.b16 %v2949
        %v2990 = vunpack.c.l.b16 %v2950
        %v2991 = vunpack.c.l.b16 %v2951
        %v2992 = vunpack.c.l.b16 %v2952
        %v2993 = vunpack.c.l.b16 %v2953
        %v2994 = vunpack.c.l.b16 %v2954
        %v2995 = vunpack.c.l.b16 %v2955
        %v2996 = vunpack.c.l.b16 %v2956
        %v2997 = vunpack.c.l.b16 %v2957
        %v2998 = vpack.c.b16 %v2983, %v2982
        %v2999 = vpack.c.b16 %v2985, %v2984
        %v3000 = vpack.c.b16 %v2987, %v2986
        %v3001 = vpack.c.b16 %v2989, %v2988
        %v3002 = vpack.c.b16 %v2991, %v2990
        %v3003 = vpack.c.b16 %v2993, %v2992
        %v3004 = vpack.c.b16 %v2995, %v2994
        %v3005 = vpack.c.b16 %v2997, %v2996
        %3014 = vmatprep.subr.bf16.mxu0 0
        %3015 = vmatpush1.bf16.msra.mxu0 %v3005
        %3016 = vmatprep.subr.bf16.mxu0 0
        %3017 = vmatpush1.bf16.msra.mxu0 %v3004
        %3018 = vmatprep.subr.bf16.mxu0 0
        %3019 = vmatpush1.bf16.msra.mxu0 %v3003
        %3020 = vmatprep.subr.bf16.mxu0 0
        %3021 = vmatpush1.bf16.msra.mxu0 %v3002
        %3022 = vmatprep.subr.bf16.mxu0 0
        %3023 = vmatpush1.bf16.msra.mxu0 %v3001
        %3024 = vmatprep.subr.bf16.mxu0 0
        %3025 = vmatpush1.bf16.msra.mxu0 %v3000
        %3026 = vmatprep.subr.bf16.mxu0 0
        %3027 = vmatpush1.bf16.msra.mxu0 %v2999
        %3028 = vmatprep.subr.bf16.mxu0 0
        %3029 = vmatpush1.bf16.msra.mxu0 %v2998
        %3030 = vmatprep.subr.bf16.mxu0 0
        %3031 = vmatpush2.bf16.msra.mxu0 0
        %3032 = vmatprep.subr.bf16.mxu0 0
        %3033 = vmatpush2.bf16.msra.mxu0 0
        %3034 = vmatprep.subr.bf16.mxu0 0
        %3035 = vmatpush2.bf16.msra.mxu0 0
        %3036 = vmatprep.subr.bf16.mxu0 0
        %3037 = vmatpush2.bf16.msra.mxu0 0
        %3038 = vmatprep.subr.bf16.mxu0 0
        %3039 = vmatpush2.bf16.msra.mxu0 0
        %3040 = vmatprep.subr.bf16.mxu0 0
        %3041 = vmatpush2.bf16.msra.mxu0 0
        %3042 = vmatprep.subr.bf16.mxu0 0
        %3043 = vmatpush2.bf16.msra.mxu0 0
        %3044 = vmatprep.subr.bf16.mxu0 0
        %3045 = vmatpush2.bf16.msra.mxu0 0
        %3046 = vmatprep.mubr.bf16.mxu0 0
        %3047 = vmatmul.mubr.bf16.gmra.mxu0 %v716
        %v3048 = vpop.f32.mrf.mxu0
        %v3049 = vadd.f32 %v2964, %v3048
        %v3050 = vpop.f32.mrf.mxu0
        %v3051 = vpop.f32.mrf.mxu0
        %v3052 = vpop.f32.mrf.mxu0
        %3053 = vdwg.mxu0
        %v3054 = vpack.c.bf16 %v2823, %v2823
        %v3055 = vpack.c.bf16 %v2936, %v2936
        %v3057 = vsel %vm1056, %v3054, 0
        %v3060 = vsel %vm1056, %v3055, 0
        %3062 = vmatprep.subr.bf16.mxu0 0
        %3063 = vmatpush1.bf16.xpose.msra.mxu0 0
        %3064 = vmatprep.subr.bf16.mxu0 0
        %3065 = vmatpush1.bf16.xpose.msra.mxu0 0
        %3066 = vmatprep.subr.bf16.mxu0 0
        %3067 = vmatpush1.bf16.xpose.msra.mxu0 0
        %3068 = vmatprep.subr.bf16.mxu0 0
        %3069 = vmatpush1.bf16.xpose.msra.mxu0 0
        %3070 = vmatprep.subr.bf16.mxu0 0
        %3071 = vmatpush1.bf16.xpose.msra.mxu0 0
        %3072 = vmatprep.subr.bf16.mxu0 0
        %3073 = vmatpush1.bf16.xpose.msra.mxu0 0
        %3074 = vmatprep.subr.bf16.mxu0 0
        %3075 = vmatpush1.bf16.xpose.msra.mxu0 0
        %3076 = vmatprep.subr.bf16.mxu0 0
        %3077 = vmatpush1.bf16.xpose.msra.mxu0 %v3060
        %3078 = vmatprep.subr.bf16.mxu0 0
        %3079 = vmatpush2.bf16.xpose.msra.mxu0 0
        %3080 = vmatprep.subr.bf16.mxu0 0
        %3081 = vmatpush2.bf16.xpose.msra.mxu0 0
        %3082 = vmatprep.subr.bf16.mxu0 0
        %3083 = vmatpush2.bf16.xpose.msra.mxu0 0
        %3084 = vmatprep.subr.bf16.mxu0 0
        %3085 = vmatpush2.bf16.xpose.msra.mxu0 0
        %3086 = vmatprep.subr.bf16.mxu0 0
        %3087 = vmatpush2.bf16.xpose.msra.mxu0 0
        %3088 = vmatprep.subr.bf16.mxu0 0
        %3089 = vmatpush2.bf16.xpose.msra.mxu0 0
        %3090 = vmatprep.subr.bf16.mxu0 0
        %3091 = vmatpush2.bf16.xpose.msra.mxu0 0
        %3092 = vmatprep.subr.bf16.mxu0 0
        %3093 = vmatpush2.bf16.xpose.msra.mxu0 0
        %3094 = vmatprep.mubr.bf16.mxu0 0
        %3095 = vmatmul.mubr.bf16.gmra.mxu0 %v3057
        %v3096 = vpop.f32.mrf.mxu0
        %v3097 = vadd.f32 0.0, %v3096
        %v3098 = vpop.f32.mrf.mxu0
        %v3099 = vpop.f32.mrf.mxu0
        %v3100 = vpop.f32.mrf.mxu0
        %3101 = vdwg.mxu0
        %v3102 = vsel %vm1103, %v3097, -inf
        %3103 = vmax.xlane.f32.xlu0 %v3102
        %v3104 = vpop.xlane.xlu0 %3103
        %v3105 = vsub.f32 %v3097, %v3104
        %v3106 = vmul.f32 %v3105, 1.442695
        %v3107 = vpow.pop %v3106
        %v3108 = vsel %vm1103, %v3107, 0.0
        %3109 = vadd.xlane.f32.xlu0 %v3108
        %v3110 = vpop.xlane.xlu0 %3109
        %v3111 = vrcp.pop %v3110
        %v3112 = vmul.f32 %v3107, %v3111
        %v3113 = vpack.c.bf16 %v3112, %v3112
        %v3114 = vpack.c.bf16 %v3049, %v3049
        %v3116 = vsel %vm1103, %v3113, 0
        %v3119 = vsel %vm1120, %v3114, 0
        %3121 = vmatprep.subr.bf16.mxu0 0
        %3122 = vmatpush1.bf16.msra.mxu0 0
        %3123 = vmatprep.subr.bf16.mxu0 0
        %3124 = vmatpush1.bf16.msra.mxu0 0
        %3125 = vmatprep.subr.bf16.mxu0 0
        %3126 = vmatpush1.bf16.msra.mxu0 0
        %3127 = vmatprep.subr.bf16.mxu0 0
        %3128 = vmatpush1.bf16.msra.mxu0 0
        %3129 = vmatprep.subr.bf16.mxu0 0
        %3130 = vmatpush1.bf16.msra.mxu0 0
        %3131 = vmatprep.subr.bf16.mxu0 0
        %3132 = vmatpush1.bf16.msra.mxu0 0
        %3133 = vmatprep.subr.bf16.mxu0 0
        %3134 = vmatpush1.bf16.msra.mxu0 0
        %3135 = vmatprep.subr.bf16.mxu0 0
        %3136 = vmatpush1.bf16.msra.mxu0 %v3119
        %3137 = vmatprep.subr.bf16.mxu0 0
        %3138 = vmatpush2.bf16.msra.mxu0 0
        %3139 = vmatprep.subr.bf16.mxu0 0
        %3140 = vmatpush2.bf16.msra.mxu0 0
        %3141 = vmatprep.subr.bf16.mxu0 0
        %3142 = vmatpush2.bf16.msra.mxu0 0
        %3143 = vmatprep.subr.bf16.mxu0 0
        %3144 = vmatpush2.bf16.msra.mxu0 0
        %3145 = vmatprep.subr.bf16.mxu0 0
        %3146 = vmatpush2.bf16.msra.mxu0 0
        %3147 = vmatprep.subr.bf16.mxu0 0
        %3148 = vmatpush2.bf16.msra.mxu0 0
        %3149 = vmatprep.subr.bf16.mxu0 0
        %3150 = vmatpush2.bf16.msra.mxu0 0
        %3151 = vmatprep.subr.bf16.mxu0 0
        %3152 = vmatpush2.bf16.msra.mxu0 0
        %3153 = vmatprep.mubr.bf16.mxu0 0
        %3154 = vmatmul.mubr.bf16.gmra.mxu0 %v3116
        %v3155 = vpop.f32.mrf.mxu0
        %v3156 = vadd.f32 0.0, %v3155
        %v3157 = vpop.f32.mrf.mxu0
        %v3158 = vpop.f32.mrf.mxu0
        %v3159 = vpop.f32.mrf.mxu0
        %3160 = vdwg.mxu0
        %v3161 = vpack.c.bf16 %v3156, %v3156
        %s3162 = scalar_lea.vmem %s10, 32
        %v3163 = vld [vmem:[%s3162] sm:$0xf]
        %v3164 = vld [vmem:[%s3162 + $0x4] sm:$0xf]
        %v3167 = vunpack.c.l.b16 %v3163
        %v3168 = vunpack.c.l.b16 %v3164
        %v3169 = vpack.c.b16 %v3168, %v3167
        %v3172 = vsel %vm1056, %v3161, 0
        %3174 = vmatprep.subr.bf16.mxu0 0
        %3175 = vmatpush1.bf16.msra.mxu0 0
        %3176 = vmatprep.subr.bf16.mxu0 0
        %3177 = vmatpush1.bf16.msra.mxu0 0
        %3178 = vmatprep.subr.bf16.mxu0 0
        %3179 = vmatpush1.bf16.msra.mxu0 0
        %3180 = vmatprep.subr.bf16.mxu0 0
        %3181 = vmatpush1.bf16.msra.mxu0 0
        %3182 = vmatprep.subr.bf16.mxu0 0
        %3183 = vmatpush1.bf16.msra.mxu0 0
        %3184 = vmatprep.subr.bf16.mxu0 0
        %3185 = vmatpush1.bf16.msra.mxu0 0
        %3186 = vmatprep.subr.bf16.mxu0 0
        %3187 = vmatpush1.bf16.msra.mxu0 0
        %3188 = vmatprep.subr.bf16.mxu0 0
        %3189 = vmatpush1.bf16.msra.mxu0 %v3169
        %3190 = vmatprep.subr.bf16.mxu0 0
        %3191 = vmatpush2.bf16.msra.mxu0 0
        %3192 = vmatprep.subr.bf16.mxu0 0
        %3193 = vmatpush2.bf16.msra.mxu0 0
        %3194 = vmatprep.subr.bf16.mxu0 0
        %3195 = vmatpush2.bf16.msra.mxu0 0
        %3196 = vmatprep.subr.bf16.mxu0 0
        %3197 = vmatpush2.bf16.msra.mxu0 0
        %3198 = vmatprep.subr.bf16.mxu0 0
        %3199 = vmatpush2.bf16.msra.mxu0 0
        %3200 = vmatprep.subr.bf16.mxu0 0
        %3201 = vmatpush2.bf16.msra.mxu0 0
        %3202 = vmatprep.subr.bf16.mxu0 0
        %3203 = vmatpush2.bf16.msra.mxu0 0
        %3204 = vmatprep.subr.bf16.mxu0 0
        %3205 = vmatpush2.bf16.msra.mxu0 0
        %3206 = vmatprep.mubr.bf16.mxu0 0
        %3207 = vmatmul.mubr.bf16.gmra.mxu0 %v3172
        %v3208 = vpop.f32.mrf.mxu0
        %v3209 = vadd.f32 0.0, %v3208
        %v3210 = vpop.f32.mrf.mxu0
        %v3211 = vpop.f32.mrf.mxu0
        %v3212 = vpop.f32.mrf.mxu0
        %3213 = vdwg.mxu0
        %v3214 = vadd.f32 %v2714, %v3209
        %s3215 = scalar_lea.vmem %s8, 320
        %v3216 = vld [vmem:[%s3215] sm:$0xf]
        %v3217 = vld [vmem:[%s3215 + $0x4] sm:$0xf]
        %v3218 = vld [vmem:[%s3215 + $0x8] sm:$0xf]
        %v3219 = vld [vmem:[%s3215 + $0xc] sm:$0xf]
        %v3220 = vld [vmem:[%s3215 + $0x10] sm:$0xf]
        %v3221 = vld [vmem:[%s3215 + $0x14] sm:$0xf]
        %v3222 = vld [vmem:[%s3215 + $0x18] sm:$0xf]
        %v3223 = vld [vmem:[%s3215 + $0x1c] sm:$0xf]
        %v3224 = vld [vmem:[%s3215 + $0x20] sm:$0xf]
        %v3225 = vld [vmem:[%s3215 + $0x24] sm:$0xf]
        %v3226 = vld [vmem:[%s3215 + $0x28] sm:$0xf]
        %v3227 = vld [vmem:[%s3215 + $0x2c] sm:$0xf]
        %v3228 = vld [vmem:[%s3215 + $0x30] sm:$0xf]
        %v3229 = vld [vmem:[%s3215 + $0x34] sm:$0xf]
        %v3230 = vld [vmem:[%s3215 + $0x38] sm:$0xf]
        %v3231 = vld [vmem:[%s3215 + $0x3c] sm:$0xf]
        %s3232 = scalar_lea.vmem %s9, 5
        %v3233 = vld [vmem:[%s3232] sm:$0x1]
        %v3235 = vlaneseq
        %v3236 = vshrl.u32 %v3235, 7
        %v3237 = vsub.s32 0, %v3236
        %v3238 = vrot.slane %v3233, %v3237
        %v3256 = vunpack.c.l.b16 %v3216
        %v3257 = vunpack.c.l.b16 %v3217
        %v3258 = vunpack.c.l.b16 %v3218
        %v3259 = vunpack.c.l.b16 %v3219
        %v3260 = vunpack.c.l.b16 %v3220
        %v3261 = vunpack.c.l.b16 %v3221
        %v3262 = vunpack.c.l.b16 %v3222
        %v3263 = vunpack.c.l.b16 %v3223
        %v3264 = vunpack.c.l.b16 %v3224
        %v3265 = vunpack.c.l.b16 %v3225
        %v3266 = vunpack.c.l.b16 %v3226
        %v3267 = vunpack.c.l.b16 %v3227
        %v3268 = vunpack.c.l.b16 %v3228
        %v3269 = vunpack.c.l.b16 %v3229
        %v3270 = vunpack.c.l.b16 %v3230
        %v3271 = vunpack.c.l.b16 %v3231
        %v3272 = vpack.c.b16 %v3257, %v3256
        %v3273 = vpack.c.b16 %v3259, %v3258
        %v3274 = vpack.c.b16 %v3261, %v3260
        %v3275 = vpack.c.b16 %v3263, %v3262
        %v3276 = vpack.c.b16 %v3265, %v3264
        %v3277 = vpack.c.b16 %v3267, %v3266
        %v3278 = vpack.c.b16 %v3269, %v3268
        %v3279 = vpack.c.b16 %v3271, %v3270
        %3288 = vmatprep.subr.bf16.mxu0 0
        %3289 = vmatpush1.bf16.msra.mxu0 %v3279
        %3290 = vmatprep.subr.bf16.mxu0 0
        %3291 = vmatpush1.bf16.msra.mxu0 %v3278
        %3292 = vmatprep.subr.bf16.mxu0 0
        %3293 = vmatpush1.bf16.msra.mxu0 %v3277
        %3294 = vmatprep.subr.bf16.mxu0 0
        %3295 = vmatpush1.bf16.msra.mxu0 %v3276
        %3296 = vmatprep.subr.bf16.mxu0 0
        %3297 = vmatpush1.bf16.msra.mxu0 %v3275
        %3298 = vmatprep.subr.bf16.mxu0 0
        %3299 = vmatpush1.bf16.msra.mxu0 %v3274
        %3300 = vmatprep.subr.bf16.mxu0 0
        %3301 = vmatpush1.bf16.msra.mxu0 %v3273
        %3302 = vmatprep.subr.bf16.mxu0 0
        %3303 = vmatpush1.bf16.msra.mxu0 %v3272
        %3304 = vmatprep.subr.bf16.mxu0 0
        %3305 = vmatpush2.bf16.msra.mxu0 0
        %3306 = vmatprep.subr.bf16.mxu0 0
        %3307 = vmatpush2.bf16.msra.mxu0 0
        %3308 = vmatprep.subr.bf16.mxu0 0
        %3309 = vmatpush2.bf16.msra.mxu0 0
        %3310 = vmatprep.subr.bf16.mxu0 0
        %3311 = vmatpush2.bf16.msra.mxu0 0
        %3312 = vmatprep.subr.bf16.mxu0 0
        %3313 = vmatpush2.bf16.msra.mxu0 0
        %3314 = vmatprep.subr.bf16.mxu0 0
        %3315 = vmatpush2.bf16.msra.mxu0 0
        %3316 = vmatprep.subr.bf16.mxu0 0
        %3317 = vmatpush2.bf16.msra.mxu0 0
        %3318 = vmatprep.subr.bf16.mxu0 0
        %3319 = vmatpush2.bf16.msra.mxu0 0
        %3320 = vmatprep.mubr.bf16.mxu0 0
        %3321 = vmatmul.mubr.bf16.gmra.mxu0 %v716
        %v3322 = vpop.f32.mrf.mxu0
        %v3323 = vadd.f32 %v3238, %v3322
        %v3324 = vpop.f32.mrf.mxu0
        %v3325 = vpop.f32.mrf.mxu0
        %v3326 = vpop.f32.mrf.mxu0
        %3327 = vdwg.mxu0
        %s3328 = scalar_lea.vmem %s8, 832
        %v3329 = vld [vmem:[%s3328] sm:$0xf]
        %v3330 = vld [vmem:[%s3328 + $0x4] sm:$0xf]
        %v3331 = vld [vmem:[%s3328 + $0x8] sm:$0xf]
        %v3332 = vld [vmem:[%s3328 + $0xc] sm:$0xf]
        %v3333 = vld [vmem:[%s3328 + $0x10] sm:$0xf]
        %v3334 = vld [vmem:[%s3328 + $0x14] sm:$0xf]
        %v3335 = vld [vmem:[%s3328 + $0x18] sm:$0xf]
        %v3336 = vld [vmem:[%s3328 + $0x1c] sm:$0xf]
        %v3337 = vld [vmem:[%s3328 + $0x20] sm:$0xf]
        %v3338 = vld [vmem:[%s3328 + $0x24] sm:$0xf]
        %v3339 = vld [vmem:[%s3328 + $0x28] sm:$0xf]
        %v3340 = vld [vmem:[%s3328 + $0x2c] sm:$0xf]
        %v3341 = vld [vmem:[%s3328 + $0x30] sm:$0xf]
        %v3342 = vld [vmem:[%s3328 + $0x34] sm:$0xf]
        %v3343 = vld [vmem:[%s3328 + $0x38] sm:$0xf]
        %v3344 = vld [vmem:[%s3328 + $0x3c] sm:$0xf]
        %s3345 = scalar_lea.vmem %s9, 13
        %v3346 = vld [vmem:[%s3345] sm:$0x1]
        %v3348 = vlaneseq
        %v3349 = vshrl.u32 %v3348, 7
        %v3350 = vsub.s32 0, %v3349
        %v3351 = vrot.slane %v3346, %v3350
        %v3369 = vunpack.c.l.b16 %v3329
        %v3370 = vunpack.c.l.b16 %v3330
        %v3371 = vunpack.c.l.b16 %v3331
        %v3372 = vunpack.c.l.b16 %v3332
        %v3373 = vunpack.c.l.b16 %v3333
        %v3374 = vunpack.c.l.b16 %v3334
        %v3375 = vunpack.c.l.b16 %v3335
        %v3376 = vunpack.c.l.b16 %v3336
        %v3377 = vunpack.c.l.b16 %v3337
        %v3378 = vunpack.c.l.b16 %v3338
        %v3379 = vunpack.c.l.b16 %v3339
        %v3380 = vunpack.c.l.b16 %v3340
        %v3381 = vunpack.c.l.b16 %v3341
        %v3382 = vunpack.c.l.b16 %v3342
        %v3383 = vunpack.c.l.b16 %v3343
        %v3384 = vunpack.c.l.b16 %v3344
        %v3385 = vpack.c.b16 %v3370, %v3369
        %v3386 = vpack.c.b16 %v3372, %v3371
        %v3387 = vpack.c.b16 %v3374, %v3373
        %v3388 = vpack.c.b16 %v3376, %v3375
        %v3389 = vpack.c.b16 %v3378, %v3377
        %v3390 = vpack.c.b16 %v3380, %v3379
        %v3391 = vpack.c.b16 %v3382, %v3381
        %v3392 = vpack.c.b16 %v3384, %v3383
        %3401 = vmatprep.subr.bf16.mxu0 0
        %3402 = vmatpush1.bf16.msra.mxu0 %v3392
        %3403 = vmatprep.subr.bf16.mxu0 0
        %3404 = vmatpush1.bf16.msra.mxu0 %v3391
        %3405 = vmatprep.subr.bf16.mxu0 0
        %3406 = vmatpush1.bf16.msra.mxu0 %v3390
        %3407 = vmatprep.subr.bf16.mxu0 0
        %3408 = vmatpush1.bf16.msra.mxu0 %v3389
        %3409 = vmatprep.subr.bf16.mxu0 0
        %3410 = vmatpush1.bf16.msra.mxu0 %v3388
        %3411 = vmatprep.subr.bf16.mxu0 0
        %3412 = vmatpush1.bf16.msra.mxu0 %v3387
        %3413 = vmatprep.subr.bf16.mxu0 0
        %3414 = vmatpush1.bf16.msra.mxu0 %v3386
        %3415 = vmatprep.subr.bf16.mxu0 0
        %3416 = vmatpush1.bf16.msra.mxu0 %v3385
        %3417 = vmatprep.subr.bf16.mxu0 0
        %3418 = vmatpush2.bf16.msra.mxu0 0
        %3419 = vmatprep.subr.bf16.mxu0 0
        %3420 = vmatpush2.bf16.msra.mxu0 0
        %3421 = vmatprep.subr.bf16.mxu0 0
        %3422 = vmatpush2.bf16.msra.mxu0 0
        %3423 = vmatprep.subr.bf16.mxu0 0
        %3424 = vmatpush2.bf16.msra.mxu0 0
        %3425 = vmatprep.subr.bf16.mxu0 0
        %3426 = vmatpush2.bf16.msra.mxu0 0
        %3427 = vmatprep.subr.bf16.mxu0 0
        %3428 = vmatpush2.bf16.msra.mxu0 0
        %3429 = vmatprep.subr.bf16.mxu0 0
        %3430 = vmatpush2.bf16.msra.mxu0 0
        %3431 = vmatprep.subr.bf16.mxu0 0
        %3432 = vmatpush2.bf16.msra.mxu0 0
        %3433 = vmatprep.mubr.bf16.mxu0 0
        %3434 = vmatmul.mubr.bf16.gmra.mxu0 %v716
        %v3435 = vpop.f32.mrf.mxu0
        %v3436 = vadd.f32 %v3351, %v3435
        %v3437 = vpop.f32.mrf.mxu0
        %v3438 = vpop.f32.mrf.mxu0
        %v3439 = vpop.f32.mrf.mxu0
        %3440 = vdwg.mxu0
        %s3441 = scalar_lea.vmem %s8, 1344
        %v3442 = vld [vmem:[%s3441] sm:$0xf]
        %v3443 = vld [vmem:[%s3441 + $0x4] sm:$0xf]
        %v3444 = vld [vmem:[%s3441 + $0x8] sm:$0xf]
        %v3445 = vld [vmem:[%s3441 + $0xc] sm:$0xf]
        %v3446 = vld [vmem:[%s3441 + $0x10] sm:$0xf]
        %v3447 = vld [vmem:[%s3441 + $0x14] sm:$0xf]
        %v3448 = vld [vmem:[%s3441 + $0x18] sm:$0xf]
        %v3449 = vld [vmem:[%s3441 + $0x1c] sm:$0xf]
        %v3450 = vld [vmem:[%s3441 + $0x20] sm:$0xf]
        %v3451 = vld [vmem:[%s3441 + $0x24] sm:$0xf]
        %v3452 = vld [vmem:[%s3441 + $0x28] sm:$0xf]
        %v3453 = vld [vmem:[%s3441 + $0x2c] sm:$0xf]
        %v3454 = vld [vmem:[%s3441 + $0x30] sm:$0xf]
        %v3455 = vld [vmem:[%s3441 + $0x34] sm:$0xf]
        %v3456 = vld [vmem:[%s3441 + $0x38] sm:$0xf]
        %v3457 = vld [vmem:[%s3441 + $0x3c] sm:$0xf]
        %s3458 = scalar_lea.vmem %s9, 21
        %v3459 = vld [vmem:[%s3458] sm:$0x1]
        %v3461 = vlaneseq
        %v3462 = vshrl.u32 %v3461, 7
        %v3463 = vsub.s32 0, %v3462
        %v3464 = vrot.slane %v3459, %v3463
        %v3482 = vunpack.c.l.b16 %v3442
        %v3483 = vunpack.c.l.b16 %v3443
        %v3484 = vunpack.c.l.b16 %v3444
        %v3485 = vunpack.c.l.b16 %v3445
        %v3486 = vunpack.c.l.b16 %v3446
        %v3487 = vunpack.c.l.b16 %v3447
        %v3488 = vunpack.c.l.b16 %v3448
        %v3489 = vunpack.c.l.b16 %v3449
        %v3490 = vunpack.c.l.b16 %v3450
        %v3491 = vunpack.c.l.b16 %v3451
        %v3492 = vunpack.c.l.b16 %v3452
        %v3493 = vunpack.c.l.b16 %v3453
        %v3494 = vunpack.c.l.b16 %v3454
        %v3495 = vunpack.c.l.b16 %v3455
        %v3496 = vunpack.c.l.b16 %v3456
        %v3497 = vunpack.c.l.b16 %v3457
        %v3498 = vpack.c.b16 %v3483, %v3482
        %v3499 = vpack.c.b16 %v3485, %v3484
        %v3500 = vpack.c.b16 %v3487, %v3486
        %v3501 = vpack.c.b16 %v3489, %v3488
        %v3502 = vpack.c.b16 %v3491, %v3490
        %v3503 = vpack.c.b16 %v3493, %v3492
        %v3504 = vpack.c.b16 %v3495, %v3494
        %v3505 = vpack.c.b16 %v3497, %v3496
        %3514 = vmatprep.subr.bf16.mxu0 0
        %3515 = vmatpush1.bf16.msra.mxu0 %v3505
        %3516 = vmatprep.subr.bf16.mxu0 0
        %3517 = vmatpush1.bf16.msra.mxu0 %v3504
        %3518 = vmatprep.subr.bf16.mxu0 0
        %3519 = vmatpush1.bf16.msra.mxu0 %v3503
        %3520 = vmatprep.subr.bf16.mxu0 0
        %3521 = vmatpush1.bf16.msra.mxu0 %v3502
        %3522 = vmatprep.subr.bf16.mxu0 0
        %3523 = vmatpush1.bf16.msra.mxu0 %v3501
        %3524 = vmatprep.subr.bf16.mxu0 0
        %3525 = vmatpush1.bf16.msra.mxu0 %v3500
        %3526 = vmatprep.subr.bf16.mxu0 0
        %3527 = vmatpush1.bf16.msra.mxu0 %v3499
        %3528 = vmatprep.subr.bf16.mxu0 0
        %3529 = vmatpush1.bf16.msra.mxu0 %v3498
        %3530 = vmatprep.subr.bf16.mxu0 0
        %3531 = vmatpush2.bf16.msra.mxu0 0
        %3532 = vmatprep.subr.bf16.mxu0 0
        %3533 = vmatpush2.bf16.msra.mxu0 0
        %3534 = vmatprep.subr.bf16.mxu0 0
        %3535 = vmatpush2.bf16.msra.mxu0 0
        %3536 = vmatprep.subr.bf16.mxu0 0
        %3537 = vmatpush2.bf16.msra.mxu0 0
        %3538 = vmatprep.subr.bf16.mxu0 0
        %3539 = vmatpush2.bf16.msra.mxu0 0
        %3540 = vmatprep.subr.bf16.mxu0 0
        %3541 = vmatpush2.bf16.msra.mxu0 0
        %3542 = vmatprep.subr.bf16.mxu0 0
        %3543 = vmatpush2.bf16.msra.mxu0 0
        %3544 = vmatprep.subr.bf16.mxu0 0
        %3545 = vmatpush2.bf16.msra.mxu0 0
        %3546 = vmatprep.mubr.bf16.mxu0 0
        %3547 = vmatmul.mubr.bf16.gmra.mxu0 %v716
        %v3548 = vpop.f32.mrf.mxu0
        %v3549 = vadd.f32 %v3464, %v3548
        %v3550 = vpop.f32.mrf.mxu0
        %v3551 = vpop.f32.mrf.mxu0
        %v3552 = vpop.f32.mrf.mxu0
        %3553 = vdwg.mxu0
        %v3554 = vpack.c.bf16 %v3323, %v3323
        %v3555 = vpack.c.bf16 %v3436, %v3436
        %v3557 = vsel %vm1056, %v3554, 0
        %v3560 = vsel %vm1056, %v3555, 0
        %3562 = vmatprep.subr.bf16.mxu0 0
        %3563 = vmatpush1.bf16.xpose.msra.mxu0 0
        %3564 = vmatprep.subr.bf16.mxu0 0
        %3565 = vmatpush1.bf16.xpose.msra.mxu0 0
        %3566 = vmatprep.subr.bf16.mxu0 0
        %3567 = vmatpush1.bf16.xpose.msra.mxu0 0
        %3568 = vmatprep.subr.bf16.mxu0 0
        %3569 = vmatpush1.bf16.xpose.msra.mxu0 0
        %3570 = vmatprep.subr.bf16.mxu0 0
        %3571 = vmatpush1.bf16.xpose.msra.mxu0 0
        %3572 = vmatprep.subr.bf16.mxu0 0
        %3573 = vmatpush1.bf16.xpose.msra.mxu0 0
        %3574 = vmatprep.subr.bf16.mxu0 0
        %3575 = vmatpush1.bf16.xpose.msra.mxu0 0
        %3576 = vmatprep.subr.bf16.mxu0 0
        %3577 = vmatpush1.bf16.xpose.msra.mxu0 %v3560
        %3578 = vmatprep.subr.bf16.mxu0 0
        %3579 = vmatpush2.bf16.xpose.msra.mxu0 0
        %3580 = vmatprep.subr.bf16.mxu0 0
        %3581 = vmatpush2.bf16.xpose.msra.mxu0 0
        %3582 = vmatprep.subr.bf16.mxu0 0
        %3583 = vmatpush2.bf16.xpose.msra.mxu0 0
        %3584 = vmatprep.subr.bf16.mxu0 0
        %3585 = vmatpush2.bf16.xpose.msra.mxu0 0
        %3586 = vmatprep.subr.bf16.mxu0 0
        %3587 = vmatpush2.bf16.xpose.msra.mxu0 0
        %3588 = vmatprep.subr.bf16.mxu0 0
        %3589 = vmatpush2.bf16.xpose.msra.mxu0 0
        %3590 = vmatprep.subr.bf16.mxu0 0
        %3591 = vmatpush2.bf16.xpose.msra.mxu0 0
        %3592 = vmatprep.subr.bf16.mxu0 0
        %3593 = vmatpush2.bf16.xpose.msra.mxu0 0
        %3594 = vmatprep.mubr.bf16.mxu0 0
        %3595 = vmatmul.mubr.bf16.gmra.mxu0 %v3557
        %v3596 = vpop.f32.mrf.mxu0
        %v3597 = vadd.f32 0.0, %v3596
        %v3598 = vpop.f32.mrf.mxu0
        %v3599 = vpop.f32.mrf.mxu0
        %v3600 = vpop.f32.mrf.mxu0
        %3601 = vdwg.mxu0
        %v3602 = vsel %vm1103, %v3597, -inf
        %3603 = vmax.xlane.f32.xlu0 %v3602
        %v3604 = vpop.xlane.xlu0 %3603
        %v3605 = vsub.f32 %v3597, %v3604
        %v3606 = vmul.f32 %v3605, 1.442695
        %v3607 = vpow.pop %v3606
        %v3608 = vsel %vm1103, %v3607, 0.0
        %3609 = vadd.xlane.f32.xlu0 %v3608
        %v3610 = vpop.xlane.xlu0 %3609
        %v3611 = vrcp.pop %v3610
        %v3612 = vmul.f32 %v3607, %v3611
        %v3613 = vpack.c.bf16 %v3612, %v3612
        %v3614 = vpack.c.bf16 %v3549, %v3549
        %v3616 = vsel %vm1103, %v3613, 0
        %v3619 = vsel %vm1120, %v3614, 0
        %3621 = vmatprep.subr.bf16.mxu0 0
        %3622 = vmatpush1.bf16.msra.mxu0 0
        %3623 = vmatprep.subr.bf16.mxu0 0
        %3624 = vmatpush1.bf16.msra.mxu0 0
        %3625 = vmatprep.subr.bf16.mxu0 0
        %3626 = vmatpush1.bf16.msra.mxu0 0
        %3627 = vmatprep.subr.bf16.mxu0 0
        %3628 = vmatpush1.bf16.msra.mxu0 0
        %3629 = vmatprep.subr.bf16.mxu0 0
        %3630 = vmatpush1.bf16.msra.mxu0 0
        %3631 = vmatprep.subr.bf16.mxu0 0
        %3632 = vmatpush1.bf16.msra.mxu0 0
        %3633 = vmatprep.subr.bf16.mxu0 0
        %3634 = vmatpush1.bf16.msra.mxu0 0
        %3635 = vmatprep.subr.bf16.mxu0 0
        %3636 = vmatpush1.bf16.msra.mxu0 %v3619
        %3637 = vmatprep.subr.bf16.mxu0 0
        %3638 = vmatpush2.bf16.msra.mxu0 0
        %3639 = vmatprep.subr.bf16.mxu0 0
        %3640 = vmatpush2.bf16.msra.mxu0 0
        %3641 = vmatprep.subr.bf16.mxu0 0
        %3642 = vmatpush2.bf16.msra.mxu0 0
        %3643 = vmatprep.subr.bf16.mxu0 0
        %3644 = vmatpush2.bf16.msra.mxu0 0
        %3645 = vmatprep.subr.bf16.mxu0 0
        %3646 = vmatpush2.bf16.msra.mxu0 0
        %3647 = vmatprep.subr.bf16.mxu0 0
        %3648 = vmatpush2.bf16.msra.mxu0 0
        %3649 = vmatprep.subr.bf16.mxu0 0
        %3650 = vmatpush2.bf16.msra.mxu0 0
        %3651 = vmatprep.subr.bf16.mxu0 0
        %3652 = vmatpush2.bf16.msra.mxu0 0
        %3653 = vmatprep.mubr.bf16.mxu0 0
        %3654 = vmatmul.mubr.bf16.gmra.mxu0 %v3616
        %v3655 = vpop.f32.mrf.mxu0
        %v3656 = vadd.f32 0.0, %v3655
        %v3657 = vpop.f32.mrf.mxu0
        %v3658 = vpop.f32.mrf.mxu0
        %v3659 = vpop.f32.mrf.mxu0
        %3660 = vdwg.mxu0
        %v3661 = vpack.c.bf16 %v3656, %v3656
        %s3662 = scalar_lea.vmem %s10, 40
        %v3663 = vld [vmem:[%s3662] sm:$0xf]
        %v3664 = vld [vmem:[%s3662 + $0x4] sm:$0xf]
        %v3667 = vunpack.c.l.b16 %v3663
        %v3668 = vunpack.c.l.b16 %v3664
        %v3669 = vpack.c.b16 %v3668, %v3667
        %v3672 = vsel %vm1056, %v3661, 0
        %3674 = vmatprep.subr.bf16.mxu0 0
        %3675 = vmatpush1.bf16.msra.mxu0 0
        %3676 = vmatprep.subr.bf16.mxu0 0
        %3677 = vmatpush1.bf16.msra.mxu0 0
        %3678 = vmatprep.subr.bf16.mxu0 0
        %3679 = vmatpush1.bf16.msra.mxu0 0
        %3680 = vmatprep.subr.bf16.mxu0 0
        %3681 = vmatpush1.bf16.msra.mxu0 0
        %3682 = vmatprep.subr.bf16.mxu0 0
        %3683 = vmatpush1.bf16.msra.mxu0 0
        %3684 = vmatprep.subr.bf16.mxu0 0
        %3685 = vmatpush1.bf16.msra.mxu0 0
        %3686 = vmatprep.subr.bf16.mxu0 0
        %3687 = vmatpush1.bf16.msra.mxu0 0
        %3688 = vmatprep.subr.bf16.mxu0 0
        %3689 = vmatpush1.bf16.msra.mxu0 %v3669
        %3690 = vmatprep.subr.bf16.mxu0 0
        %3691 = vmatpush2.bf16.msra.mxu0 0
        %3692 = vmatprep.subr.bf16.mxu0 0
        %3693 = vmatpush2.bf16.msra.mxu0 0
        %3694 = vmatprep.subr.bf16.mxu0 0
        %3695 = vmatpush2.bf16.msra.mxu0 0
        %3696 = vmatprep.subr.bf16.mxu0 0
        %3697 = vmatpush2.bf16.msra.mxu0 0
        %3698 = vmatprep.subr.bf16.mxu0 0
        %3699 = vmatpush2.bf16.msra.mxu0 0
        %3700 = vmatprep.subr.bf16.mxu0 0
        %3701 = vmatpush2.bf16.msra.mxu0 0
        %3702 = vmatprep.subr.bf16.mxu0 0
        %3703 = vmatpush2.bf16.msra.mxu0 0
        %3704 = vmatprep.subr.bf16.mxu0 0
        %3705 = vmatpush2.bf16.msra.mxu0 0
        %3706 = vmatprep.mubr.bf16.mxu0 0
        %3707 = vmatmul.mubr.bf16.gmra.mxu0 %v3672
        %v3708 = vpop.f32.mrf.mxu0
        %v3709 = vadd.f32 0.0, %v3708
        %v3710 = vpop.f32.mrf.mxu0
        %v3711 = vpop.f32.mrf.mxu0
        %v3712 = vpop.f32.mrf.mxu0
        %3713 = vdwg.mxu0
        %v3714 = vadd.f32 %v3214, %v3709
        %s3715 = scalar_lea.vmem %s8, 384
        %v3716 = vld [vmem:[%s3715] sm:$0xf]
        %v3717 = vld [vmem:[%s3715 + $0x4] sm:$0xf]
        %v3718 = vld [vmem:[%s3715 + $0x8] sm:$0xf]
        %v3719 = vld [vmem:[%s3715 + $0xc] sm:$0xf]
        %v3720 = vld [vmem:[%s3715 + $0x10] sm:$0xf]
        %v3721 = vld [vmem:[%s3715 + $0x14] sm:$0xf]
        %v3722 = vld [vmem:[%s3715 + $0x18] sm:$0xf]
        %v3723 = vld [vmem:[%s3715 + $0x1c] sm:$0xf]
        %v3724 = vld [vmem:[%s3715 + $0x20] sm:$0xf]
        %v3725 = vld [vmem:[%s3715 + $0x24] sm:$0xf]
        %v3726 = vld [vmem:[%s3715 + $0x28] sm:$0xf]
        %v3727 = vld [vmem:[%s3715 + $0x2c] sm:$0xf]
        %v3728 = vld [vmem:[%s3715 + $0x30] sm:$0xf]
        %v3729 = vld [vmem:[%s3715 + $0x34] sm:$0xf]
        %v3730 = vld [vmem:[%s3715 + $0x38] sm:$0xf]
        %v3731 = vld [vmem:[%s3715 + $0x3c] sm:$0xf]
        %s3732 = scalar_lea.vmem %s9, 6
        %v3733 = vld [vmem:[%s3732] sm:$0x1]
        %v3735 = vlaneseq
        %v3736 = vshrl.u32 %v3735, 7
        %v3737 = vsub.s32 0, %v3736
        %v3738 = vrot.slane %v3733, %v3737
        %v3756 = vunpack.c.l.b16 %v3716
        %v3757 = vunpack.c.l.b16 %v3717
        %v3758 = vunpack.c.l.b16 %v3718
        %v3759 = vunpack.c.l.b16 %v3719
        %v3760 = vunpack.c.l.b16 %v3720
        %v3761 = vunpack.c.l.b16 %v3721
        %v3762 = vunpack.c.l.b16 %v3722
        %v3763 = vunpack.c.l.b16 %v3723
        %v3764 = vunpack.c.l.b16 %v3724
        %v3765 = vunpack.c.l.b16 %v3725
        %v3766 = vunpack.c.l.b16 %v3726
        %v3767 = vunpack.c.l.b16 %v3727
        %v3768 = vunpack.c.l.b16 %v3728
        %v3769 = vunpack.c.l.b16 %v3729
        %v3770 = vunpack.c.l.b16 %v3730
        %v3771 = vunpack.c.l.b16 %v3731
        %v3772 = vpack.c.b16 %v3757, %v3756
        %v3773 = vpack.c.b16 %v3759, %v3758
        %v3774 = vpack.c.b16 %v3761, %v3760
        %v3775 = vpack.c.b16 %v3763, %v3762
        %v3776 = vpack.c.b16 %v3765, %v3764
        %v3777 = vpack.c.b16 %v3767, %v3766
        %v3778 = vpack.c.b16 %v3769, %v3768
        %v3779 = vpack.c.b16 %v3771, %v3770
        %3788 = vmatprep.subr.bf16.mxu0 0
        %3789 = vmatpush1.bf16.msra.mxu0 %v3779
        %3790 = vmatprep.subr.bf16.mxu0 0
        %3791 = vmatpush1.bf16.msra.mxu0 %v3778
        %3792 = vmatprep.subr.bf16.mxu0 0
        %3793 = vmatpush1.bf16.msra.mxu0 %v3777
        %3794 = vmatprep.subr.bf16.mxu0 0
        %3795 = vmatpush1.bf16.msra.mxu0 %v3776
        %3796 = vmatprep.subr.bf16.mxu0 0
        %3797 = vmatpush1.bf16.msra.mxu0 %v3775
        %3798 = vmatprep.subr.bf16.mxu0 0
        %3799 = vmatpush1.bf16.msra.mxu0 %v3774
        %3800 = vmatprep.subr.bf16.mxu0 0
        %3801 = vmatpush1.bf16.msra.mxu0 %v3773
        %3802 = vmatprep.subr.bf16.mxu0 0
        %3803 = vmatpush1.bf16.msra.mxu0 %v3772
        %3804 = vmatprep.subr.bf16.mxu0 0
        %3805 = vmatpush2.bf16.msra.mxu0 0
        %3806 = vmatprep.subr.bf16.mxu0 0
        %3807 = vmatpush2.bf16.msra.mxu0 0
        %3808 = vmatprep.subr.bf16.mxu0 0
        %3809 = vmatpush2.bf16.msra.mxu0 0
        %3810 = vmatprep.subr.bf16.mxu0 0
        %3811 = vmatpush2.bf16.msra.mxu0 0
        %3812 = vmatprep.subr.bf16.mxu0 0
        %3813 = vmatpush2.bf16.msra.mxu0 0
        %3814 = vmatprep.subr.bf16.mxu0 0
        %3815 = vmatpush2.bf16.msra.mxu0 0
        %3816 = vmatprep.subr.bf16.mxu0 0
        %3817 = vmatpush2.bf16.msra.mxu0 0
        %3818 = vmatprep.subr.bf16.mxu0 0
        %3819 = vmatpush2.bf16.msra.mxu0 0
        %3820 = vmatprep.mubr.bf16.mxu0 0
        %3821 = vmatmul.mubr.bf16.gmra.mxu0 %v716
        %v3822 = vpop.f32.mrf.mxu0
        %v3823 = vadd.f32 %v3738, %v3822
        %v3824 = vpop.f32.mrf.mxu0
        %v3825 = vpop.f32.mrf.mxu0
        %v3826 = vpop.f32.mrf.mxu0
        %3827 = vdwg.mxu0
        %s3828 = scalar_lea.vmem %s8, 896
        %v3829 = vld [vmem:[%s3828] sm:$0xf]
        %v3830 = vld [vmem:[%s3828 + $0x4] sm:$0xf]
        %v3831 = vld [vmem:[%s3828 + $0x8] sm:$0xf]
        %v3832 = vld [vmem:[%s3828 + $0xc] sm:$0xf]
        %v3833 = vld [vmem:[%s3828 + $0x10] sm:$0xf]
        %v3834 = vld [vmem:[%s3828 + $0x14] sm:$0xf]
        %v3835 = vld [vmem:[%s3828 + $0x18] sm:$0xf]
        %v3836 = vld [vmem:[%s3828 + $0x1c] sm:$0xf]
        %v3837 = vld [vmem:[%s3828 + $0x20] sm:$0xf]
        %v3838 = vld [vmem:[%s3828 + $0x24] sm:$0xf]
        %v3839 = vld [vmem:[%s3828 + $0x28] sm:$0xf]
        %v3840 = vld [vmem:[%s3828 + $0x2c] sm:$0xf]
        %v3841 = vld [vmem:[%s3828 + $0x30] sm:$0xf]
        %v3842 = vld [vmem:[%s3828 + $0x34] sm:$0xf]
        %v3843 = vld [vmem:[%s3828 + $0x38] sm:$0xf]
        %v3844 = vld [vmem:[%s3828 + $0x3c] sm:$0xf]
        %s3845 = scalar_lea.vmem %s9, 14
        %v3846 = vld [vmem:[%s3845] sm:$0x1]
        %v3848 = vlaneseq
        %v3849 = vshrl.u32 %v3848, 7
        %v3850 = vsub.s32 0, %v3849
        %v3851 = vrot.slane %v3846, %v3850
        %v3869 = vunpack.c.l.b16 %v3829
        %v3870 = vunpack.c.l.b16 %v3830
        %v3871 = vunpack.c.l.b16 %v3831
        %v3872 = vunpack.c.l.b16 %v3832
        %v3873 = vunpack.c.l.b16 %v3833
        %v3874 = vunpack.c.l.b16 %v3834
        %v3875 = vunpack.c.l.b16 %v3835
        %v3876 = vunpack.c.l.b16 %v3836
        %v3877 = vunpack.c.l.b16 %v3837
        %v3878 = vunpack.c.l.b16 %v3838
        %v3879 = vunpack.c.l.b16 %v3839
        %v3880 = vunpack.c.l.b16 %v3840
        %v3881 = vunpack.c.l.b16 %v3841
        %v3882 = vunpack.c.l.b16 %v3842
        %v3883 = vunpack.c.l.b16 %v3843
        %v3884 = vunpack.c.l.b16 %v3844
        %v3885 = vpack.c.b16 %v3870, %v3869
        %v3886 = vpack.c.b16 %v3872, %v3871
        %v3887 = vpack.c.b16 %v3874, %v3873
        %v3888 = vpack.c.b16 %v3876, %v3875
        %v3889 = vpack.c.b16 %v3878, %v3877
        %v3890 = vpack.c.b16 %v3880, %v3879
        %v3891 = vpack.c.b16 %v3882, %v3881
        %v3892 = vpack.c.b16 %v3884, %v3883
        %3901 = vmatprep.subr.bf16.mxu0 0
        %3902 = vmatpush1.bf16.msra.mxu0 %v3892
        %3903 = vmatprep.subr.bf16.mxu0 0
        %3904 = vmatpush1.bf16.msra.mxu0 %v3891
        %3905 = vmatprep.subr.bf16.mxu0 0
        %3906 = vmatpush1.bf16.msra.mxu0 %v3890
        %3907 = vmatprep.subr.bf16.mxu0 0
        %3908 = vmatpush1.bf16.msra.mxu0 %v3889
        %3909 = vmatprep.subr.bf16.mxu0 0
        %3910 = vmatpush1.bf16.msra.mxu0 %v3888
        %3911 = vmatprep.subr.bf16.mxu0 0
        %3912 = vmatpush1.bf16.msra.mxu0 %v3887
        %3913 = vmatprep.subr.bf16.mxu0 0
        %3914 = vmatpush1.bf16.msra.mxu0 %v3886
        %3915 = vmatprep.subr.bf16.mxu0 0
        %3916 = vmatpush1.bf16.msra.mxu0 %v3885
        %3917 = vmatprep.subr.bf16.mxu0 0
        %3918 = vmatpush2.bf16.msra.mxu0 0
        %3919 = vmatprep.subr.bf16.mxu0 0
        %3920 = vmatpush2.bf16.msra.mxu0 0
        %3921 = vmatprep.subr.bf16.mxu0 0
        %3922 = vmatpush2.bf16.msra.mxu0 0
        %3923 = vmatprep.subr.bf16.mxu0 0
        %3924 = vmatpush2.bf16.msra.mxu0 0
        %3925 = vmatprep.subr.bf16.mxu0 0
        %3926 = vmatpush2.bf16.msra.mxu0 0
        %3927 = vmatprep.subr.bf16.mxu0 0
        %3928 = vmatpush2.bf16.msra.mxu0 0
        %3929 = vmatprep.subr.bf16.mxu0 0
        %3930 = vmatpush2.bf16.msra.mxu0 0
        %3931 = vmatprep.subr.bf16.mxu0 0
        %3932 = vmatpush2.bf16.msra.mxu0 0
        %3933 = vmatprep.mubr.bf16.mxu0 0
        %3934 = vmatmul.mubr.bf16.gmra.mxu0 %v716
        %v3935 = vpop.f32.mrf.mxu0
        %v3936 = vadd.f32 %v3851, %v3935
        %v3937 = vpop.f32.mrf.mxu0
        %v3938 = vpop.f32.mrf.mxu0
        %v3939 = vpop.f32.mrf.mxu0
        %3940 = vdwg.mxu0
        %s3941 = scalar_lea.vmem %s8, 1408
        %v3942 = vld [vmem:[%s3941] sm:$0xf]
        %v3943 = vld [vmem:[%s3941 + $0x4] sm:$0xf]
        %v3944 = vld [vmem:[%s3941 + $0x8] sm:$0xf]
        %v3945 = vld [vmem:[%s3941 + $0xc] sm:$0xf]
        %v3946 = vld [vmem:[%s3941 + $0x10] sm:$0xf]
        %v3947 = vld [vmem:[%s3941 + $0x14] sm:$0xf]
        %v3948 = vld [vmem:[%s3941 + $0x18] sm:$0xf]
        %v3949 = vld [vmem:[%s3941 + $0x1c] sm:$0xf]
        %v3950 = vld [vmem:[%s3941 + $0x20] sm:$0xf]
        %v3951 = vld [vmem:[%s3941 + $0x24] sm:$0xf]
        %v3952 = vld [vmem:[%s3941 + $0x28] sm:$0xf]
        %v3953 = vld [vmem:[%s3941 + $0x2c] sm:$0xf]
        %v3954 = vld [vmem:[%s3941 + $0x30] sm:$0xf]
        %v3955 = vld [vmem:[%s3941 + $0x34] sm:$0xf]
        %v3956 = vld [vmem:[%s3941 + $0x38] sm:$0xf]
        %v3957 = vld [vmem:[%s3941 + $0x3c] sm:$0xf]
        %s3958 = scalar_lea.vmem %s9, 22
        %v3959 = vld [vmem:[%s3958] sm:$0x1]
        %v3961 = vlaneseq
        %v3962 = vshrl.u32 %v3961, 7
        %v3963 = vsub.s32 0, %v3962
        %v3964 = vrot.slane %v3959, %v3963
        %v3982 = vunpack.c.l.b16 %v3942
        %v3983 = vunpack.c.l.b16 %v3943
        %v3984 = vunpack.c.l.b16 %v3944
        %v3985 = vunpack.c.l.b16 %v3945
        %v3986 = vunpack.c.l.b16 %v3946
        %v3987 = vunpack.c.l.b16 %v3947
        %v3988 = vunpack.c.l.b16 %v3948
        %v3989 = vunpack.c.l.b16 %v3949
        %v3990 = vunpack.c.l.b16 %v3950
        %v3991 = vunpack.c.l.b16 %v3951
        %v3992 = vunpack.c.l.b16 %v3952
        %v3993 = vunpack.c.l.b16 %v3953
        %v3994 = vunpack.c.l.b16 %v3954
        %v3995 = vunpack.c.l.b16 %v3955
        %v3996 = vunpack.c.l.b16 %v3956
        %v3997 = vunpack.c.l.b16 %v3957
        %v3998 = vpack.c.b16 %v3983, %v3982
        %v3999 = vpack.c.b16 %v3985, %v3984
        %v4000 = vpack.c.b16 %v3987, %v3986
        %v4001 = vpack.c.b16 %v3989, %v3988
        %v4002 = vpack.c.b16 %v3991, %v3990
        %v4003 = vpack.c.b16 %v3993, %v3992
        %v4004 = vpack.c.b16 %v3995, %v3994
        %v4005 = vpack.c.b16 %v3997, %v3996
        %4014 = vmatprep.subr.bf16.mxu0 0
        %4015 = vmatpush1.bf16.msra.mxu0 %v4005
        %4016 = vmatprep.subr.bf16.mxu0 0
        %4017 = vmatpush1.bf16.msra.mxu0 %v4004
        %4018 = vmatprep.subr.bf16.mxu0 0
        %4019 = vmatpush1.bf16.msra.mxu0 %v4003
        %4020 = vmatprep.subr.bf16.mxu0 0
        %4021 = vmatpush1.bf16.msra.mxu0 %v4002
        %4022 = vmatprep.subr.bf16.mxu0 0
        %4023 = vmatpush1.bf16.msra.mxu0 %v4001
        %4024 = vmatprep.subr.bf16.mxu0 0
        %4025 = vmatpush1.bf16.msra.mxu0 %v4000
        %4026 = vmatprep.subr.bf16.mxu0 0
        %4027 = vmatpush1.bf16.msra.mxu0 %v3999
        %4028 = vmatprep.subr.bf16.mxu0 0
        %4029 = vmatpush1.bf16.msra.mxu0 %v3998
        %4030 = vmatprep.subr.bf16.mxu0 0
        %4031 = vmatpush2.bf16.msra.mxu0 0
        %4032 = vmatprep.subr.bf16.mxu0 0
        %4033 = vmatpush2.bf16.msra.mxu0 0
        %4034 = vmatprep.subr.bf16.mxu0 0
        %4035 = vmatpush2.bf16.msra.mxu0 0
        %4036 = vmatprep.subr.bf16.mxu0 0
        %4037 = vmatpush2.bf16.msra.mxu0 0
        %4038 = vmatprep.subr.bf16.mxu0 0
        %4039 = vmatpush2.bf16.msra.mxu0 0
        %4040 = vmatprep.subr.bf16.mxu0 0
        %4041 = vmatpush2.bf16.msra.mxu0 0
        %4042 = vmatprep.subr.bf16.mxu0 0
        %4043 = vmatpush2.bf16.msra.mxu0 0
        %4044 = vmatprep.subr.bf16.mxu0 0
        %4045 = vmatpush2.bf16.msra.mxu0 0
        %4046 = vmatprep.mubr.bf16.mxu0 0
        %4047 = vmatmul.mubr.bf16.gmra.mxu0 %v716
        %v4048 = vpop.f32.mrf.mxu0
        %v4049 = vadd.f32 %v3964, %v4048
        %v4050 = vpop.f32.mrf.mxu0
        %v4051 = vpop.f32.mrf.mxu0
        %v4052 = vpop.f32.mrf.mxu0
        %4053 = vdwg.mxu0
        %v4054 = vpack.c.bf16 %v3823, %v3823
        %v4055 = vpack.c.bf16 %v3936, %v3936
        %v4057 = vsel %vm1056, %v4054, 0
        %v4060 = vsel %vm1056, %v4055, 0
        %4062 = vmatprep.subr.bf16.mxu0 0
        %4063 = vmatpush1.bf16.xpose.msra.mxu0 0
        %4064 = vmatprep.subr.bf16.mxu0 0
        %4065 = vmatpush1.bf16.xpose.msra.mxu0 0
        %4066 = vmatprep.subr.bf16.mxu0 0
        %4067 = vmatpush1.bf16.xpose.msra.mxu0 0
        %4068 = vmatprep.subr.bf16.mxu0 0
        %4069 = vmatpush1.bf16.xpose.msra.mxu0 0
        %4070 = vmatprep.subr.bf16.mxu0 0
        %4071 = vmatpush1.bf16.xpose.msra.mxu0 0
        %4072 = vmatprep.subr.bf16.mxu0 0
        %4073 = vmatpush1.bf16.xpose.msra.mxu0 0
        %4074 = vmatprep.subr.bf16.mxu0 0
        %4075 = vmatpush1.bf16.xpose.msra.mxu0 0
        %4076 = vmatprep.subr.bf16.mxu0 0
        %4077 = vmatpush1.bf16.xpose.msra.mxu0 %v4060
        %4078 = vmatprep.subr.bf16.mxu0 0
        %4079 = vmatpush2.bf16.xpose.msra.mxu0 0
        %4080 = vmatprep.subr.bf16.mxu0 0
        %4081 = vmatpush2.bf16.xpose.msra.mxu0 0
        %4082 = vmatprep.subr.bf16.mxu0 0
        %4083 = vmatpush2.bf16.xpose.msra.mxu0 0
        %4084 = vmatprep.subr.bf16.mxu0 0
        %4085 = vmatpush2.bf16.xpose.msra.mxu0 0
        %4086 = vmatprep.subr.bf16.mxu0 0
        %4087 = vmatpush2.bf16.xpose.msra.mxu0 0
        %4088 = vmatprep.subr.bf16.mxu0 0
        %4089 = vmatpush2.bf16.xpose.msra.mxu0 0
        %4090 = vmatprep.subr.bf16.mxu0 0
        %4091 = vmatpush2.bf16.xpose.msra.mxu0 0
        %4092 = vmatprep.subr.bf16.mxu0 0
        %4093 = vmatpush2.bf16.xpose.msra.mxu0 0
        %4094 = vmatprep.mubr.bf16.mxu0 0
        %4095 = vmatmul.mubr.bf16.gmra.mxu0 %v4057
        %v4096 = vpop.f32.mrf.mxu0
        %v4097 = vadd.f32 0.0, %v4096
        %v4098 = vpop.f32.mrf.mxu0
        %v4099 = vpop.f32.mrf.mxu0
        %v4100 = vpop.f32.mrf.mxu0
        %4101 = vdwg.mxu0
        %v4102 = vsel %vm1103, %v4097, -inf
        %4103 = vmax.xlane.f32.xlu0 %v4102
        %v4104 = vpop.xlane.xlu0 %4103
        %v4105 = vsub.f32 %v4097, %v4104
        %v4106 = vmul.f32 %v4105, 1.442695
        %v4107 = vpow.pop %v4106
        %v4108 = vsel %vm1103, %v4107, 0.0
        %4109 = vadd.xlane.f32.xlu0 %v4108
        %v4110 = vpop.xlane.xlu0 %4109
        %v4111 = vrcp.pop %v4110
        %v4112 = vmul.f32 %v4107, %v4111
        %v4113 = vpack.c.bf16 %v4112, %v4112
        %v4114 = vpack.c.bf16 %v4049, %v4049
        %v4116 = vsel %vm1103, %v4113, 0
        %v4119 = vsel %vm1120, %v4114, 0
        %4121 = vmatprep.subr.bf16.mxu0 0
        %4122 = vmatpush1.bf16.msra.mxu0 0
        %4123 = vmatprep.subr.bf16.mxu0 0
        %4124 = vmatpush1.bf16.msra.mxu0 0
        %4125 = vmatprep.subr.bf16.mxu0 0
        %4126 = vmatpush1.bf16.msra.mxu0 0
        %4127 = vmatprep.subr.bf16.mxu0 0
        %4128 = vmatpush1.bf16.msra.mxu0 0
        %4129 = vmatprep.subr.bf16.mxu0 0
        %4130 = vmatpush1.bf16.msra.mxu0 0
        %4131 = vmatprep.subr.bf16.mxu0 0
        %4132 = vmatpush1.bf16.msra.mxu0 0
        %4133 = vmatprep.subr.bf16.mxu0 0
        %4134 = vmatpush1.bf16.msra.mxu0 0
        %4135 = vmatprep.subr.bf16.mxu0 0
        %4136 = vmatpush1.bf16.msra.mxu0 %v4119
        %4137 = vmatprep.subr.bf16.mxu0 0
        %4138 = vmatpush2.bf16.msra.mxu0 0
        %4139 = vmatprep.subr.bf16.mxu0 0
        %4140 = vmatpush2.bf16.msra.mxu0 0
        %4141 = vmatprep.subr.bf16.mxu0 0
        %4142 = vmatpush2.bf16.msra.mxu0 0
        %4143 = vmatprep.subr.bf16.mxu0 0
        %4144 = vmatpush2.bf16.msra.mxu0 0
        %4145 = vmatprep.subr.bf16.mxu0 0
        %4146 = vmatpush2.bf16.msra.mxu0 0
        %4147 = vmatprep.subr.bf16.mxu0 0
        %4148 = vmatpush2.bf16.msra.mxu0 0
        %4149 = vmatprep.subr.bf16.mxu0 0
        %4150 = vmatpush2.bf16.msra.mxu0 0
        %4151 = vmatprep.subr.bf16.mxu0 0
        %4152 = vmatpush2.bf16.msra.mxu0 0
        %4153 = vmatprep.mubr.bf16.mxu0 0
        %4154 = vmatmul.mubr.bf16.gmra.mxu0 %v4116
        %v4155 = vpop.f32.mrf.mxu0
        %v4156 = vadd.f32 0.0, %v4155
        %v4157 = vpop.f32.mrf.mxu0
        %v4158 = vpop.f32.mrf.mxu0
        %v4159 = vpop.f32.mrf.mxu0
        %4160 = vdwg.mxu0
        %v4161 = vpack.c.bf16 %v4156, %v4156
        %s4162 = scalar_lea.vmem %s10, 48
        %v4163 = vld [vmem:[%s4162] sm:$0xf]
        %v4164 = vld [vmem:[%s4162 + $0x4] sm:$0xf]
        %v4167 = vunpack.c.l.b16 %v4163
        %v4168 = vunpack.c.l.b16 %v4164
        %v4169 = vpack.c.b16 %v4168, %v4167
        %v4172 = vsel %vm1056, %v4161, 0
        %4174 = vmatprep.subr.bf16.mxu0 0
        %4175 = vmatpush1.bf16.msra.mxu0 0
        %4176 = vmatprep.subr.bf16.mxu0 0
        %4177 = vmatpush1.bf16.msra.mxu0 0
        %4178 = vmatprep.subr.bf16.mxu0 0
        %4179 = vmatpush1.bf16.msra.mxu0 0
        %4180 = vmatprep.subr.bf16.mxu0 0
        %4181 = vmatpush1.bf16.msra.mxu0 0
        %4182 = vmatprep.subr.bf16.mxu0 0
        %4183 = vmatpush1.bf16.msra.mxu0 0
        %4184 = vmatprep.subr.bf16.mxu0 0
        %4185 = vmatpush1.bf16.msra.mxu0 0
        %4186 = vmatprep.subr.bf16.mxu0 0
        %4187 = vmatpush1.bf16.msra.mxu0 0
        %4188 = vmatprep.subr.bf16.mxu0 0
        %4189 = vmatpush1.bf16.msra.mxu0 %v4169
        %4190 = vmatprep.subr.bf16.mxu0 0
        %4191 = vmatpush2.bf16.msra.mxu0 0
        %4192 = vmatprep.subr.bf16.mxu0 0
        %4193 = vmatpush2.bf16.msra.mxu0 0
        %4194 = vmatprep.subr.bf16.mxu0 0
        %4195 = vmatpush2.bf16.msra.mxu0 0
        %4196 = vmatprep.subr.bf16.mxu0 0
        %4197 = vmatpush2.bf16.msra.mxu0 0
        %4198 = vmatprep.subr.bf16.mxu0 0
        %4199 = vmatpush2.bf16.msra.mxu0 0
        %4200 = vmatprep.subr.bf16.mxu0 0
        %4201 = vmatpush2.bf16.msra.mxu0 0
        %4202 = vmatprep.subr.bf16.mxu0 0
        %4203 = vmatpush2.bf16.msra.mxu0 0
        %4204 = vmatprep.subr.bf16.mxu0 0
        %4205 = vmatpush2.bf16.msra.mxu0 0
        %4206 = vmatprep.mubr.bf16.mxu0 0
        %4207 = vmatmul.mubr.bf16.gmra.mxu0 %v4172
        %v4208 = vpop.f32.mrf.mxu0
        %v4209 = vadd.f32 0.0, %v4208
        %v4210 = vpop.f32.mrf.mxu0
        %v4211 = vpop.f32.mrf.mxu0
        %v4212 = vpop.f32.mrf.mxu0
        %4213 = vdwg.mxu0
        %v4214 = vadd.f32 %v3714, %v4209
        %s4215 = scalar_lea.vmem %s8, 448
        %v4216 = vld [vmem:[%s4215] sm:$0xf]
        %v4217 = vld [vmem:[%s4215 + $0x4] sm:$0xf]
        %v4218 = vld [vmem:[%s4215 + $0x8] sm:$0xf]
        %v4219 = vld [vmem:[%s4215 + $0xc] sm:$0xf]
        %v4220 = vld [vmem:[%s4215 + $0x10] sm:$0xf]
        %v4221 = vld [vmem:[%s4215 + $0x14] sm:$0xf]
        %v4222 = vld [vmem:[%s4215 + $0x18] sm:$0xf]
        %v4223 = vld [vmem:[%s4215 + $0x1c] sm:$0xf]
        %v4224 = vld [vmem:[%s4215 + $0x20] sm:$0xf]
        %v4225 = vld [vmem:[%s4215 + $0x24] sm:$0xf]
        %v4226 = vld [vmem:[%s4215 + $0x28] sm:$0xf]
        %v4227 = vld [vmem:[%s4215 + $0x2c] sm:$0xf]
        %v4228 = vld [vmem:[%s4215 + $0x30] sm:$0xf]
        %v4229 = vld [vmem:[%s4215 + $0x34] sm:$0xf]
        %v4230 = vld [vmem:[%s4215 + $0x38] sm:$0xf]
        %v4231 = vld [vmem:[%s4215 + $0x3c] sm:$0xf]
        %s4232 = scalar_lea.vmem %s9, 7
        %v4233 = vld [vmem:[%s4232] sm:$0x1]
        %v4235 = vlaneseq
        %v4236 = vshrl.u32 %v4235, 7
        %v4237 = vsub.s32 0, %v4236
        %v4238 = vrot.slane %v4233, %v4237
        %v4256 = vunpack.c.l.b16 %v4216
        %v4257 = vunpack.c.l.b16 %v4217
        %v4258 = vunpack.c.l.b16 %v4218
        %v4259 = vunpack.c.l.b16 %v4219
        %v4260 = vunpack.c.l.b16 %v4220
        %v4261 = vunpack.c.l.b16 %v4221
        %v4262 = vunpack.c.l.b16 %v4222
        %v4263 = vunpack.c.l.b16 %v4223
        %v4264 = vunpack.c.l.b16 %v4224
        %v4265 = vunpack.c.l.b16 %v4225
        %v4266 = vunpack.c.l.b16 %v4226
        %v4267 = vunpack.c.l.b16 %v4227
        %v4268 = vunpack.c.l.b16 %v4228
        %v4269 = vunpack.c.l.b16 %v4229
        %v4270 = vunpack.c.l.b16 %v4230
        %v4271 = vunpack.c.l.b16 %v4231
        %v4272 = vpack.c.b16 %v4257, %v4256
        %v4273 = vpack.c.b16 %v4259, %v4258
        %v4274 = vpack.c.b16 %v4261, %v4260
        %v4275 = vpack.c.b16 %v4263, %v4262
        %v4276 = vpack.c.b16 %v4265, %v4264
        %v4277 = vpack.c.b16 %v4267, %v4266
        %v4278 = vpack.c.b16 %v4269, %v4268
        %v4279 = vpack.c.b16 %v4271, %v4270
        %4288 = vmatprep.subr.bf16.mxu0 0
        %4289 = vmatpush1.bf16.msra.mxu0 %v4279
        %4290 = vmatprep.subr.bf16.mxu0 0
        %4291 = vmatpush1.bf16.msra.mxu0 %v4278
        %4292 = vmatprep.subr.bf16.mxu0 0
        %4293 = vmatpush1.bf16.msra.mxu0 %v4277
        %4294 = vmatprep.subr.bf16.mxu0 0
        %4295 = vmatpush1.bf16.msra.mxu0 %v4276
        %4296 = vmatprep.subr.bf16.mxu0 0
        %4297 = vmatpush1.bf16.msra.mxu0 %v4275
        %4298 = vmatprep.subr.bf16.mxu0 0
        %4299 = vmatpush1.bf16.msra.mxu0 %v4274
        %4300 = vmatprep.subr.bf16.mxu0 0
        %4301 = vmatpush1.bf16.msra.mxu0 %v4273
        %4302 = vmatprep.subr.bf16.mxu0 0
        %4303 = vmatpush1.bf16.msra.mxu0 %v4272
        %4304 = vmatprep.subr.bf16.mxu0 0
        %4305 = vmatpush2.bf16.msra.mxu0 0
        %4306 = vmatprep.subr.bf16.mxu0 0
        %4307 = vmatpush2.bf16.msra.mxu0 0
        %4308 = vmatprep.subr.bf16.mxu0 0
        %4309 = vmatpush2.bf16.msra.mxu0 0
        %4310 = vmatprep.subr.bf16.mxu0 0
        %4311 = vmatpush2.bf16.msra.mxu0 0
        %4312 = vmatprep.subr.bf16.mxu0 0
        %4313 = vmatpush2.bf16.msra.mxu0 0
        %4314 = vmatprep.subr.bf16.mxu0 0
        %4315 = vmatpush2.bf16.msra.mxu0 0
        %4316 = vmatprep.subr.bf16.mxu0 0
        %4317 = vmatpush2.bf16.msra.mxu0 0
        %4318 = vmatprep.subr.bf16.mxu0 0
        %4319 = vmatpush2.bf16.msra.mxu0 0
        %4320 = vmatprep.mubr.bf16.mxu0 0
        %4321 = vmatmul.mubr.bf16.gmra.mxu0 %v716
        %v4322 = vpop.f32.mrf.mxu0
        %v4323 = vadd.f32 %v4238, %v4322
        %v4324 = vpop.f32.mrf.mxu0
        %v4325 = vpop.f32.mrf.mxu0
        %v4326 = vpop.f32.mrf.mxu0
        %4327 = vdwg.mxu0
        %s4328 = scalar_lea.vmem %s8, 960
        %v4329 = vld [vmem:[%s4328] sm:$0xf]
        %v4330 = vld [vmem:[%s4328 + $0x4] sm:$0xf]
        %v4331 = vld [vmem:[%s4328 + $0x8] sm:$0xf]
        %v4332 = vld [vmem:[%s4328 + $0xc] sm:$0xf]
        %v4333 = vld [vmem:[%s4328 + $0x10] sm:$0xf]
        %v4334 = vld [vmem:[%s4328 + $0x14] sm:$0xf]
        %v4335 = vld [vmem:[%s4328 + $0x18] sm:$0xf]
        %v4336 = vld [vmem:[%s4328 + $0x1c] sm:$0xf]
        %v4337 = vld [vmem:[%s4328 + $0x20] sm:$0xf]
        %v4338 = vld [vmem:[%s4328 + $0x24] sm:$0xf]
        %v4339 = vld [vmem:[%s4328 + $0x28] sm:$0xf]
        %v4340 = vld [vmem:[%s4328 + $0x2c] sm:$0xf]
        %v4341 = vld [vmem:[%s4328 + $0x30] sm:$0xf]
        %v4342 = vld [vmem:[%s4328 + $0x34] sm:$0xf]
        %v4343 = vld [vmem:[%s4328 + $0x38] sm:$0xf]
        %v4344 = vld [vmem:[%s4328 + $0x3c] sm:$0xf]
        %s4345 = scalar_lea.vmem %s9, 15
        %v4346 = vld [vmem:[%s4345] sm:$0x1]
        %v4348 = vlaneseq
        %v4349 = vshrl.u32 %v4348, 7
        %v4350 = vsub.s32 0, %v4349
        %v4351 = vrot.slane %v4346, %v4350
        %v4369 = vunpack.c.l.b16 %v4329
        %v4370 = vunpack.c.l.b16 %v4330
        %v4371 = vunpack.c.l.b16 %v4331
        %v4372 = vunpack.c.l.b16 %v4332
        %v4373 = vunpack.c.l.b16 %v4333
        %v4374 = vunpack.c.l.b16 %v4334
        %v4375 = vunpack.c.l.b16 %v4335
        %v4376 = vunpack.c.l.b16 %v4336
        %v4377 = vunpack.c.l.b16 %v4337
        %v4378 = vunpack.c.l.b16 %v4338
        %v4379 = vunpack.c.l.b16 %v4339
        %v4380 = vunpack.c.l.b16 %v4340
        %v4381 = vunpack.c.l.b16 %v4341
        %v4382 = vunpack.c.l.b16 %v4342
        %v4383 = vunpack.c.l.b16 %v4343
        %v4384 = vunpack.c.l.b16 %v4344
        %v4385 = vpack.c.b16 %v4370, %v4369
        %v4386 = vpack.c.b16 %v4372, %v4371
        %v4387 = vpack.c.b16 %v4374, %v4373
        %v4388 = vpack.c.b16 %v4376, %v4375
        %v4389 = vpack.c.b16 %v4378, %v4377
        %v4390 = vpack.c.b16 %v4380, %v4379
        %v4391 = vpack.c.b16 %v4382, %v4381
        %v4392 = vpack.c.b16 %v4384, %v4383
        %4401 = vmatprep.subr.bf16.mxu0 0
        %4402 = vmatpush1.bf16.msra.mxu0 %v4392
        %4403 = vmatprep.subr.bf16.mxu0 0
        %4404 = vmatpush1.bf16.msra.mxu0 %v4391
        %4405 = vmatprep.subr.bf16.mxu0 0
        %4406 = vmatpush1.bf16.msra.mxu0 %v4390
        %4407 = vmatprep.subr.bf16.mxu0 0
        %4408 = vmatpush1.bf16.msra.mxu0 %v4389
        %4409 = vmatprep.subr.bf16.mxu0 0
        %4410 = vmatpush1.bf16.msra.mxu0 %v4388
        %4411 = vmatprep.subr.bf16.mxu0 0
        %4412 = vmatpush1.bf16.msra.mxu0 %v4387
        %4413 = vmatprep.subr.bf16.mxu0 0
        %4414 = vmatpush1.bf16.msra.mxu0 %v4386
        %4415 = vmatprep.subr.bf16.mxu0 0
        %4416 = vmatpush1.bf16.msra.mxu0 %v4385
        %4417 = vmatprep.subr.bf16.mxu0 0
        %4418 = vmatpush2.bf16.msra.mxu0 0
        %4419 = vmatprep.subr.bf16.mxu0 0
        %4420 = vmatpush2.bf16.msra.mxu0 0
        %4421 = vmatprep.subr.bf16.mxu0 0
        %4422 = vmatpush2.bf16.msra.mxu0 0
        %4423 = vmatprep.subr.bf16.mxu0 0
        %4424 = vmatpush2.bf16.msra.mxu0 0
        %4425 = vmatprep.subr.bf16.mxu0 0
        %4426 = vmatpush2.bf16.msra.mxu0 0
        %4427 = vmatprep.subr.bf16.mxu0 0
        %4428 = vmatpush2.bf16.msra.mxu0 0
        %4429 = vmatprep.subr.bf16.mxu0 0
        %4430 = vmatpush2.bf16.msra.mxu0 0
        %4431 = vmatprep.subr.bf16.mxu0 0
        %4432 = vmatpush2.bf16.msra.mxu0 0
        %4433 = vmatprep.mubr.bf16.mxu0 0
        %4434 = vmatmul.mubr.bf16.gmra.mxu0 %v716
        %v4435 = vpop.f32.mrf.mxu0
        %v4436 = vadd.f32 %v4351, %v4435
        %v4437 = vpop.f32.mrf.mxu0
        %v4438 = vpop.f32.mrf.mxu0
        %v4439 = vpop.f32.mrf.mxu0
        %4440 = vdwg.mxu0
        %s4441 = scalar_lea.vmem %s8, 1472
        %v4442 = vld [vmem:[%s4441] sm:$0xf]
        %v4443 = vld [vmem:[%s4441 + $0x4] sm:$0xf]
        %v4444 = vld [vmem:[%s4441 + $0x8] sm:$0xf]
        %v4445 = vld [vmem:[%s4441 + $0xc] sm:$0xf]
        %v4446 = vld [vmem:[%s4441 + $0x10] sm:$0xf]
        %v4447 = vld [vmem:[%s4441 + $0x14] sm:$0xf]
        %v4448 = vld [vmem:[%s4441 + $0x18] sm:$0xf]
        %v4449 = vld [vmem:[%s4441 + $0x1c] sm:$0xf]
        %v4450 = vld [vmem:[%s4441 + $0x20] sm:$0xf]
        %v4451 = vld [vmem:[%s4441 + $0x24] sm:$0xf]
        %v4452 = vld [vmem:[%s4441 + $0x28] sm:$0xf]
        %v4453 = vld [vmem:[%s4441 + $0x2c] sm:$0xf]
        %v4454 = vld [vmem:[%s4441 + $0x30] sm:$0xf]
        %v4455 = vld [vmem:[%s4441 + $0x34] sm:$0xf]
        %v4456 = vld [vmem:[%s4441 + $0x38] sm:$0xf]
        %v4457 = vld [vmem:[%s4441 + $0x3c] sm:$0xf]
        %s4458 = scalar_lea.vmem %s9, 23
        %v4459 = vld [vmem:[%s4458] sm:$0x1]
        %v4461 = vlaneseq
        %v4462 = vshrl.u32 %v4461, 7
        %v4463 = vsub.s32 0, %v4462
        %v4464 = vrot.slane %v4459, %v4463
        %v4482 = vunpack.c.l.b16 %v4442
        %v4483 = vunpack.c.l.b16 %v4443
        %v4484 = vunpack.c.l.b16 %v4444
        %v4485 = vunpack.c.l.b16 %v4445
        %v4486 = vunpack.c.l.b16 %v4446
        %v4487 = vunpack.c.l.b16 %v4447
        %v4488 = vunpack.c.l.b16 %v4448
        %v4489 = vunpack.c.l.b16 %v4449
        %v4490 = vunpack.c.l.b16 %v4450
        %v4491 = vunpack.c.l.b16 %v4451
        %v4492 = vunpack.c.l.b16 %v4452
        %v4493 = vunpack.c.l.b16 %v4453
        %v4494 = vunpack.c.l.b16 %v4454
        %v4495 = vunpack.c.l.b16 %v4455
        %v4496 = vunpack.c.l.b16 %v4456
        %v4497 = vunpack.c.l.b16 %v4457
        %v4498 = vpack.c.b16 %v4483, %v4482
        %v4499 = vpack.c.b16 %v4485, %v4484
        %v4500 = vpack.c.b16 %v4487, %v4486
        %v4501 = vpack.c.b16 %v4489, %v4488
        %v4502 = vpack.c.b16 %v4491, %v4490
        %v4503 = vpack.c.b16 %v4493, %v4492
        %v4504 = vpack.c.b16 %v4495, %v4494
        %v4505 = vpack.c.b16 %v4497, %v4496
        %4514 = vmatprep.subr.bf16.mxu0 0
        %4515 = vmatpush1.bf16.msra.mxu0 %v4505
        %4516 = vmatprep.subr.bf16.mxu0 0
        %4517 = vmatpush1.bf16.msra.mxu0 %v4504
        %4518 = vmatprep.subr.bf16.mxu0 0
        %4519 = vmatpush1.bf16.msra.mxu0 %v4503
        %4520 = vmatprep.subr.bf16.mxu0 0
        %4521 = vmatpush1.bf16.msra.mxu0 %v4502
        %4522 = vmatprep.subr.bf16.mxu0 0
        %4523 = vmatpush1.bf16.msra.mxu0 %v4501
        %4524 = vmatprep.subr.bf16.mxu0 0
        %4525 = vmatpush1.bf16.msra.mxu0 %v4500
        %4526 = vmatprep.subr.bf16.mxu0 0
        %4527 = vmatpush1.bf16.msra.mxu0 %v4499
        %4528 = vmatprep.subr.bf16.mxu0 0
        %4529 = vmatpush1.bf16.msra.mxu0 %v4498
        %4530 = vmatprep.subr.bf16.mxu0 0
        %4531 = vmatpush2.bf16.msra.mxu0 0
        %4532 = vmatprep.subr.bf16.mxu0 0
        %4533 = vmatpush2.bf16.msra.mxu0 0
        %4534 = vmatprep.subr.bf16.mxu0 0
        %4535 = vmatpush2.bf16.msra.mxu0 0
        %4536 = vmatprep.subr.bf16.mxu0 0
        %4537 = vmatpush2.bf16.msra.mxu0 0
        %4538 = vmatprep.subr.bf16.mxu0 0
        %4539 = vmatpush2.bf16.msra.mxu0 0
        %4540 = vmatprep.subr.bf16.mxu0 0
        %4541 = vmatpush2.bf16.msra.mxu0 0
        %4542 = vmatprep.subr.bf16.mxu0 0
        %4543 = vmatpush2.bf16.msra.mxu0 0
        %4544 = vmatprep.subr.bf16.mxu0 0
        %4545 = vmatpush2.bf16.msra.mxu0 0
        %4546 = vmatprep.mubr.bf16.mxu0 0
        %4547 = vmatmul.mubr.bf16.gmra.mxu0 %v716
        %v4548 = vpop.f32.mrf.mxu0
        %v4549 = vadd.f32 %v4464, %v4548
        %v4550 = vpop.f32.mrf.mxu0
        %v4551 = vpop.f32.mrf.mxu0
        %v4552 = vpop.f32.mrf.mxu0
        %4553 = vdwg.mxu0
        %v4554 = vpack.c.bf16 %v4323, %v4323
        %v4555 = vpack.c.bf16 %v4436, %v4436
        %v4557 = vsel %vm1056, %v4554, 0
        %v4560 = vsel %vm1056, %v4555, 0
        %4562 = vmatprep.subr.bf16.mxu0 0
        %4563 = vmatpush1.bf16.xpose.msra.mxu0 0
        %4564 = vmatprep.subr.bf16.mxu0 0
        %4565 = vmatpush1.bf16.xpose.msra.mxu0 0
        %4566 = vmatprep.subr.bf16.mxu0 0
        %4567 = vmatpush1.bf16.xpose.msra.mxu0 0
        %4568 = vmatprep.subr.bf16.mxu0 0
        %4569 = vmatpush1.bf16.xpose.msra.mxu0 0
        %4570 = vmatprep.subr.bf16.mxu0 0
        %4571 = vmatpush1.bf16.xpose.msra.mxu0 0
        %4572 = vmatprep.subr.bf16.mxu0 0
        %4573 = vmatpush1.bf16.xpose.msra.mxu0 0
        %4574 = vmatprep.subr.bf16.mxu0 0
        %4575 = vmatpush1.bf16.xpose.msra.mxu0 0
        %4576 = vmatprep.subr.bf16.mxu0 0
        %4577 = vmatpush1.bf16.xpose.msra.mxu0 %v4560
        %4578 = vmatprep.subr.bf16.mxu0 0
        %4579 = vmatpush2.bf16.xpose.msra.mxu0 0
        %4580 = vmatprep.subr.bf16.mxu0 0
        %4581 = vmatpush2.bf16.xpose.msra.mxu0 0
        %4582 = vmatprep.subr.bf16.mxu0 0
        %4583 = vmatpush2.bf16.xpose.msra.mxu0 0
        %4584 = vmatprep.subr.bf16.mxu0 0
        %4585 = vmatpush2.bf16.xpose.msra.mxu0 0
        %4586 = vmatprep.subr.bf16.mxu0 0
        %4587 = vmatpush2.bf16.xpose.msra.mxu0 0
        %4588 = vmatprep.subr.bf16.mxu0 0
        %4589 = vmatpush2.bf16.xpose.msra.mxu0 0
        %4590 = vmatprep.subr.bf16.mxu0 0
        %4591 = vmatpush2.bf16.xpose.msra.mxu0 0
        %4592 = vmatprep.subr.bf16.mxu0 0
        %4593 = vmatpush2.bf16.xpose.msra.mxu0 0
        %4594 = vmatprep.mubr.bf16.mxu0 0
        %4595 = vmatmul.mubr.bf16.gmra.mxu0 %v4557
        %v4596 = vpop.f32.mrf.mxu0
        %v4597 = vadd.f32 0.0, %v4596
        %v4598 = vpop.f32.mrf.mxu0
        %v4599 = vpop.f32.mrf.mxu0
        %v4600 = vpop.f32.mrf.mxu0
        %4601 = vdwg.mxu0
        %v4602 = vsel %vm1103, %v4597, -inf
        %4603 = vmax.xlane.f32.xlu0 %v4602
        %v4604 = vpop.xlane.xlu0 %4603
        %v4605 = vsub.f32 %v4597, %v4604
        %v4606 = vmul.f32 %v4605, 1.442695
        %v4607 = vpow.pop %v4606
        %v4608 = vsel %vm1103, %v4607, 0.0
        %4609 = vadd.xlane.f32.xlu0 %v4608
        %v4610 = vpop.xlane.xlu0 %4609
        %v4611 = vrcp.pop %v4610
        %v4612 = vmul.f32 %v4607, %v4611
        %v4613 = vpack.c.bf16 %v4612, %v4612
        %v4614 = vpack.c.bf16 %v4549, %v4549
        %v4616 = vsel %vm1103, %v4613, 0
        %v4619 = vsel %vm1120, %v4614, 0
        %4621 = vmatprep.subr.bf16.mxu0 0
        %4622 = vmatpush1.bf16.msra.mxu0 0
        %4623 = vmatprep.subr.bf16.mxu0 0
        %4624 = vmatpush1.bf16.msra.mxu0 0
        %4625 = vmatprep.subr.bf16.mxu0 0
        %4626 = vmatpush1.bf16.msra.mxu0 0
        %4627 = vmatprep.subr.bf16.mxu0 0
        %4628 = vmatpush1.bf16.msra.mxu0 0
        %4629 = vmatprep.subr.bf16.mxu0 0
        %4630 = vmatpush1.bf16.msra.mxu0 0
        %4631 = vmatprep.subr.bf16.mxu0 0
        %4632 = vmatpush1.bf16.msra.mxu0 0
        %4633 = vmatprep.subr.bf16.mxu0 0
        %4634 = vmatpush1.bf16.msra.mxu0 0
        %4635 = vmatprep.subr.bf16.mxu0 0
        %4636 = vmatpush1.bf16.msra.mxu0 %v4619
        %4637 = vmatprep.subr.bf16.mxu0 0
        %4638 = vmatpush2.bf16.msra.mxu0 0
        %4639 = vmatprep.subr.bf16.mxu0 0
        %4640 = vmatpush2.bf16.msra.mxu0 0
        %4641 = vmatprep.subr.bf16.mxu0 0
        %4642 = vmatpush2.bf16.msra.mxu0 0
        %4643 = vmatprep.subr.bf16.mxu0 0
        %4644 = vmatpush2.bf16.msra.mxu0 0
        %4645 = vmatprep.subr.bf16.mxu0 0
        %4646 = vmatpush2.bf16.msra.mxu0 0
        %4647 = vmatprep.subr.bf16.mxu0 0
        %4648 = vmatpush2.bf16.msra.mxu0 0
        %4649 = vmatprep.subr.bf16.mxu0 0
        %4650 = vmatpush2.bf16.msra.mxu0 0
        %4651 = vmatprep.subr.bf16.mxu0 0
        %4652 = vmatpush2.bf16.msra.mxu0 0
        %4653 = vmatprep.mubr.bf16.mxu0 0
        %4654 = vmatmul.mubr.bf16.gmra.mxu0 %v4616
        %v4655 = vpop.f32.mrf.mxu0
        %v4656 = vadd.f32 0.0, %v4655
        %v4657 = vpop.f32.mrf.mxu0
        %v4658 = vpop.f32.mrf.mxu0
        %v4659 = vpop.f32.mrf.mxu0
        %4660 = vdwg.mxu0
        %v4661 = vpack.c.bf16 %v4656, %v4656
        %s4662 = scalar_lea.vmem %s10, 56
        %v4663 = vld [vmem:[%s4662] sm:$0xf]
        %v4664 = vld [vmem:[%s4662 + $0x4] sm:$0xf]
        %v4667 = vunpack.c.l.b16 %v4663
        %v4668 = vunpack.c.l.b16 %v4664
        %v4669 = vpack.c.b16 %v4668, %v4667
        %v4672 = vsel %vm1056, %v4661, 0
        %4674 = vmatprep.subr.bf16.mxu0 0
        %4675 = vmatpush1.bf16.msra.mxu0 0
        %4676 = vmatprep.subr.bf16.mxu0 0
        %4677 = vmatpush1.bf16.msra.mxu0 0
        %4678 = vmatprep.subr.bf16.mxu0 0
        %4679 = vmatpush1.bf16.msra.mxu0 0
        %4680 = vmatprep.subr.bf16.mxu0 0
        %4681 = vmatpush1.bf16.msra.mxu0 0
        %4682 = vmatprep.subr.bf16.mxu0 0
        %4683 = vmatpush1.bf16.msra.mxu0 0
        %4684 = vmatprep.subr.bf16.mxu0 0
        %4685 = vmatpush1.bf16.msra.mxu0 0
        %4686 = vmatprep.subr.bf16.mxu0 0
        %4687 = vmatpush1.bf16.msra.mxu0 0
        %4688 = vmatprep.subr.bf16.mxu0 0
        %4689 = vmatpush1.bf16.msra.mxu0 %v4669
        %4690 = vmatprep.subr.bf16.mxu0 0
        %4691 = vmatpush2.bf16.msra.mxu0 0
        %4692 = vmatprep.subr.bf16.mxu0 0
        %4693 = vmatpush2.bf16.msra.mxu0 0
        %4694 = vmatprep.subr.bf16.mxu0 0
        %4695 = vmatpush2.bf16.msra.mxu0 0
        %4696 = vmatprep.subr.bf16.mxu0 0
        %4697 = vmatpush2.bf16.msra.mxu0 0
        %4698 = vmatprep.subr.bf16.mxu0 0
        %4699 = vmatpush2.bf16.msra.mxu0 0
        %4700 = vmatprep.subr.bf16.mxu0 0
        %4701 = vmatpush2.bf16.msra.mxu0 0
        %4702 = vmatprep.subr.bf16.mxu0 0
        %4703 = vmatpush2.bf16.msra.mxu0 0
        %4704 = vmatprep.subr.bf16.mxu0 0
        %4705 = vmatpush2.bf16.msra.mxu0 0
        %4706 = vmatprep.mubr.bf16.mxu0 0
        %4707 = vmatmul.mubr.bf16.gmra.mxu0 %v4672
        %v4708 = vpop.f32.mrf.mxu0
        %v4709 = vadd.f32 0.0, %v4708
        %v4710 = vpop.f32.mrf.mxu0
        %v4711 = vpop.f32.mrf.mxu0
        %v4712 = vpop.f32.mrf.mxu0
        %4713 = vdwg.mxu0
        %v4714 = vadd.f32 %v4214, %v4709
        %v4715 = vld [vmem:[%s11] sm:$0x1]
        %v4717 = vlaneseq
        %v4718 = vshrl.u32 %v4717, 7
        %v4719 = vsub.s32 0, %v4718
        %v4720 = vrot.slane %v4715, %v4719
        %v4722 = vadd.f32 %v4714, %v4720
        %v4723 = vadd.f32 %v685, %v4722
        %v4724 = vld [vmem:[%s4] sm:$0x1]
        %v4725 = vld [vmem:[%s5] sm:$0x1]
        %4726 = vadd.xlane.f32.xlu0 %v4723
        %v4727 = vpop.xlane.xlu0 %4726
        %v4728 = vmul.f32 %v4727, %v692
        %v4729 = vsub.f32 %v4723, %v4728
        %v4730 = vmul.f32 %v4729, %v4729
        %4731 = vadd.xlane.f32.xlu0 %v4730
        %v4732 = vpop.xlane.xlu0 %4731
        %v4733 = vmul.f32 %v4732, %v692
        %v4734 = vadd.f32 %v4733, 1e-05
        %v4735 = vrsqrt.pop %v4734
        %v4736 = vmul.f32 %v4729, %v4735
        %v4738 = vlaneseq
        %v4739 = vshrl.u32 %v4738, 7
        %v4740 = vsub.s32 0, %v4739
        %v4741 = vrot.slane %v4724, %v4740
        %v4743 = vmul.f32 %v4736, %v4741
        %v4745 = vlaneseq
        %v4746 = vshrl.u32 %v4745, 7
        %v4747 = vsub.s32 0, %v4746
        %v4748 = vrot.slane %v4725, %v4747
        %v4750 = vadd.f32 %v4743, %v4748
        %v4751 = vpack.c.bf16 %v4750, %v4750
        %v4752 = vpack.c.bf16 %v687, %v686
        %v4753 = vld [vmem:[%s12] sm:$0xf]
        %v4754 = vld [vmem:[%s12 + $0x4] sm:$0xf]
        %v4755 = vld [vmem:[%s12 + $0x8] sm:$0xf]
        %v4756 = vld [vmem:[%s12 + $0xc] sm:$0xf]
        %v4757 = vld [vmem:[%s12 + $0x10] sm:$0xf]
        %v4758 = vld [vmem:[%s12 + $0x14] sm:$0xf]
        %v4759 = vld [vmem:[%s12 + $0x18] sm:$0xf]
        %v4760 = vld [vmem:[%s12 + $0x1c] sm:$0xf]
        %v4761 = vld [vmem:[%s12 + $0x20] sm:$0xf]
        %v4762 = vld [vmem:[%s12 + $0x24] sm:$0xf]
        %v4763 = vld [vmem:[%s12 + $0x28] sm:$0xf]
        %v4764 = vld [vmem:[%s12 + $0x2c] sm:$0xf]
        %v4765 = vld [vmem:[%s12 + $0x30] sm:$0xf]
        %v4766 = vld [vmem:[%s12 + $0x34] sm:$0xf]
        %v4767 = vld [vmem:[%s12 + $0x38] sm:$0xf]
        %v4768 = vld [vmem:[%s12 + $0x3c] sm:$0xf]
        %v4769 = vld [vmem:[%s13] sm:$0x1]
        %v4771 = vlaneseq
        %v4772 = vshrl.u32 %v4771, 7
        %v4773 = vsub.s32 0, %v4772
        %v4774 = vrot.slane %v4769, %v4773
        %v4792 = vunpack.c.l.b16 %v4753
        %v4793 = vunpack.c.l.b16 %v4754
        %v4794 = vunpack.c.l.b16 %v4755
        %v4795 = vunpack.c.l.b16 %v4756
        %v4796 = vunpack.c.l.b16 %v4757
        %v4797 = vunpack.c.l.b16 %v4758
        %v4798 = vunpack.c.l.b16 %v4759
        %v4799 = vunpack.c.l.b16 %v4760
        %v4800 = vunpack.c.l.b16 %v4761
        %v4801 = vunpack.c.l.b16 %v4762
        %v4802 = vunpack.c.l.b16 %v4763
        %v4803 = vunpack.c.l.b16 %v4764
        %v4804 = vunpack.c.l.b16 %v4765
        %v4805 = vunpack.c.l.b16 %v4766
        %v4806 = vunpack.c.l.b16 %v4767
        %v4807 = vunpack.c.l.b16 %v4768
        %v4808 = vpack.c.b16 %v4793, %v4792
        %v4809 = vpack.c.b16 %v4795, %v4794
        %v4810 = vpack.c.b16 %v4797, %v4796
        %v4811 = vpack.c.b16 %v4799, %v4798
        %v4812 = vpack.c.b16 %v4801, %v4800
        %v4813 = vpack.c.b16 %v4803, %v4802
        %v4814 = vpack.c.b16 %v4805, %v4804
        %v4815 = vpack.c.b16 %v4807, %v4806
        %4824 = vmatprep.subr.bf16.mxu0 0
        %4825 = vmatpush1.bf16.msra.mxu0 %v4815
        %4826 = vmatprep.subr.bf16.mxu0 0
        %4827 = vmatpush1.bf16.msra.mxu0 %v4814
        %4828 = vmatprep.subr.bf16.mxu0 0
        %4829 = vmatpush1.bf16.msra.mxu0 %v4813
        %4830 = vmatprep.subr.bf16.mxu0 0
        %4831 = vmatpush1.bf16.msra.mxu0 %v4812
        %4832 = vmatprep.subr.bf16.mxu0 0
        %4833 = vmatpush1.bf16.msra.mxu0 %v4811
        %4834 = vmatprep.subr.bf16.mxu0 0
        %4835 = vmatpush1.bf16.msra.mxu0 %v4810
        %4836 = vmatprep.subr.bf16.mxu0 0
        %4837 = vmatpush1.bf16.msra.mxu0 %v4809
        %4838 = vmatprep.subr.bf16.mxu0 0
        %4839 = vmatpush1.bf16.msra.mxu0 %v4808
        %4840 = vmatprep.subr.bf16.mxu0 0
        %4841 = vmatpush2.bf16.msra.mxu0 0
        %4842 = vmatprep.subr.bf16.mxu0 0
        %4843 = vmatpush2.bf16.msra.mxu0 0
        %4844 = vmatprep.subr.bf16.mxu0 0
        %4845 = vmatpush2.bf16.msra.mxu0 0
        %4846 = vmatprep.subr.bf16.mxu0 0
        %4847 = vmatpush2.bf16.msra.mxu0 0
        %4848 = vmatprep.subr.bf16.mxu0 0
        %4849 = vmatpush2.bf16.msra.mxu0 0
        %4850 = vmatprep.subr.bf16.mxu0 0
        %4851 = vmatpush2.bf16.msra.mxu0 0
        %4852 = vmatprep.subr.bf16.mxu0 0
        %4853 = vmatpush2.bf16.msra.mxu0 0
        %4854 = vmatprep.subr.bf16.mxu0 0
        %4855 = vmatpush2.bf16.msra.mxu0 0
        %4856 = vmatprep.mubr.bf16.mxu0 0
        %4857 = vmatmul.mubr.bf16.gmra.mxu0 %v4751
        %v4858 = vpop.f32.mrf.mxu0
        %v4859 = vadd.f32 %v4774, %v4858
        %v4860 = vpop.f32.mrf.mxu0
        %v4861 = vpop.f32.mrf.mxu0
        %v4862 = vpop.f32.mrf.mxu0
        %4863 = vdwg.mxu0
        %s4864 = scalar_lea.vmem %s12, 512
        %v4865 = vld [vmem:[%s4864] sm:$0xf]
        %v4866 = vld [vmem:[%s4864 + $0x4] sm:$0xf]
        %v4867 = vld [vmem:[%s4864 + $0x8] sm:$0xf]
        %v4868 = vld [vmem:[%s4864 + $0xc] sm:$0xf]
        %v4869 = vld [vmem:[%s4864 + $0x10] sm:$0xf]
        %v4870 = vld [vmem:[%s4864 + $0x14] sm:$0xf]
        %v4871 = vld [vmem:[%s4864 + $0x18] sm:$0xf]
        %v4872 = vld [vmem:[%s4864 + $0x1c] sm:$0xf]
        %v4873 = vld [vmem:[%s4864 + $0x20] sm:$0xf]
        %v4874 = vld [vmem:[%s4864 + $0x24] sm:$0xf]
        %v4875 = vld [vmem:[%s4864 + $0x28] sm:$0xf]
        %v4876 = vld [vmem:[%s4864 + $0x2c] sm:$0xf]
        %v4877 = vld [vmem:[%s4864 + $0x30] sm:$0xf]
        %v4878 = vld [vmem:[%s4864 + $0x34] sm:$0xf]
        %v4879 = vld [vmem:[%s4864 + $0x38] sm:$0xf]
        %v4880 = vld [vmem:[%s4864 + $0x3c] sm:$0xf]
        %s4881 = scalar_lea.vmem %s13, 8
        %v4882 = vld [vmem:[%s4881] sm:$0x1]
        %v4884 = vlaneseq
        %v4885 = vshrl.u32 %v4884, 7
        %v4886 = vsub.s32 0, %v4885
        %v4887 = vrot.slane %v4882, %v4886
        %v4905 = vunpack.c.l.b16 %v4865
        %v4906 = vunpack.c.l.b16 %v4866
        %v4907 = vunpack.c.l.b16 %v4867
        %v4908 = vunpack.c.l.b16 %v4868
        %v4909 = vunpack.c.l.b16 %v4869
        %v4910 = vunpack.c.l.b16 %v4870
        %v4911 = vunpack.c.l.b16 %v4871
        %v4912 = vunpack.c.l.b16 %v4872
        %v4913 = vunpack.c.l.b16 %v4873
        %v4914 = vunpack.c.l.b16 %v4874
        %v4915 = vunpack.c.l.b16 %v4875
        %v4916 = vunpack.c.l.b16 %v4876
        %v4917 = vunpack.c.l.b16 %v4877
        %v4918 = vunpack.c.l.b16 %v4878
        %v4919 = vunpack.c.l.b16 %v4879
        %v4920 = vunpack.c.l.b16 %v4880
        %v4921 = vpack.c.b16 %v4906, %v4905
        %v4922 = vpack.c.b16 %v4908, %v4907
        %v4923 = vpack.c.b16 %v4910, %v4909
        %v4924 = vpack.c.b16 %v4912, %v4911
        %v4925 = vpack.c.b16 %v4914, %v4913
        %v4926 = vpack.c.b16 %v4916, %v4915
        %v4927 = vpack.c.b16 %v4918, %v4917
        %v4928 = vpack.c.b16 %v4920, %v4919
        %4937 = vmatprep.subr.bf16.mxu0 0
        %4938 = vmatpush1.bf16.msra.mxu0 %v4928
        %4939 = vmatprep.subr.bf16.mxu0 0
        %4940 = vmatpush1.bf16.msra.mxu0 %v4927
        %4941 = vmatprep.subr.bf16.mxu0 0
        %4942 = vmatpush1.bf16.msra.mxu0 %v4926
        %4943 = vmatprep.subr.bf16.mxu0 0
        %4944 = vmatpush1.bf16.msra.mxu0 %v4925
        %4945 = vmatprep.subr.bf16.mxu0 0
        %4946 = vmatpush1.bf16.msra.mxu0 %v4924
        %4947 = vmatprep.subr.bf16.mxu0 0
        %4948 = vmatpush1.bf16.msra.mxu0 %v4923
        %4949 = vmatprep.subr.bf16.mxu0 0
        %4950 = vmatpush1.bf16.msra.mxu0 %v4922
        %4951 = vmatprep.subr.bf16.mxu0 0
        %4952 = vmatpush1.bf16.msra.mxu0 %v4921
        %4953 = vmatprep.subr.bf16.mxu0 0
        %4954 = vmatpush2.bf16.msra.mxu0 0
        %4955 = vmatprep.subr.bf16.mxu0 0
        %4956 = vmatpush2.bf16.msra.mxu0 0
        %4957 = vmatprep.subr.bf16.mxu0 0
        %4958 = vmatpush2.bf16.msra.mxu0 0
        %4959 = vmatprep.subr.bf16.mxu0 0
        %4960 = vmatpush2.bf16.msra.mxu0 0
        %4961 = vmatprep.subr.bf16.mxu0 0
        %4962 = vmatpush2.bf16.msra.mxu0 0
        %4963 = vmatprep.subr.bf16.mxu0 0
        %4964 = vmatpush2.bf16.msra.mxu0 0
        %4965 = vmatprep.subr.bf16.mxu0 0
        %4966 = vmatpush2.bf16.msra.mxu0 0
        %4967 = vmatprep.subr.bf16.mxu0 0
        %4968 = vmatpush2.bf16.msra.mxu0 0
        %4969 = vmatprep.mubr.bf16.mxu0 0
        %4970 = vmatmul.mubr.bf16.gmra.mxu0 %v4752
        %v4971 = vpop.f32.mrf.mxu0
        %v4972 = vadd.f32 %v4887, %v4971
        %v4973 = vpop.f32.mrf.mxu0
        %v4974 = vpop.f32.mrf.mxu0
        %v4975 = vadd.f32 %v4887, %v4974
        %v4976 = vpop.f32.mrf.mxu0
        %4977 = vdwg.mxu0
        %s4978 = scalar_lea.vmem %s12, 1024
        %v4979 = vld [vmem:[%s4978] sm:$0xf]
        %v4980 = vld [vmem:[%s4978 + $0x4] sm:$0xf]
        %v4981 = vld [vmem:[%s4978 + $0x8] sm:$0xf]
        %v4982 = vld [vmem:[%s4978 + $0xc] sm:$0xf]
        %v4983 = vld [vmem:[%s4978 + $0x10] sm:$0xf]
        %v4984 = vld [vmem:[%s4978 + $0x14] sm:$0xf]
        %v4985 = vld [vmem:[%s4978 + $0x18] sm:$0xf]
        %v4986 = vld [vmem:[%s4978 + $0x1c] sm:$0xf]
        %v4987 = vld [vmem:[%s4978 + $0x20] sm:$0xf]
        %v4988 = vld [vmem:[%s4978 + $0x24] sm:$0xf]
        %v4989 = vld [vmem:[%s4978 + $0x28] sm:$0xf]
        %v4990 = vld [vmem:[%s4978 + $0x2c] sm:$0xf]
        %v4991 = vld [vmem:[%s4978 + $0x30] sm:$0xf]
        %v4992 = vld [vmem:[%s4978 + $0x34] sm:$0xf]
        %v4993 = vld [vmem:[%s4978 + $0x38] sm:$0xf]
        %v4994 = vld [vmem:[%s4978 + $0x3c] sm:$0xf]
        %s4995 = scalar_lea.vmem %s13, 16
        %v4996 = vld [vmem:[%s4995] sm:$0x1]
        %v4998 = vlaneseq
        %v4999 = vshrl.u32 %v4998, 7
        %v5000 = vsub.s32 0, %v4999
        %v5001 = vrot.slane %v4996, %v5000
        %v5019 = vunpack.c.l.b16 %v4979
        %v5020 = vunpack.c.l.b16 %v4980
        %v5021 = vunpack.c.l.b16 %v4981
        %v5022 = vunpack.c.l.b16 %v4982
        %v5023 = vunpack.c.l.b16 %v4983
        %v5024 = vunpack.c.l.b16 %v4984
        %v5025 = vunpack.c.l.b16 %v4985
        %v5026 = vunpack.c.l.b16 %v4986
        %v5027 = vunpack.c.l.b16 %v4987
        %v5028 = vunpack.c.l.b16 %v4988
        %v5029 = vunpack.c.l.b16 %v4989
        %v5030 = vunpack.c.l.b16 %v4990
        %v5031 = vunpack.c.l.b16 %v4991
        %v5032 = vunpack.c.l.b16 %v4992
        %v5033 = vunpack.c.l.b16 %v4993
        %v5034 = vunpack.c.l.b16 %v4994
        %v5035 = vpack.c.b16 %v5020, %v5019
        %v5036 = vpack.c.b16 %v5022, %v5021
        %v5037 = vpack.c.b16 %v5024, %v5023
        %v5038 = vpack.c.b16 %v5026, %v5025
        %v5039 = vpack.c.b16 %v5028, %v5027
        %v5040 = vpack.c.b16 %v5030, %v5029
        %v5041 = vpack.c.b16 %v5032, %v5031
        %v5042 = vpack.c.b16 %v5034, %v5033
        %5051 = vmatprep.subr.bf16.mxu0 0
        %5052 = vmatpush1.bf16.msra.mxu0 %v5042
        %5053 = vmatprep.subr.bf16.mxu0 0
        %5054 = vmatpush1.bf16.msra.mxu0 %v5041
        %5055 = vmatprep.subr.bf16.mxu0 0
        %5056 = vmatpush1.bf16.msra.mxu0 %v5040
        %5057 = vmatprep.subr.bf16.mxu0 0
        %5058 = vmatpush1.bf16.msra.mxu0 %v5039
        %5059 = vmatprep.subr.bf16.mxu0 0
        %5060 = vmatpush1.bf16.msra.mxu0 %v5038
        %5061 = vmatprep.subr.bf16.mxu0 0
        %5062 = vmatpush1.bf16.msra.mxu0 %v5037
        %5063 = vmatprep.subr.bf16.mxu0 0
        %5064 = vmatpush1.bf16.msra.mxu0 %v5036
        %5065 = vmatprep.subr.bf16.mxu0 0
        %5066 = vmatpush1.bf16.msra.mxu0 %v5035
        %5067 = vmatprep.subr.bf16.mxu0 0
        %5068 = vmatpush2.bf16.msra.mxu0 0
        %5069 = vmatprep.subr.bf16.mxu0 0
        %5070 = vmatpush2.bf16.msra.mxu0 0
        %5071 = vmatprep.subr.bf16.mxu0 0
        %5072 = vmatpush2.bf16.msra.mxu0 0
        %5073 = vmatprep.subr.bf16.mxu0 0
        %5074 = vmatpush2.bf16.msra.mxu0 0
        %5075 = vmatprep.subr.bf16.mxu0 0
        %5076 = vmatpush2.bf16.msra.mxu0 0
        %5077 = vmatprep.subr.bf16.mxu0 0
        %5078 = vmatpush2.bf16.msra.mxu0 0
        %5079 = vmatprep.subr.bf16.mxu0 0
        %5080 = vmatpush2.bf16.msra.mxu0 0
        %5081 = vmatprep.subr.bf16.mxu0 0
        %5082 = vmatpush2.bf16.msra.mxu0 0
        %5083 = vmatprep.mubr.bf16.mxu0 0
        %5084 = vmatmul.mubr.bf16.gmra.mxu0 %v4752
        %v5085 = vpop.f32.mrf.mxu0
        %v5086 = vadd.f32 %v5001, %v5085
        %v5087 = vpop.f32.mrf.mxu0
        %v5088 = vpop.f32.mrf.mxu0
        %v5089 = vadd.f32 %v5001, %v5088
        %v5090 = vpop.f32.mrf.mxu0
        %5091 = vdwg.mxu0
        %v5092 = vpack.c.bf16 %v4859, %v4859
        %v5093 = vpack.c.bf16 %v4975, %v4972
        %v5095 = vsel %vm1056, %v5092, 0
        %v5098 = vsel %vm1056, %v5093, 0
        %5100 = vmatprep.subr.bf16.mxu0 0
        %5101 = vmatpush1.bf16.xpose.msra.mxu0 0
        %5102 = vmatprep.subr.bf16.mxu0 0
        %5103 = vmatpush1.bf16.xpose.msra.mxu0 0
        %5104 = vmatprep.subr.bf16.mxu0 0
        %5105 = vmatpush1.bf16.xpose.msra.mxu0 0
        %5106 = vmatprep.subr.bf16.mxu0 0
        %5107 = vmatpush1.bf16.xpose.msra.mxu0 0
        %5108 = vmatprep.subr.bf16.mxu0 0
        %5109 = vmatpush1.bf16.xpose.msra.mxu0 0
        %5110 = vmatprep.subr.bf16.mxu0 0
        %5111 = vmatpush1.bf16.xpose.msra.mxu0 0
        %5112 = vmatprep.subr.bf16.mxu0 0
        %5113 = vmatpush1.bf16.xpose.msra.mxu0 0
        %5114 = vmatprep.subr.bf16.mxu0 0
        %5115 = vmatpush1.bf16.xpose.msra.mxu0 %v5098
        %5116 = vmatprep.subr.bf16.mxu0 0
        %5117 = vmatpush2.bf16.xpose.msra.mxu0 0
        %5118 = vmatprep.subr.bf16.mxu0 0
        %5119 = vmatpush2.bf16.xpose.msra.mxu0 0
        %5120 = vmatprep.subr.bf16.mxu0 0
        %5121 = vmatpush2.bf16.xpose.msra.mxu0 0
        %5122 = vmatprep.subr.bf16.mxu0 0
        %5123 = vmatpush2.bf16.xpose.msra.mxu0 0
        %5124 = vmatprep.subr.bf16.mxu0 0
        %5125 = vmatpush2.bf16.xpose.msra.mxu0 0
        %5126 = vmatprep.subr.bf16.mxu0 0
        %5127 = vmatpush2.bf16.xpose.msra.mxu0 0
        %5128 = vmatprep.subr.bf16.mxu0 0
        %5129 = vmatpush2.bf16.xpose.msra.mxu0 0
        %5130 = vmatprep.subr.bf16.mxu0 0
        %5131 = vmatpush2.bf16.xpose.msra.mxu0 0
        %5132 = vmatprep.mubr.bf16.mxu0 0
        %5133 = vmatmul.mubr.bf16.gmra.mxu0 %v5095
        %v5134 = vpop.f32.mrf.mxu0
        %v5135 = vadd.f32 0.0, %v5134
        %v5136 = vpop.f32.mrf.mxu0
        %v5137 = vpop.f32.mrf.mxu0
        %v5138 = vpop.f32.mrf.mxu0
        %5139 = vdwg.mxu0
        %v5140 = vsel %vm1056, %v5135, -inf
        %5141 = vmax.xlane.f32.xlu0 %v5140
        %v5142 = vpop.xlane.xlu0 %5141
        %v5143 = vsub.f32 %v5135, %v5142
        %v5144 = vmul.f32 %v5143, 1.442695
        %v5145 = vpow.pop %v5144
        %v5146 = vsel %vm1056, %v5145, 0.0
        %5147 = vadd.xlane.f32.xlu0 %v5146
        %v5148 = vpop.xlane.xlu0 %5147
        %v5149 = vrcp.pop %v5148
        %v5150 = vmul.f32 %v5145, %v5149
        %v5151 = vpack.c.bf16 %v5150, %v5150
        %v5152 = vpack.c.bf16 %v5089, %v5086
        %v5154 = vsel %vm1056, %v5151, 0
        %5156 = vmatprep.subr.bf16.mxu0 0
        %5157 = vmatpush1.bf16.msra.mxu0 0
        %5158 = vmatprep.subr.bf16.mxu0 0
        %5159 = vmatpush1.bf16.msra.mxu0 0
        %5160 = vmatprep.subr.bf16.mxu0 0
        %5161 = vmatpush1.bf16.msra.mxu0 0
        %5162 = vmatprep.subr.bf16.mxu0 0
        %5163 = vmatpush1.bf16.msra.mxu0 0
        %5164 = vmatprep.subr.bf16.mxu0 0
        %5165 = vmatpush1.bf16.msra.mxu0 0
        %5166 = vmatprep.subr.bf16.mxu0 0
        %5167 = vmatpush1.bf16.msra.mxu0 0
        %5168 = vmatprep.subr.bf16.mxu0 0
        %5169 = vmatpush1.bf16.msra.mxu0 0
        %5170 = vmatprep.subr.bf16.mxu0 0
        %5171 = vmatpush1.bf16.msra.mxu0 %v5152
        %5172 = vmatprep.subr.bf16.mxu0 0
        %5173 = vmatpush2.bf16.msra.mxu0 0
        %5174 = vmatprep.subr.bf16.mxu0 0
        %5175 = vmatpush2.bf16.msra.mxu0 0
        %5176 = vmatprep.subr.bf16.mxu0 0
        %5177 = vmatpush2.bf16.msra.mxu0 0
        %5178 = vmatprep.subr.bf16.mxu0 0
        %5179 = vmatpush2.bf16.msra.mxu0 0
        %5180 = vmatprep.subr.bf16.mxu0 0
        %5181 = vmatpush2.bf16.msra.mxu0 0
        %5182 = vmatprep.subr.bf16.mxu0 0
        %5183 = vmatpush2.bf16.msra.mxu0 0
        %5184 = vmatprep.subr.bf16.mxu0 0
        %5185 = vmatpush2.bf16.msra.mxu0 0
        %5186 = vmatprep.subr.bf16.mxu0 0
        %5187 = vmatpush2.bf16.msra.mxu0 0
        %5188 = vmatprep.mubr.bf16.mxu0 0
        %5189 = vmatmul.mubr.bf16.gmra.mxu0 %v5154
        %v5190 = vpop.f32.mrf.mxu0
        %v5191 = vadd.f32 0.0, %v5190
        %v5192 = vpop.f32.mrf.mxu0
        %v5193 = vpop.f32.mrf.mxu0
        %v5194 = vpop.f32.mrf.mxu0
        %5195 = vdwg.mxu0
        %v5196 = vpack.c.bf16 %v5191, %v5191
        %v5197 = vld [vmem:[%s14] sm:$0xf]
        %v5198 = vld [vmem:[%s14 + $0x4] sm:$0xf]
        %s5199 = scalar_lea.vmem %s12, 64
        %v5200 = vld [vmem:[%s5199] sm:$0xf]
        %v5201 = vld [vmem:[%s5199 + $0x4] sm:$0xf]
        %v5202 = vld [vmem:[%s5199 + $0x8] sm:$0xf]
        %v5203 = vld [vmem:[%s5199 + $0xc] sm:$0xf]
        %v5204 = vld [vmem:[%s5199 + $0x10] sm:$0xf]
        %v5205 = vld [vmem:[%s5199 + $0x14] sm:$0xf]
        %v5206 = vld [vmem:[%s5199 + $0x18] sm:$0xf]
        %v5207 = vld [vmem:[%s5199 + $0x1c] sm:$0xf]
        %v5208 = vld [vmem:[%s5199 + $0x20] sm:$0xf]
        %v5209 = vld [vmem:[%s5199 + $0x24] sm:$0xf]
        %v5210 = vld [vmem:[%s5199 + $0x28] sm:$0xf]
        %v5211 = vld [vmem:[%s5199 + $0x2c] sm:$0xf]
        %v5212 = vld [vmem:[%s5199 + $0x30] sm:$0xf]
        %v5213 = vld [vmem:[%s5199 + $0x34] sm:$0xf]
        %v5214 = vld [vmem:[%s5199 + $0x38] sm:$0xf]
        %v5215 = vld [vmem:[%s5199 + $0x3c] sm:$0xf]
        %s5216 = scalar_lea.vmem %s13, 1
        %v5217 = vld [vmem:[%s5216] sm:$0x1]
        %v5219 = vlaneseq
        %v5220 = vshrl.u32 %v5219, 7
        %v5221 = vsub.s32 0, %v5220
        %v5222 = vrot.slane %v5217, %v5221
        %v5240 = vunpack.c.l.b16 %v5200
        %v5241 = vunpack.c.l.b16 %v5201
        %v5242 = vunpack.c.l.b16 %v5202
        %v5243 = vunpack.c.l.b16 %v5203
        %v5244 = vunpack.c.l.b16 %v5204
        %v5245 = vunpack.c.l.b16 %v5205
        %v5246 = vunpack.c.l.b16 %v5206
        %v5247 = vunpack.c.l.b16 %v5207
        %v5248 = vunpack.c.l.b16 %v5208
        %v5249 = vunpack.c.l.b16 %v5209
        %v5250 = vunpack.c.l.b16 %v5210
        %v5251 = vunpack.c.l.b16 %v5211
        %v5252 = vunpack.c.l.b16 %v5212
        %v5253 = vunpack.c.l.b16 %v5213
        %v5254 = vunpack.c.l.b16 %v5214
        %v5255 = vunpack.c.l.b16 %v5215
        %v5256 = vpack.c.b16 %v5241, %v5240
        %v5257 = vpack.c.b16 %v5243, %v5242
        %v5258 = vpack.c.b16 %v5245, %v5244
        %v5259 = vpack.c.b16 %v5247, %v5246
        %v5260 = vpack.c.b16 %v5249, %v5248
        %v5261 = vpack.c.b16 %v5251, %v5250
        %v5262 = vpack.c.b16 %v5253, %v5252
        %v5263 = vpack.c.b16 %v5255, %v5254
        %5272 = vmatprep.subr.bf16.mxu0 0
        %5273 = vmatpush1.bf16.msra.mxu0 %v5263
        %5274 = vmatprep.subr.bf16.mxu0 0
        %5275 = vmatpush1.bf16.msra.mxu0 %v5262
        %5276 = vmatprep.subr.bf16.mxu0 0
        %5277 = vmatpush1.bf16.msra.mxu0 %v5261
        %5278 = vmatprep.subr.bf16.mxu0 0
        %5279 = vmatpush1.bf16.msra.mxu0 %v5260
        %5280 = vmatprep.subr.bf16.mxu0 0
        %5281 = vmatpush1.bf16.msra.mxu0 %v5259
        %5282 = vmatprep.subr.bf16.mxu0 0
        %5283 = vmatpush1.bf16.msra.mxu0 %v5258
        %5284 = vmatprep.subr.bf16.mxu0 0
        %5285 = vmatpush1.bf16.msra.mxu0 %v5257
        %5286 = vmatprep.subr.bf16.mxu0 0
        %5287 = vmatpush1.bf16.msra.mxu0 %v5256
        %5288 = vmatprep.subr.bf16.mxu0 0
        %5289 = vmatpush2.bf16.msra.mxu0 0
        %5290 = vmatprep.subr.bf16.mxu0 0
        %5291 = vmatpush2.bf16.msra.mxu0 0
        %5292 = vmatprep.subr.bf16.mxu0 0
        %5293 = vmatpush2.bf16.msra.mxu0 0
        %5294 = vmatprep.subr.bf16.mxu0 0
        %5295 = vmatpush2.bf16.msra.mxu0 0
        %5296 = vmatprep.subr.bf16.mxu0 0
        %5297 = vmatpush2.bf16.msra.mxu0 0
        %5298 = vmatprep.subr.bf16.mxu0 0
        %5299 = vmatpush2.bf16.msra.mxu0 0
        %5300 = vmatprep.subr.bf16.mxu0 0
        %5301 = vmatpush2.bf16.msra.mxu0 0
        %5302 = vmatprep.subr.bf16.mxu0 0
        %5303 = vmatpush2.bf16.msra.mxu0 0
        %5304 = vmatprep.mubr.bf16.mxu0 0
        %5305 = vmatmul.mubr.bf16.gmra.mxu0 %v4751
        %v5306 = vpop.f32.mrf.mxu0
        %v5307 = vadd.f32 %v5222, %v5306
        %v5308 = vpop.f32.mrf.mxu0
        %v5309 = vpop.f32.mrf.mxu0
        %v5310 = vpop.f32.mrf.mxu0
        %5311 = vdwg.mxu0
        %s5312 = scalar_lea.vmem %s12, 576
        %v5313 = vld [vmem:[%s5312] sm:$0xf]
        %v5314 = vld [vmem:[%s5312 + $0x4] sm:$0xf]
        %v5315 = vld [vmem:[%s5312 + $0x8] sm:$0xf]
        %v5316 = vld [vmem:[%s5312 + $0xc] sm:$0xf]
        %v5317 = vld [vmem:[%s5312 + $0x10] sm:$0xf]
        %v5318 = vld [vmem:[%s5312 + $0x14] sm:$0xf]
        %v5319 = vld [vmem:[%s5312 + $0x18] sm:$0xf]
        %v5320 = vld [vmem:[%s5312 + $0x1c] sm:$0xf]
        %v5321 = vld [vmem:[%s5312 + $0x20] sm:$0xf]
        %v5322 = vld [vmem:[%s5312 + $0x24] sm:$0xf]
        %v5323 = vld [vmem:[%s5312 + $0x28] sm:$0xf]
        %v5324 = vld [vmem:[%s5312 + $0x2c] sm:$0xf]
        %v5325 = vld [vmem:[%s5312 + $0x30] sm:$0xf]
        %v5326 = vld [vmem:[%s5312 + $0x34] sm:$0xf]
        %v5327 = vld [vmem:[%s5312 + $0x38] sm:$0xf]
        %v5328 = vld [vmem:[%s5312 + $0x3c] sm:$0xf]
        %s5329 = scalar_lea.vmem %s13, 9
        %v5330 = vld [vmem:[%s5329] sm:$0x1]
        %v5332 = vlaneseq
        %v5333 = vshrl.u32 %v5332, 7
        %v5334 = vsub.s32 0, %v5333
        %v5335 = vrot.slane %v5330, %v5334
        %v5353 = vunpack.c.l.b16 %v5313
        %v5354 = vunpack.c.l.b16 %v5314
        %v5355 = vunpack.c.l.b16 %v5315
        %v5356 = vunpack.c.l.b16 %v5316
        %v5357 = vunpack.c.l.b16 %v5317
        %v5358 = vunpack.c.l.b16 %v5318
        %v5359 = vunpack.c.l.b16 %v5319
        %v5360 = vunpack.c.l.b16 %v5320
        %v5361 = vunpack.c.l.b16 %v5321
        %v5362 = vunpack.c.l.b16 %v5322
        %v5363 = vunpack.c.l.b16 %v5323
        %v5364 = vunpack.c.l.b16 %v5324
        %v5365 = vunpack.c.l.b16 %v5325
        %v5366 = vunpack.c.l.b16 %v5326
        %v5367 = vunpack.c.l.b16 %v5327
        %v5368 = vunpack.c.l.b16 %v5328
        %v5369 = vpack.c.b16 %v5354, %v5353
        %v5370 = vpack.c.b16 %v5356, %v5355
        %v5371 = vpack.c.b16 %v5358, %v5357
        %v5372 = vpack.c.b16 %v5360, %v5359
        %v5373 = vpack.c.b16 %v5362, %v5361
        %v5374 = vpack.c.b16 %v5364, %v5363
        %v5375 = vpack.c.b16 %v5366, %v5365
        %v5376 = vpack.c.b16 %v5368, %v5367
        %5385 = vmatprep.subr.bf16.mxu0 0
        %5386 = vmatpush1.bf16.msra.mxu0 %v5376
        %5387 = vmatprep.subr.bf16.mxu0 0
        %5388 = vmatpush1.bf16.msra.mxu0 %v5375
        %5389 = vmatprep.subr.bf16.mxu0 0
        %5390 = vmatpush1.bf16.msra.mxu0 %v5374
        %5391 = vmatprep.subr.bf16.mxu0 0
        %5392 = vmatpush1.bf16.msra.mxu0 %v5373
        %5393 = vmatprep.subr.bf16.mxu0 0
        %5394 = vmatpush1.bf16.msra.mxu0 %v5372
        %5395 = vmatprep.subr.bf16.mxu0 0
        %5396 = vmatpush1.bf16.msra.mxu0 %v5371
        %5397 = vmatprep.subr.bf16.mxu0 0
        %5398 = vmatpush1.bf16.msra.mxu0 %v5370
        %5399 = vmatprep.subr.bf16.mxu0 0
        %5400 = vmatpush1.bf16.msra.mxu0 %v5369
        %5401 = vmatprep.subr.bf16.mxu0 0
        %5402 = vmatpush2.bf16.msra.mxu0 0
        %5403 = vmatprep.subr.bf16.mxu0 0
        %5404 = vmatpush2.bf16.msra.mxu0 0
        %5405 = vmatprep.subr.bf16.mxu0 0
        %5406 = vmatpush2.bf16.msra.mxu0 0
        %5407 = vmatprep.subr.bf16.mxu0 0
        %5408 = vmatpush2.bf16.msra.mxu0 0
        %5409 = vmatprep.subr.bf16.mxu0 0
        %5410 = vmatpush2.bf16.msra.mxu0 0
        %5411 = vmatprep.subr.bf16.mxu0 0
        %5412 = vmatpush2.bf16.msra.mxu0 0
        %5413 = vmatprep.subr.bf16.mxu0 0
        %5414 = vmatpush2.bf16.msra.mxu0 0
        %5415 = vmatprep.subr.bf16.mxu0 0
        %5416 = vmatpush2.bf16.msra.mxu0 0
        %5417 = vmatprep.mubr.bf16.mxu0 0
        %5418 = vmatmul.mubr.bf16.gmra.mxu0 %v4752
        %v5419 = vpop.f32.mrf.mxu0
        %v5420 = vadd.f32 %v5335, %v5419
        %v5421 = vpop.f32.mrf.mxu0
        %v5422 = vpop.f32.mrf.mxu0
        %v5423 = vadd.f32 %v5335, %v5422
        %v5424 = vpop.f32.mrf.mxu0
        %5425 = vdwg.mxu0
        %s5426 = scalar_lea.vmem %s12, 1088
        %v5427 = vld [vmem:[%s5426] sm:$0xf]
        %v5428 = vld [vmem:[%s5426 + $0x4] sm:$0xf]
        %v5429 = vld [vmem:[%s5426 + $0x8] sm:$0xf]
        %v5430 = vld [vmem:[%s5426 + $0xc] sm:$0xf]
        %v5431 = vld [vmem:[%s5426 + $0x10] sm:$0xf]
        %v5432 = vld [vmem:[%s5426 + $0x14] sm:$0xf]
        %v5433 = vld [vmem:[%s5426 + $0x18] sm:$0xf]
        %v5434 = vld [vmem:[%s5426 + $0x1c] sm:$0xf]
        %v5435 = vld [vmem:[%s5426 + $0x20] sm:$0xf]
        %v5436 = vld [vmem:[%s5426 + $0x24] sm:$0xf]
        %v5437 = vld [vmem:[%s5426 + $0x28] sm:$0xf]
        %v5438 = vld [vmem:[%s5426 + $0x2c] sm:$0xf]
        %v5439 = vld [vmem:[%s5426 + $0x30] sm:$0xf]
        %v5440 = vld [vmem:[%s5426 + $0x34] sm:$0xf]
        %v5441 = vld [vmem:[%s5426 + $0x38] sm:$0xf]
        %v5442 = vld [vmem:[%s5426 + $0x3c] sm:$0xf]
        %s5443 = scalar_lea.vmem %s13, 17
        %v5444 = vld [vmem:[%s5443] sm:$0x1]
        %v5446 = vlaneseq
        %v5447 = vshrl.u32 %v5446, 7
        %v5448 = vsub.s32 0, %v5447
        %v5449 = vrot.slane %v5444, %v5448
        %v5467 = vunpack.c.l.b16 %v5427
        %v5468 = vunpack.c.l.b16 %v5428
        %v5469 = vunpack.c.l.b16 %v5429
        %v5470 = vunpack.c.l.b16 %v5430
        %v5471 = vunpack.c.l.b16 %v5431
        %v5472 = vunpack.c.l.b16 %v5432
        %v5473 = vunpack.c.l.b16 %v5433
        %v5474 = vunpack.c.l.b16 %v5434
        %v5475 = vunpack.c.l.b16 %v5435
        %v5476 = vunpack.c.l.b16 %v5436
        %v5477 = vunpack.c.l.b16 %v5437
        %v5478 = vunpack.c.l.b16 %v5438
        %v5479 = vunpack.c.l.b16 %v5439
        %v5480 = vunpack.c.l.b16 %v5440
        %v5481 = vunpack.c.l.b16 %v5441
        %v5482 = vunpack.c.l.b16 %v5442
        %v5483 = vpack.c.b16 %v5468, %v5467
        %v5484 = vpack.c.b16 %v5470, %v5469
        %v5485 = vpack.c.b16 %v5472, %v5471
        %v5486 = vpack.c.b16 %v5474, %v5473
        %v5487 = vpack.c.b16 %v5476, %v5475
        %v5488 = vpack.c.b16 %v5478, %v5477
        %v5489 = vpack.c.b16 %v5480, %v5479
        %v5490 = vpack.c.b16 %v5482, %v5481
        %5499 = vmatprep.subr.bf16.mxu0 0
        %5500 = vmatpush1.bf16.msra.mxu0 %v5490
        %5501 = vmatprep.subr.bf16.mxu0 0
        %5502 = vmatpush1.bf16.msra.mxu0 %v5489
        %5503 = vmatprep.subr.bf16.mxu0 0
        %5504 = vmatpush1.bf16.msra.mxu0 %v5488
        %5505 = vmatprep.subr.bf16.mxu0 0
        %5506 = vmatpush1.bf16.msra.mxu0 %v5487
        %5507 = vmatprep.subr.bf16.mxu0 0
        %5508 = vmatpush1.bf16.msra.mxu0 %v5486
        %5509 = vmatprep.subr.bf16.mxu0 0
        %5510 = vmatpush1.bf16.msra.mxu0 %v5485
        %5511 = vmatprep.subr.bf16.mxu0 0
        %5512 = vmatpush1.bf16.msra.mxu0 %v5484
        %5513 = vmatprep.subr.bf16.mxu0 0
        %5514 = vmatpush1.bf16.msra.mxu0 %v5483
        %5515 = vmatprep.subr.bf16.mxu0 0
        %5516 = vmatpush2.bf16.msra.mxu0 0
        %5517 = vmatprep.subr.bf16.mxu0 0
        %5518 = vmatpush2.bf16.msra.mxu0 0
        %5519 = vmatprep.subr.bf16.mxu0 0
        %5520 = vmatpush2.bf16.msra.mxu0 0
        %5521 = vmatprep.subr.bf16.mxu0 0
        %5522 = vmatpush2.bf16.msra.mxu0 0
        %5523 = vmatprep.subr.bf16.mxu0 0
        %5524 = vmatpush2.bf16.msra.mxu0 0
        %5525 = vmatprep.subr.bf16.mxu0 0
        %5526 = vmatpush2.bf16.msra.mxu0 0
        %5527 = vmatprep.subr.bf16.mxu0 0
        %5528 = vmatpush2.bf16.msra.mxu0 0
        %5529 = vmatprep.subr.bf16.mxu0 0
        %5530 = vmatpush2.bf16.msra.mxu0 0
        %5531 = vmatprep.mubr.bf16.mxu0 0
        %5532 = vmatmul.mubr.bf16.gmra.mxu0 %v4752
        %v5533 = vpop.f32.mrf.mxu0
        %v5534 = vadd.f32 %v5449, %v5533
        %v5535 = vpop.f32.mrf.mxu0
        %v5536 = vpop.f32.mrf.mxu0
        %v5537 = vadd.f32 %v5449, %v5536
        %v5538 = vpop.f32.mrf.mxu0
        %5539 = vdwg.mxu0
        %v5540 = vpack.c.bf16 %v5307, %v5307
        %v5541 = vpack.c.bf16 %v5423, %v5420
        %v5543 = vsel %vm1056, %v5540, 0
        %v5546 = vsel %vm1056, %v5541, 0
        %5548 = vmatprep.subr.bf16.mxu0 0
        %5549 = vmatpush1.bf16.xpose.msra.mxu0 0
        %5550 = vmatprep.subr.bf16.mxu0 0
        %5551 = vmatpush1.bf16.xpose.msra.mxu0 0
        %5552 = vmatprep.subr.bf16.mxu0 0
        %5553 = vmatpush1.bf16.xpose.msra.mxu0 0
        %5554 = vmatprep.subr.bf16.mxu0 0
        %5555 = vmatpush1.bf16.xpose.msra.mxu0 0
        %5556 = vmatprep.subr.bf16.mxu0 0
        %5557 = vmatpush1.bf16.xpose.msra.mxu0 0
        %5558 = vmatprep.subr.bf16.mxu0 0
        %5559 = vmatpush1.bf16.xpose.msra.mxu0 0
        %5560 = vmatprep.subr.bf16.mxu0 0
        %5561 = vmatpush1.bf16.xpose.msra.mxu0 0
        %5562 = vmatprep.subr.bf16.mxu0 0
        %5563 = vmatpush1.bf16.xpose.msra.mxu0 %v5546
        %5564 = vmatprep.subr.bf16.mxu0 0
        %5565 = vmatpush2.bf16.xpose.msra.mxu0 0
        %5566 = vmatprep.subr.bf16.mxu0 0
        %5567 = vmatpush2.bf16.xpose.msra.mxu0 0
        %5568 = vmatprep.subr.bf16.mxu0 0
        %5569 = vmatpush2.bf16.xpose.msra.mxu0 0
        %5570 = vmatprep.subr.bf16.mxu0 0
        %5571 = vmatpush2.bf16.xpose.msra.mxu0 0
        %5572 = vmatprep.subr.bf16.mxu0 0
        %5573 = vmatpush2.bf16.xpose.msra.mxu0 0
        %5574 = vmatprep.subr.bf16.mxu0 0
        %5575 = vmatpush2.bf16.xpose.msra.mxu0 0
        %5576 = vmatprep.subr.bf16.mxu0 0
        %5577 = vmatpush2.bf16.xpose.msra.mxu0 0
        %5578 = vmatprep.subr.bf16.mxu0 0
        %5579 = vmatpush2.bf16.xpose.msra.mxu0 0
        %5580 = vmatprep.mubr.bf16.mxu0 0
        %5581 = vmatmul.mubr.bf16.gmra.mxu0 %v5543
        %v5582 = vpop.f32.mrf.mxu0
        %v5583 = vadd.f32 0.0, %v5582
        %v5584 = vpop.f32.mrf.mxu0
        %v5585 = vpop.f32.mrf.mxu0
        %v5586 = vpop.f32.mrf.mxu0
        %5587 = vdwg.mxu0
        %v5588 = vsel %vm1056, %v5583, -inf
        %5589 = vmax.xlane.f32.xlu0 %v5588
        %v5590 = vpop.xlane.xlu0 %5589
        %v5591 = vsub.f32 %v5583, %v5590
        %v5592 = vmul.f32 %v5591, 1.442695
        %v5593 = vpow.pop %v5592
        %v5594 = vsel %vm1056, %v5593, 0.0
        %5595 = vadd.xlane.f32.xlu0 %v5594
        %v5596 = vpop.xlane.xlu0 %5595
        %v5597 = vrcp.pop %v5596
        %v5598 = vmul.f32 %v5593, %v5597
        %v5599 = vpack.c.bf16 %v5598, %v5598
        %v5600 = vpack.c.bf16 %v5537, %v5534
        %v5602 = vsel %vm1056, %v5599, 0
        %5604 = vmatprep.subr.bf16.mxu0 0
        %5605 = vmatpush1.bf16.msra.mxu0 0
        %5606 = vmatprep.subr.bf16.mxu0 0
        %5607 = vmatpush1.bf16.msra.mxu0 0
        %5608 = vmatprep.subr.bf16.mxu0 0
        %5609 = vmatpush1.bf16.msra.mxu0 0
        %5610 = vmatprep.subr.bf16.mxu0 0
        %5611 = vmatpush1.bf16.msra.mxu0 0
        %5612 = vmatprep.subr.bf16.mxu0 0
        %5613 = vmatpush1.bf16.msra.mxu0 0
        %5614 = vmatprep.subr.bf16.mxu0 0
        %5615 = vmatpush1.bf16.msra.mxu0 0
        %5616 = vmatprep.subr.bf16.mxu0 0
        %5617 = vmatpush1.bf16.msra.mxu0 0
        %5618 = vmatprep.subr.bf16.mxu0 0
        %5619 = vmatpush1.bf16.msra.mxu0 %v5600
        %5620 = vmatprep.subr.bf16.mxu0 0
        %5621 = vmatpush2.bf16.msra.mxu0 0
        %5622 = vmatprep.subr.bf16.mxu0 0
        %5623 = vmatpush2.bf16.msra.mxu0 0
        %5624 = vmatprep.subr.bf16.mxu0 0
        %5625 = vmatpush2.bf16.msra.mxu0 0
        %5626 = vmatprep.subr.bf16.mxu0 0
        %5627 = vmatpush2.bf16.msra.mxu0 0
        %5628 = vmatprep.subr.bf16.mxu0 0
        %5629 = vmatpush2.bf16.msra.mxu0 0
        %5630 = vmatprep.subr.bf16.mxu0 0
        %5631 = vmatpush2.bf16.msra.mxu0 0
        %5632 = vmatprep.subr.bf16.mxu0 0
        %5633 = vmatpush2.bf16.msra.mxu0 0
        %5634 = vmatprep.subr.bf16.mxu0 0
        %5635 = vmatpush2.bf16.msra.mxu0 0
        %5636 = vmatprep.mubr.bf16.mxu0 0
        %5637 = vmatmul.mubr.bf16.gmra.mxu0 %v5602
        %v5638 = vpop.f32.mrf.mxu0
        %v5639 = vadd.f32 0.0, %v5638
        %v5640 = vpop.f32.mrf.mxu0
        %v5641 = vpop.f32.mrf.mxu0
        %v5642 = vpop.f32.mrf.mxu0
        %5643 = vdwg.mxu0
        %v5644 = vpack.c.bf16 %v5639, %v5639
        %s5645 = scalar_lea.vmem %s14, 8
        %v5646 = vld [vmem:[%s5645] sm:$0xf]
        %v5647 = vld [vmem:[%s5645 + $0x4] sm:$0xf]
        %v5650 = vunpack.c.l.b16 %v5646
        %v5651 = vunpack.c.l.b16 %v5647
        %v5652 = vpack.c.b16 %v5651, %v5650
        %v5655 = vsel %vm1056, %v5644, 0
        %5657 = vmatprep.subr.bf16.mxu0 0
        %5658 = vmatpush1.bf16.msra.mxu0 0
        %5659 = vmatprep.subr.bf16.mxu0 0
        %5660 = vmatpush1.bf16.msra.mxu0 0
        %5661 = vmatprep.subr.bf16.mxu0 0
        %5662 = vmatpush1.bf16.msra.mxu0 0
        %5663 = vmatprep.subr.bf16.mxu0 0
        %5664 = vmatpush1.bf16.msra.mxu0 0
        %5665 = vmatprep.subr.bf16.mxu0 0
        %5666 = vmatpush1.bf16.msra.mxu0 0
        %5667 = vmatprep.subr.bf16.mxu0 0
        %5668 = vmatpush1.bf16.msra.mxu0 0
        %5669 = vmatprep.subr.bf16.mxu0 0
        %5670 = vmatpush1.bf16.msra.mxu0 0
        %5671 = vmatprep.subr.bf16.mxu0 0
        %5672 = vmatpush1.bf16.msra.mxu0 %v5652
        %5673 = vmatprep.subr.bf16.mxu0 0
        %5674 = vmatpush2.bf16.msra.mxu0 0
        %5675 = vmatprep.subr.bf16.mxu0 0
        %5676 = vmatpush2.bf16.msra.mxu0 0
        %5677 = vmatprep.subr.bf16.mxu0 0
        %5678 = vmatpush2.bf16.msra.mxu0 0
        %5679 = vmatprep.subr.bf16.mxu0 0
        %5680 = vmatpush2.bf16.msra.mxu0 0
        %5681 = vmatprep.subr.bf16.mxu0 0
        %5682 = vmatpush2.bf16.msra.mxu0 0
        %5683 = vmatprep.subr.bf16.mxu0 0
        %5684 = vmatpush2.bf16.msra.mxu0 0
        %5685 = vmatprep.subr.bf16.mxu0 0
        %5686 = vmatpush2.bf16.msra.mxu0 0
        %5687 = vmatprep.subr.bf16.mxu0 0
        %5688 = vmatpush2.bf16.msra.mxu0 0
        %5689 = vmatprep.mubr.bf16.mxu0 0
        %5690 = vmatmul.mubr.bf16.gmra.mxu0 %v5655
        %v5691 = vpop.f32.mrf.mxu0
        %v5692 = vadd.f32 0.0, %v5691
        %v5693 = vpop.f32.mrf.mxu0
        %v5694 = vpop.f32.mrf.mxu0
        %v5695 = vpop.f32.mrf.mxu0
        %5696 = vdwg.mxu0
        %v5699 = vunpack.c.l.b16 %v5197
        %v5700 = vunpack.c.l.b16 %v5198
        %v5701 = vpack.c.b16 %v5700, %v5699
        %v5704 = vsel %vm1056, %v5196, 0
        %5706 = vmatprep.subr.bf16.mxu0 0
        %5707 = vmatpush1.bf16.msra.mxu0 0
        %5708 = vmatprep.subr.bf16.mxu0 0
        %5709 = vmatpush1.bf16.msra.mxu0 0
        %5710 = vmatprep.subr.bf16.mxu0 0
        %5711 = vmatpush1.bf16.msra.mxu0 0
        %5712 = vmatprep.subr.bf16.mxu0 0
        %5713 = vmatpush1.bf16.msra.mxu0 0
        %5714 = vmatprep.subr.bf16.mxu0 0
        %5715 = vmatpush1.bf16.msra.mxu0 0
        %5716 = vmatprep.subr.bf16.mxu0 0
        %5717 = vmatpush1.bf16.msra.mxu0 0
        %5718 = vmatprep.subr.bf16.mxu0 0
        %5719 = vmatpush1.bf16.msra.mxu0 0
        %5720 = vmatprep.subr.bf16.mxu0 0
        %5721 = vmatpush1.bf16.msra.mxu0 %v5701
        %5722 = vmatprep.subr.bf16.mxu0 0
        %5723 = vmatpush2.bf16.msra.mxu0 0
        %5724 = vmatprep.subr.bf16.mxu0 0
        %5725 = vmatpush2.bf16.msra.mxu0 0
        %5726 = vmatprep.subr.bf16.mxu0 0
        %5727 = vmatpush2.bf16.msra.mxu0 0
        %5728 = vmatprep.subr.bf16.mxu0 0
        %5729 = vmatpush2.bf16.msra.mxu0 0
        %5730 = vmatprep.subr.bf16.mxu0 0
        %5731 = vmatpush2.bf16.msra.mxu0 0
        %5732 = vmatprep.subr.bf16.mxu0 0
        %5733 = vmatpush2.bf16.msra.mxu0 0
        %5734 = vmatprep.subr.bf16.mxu0 0
        %5735 = vmatpush2.bf16.msra.mxu0 0
        %5736 = vmatprep.subr.bf16.mxu0 0
        %5737 = vmatpush2.bf16.msra.mxu0 0
        %5738 = vmatprep.mubr.bf16.mxu0 0
        %5739 = vmatmul.mubr.bf16.gmra.mxu0 %v5704
        %v5740 = vpop.f32.mrf.mxu0
        %v5741 = vadd.f32 %v5692, %v5740
        %v5742 = vpop.f32.mrf.mxu0
        %v5743 = vpop.f32.mrf.mxu0
        %v5744 = vpop.f32.mrf.mxu0
        %5745 = vdwg.mxu0
        %s5746 = scalar_lea.vmem %s12, 128
        %v5747 = vld [vmem:[%s5746] sm:$0xf]
        %v5748 = vld [vmem:[%s5746 + $0x4] sm:$0xf]
        %v5749 = vld [vmem:[%s5746 + $0x8] sm:$0xf]
        %v5750 = vld [vmem:[%s5746 + $0xc] sm:$0xf]
        %v5751 = vld [vmem:[%s5746 + $0x10] sm:$0xf]
        %v5752 = vld [vmem:[%s5746 + $0x14] sm:$0xf]
        %v5753 = vld [vmem:[%s5746 + $0x18] sm:$0xf]
        %v5754 = vld [vmem:[%s5746 + $0x1c] sm:$0xf]
        %v5755 = vld [vmem:[%s5746 + $0x20] sm:$0xf]
        %v5756 = vld [vmem:[%s5746 + $0x24] sm:$0xf]
        %v5757 = vld [vmem:[%s5746 + $0x28] sm:$0xf]
        %v5758 = vld [vmem:[%s5746 + $0x2c] sm:$0xf]
        %v5759 = vld [vmem:[%s5746 + $0x30] sm:$0xf]
        %v5760 = vld [vmem:[%s5746 + $0x34] sm:$0xf]
        %v5761 = vld [vmem:[%s5746 + $0x38] sm:$0xf]
        %v5762 = vld [vmem:[%s5746 + $0x3c] sm:$0xf]
        %s5763 = scalar_lea.vmem %s13, 2
        %v5764 = vld [vmem:[%s5763] sm:$0x1]
        %v5766 = vlaneseq
        %v5767 = vshrl.u32 %v5766, 7
        %v5768 = vsub.s32 0, %v5767
        %v5769 = vrot.slane %v5764, %v5768
        %v5787 = vunpack.c.l.b16 %v5747
        %v5788 = vunpack.c.l.b16 %v5748
        %v5789 = vunpack.c.l.b16 %v5749
        %v5790 = vunpack.c.l.b16 %v5750
        %v5791 = vunpack.c.l.b16 %v5751
        %v5792 = vunpack.c.l.b16 %v5752
        %v5793 = vunpack.c.l.b16 %v5753
        %v5794 = vunpack.c.l.b16 %v5754
        %v5795 = vunpack.c.l.b16 %v5755
        %v5796 = vunpack.c.l.b16 %v5756
        %v5797 = vunpack.c.l.b16 %v5757
        %v5798 = vunpack.c.l.b16 %v5758
        %v5799 = vunpack.c.l.b16 %v5759
        %v5800 = vunpack.c.l.b16 %v5760
        %v5801 = vunpack.c.l.b16 %v5761
        %v5802 = vunpack.c.l.b16 %v5762
        %v5803 = vpack.c.b16 %v5788, %v5787
        %v5804 = vpack.c.b16 %v5790, %v5789
        %v5805 = vpack.c.b16 %v5792, %v5791
        %v5806 = vpack.c.b16 %v5794, %v5793
        %v5807 = vpack.c.b16 %v5796, %v5795
        %v5808 = vpack.c.b16 %v5798, %v5797
        %v5809 = vpack.c.b16 %v5800, %v5799
        %v5810 = vpack.c.b16 %v5802, %v5801
        %5819 = vmatprep.subr.bf16.mxu0 0
        %5820 = vmatpush1.bf16.msra.mxu0 %v5810
        %5821 = vmatprep.subr.bf16.mxu0 0
        %5822 = vmatpush1.bf16.msra.mxu0 %v5809
        %5823 = vmatprep.subr.bf16.mxu0 0
        %5824 = vmatpush1.bf16.msra.mxu0 %v5808
        %5825 = vmatprep.subr.bf16.mxu0 0
        %5826 = vmatpush1.bf16.msra.mxu0 %v5807
        %5827 = vmatprep.subr.bf16.mxu0 0
        %5828 = vmatpush1.bf16.msra.mxu0 %v5806
        %5829 = vmatprep.subr.bf16.mxu0 0
        %5830 = vmatpush1.bf16.msra.mxu0 %v5805
        %5831 = vmatprep.subr.bf16.mxu0 0
        %5832 = vmatpush1.bf16.msra.mxu0 %v5804
        %5833 = vmatprep.subr.bf16.mxu0 0
        %5834 = vmatpush1.bf16.msra.mxu0 %v5803
        %5835 = vmatprep.subr.bf16.mxu0 0
        %5836 = vmatpush2.bf16.msra.mxu0 0
        %5837 = vmatprep.subr.bf16.mxu0 0
        %5838 = vmatpush2.bf16.msra.mxu0 0
        %5839 = vmatprep.subr.bf16.mxu0 0
        %5840 = vmatpush2.bf16.msra.mxu0 0
        %5841 = vmatprep.subr.bf16.mxu0 0
        %5842 = vmatpush2.bf16.msra.mxu0 0
        %5843 = vmatprep.subr.bf16.mxu0 0
        %5844 = vmatpush2.bf16.msra.mxu0 0
        %5845 = vmatprep.subr.bf16.mxu0 0
        %5846 = vmatpush2.bf16.msra.mxu0 0
        %5847 = vmatprep.subr.bf16.mxu0 0
        %5848 = vmatpush2.bf16.msra.mxu0 0
        %5849 = vmatprep.subr.bf16.mxu0 0
        %5850 = vmatpush2.bf16.msra.mxu0 0
        %5851 = vmatprep.mubr.bf16.mxu0 0
        %5852 = vmatmul.mubr.bf16.gmra.mxu0 %v4751
        %v5853 = vpop.f32.mrf.mxu0
        %v5854 = vadd.f32 %v5769, %v5853
        %v5855 = vpop.f32.mrf.mxu0
        %v5856 = vpop.f32.mrf.mxu0
        %v5857 = vpop.f32.mrf.mxu0
        %5858 = vdwg.mxu0
        %s5859 = scalar_lea.vmem %s12, 640
        %v5860 = vld [vmem:[%s5859] sm:$0xf]
        %v5861 = vld [vmem:[%s5859 + $0x4] sm:$0xf]
        %v5862 = vld [vmem:[%s5859 + $0x8] sm:$0xf]
        %v5863 = vld [vmem:[%s5859 + $0xc] sm:$0xf]
        %v5864 = vld [vmem:[%s5859 + $0x10] sm:$0xf]
        %v5865 = vld [vmem:[%s5859 + $0x14] sm:$0xf]
        %v5866 = vld [vmem:[%s5859 + $0x18] sm:$0xf]
        %v5867 = vld [vmem:[%s5859 + $0x1c] sm:$0xf]
        %v5868 = vld [vmem:[%s5859 + $0x20] sm:$0xf]
        %v5869 = vld [vmem:[%s5859 + $0x24] sm:$0xf]
        %v5870 = vld [vmem:[%s5859 + $0x28] sm:$0xf]
        %v5871 = vld [vmem:[%s5859 + $0x2c] sm:$0xf]
        %v5872 = vld [vmem:[%s5859 + $0x30] sm:$0xf]
        %v5873 = vld [vmem:[%s5859 + $0x34] sm:$0xf]
        %v5874 = vld [vmem:[%s5859 + $0x38] sm:$0xf]
        %v5875 = vld [vmem:[%s5859 + $0x3c] sm:$0xf]
        %s5876 = scalar_lea.vmem %s13, 10
        %v5877 = vld [vmem:[%s5876] sm:$0x1]
        %v5879 = vlaneseq
        %v5880 = vshrl.u32 %v5879, 7
        %v5881 = vsub.s32 0, %v5880
        %v5882 = vrot.slane %v5877, %v5881
        %v5900 = vunpack.c.l.b16 %v5860
        %v5901 = vunpack.c.l.b16 %v5861
        %v5902 = vunpack.c.l.b16 %v5862
        %v5903 = vunpack.c.l.b16 %v5863
        %v5904 = vunpack.c.l.b16 %v5864
        %v5905 = vunpack.c.l.b16 %v5865
        %v5906 = vunpack.c.l.b16 %v5866
        %v5907 = vunpack.c.l.b16 %v5867
        %v5908 = vunpack.c.l.b16 %v5868
        %v5909 = vunpack.c.l.b16 %v5869
        %v5910 = vunpack.c.l.b16 %v5870
        %v5911 = vunpack.c.l.b16 %v5871
        %v5912 = vunpack.c.l.b16 %v5872
        %v5913 = vunpack.c.l.b16 %v5873
        %v5914 = vunpack.c.l.b16 %v5874
        %v5915 = vunpack.c.l.b16 %v5875
        %v5916 = vpack.c.b16 %v5901, %v5900
        %v5917 = vpack.c.b16 %v5903, %v5902
        %v5918 = vpack.c.b16 %v5905, %v5904
        %v5919 = vpack.c.b16 %v5907, %v5906
        %v5920 = vpack.c.b16 %v5909, %v5908
        %v5921 = vpack.c.b16 %v5911, %v5910
        %v5922 = vpack.c.b16 %v5913, %v5912
        %v5923 = vpack.c.b16 %v5915, %v5914
        %5932 = vmatprep.subr.bf16.mxu0 0
        %5933 = vmatpush1.bf16.msra.mxu0 %v5923
        %5934 = vmatprep.subr.bf16.mxu0 0
        %5935 = vmatpush1.bf16.msra.mxu0 %v5922
        %5936 = vmatprep.subr.bf16.mxu0 0
        %5937 = vmatpush1.bf16.msra.mxu0 %v5921
        %5938 = vmatprep.subr.bf16.mxu0 0
        %5939 = vmatpush1.bf16.msra.mxu0 %v5920
        %5940 = vmatprep.subr.bf16.mxu0 0
        %5941 = vmatpush1.bf16.msra.mxu0 %v5919
        %5942 = vmatprep.subr.bf16.mxu0 0
        %5943 = vmatpush1.bf16.msra.mxu0 %v5918
        %5944 = vmatprep.subr.bf16.mxu0 0
        %5945 = vmatpush1.bf16.msra.mxu0 %v5917
        %5946 = vmatprep.subr.bf16.mxu0 0
        %5947 = vmatpush1.bf16.msra.mxu0 %v5916
        %5948 = vmatprep.subr.bf16.mxu0 0
        %5949 = vmatpush2.bf16.msra.mxu0 0
        %5950 = vmatprep.subr.bf16.mxu0 0
        %5951 = vmatpush2.bf16.msra.mxu0 0
        %5952 = vmatprep.subr.bf16.mxu0 0
        %5953 = vmatpush2.bf16.msra.mxu0 0
        %5954 = vmatprep.subr.bf16.mxu0 0
        %5955 = vmatpush2.bf16.msra.mxu0 0
        %5956 = vmatprep.subr.bf16.mxu0 0
        %5957 = vmatpush2.bf16.msra.mxu0 0
        %5958 = vmatprep.subr.bf16.mxu0 0
        %5959 = vmatpush2.bf16.msra.mxu0 0
        %5960 = vmatprep.subr.bf16.mxu0 0
        %5961 = vmatpush2.bf16.msra.mxu0 0
        %5962 = vmatprep.subr.bf16.mxu0 0
        %5963 = vmatpush2.bf16.msra.mxu0 0
        %5964 = vmatprep.mubr.bf16.mxu0 0
        %5965 = vmatmul.mubr.bf16.gmra.mxu0 %v4752
        %v5966 = vpop.f32.mrf.mxu0
        %v5967 = vadd.f32 %v5882, %v5966
        %v5968 = vpop.f32.mrf.mxu0
        %v5969 = vpop.f32.mrf.mxu0
        %v5970 = vadd.f32 %v5882, %v5969
        %v5971 = vpop.f32.mrf.mxu0
        %5972 = vdwg.mxu0
        %s5973 = scalar_lea.vmem %s12, 1152
        %v5974 = vld [vmem:[%s5973] sm:$0xf]
        %v5975 = vld [vmem:[%s5973 + $0x4] sm:$0xf]
        %v5976 = vld [vmem:[%s5973 + $0x8] sm:$0xf]
        %v5977 = vld [vmem:[%s5973 + $0xc] sm:$0xf]
        %v5978 = vld [vmem:[%s5973 + $0x10] sm:$0xf]
        %v5979 = vld [vmem:[%s5973 + $0x14] sm:$0xf]
        %v5980 = vld [vmem:[%s5973 + $0x18] sm:$0xf]
        %v5981 = vld [vmem:[%s5973 + $0x1c] sm:$0xf]
        %v5982 = vld [vmem:[%s5973 + $0x20] sm:$0xf]
        %v5983 = vld [vmem:[%s5973 + $0x24] sm:$0xf]
        %v5984 = vld [vmem:[%s5973 + $0x28] sm:$0xf]
        %v5985 = vld [vmem:[%s5973 + $0x2c] sm:$0xf]
        %v5986 = vld [vmem:[%s5973 + $0x30] sm:$0xf]
        %v5987 = vld [vmem:[%s5973 + $0x34] sm:$0xf]
        %v5988 = vld [vmem:[%s5973 + $0x38] sm:$0xf]
        %v5989 = vld [vmem:[%s5973 + $0x3c] sm:$0xf]
        %s5990 = scalar_lea.vmem %s13, 18
        %v5991 = vld [vmem:[%s5990] sm:$0x1]
        %v5993 = vlaneseq
        %v5994 = vshrl.u32 %v5993, 7
        %v5995 = vsub.s32 0, %v5994
        %v5996 = vrot.slane %v5991, %v5995
        %v6014 = vunpack.c.l.b16 %v5974
        %v6015 = vunpack.c.l.b16 %v5975
        %v6016 = vunpack.c.l.b16 %v5976
        %v6017 = vunpack.c.l.b16 %v5977
        %v6018 = vunpack.c.l.b16 %v5978
        %v6019 = vunpack.c.l.b16 %v5979
        %v6020 = vunpack.c.l.b16 %v5980
        %v6021 = vunpack.c.l.b16 %v5981
        %v6022 = vunpack.c.l.b16 %v5982
        %v6023 = vunpack.c.l.b16 %v5983
        %v6024 = vunpack.c.l.b16 %v5984
        %v6025 = vunpack.c.l.b16 %v5985
        %v6026 = vunpack.c.l.b16 %v5986
        %v6027 = vunpack.c.l.b16 %v5987
        %v6028 = vunpack.c.l.b16 %v5988
        %v6029 = vunpack.c.l.b16 %v5989
        %v6030 = vpack.c.b16 %v6015, %v6014
        %v6031 = vpack.c.b16 %v6017, %v6016
        %v6032 = vpack.c.b16 %v6019, %v6018
        %v6033 = vpack.c.b16 %v6021, %v6020
        %v6034 = vpack.c.b16 %v6023, %v6022
        %v6035 = vpack.c.b16 %v6025, %v6024
        %v6036 = vpack.c.b16 %v6027, %v6026
        %v6037 = vpack.c.b16 %v6029, %v6028
        %6046 = vmatprep.subr.bf16.mxu0 0
        %6047 = vmatpush1.bf16.msra.mxu0 %v6037
        %6048 = vmatprep.subr.bf16.mxu0 0
        %6049 = vmatpush1.bf16.msra.mxu0 %v6036
        %6050 = vmatprep.subr.bf16.mxu0 0
        %6051 = vmatpush1.bf16.msra.mxu0 %v6035
        %6052 = vmatprep.subr.bf16.mxu0 0
        %6053 = vmatpush1.bf16.msra.mxu0 %v6034
        %6054 = vmatprep.subr.bf16.mxu0 0
        %6055 = vmatpush1.bf16.msra.mxu0 %v6033
        %6056 = vmatprep.subr.bf16.mxu0 0
        %6057 = vmatpush1.bf16.msra.mxu0 %v6032
        %6058 = vmatprep.subr.bf16.mxu0 0
        %6059 = vmatpush1.bf16.msra.mxu0 %v6031
        %6060 = vmatprep.subr.bf16.mxu0 0
        %6061 = vmatpush1.bf16.msra.mxu0 %v6030
        %6062 = vmatprep.subr.bf16.mxu0 0
        %6063 = vmatpush2.bf16.msra.mxu0 0
        %6064 = vmatprep.subr.bf16.mxu0 0
        %6065 = vmatpush2.bf16.msra.mxu0 0
        %6066 = vmatprep.subr.bf16.mxu0 0
        %6067 = vmatpush2.bf16.msra.mxu0 0
        %6068 = vmatprep.subr.bf16.mxu0 0
        %6069 = vmatpush2.bf16.msra.mxu0 0
        %6070 = vmatprep.subr.bf16.mxu0 0
        %6071 = vmatpush2.bf16.msra.mxu0 0
        %6072 = vmatprep.subr.bf16.mxu0 0
        %6073 = vmatpush2.bf16.msra.mxu0 0
        %6074 = vmatprep.subr.bf16.mxu0 0
        %6075 = vmatpush2.bf16.msra.mxu0 0
        %6076 = vmatprep.subr.bf16.mxu0 0
        %6077 = vmatpush2.bf16.msra.mxu0 0
        %6078 = vmatprep.mubr.bf16.mxu0 0
        %6079 = vmatmul.mubr.bf16.gmra.mxu0 %v4752
        %v6080 = vpop.f32.mrf.mxu0
        %v6081 = vadd.f32 %v5996, %v6080
        %v6082 = vpop.f32.mrf.mxu0
        %v6083 = vpop.f32.mrf.mxu0
        %v6084 = vadd.f32 %v5996, %v6083
        %v6085 = vpop.f32.mrf.mxu0
        %6086 = vdwg.mxu0
        %v6087 = vpack.c.bf16 %v5854, %v5854
        %v6088 = vpack.c.bf16 %v5970, %v5967
        %v6090 = vsel %vm1056, %v6087, 0
        %v6093 = vsel %vm1056, %v6088, 0
        %6095 = vmatprep.subr.bf16.mxu0 0
        %6096 = vmatpush1.bf16.xpose.msra.mxu0 0
        %6097 = vmatprep.subr.bf16.mxu0 0
        %6098 = vmatpush1.bf16.xpose.msra.mxu0 0
        %6099 = vmatprep.subr.bf16.mxu0 0
        %6100 = vmatpush1.bf16.xpose.msra.mxu0 0
        %6101 = vmatprep.subr.bf16.mxu0 0
        %6102 = vmatpush1.bf16.xpose.msra.mxu0 0
        %6103 = vmatprep.subr.bf16.mxu0 0
        %6104 = vmatpush1.bf16.xpose.msra.mxu0 0
        %6105 = vmatprep.subr.bf16.mxu0 0
        %6106 = vmatpush1.bf16.xpose.msra.mxu0 0
        %6107 = vmatprep.subr.bf16.mxu0 0
        %6108 = vmatpush1.bf16.xpose.msra.mxu0 0
        %6109 = vmatprep.subr.bf16.mxu0 0
        %6110 = vmatpush1.bf16.xpose.msra.mxu0 %v6093
        %6111 = vmatprep.subr.bf16.mxu0 0
        %6112 = vmatpush2.bf16.xpose.msra.mxu0 0
        %6113 = vmatprep.subr.bf16.mxu0 0
        %6114 = vmatpush2.bf16.xpose.msra.mxu0 0
        %6115 = vmatprep.subr.bf16.mxu0 0
        %6116 = vmatpush2.bf16.xpose.msra.mxu0 0
        %6117 = vmatprep.subr.bf16.mxu0 0
        %6118 = vmatpush2.bf16.xpose.msra.mxu0 0
        %6119 = vmatprep.subr.bf16.mxu0 0
        %6120 = vmatpush2.bf16.xpose.msra.mxu0 0
        %6121 = vmatprep.subr.bf16.mxu0 0
        %6122 = vmatpush2.bf16.xpose.msra.mxu0 0
        %6123 = vmatprep.subr.bf16.mxu0 0
        %6124 = vmatpush2.bf16.xpose.msra.mxu0 0
        %6125 = vmatprep.subr.bf16.mxu0 0
        %6126 = vmatpush2.bf16.xpose.msra.mxu0 0
        %6127 = vmatprep.mubr.bf16.mxu0 0
        %6128 = vmatmul.mubr.bf16.gmra.mxu0 %v6090
        %v6129 = vpop.f32.mrf.mxu0
        %v6130 = vadd.f32 0.0, %v6129
        %v6131 = vpop.f32.mrf.mxu0
        %v6132 = vpop.f32.mrf.mxu0
        %v6133 = vpop.f32.mrf.mxu0
        %6134 = vdwg.mxu0
        %v6135 = vsel %vm1056, %v6130, -inf
        %6136 = vmax.xlane.f32.xlu0 %v6135
        %v6137 = vpop.xlane.xlu0 %6136
        %v6138 = vsub.f32 %v6130, %v6137
        %v6139 = vmul.f32 %v6138, 1.442695
        %v6140 = vpow.pop %v6139
        %v6141 = vsel %vm1056, %v6140, 0.0
        %6142 = vadd.xlane.f32.xlu0 %v6141
        %v6143 = vpop.xlane.xlu0 %6142
        %v6144 = vrcp.pop %v6143
        %v6145 = vmul.f32 %v6140, %v6144
        %v6146 = vpack.c.bf16 %v6145, %v6145
        %v6147 = vpack.c.bf16 %v6084, %v6081
        %v6149 = vsel %vm1056, %v6146, 0
        %6151 = vmatprep.subr.bf16.mxu0 0
        %6152 = vmatpush1.bf16.msra.mxu0 0
        %6153 = vmatprep.subr.bf16.mxu0 0
        %6154 = vmatpush1.bf16.msra.mxu0 0
        %6155 = vmatprep.subr.bf16.mxu0 0
        %6156 = vmatpush1.bf16.msra.mxu0 0
        %6157 = vmatprep.subr.bf16.mxu0 0
        %6158 = vmatpush1.bf16.msra.mxu0 0
        %6159 = vmatprep.subr.bf16.mxu0 0
        %6160 = vmatpush1.bf16.msra.mxu0 0
        %6161 = vmatprep.subr.bf16.mxu0 0
        %6162 = vmatpush1.bf16.msra.mxu0 0
        %6163 = vmatprep.subr.bf16.mxu0 0
        %6164 = vmatpush1.bf16.msra.mxu0 0
        %6165 = vmatprep.subr.bf16.mxu0 0
        %6166 = vmatpush1.bf16.msra.mxu0 %v6147
        %6167 = vmatprep.subr.bf16.mxu0 0
        %6168 = vmatpush2.bf16.msra.mxu0 0
        %6169 = vmatprep.subr.bf16.mxu0 0
        %6170 = vmatpush2.bf16.msra.mxu0 0
        %6171 = vmatprep.subr.bf16.mxu0 0
        %6172 = vmatpush2.bf16.msra.mxu0 0
        %6173 = vmatprep.subr.bf16.mxu0 0
        %6174 = vmatpush2.bf16.msra.mxu0 0
        %6175 = vmatprep.subr.bf16.mxu0 0
        %6176 = vmatpush2.bf16.msra.mxu0 0
        %6177 = vmatprep.subr.bf16.mxu0 0
        %6178 = vmatpush2.bf16.msra.mxu0 0
        %6179 = vmatprep.subr.bf16.mxu0 0
        %6180 = vmatpush2.bf16.msra.mxu0 0
        %6181 = vmatprep.subr.bf16.mxu0 0
        %6182 = vmatpush2.bf16.msra.mxu0 0
        %6183 = vmatprep.mubr.bf16.mxu0 0
        %6184 = vmatmul.mubr.bf16.gmra.mxu0 %v6149
        %v6185 = vpop.f32.mrf.mxu0
        %v6186 = vadd.f32 0.0, %v6185
        %v6187 = vpop.f32.mrf.mxu0
        %v6188 = vpop.f32.mrf.mxu0
        %v6189 = vpop.f32.mrf.mxu0
        %6190 = vdwg.mxu0
        %v6191 = vpack.c.bf16 %v6186, %v6186
        %s6192 = scalar_lea.vmem %s14, 16
        %v6193 = vld [vmem:[%s6192] sm:$0xf]
        %v6194 = vld [vmem:[%s6192 + $0x4] sm:$0xf]
        %v6197 = vunpack.c.l.b16 %v6193
        %v6198 = vunpack.c.l.b16 %v6194
        %v6199 = vpack.c.b16 %v6198, %v6197
        %v6202 = vsel %vm1056, %v6191, 0
        %6204 = vmatprep.subr.bf16.mxu0 0
        %6205 = vmatpush1.bf16.msra.mxu0 0
        %6206 = vmatprep.subr.bf16.mxu0 0
        %6207 = vmatpush1.bf16.msra.mxu0 0
        %6208 = vmatprep.subr.bf16.mxu0 0
        %6209 = vmatpush1.bf16.msra.mxu0 0
        %6210 = vmatprep.subr.bf16.mxu0 0
        %6211 = vmatpush1.bf16.msra.mxu0 0
        %6212 = vmatprep.subr.bf16.mxu0 0
        %6213 = vmatpush1.bf16.msra.mxu0 0
        %6214 = vmatprep.subr.bf16.mxu0 0
        %6215 = vmatpush1.bf16.msra.mxu0 0
        %6216 = vmatprep.subr.bf16.mxu0 0
        %6217 = vmatpush1.bf16.msra.mxu0 0
        %6218 = vmatprep.subr.bf16.mxu0 0
        %6219 = vmatpush1.bf16.msra.mxu0 %v6199
        %6220 = vmatprep.subr.bf16.mxu0 0
        %6221 = vmatpush2.bf16.msra.mxu0 0
        %6222 = vmatprep.subr.bf16.mxu0 0
        %6223 = vmatpush2.bf16.msra.mxu0 0
        %6224 = vmatprep.subr.bf16.mxu0 0
        %6225 = vmatpush2.bf16.msra.mxu0 0
        %6226 = vmatprep.subr.bf16.mxu0 0
        %6227 = vmatpush2.bf16.msra.mxu0 0
        %6228 = vmatprep.subr.bf16.mxu0 0
        %6229 = vmatpush2.bf16.msra.mxu0 0
        %6230 = vmatprep.subr.bf16.mxu0 0
        %6231 = vmatpush2.bf16.msra.mxu0 0
        %6232 = vmatprep.subr.bf16.mxu0 0
        %6233 = vmatpush2.bf16.msra.mxu0 0
        %6234 = vmatprep.subr.bf16.mxu0 0
        %6235 = vmatpush2.bf16.msra.mxu0 0
        %6236 = vmatprep.mubr.bf16.mxu0 0
        %6237 = vmatmul.mubr.bf16.gmra.mxu0 %v6202
        %v6238 = vpop.f32.mrf.mxu0
        %v6239 = vadd.f32 0.0, %v6238
        %v6240 = vpop.f32.mrf.mxu0
        %v6241 = vpop.f32.mrf.mxu0
        %v6242 = vpop.f32.mrf.mxu0
        %6243 = vdwg.mxu0
        %v6244 = vadd.f32 %v5741, %v6239
        %s6245 = scalar_lea.vmem %s12, 192
        %v6246 = vld [vmem:[%s6245] sm:$0xf]
        %v6247 = vld [vmem:[%s6245 + $0x4] sm:$0xf]
        %v6248 = vld [vmem:[%s6245 + $0x8] sm:$0xf]
        %v6249 = vld [vmem:[%s6245 + $0xc] sm:$0xf]
        %v6250 = vld [vmem:[%s6245 + $0x10] sm:$0xf]
        %v6251 = vld [vmem:[%s6245 + $0x14] sm:$0xf]
        %v6252 = vld [vmem:[%s6245 + $0x18] sm:$0xf]
        %v6253 = vld [vmem:[%s6245 + $0x1c] sm:$0xf]
        %v6254 = vld [vmem:[%s6245 + $0x20] sm:$0xf]
        %v6255 = vld [vmem:[%s6245 + $0x24] sm:$0xf]
        %v6256 = vld [vmem:[%s6245 + $0x28] sm:$0xf]
        %v6257 = vld [vmem:[%s6245 + $0x2c] sm:$0xf]
        %v6258 = vld [vmem:[%s6245 + $0x30] sm:$0xf]
        %v6259 = vld [vmem:[%s6245 + $0x34] sm:$0xf]
        %v6260 = vld [vmem:[%s6245 + $0x38] sm:$0xf]
        %v6261 = vld [vmem:[%s6245 + $0x3c] sm:$0xf]
        %s6262 = scalar_lea.vmem %s13, 3
        %v6263 = vld [vmem:[%s6262] sm:$0x1]
        %v6265 = vlaneseq
        %v6266 = vshrl.u32 %v6265, 7
        %v6267 = vsub.s32 0, %v6266
        %v6268 = vrot.slane %v6263, %v6267
        %v6286 = vunpack.c.l.b16 %v6246
        %v6287 = vunpack.c.l.b16 %v6247
        %v6288 = vunpack.c.l.b16 %v6248
        %v6289 = vunpack.c.l.b16 %v6249
        %v6290 = vunpack.c.l.b16 %v6250
        %v6291 = vunpack.c.l.b16 %v6251
        %v6292 = vunpack.c.l.b16 %v6252
        %v6293 = vunpack.c.l.b16 %v6253
        %v6294 = vunpack.c.l.b16 %v6254
        %v6295 = vunpack.c.l.b16 %v6255
        %v6296 = vunpack.c.l.b16 %v6256
        %v6297 = vunpack.c.l.b16 %v6257
        %v6298 = vunpack.c.l.b16 %v6258
        %v6299 = vunpack.c.l.b16 %v6259
        %v6300 = vunpack.c.l.b16 %v6260
        %v6301 = vunpack.c.l.b16 %v6261
        %v6302 = vpack.c.b16 %v6287, %v6286
        %v6303 = vpack.c.b16 %v6289, %v6288
        %v6304 = vpack.c.b16 %v6291, %v6290
        %v6305 = vpack.c.b16 %v6293, %v6292
        %v6306 = vpack.c.b16 %v6295, %v6294
        %v6307 = vpack.c.b16 %v6297, %v6296
        %v6308 = vpack.c.b16 %v6299, %v6298
        %v6309 = vpack.c.b16 %v6301, %v6300
        %6318 = vmatprep.subr.bf16.mxu0 0
        %6319 = vmatpush1.bf16.msra.mxu0 %v6309
        %6320 = vmatprep.subr.bf16.mxu0 0
        %6321 = vmatpush1.bf16.msra.mxu0 %v6308
        %6322 = vmatprep.subr.bf16.mxu0 0
        %6323 = vmatpush1.bf16.msra.mxu0 %v6307
        %6324 = vmatprep.subr.bf16.mxu0 0
        %6325 = vmatpush1.bf16.msra.mxu0 %v6306
        %6326 = vmatprep.subr.bf16.mxu0 0
        %6327 = vmatpush1.bf16.msra.mxu0 %v6305
        %6328 = vmatprep.subr.bf16.mxu0 0
        %6329 = vmatpush1.bf16.msra.mxu0 %v6304
        %6330 = vmatprep.subr.bf16.mxu0 0
        %6331 = vmatpush1.bf16.msra.mxu0 %v6303
        %6332 = vmatprep.subr.bf16.mxu0 0
        %6333 = vmatpush1.bf16.msra.mxu0 %v6302
        %6334 = vmatprep.subr.bf16.mxu0 0
        %6335 = vmatpush2.bf16.msra.mxu0 0
        %6336 = vmatprep.subr.bf16.mxu0 0
        %6337 = vmatpush2.bf16.msra.mxu0 0
        %6338 = vmatprep.subr.bf16.mxu0 0
        %6339 = vmatpush2.bf16.msra.mxu0 0
        %6340 = vmatprep.subr.bf16.mxu0 0
        %6341 = vmatpush2.bf16.msra.mxu0 0
        %6342 = vmatprep.subr.bf16.mxu0 0
        %6343 = vmatpush2.bf16.msra.mxu0 0
        %6344 = vmatprep.subr.bf16.mxu0 0
        %6345 = vmatpush2.bf16.msra.mxu0 0
        %6346 = vmatprep.subr.bf16.mxu0 0
        %6347 = vmatpush2.bf16.msra.mxu0 0
        %6348 = vmatprep.subr.bf16.mxu0 0
        %6349 = vmatpush2.bf16.msra.mxu0 0
        %6350 = vmatprep.mubr.bf16.mxu0 0
        %6351 = vmatmul.mubr.bf16.gmra.mxu0 %v4751
        %v6352 = vpop.f32.mrf.mxu0
        %v6353 = vadd.f32 %v6268, %v6352
        %v6354 = vpop.f32.mrf.mxu0
        %v6355 = vpop.f32.mrf.mxu0
        %v6356 = vpop.f32.mrf.mxu0
        %6357 = vdwg.mxu0
        %s6358 = scalar_lea.vmem %s12, 704
        %v6359 = vld [vmem:[%s6358] sm:$0xf]
        %v6360 = vld [vmem:[%s6358 + $0x4] sm:$0xf]
        %v6361 = vld [vmem:[%s6358 + $0x8] sm:$0xf]
        %v6362 = vld [vmem:[%s6358 + $0xc] sm:$0xf]
        %v6363 = vld [vmem:[%s6358 + $0x10] sm:$0xf]
        %v6364 = vld [vmem:[%s6358 + $0x14] sm:$0xf]
        %v6365 = vld [vmem:[%s6358 + $0x18] sm:$0xf]
        %v6366 = vld [vmem:[%s6358 + $0x1c] sm:$0xf]
        %v6367 = vld [vmem:[%s6358 + $0x20] sm:$0xf]
        %v6368 = vld [vmem:[%s6358 + $0x24] sm:$0xf]
        %v6369 = vld [vmem:[%s6358 + $0x28] sm:$0xf]
        %v6370 = vld [vmem:[%s6358 + $0x2c] sm:$0xf]
        %v6371 = vld [vmem:[%s6358 + $0x30] sm:$0xf]
        %v6372 = vld [vmem:[%s6358 + $0x34] sm:$0xf]
        %v6373 = vld [vmem:[%s6358 + $0x38] sm:$0xf]
        %v6374 = vld [vmem:[%s6358 + $0x3c] sm:$0xf]
        %s6375 = scalar_lea.vmem %s13, 11
        %v6376 = vld [vmem:[%s6375] sm:$0x1]
        %v6378 = vlaneseq
        %v6379 = vshrl.u32 %v6378, 7
        %v6380 = vsub.s32 0, %v6379
        %v6381 = vrot.slane %v6376, %v6380
        %v6399 = vunpack.c.l.b16 %v6359
        %v6400 = vunpack.c.l.b16 %v6360
        %v6401 = vunpack.c.l.b16 %v6361
        %v6402 = vunpack.c.l.b16 %v6362
        %v6403 = vunpack.c.l.b16 %v6363
        %v6404 = vunpack.c.l.b16 %v6364
        %v6405 = vunpack.c.l.b16 %v6365
        %v6406 = vunpack.c.l.b16 %v6366
        %v6407 = vunpack.c.l.b16 %v6367
        %v6408 = vunpack.c.l.b16 %v6368
        %v6409 = vunpack.c.l.b16 %v6369
        %v6410 = vunpack.c.l.b16 %v6370
        %v6411 = vunpack.c.l.b16 %v6371
        %v6412 = vunpack.c.l.b16 %v6372
        %v6413 = vunpack.c.l.b16 %v6373
        %v6414 = vunpack.c.l.b16 %v6374
        %v6415 = vpack.c.b16 %v6400, %v6399
        %v6416 = vpack.c.b16 %v6402, %v6401
        %v6417 = vpack.c.b16 %v6404, %v6403
        %v6418 = vpack.c.b16 %v6406, %v6405
        %v6419 = vpack.c.b16 %v6408, %v6407
        %v6420 = vpack.c.b16 %v6410, %v6409
        %v6421 = vpack.c.b16 %v6412, %v6411
        %v6422 = vpack.c.b16 %v6414, %v6413
        %6431 = vmatprep.subr.bf16.mxu0 0
        %6432 = vmatpush1.bf16.msra.mxu0 %v6422
        %6433 = vmatprep.subr.bf16.mxu0 0
        %6434 = vmatpush1.bf16.msra.mxu0 %v6421
        %6435 = vmatprep.subr.bf16.mxu0 0
        %6436 = vmatpush1.bf16.msra.mxu0 %v6420
        %6437 = vmatprep.subr.bf16.mxu0 0
        %6438 = vmatpush1.bf16.msra.mxu0 %v6419
        %6439 = vmatprep.subr.bf16.mxu0 0
        %6440 = vmatpush1.bf16.msra.mxu0 %v6418
        %6441 = vmatprep.subr.bf16.mxu0 0
        %6442 = vmatpush1.bf16.msra.mxu0 %v6417
        %6443 = vmatprep.subr.bf16.mxu0 0
        %6444 = vmatpush1.bf16.msra.mxu0 %v6416
        %6445 = vmatprep.subr.bf16.mxu0 0
        %6446 = vmatpush1.bf16.msra.mxu0 %v6415
        %6447 = vmatprep.subr.bf16.mxu0 0
        %6448 = vmatpush2.bf16.msra.mxu0 0
        %6449 = vmatprep.subr.bf16.mxu0 0
        %6450 = vmatpush2.bf16.msra.mxu0 0
        %6451 = vmatprep.subr.bf16.mxu0 0
        %6452 = vmatpush2.bf16.msra.mxu0 0
        %6453 = vmatprep.subr.bf16.mxu0 0
        %6454 = vmatpush2.bf16.msra.mxu0 0
        %6455 = vmatprep.subr.bf16.mxu0 0
        %6456 = vmatpush2.bf16.msra.mxu0 0
        %6457 = vmatprep.subr.bf16.mxu0 0
        %6458 = vmatpush2.bf16.msra.mxu0 0
        %6459 = vmatprep.subr.bf16.mxu0 0
        %6460 = vmatpush2.bf16.msra.mxu0 0
        %6461 = vmatprep.subr.bf16.mxu0 0
        %6462 = vmatpush2.bf16.msra.mxu0 0
        %6463 = vmatprep.mubr.bf16.mxu0 0
        %6464 = vmatmul.mubr.bf16.gmra.mxu0 %v4752
        %v6465 = vpop.f32.mrf.mxu0
        %v6466 = vadd.f32 %v6381, %v6465
        %v6467 = vpop.f32.mrf.mxu0
        %v6468 = vpop.f32.mrf.mxu0
        %v6469 = vadd.f32 %v6381, %v6468
        %v6470 = vpop.f32.mrf.mxu0
        %6471 = vdwg.mxu0
        %s6472 = scalar_lea.vmem %s12, 1216
        %v6473 = vld [vmem:[%s6472] sm:$0xf]
        %v6474 = vld [vmem:[%s6472 + $0x4] sm:$0xf]
        %v6475 = vld [vmem:[%s6472 + $0x8] sm:$0xf]
        %v6476 = vld [vmem:[%s6472 + $0xc] sm:$0xf]
        %v6477 = vld [vmem:[%s6472 + $0x10] sm:$0xf]
        %v6478 = vld [vmem:[%s6472 + $0x14] sm:$0xf]
        %v6479 = vld [vmem:[%s6472 + $0x18] sm:$0xf]
        %v6480 = vld [vmem:[%s6472 + $0x1c] sm:$0xf]
        %v6481 = vld [vmem:[%s6472 + $0x20] sm:$0xf]
        %v6482 = vld [vmem:[%s6472 + $0x24] sm:$0xf]
        %v6483 = vld [vmem:[%s6472 + $0x28] sm:$0xf]
        %v6484 = vld [vmem:[%s6472 + $0x2c] sm:$0xf]
        %v6485 = vld [vmem:[%s6472 + $0x30] sm:$0xf]
        %v6486 = vld [vmem:[%s6472 + $0x34] sm:$0xf]
        %v6487 = vld [vmem:[%s6472 + $0x38] sm:$0xf]
        %v6488 = vld [vmem:[%s6472 + $0x3c] sm:$0xf]
        %s6489 = scalar_lea.vmem %s13, 19
        %v6490 = vld [vmem:[%s6489] sm:$0x1]
        %v6492 = vlaneseq
        %v6493 = vshrl.u32 %v6492, 7
        %v6494 = vsub.s32 0, %v6493
        %v6495 = vrot.slane %v6490, %v6494
        %v6513 = vunpack.c.l.b16 %v6473
        %v6514 = vunpack.c.l.b16 %v6474
        %v6515 = vunpack.c.l.b16 %v6475
        %v6516 = vunpack.c.l.b16 %v6476
        %v6517 = vunpack.c.l.b16 %v6477
        %v6518 = vunpack.c.l.b16 %v6478
        %v6519 = vunpack.c.l.b16 %v6479
        %v6520 = vunpack.c.l.b16 %v6480
        %v6521 = vunpack.c.l.b16 %v6481
        %v6522 = vunpack.c.l.b16 %v6482
        %v6523 = vunpack.c.l.b16 %v6483
        %v6524 = vunpack.c.l.b16 %v6484
        %v6525 = vunpack.c.l.b16 %v6485
        %v6526 = vunpack.c.l.b16 %v6486
        %v6527 = vunpack.c.l.b16 %v6487
        %v6528 = vunpack.c.l.b16 %v6488
        %v6529 = vpack.c.b16 %v6514, %v6513
        %v6530 = vpack.c.b16 %v6516, %v6515
        %v6531 = vpack.c.b16 %v6518, %v6517
        %v6532 = vpack.c.b16 %v6520, %v6519
        %v6533 = vpack.c.b16 %v6522, %v6521
        %v6534 = vpack.c.b16 %v6524, %v6523
        %v6535 = vpack.c.b16 %v6526, %v6525
        %v6536 = vpack.c.b16 %v6528, %v6527
        %6545 = vmatprep.subr.bf16.mxu0 0
        %6546 = vmatpush1.bf16.msra.mxu0 %v6536
        %6547 = vmatprep.subr.bf16.mxu0 0
        %6548 = vmatpush1.bf16.msra.mxu0 %v6535
        %6549 = vmatprep.subr.bf16.mxu0 0
        %6550 = vmatpush1.bf16.msra.mxu0 %v6534
        %6551 = vmatprep.subr.bf16.mxu0 0
        %6552 = vmatpush1.bf16.msra.mxu0 %v6533
        %6553 = vmatprep.subr.bf16.mxu0 0
        %6554 = vmatpush1.bf16.msra.mxu0 %v6532
        %6555 = vmatprep.subr.bf16.mxu0 0
        %6556 = vmatpush1.bf16.msra.mxu0 %v6531
        %6557 = vmatprep.subr.bf16.mxu0 0
        %6558 = vmatpush1.bf16.msra.mxu0 %v6530
        %6559 = vmatprep.subr.bf16.mxu0 0
        %6560 = vmatpush1.bf16.msra.mxu0 %v6529
        %6561 = vmatprep.subr.bf16.mxu0 0
        %6562 = vmatpush2.bf16.msra.mxu0 0
        %6563 = vmatprep.subr.bf16.mxu0 0
        %6564 = vmatpush2.bf16.msra.mxu0 0
        %6565 = vmatprep.subr.bf16.mxu0 0
        %6566 = vmatpush2.bf16.msra.mxu0 0
        %6567 = vmatprep.subr.bf16.mxu0 0
        %6568 = vmatpush2.bf16.msra.mxu0 0
        %6569 = vmatprep.subr.bf16.mxu0 0
        %6570 = vmatpush2.bf16.msra.mxu0 0
        %6571 = vmatprep.subr.bf16.mxu0 0
        %6572 = vmatpush2.bf16.msra.mxu0 0
        %6573 = vmatprep.subr.bf16.mxu0 0
        %6574 = vmatpush2.bf16.msra.mxu0 0
        %6575 = vmatprep.subr.bf16.mxu0 0
        %6576 = vmatpush2.bf16.msra.mxu0 0
        %6577 = vmatprep.mubr.bf16.mxu0 0
        %6578 = vmatmul.mubr.bf16.gmra.mxu0 %v4752
        %v6579 = vpop.f32.mrf.mxu0
        %v6580 = vadd.f32 %v6495, %v6579
        %v6581 = vpop.f32.mrf.mxu0
        %v6582 = vpop.f32.mrf.mxu0
        %v6583 = vadd.f32 %v6495, %v6582
        %v6584 = vpop.f32.mrf.mxu0
        %6585 = vdwg.mxu0
        %v6586 = vpack.c.bf16 %v6353, %v6353
        %v6587 = vpack.c.bf16 %v6469, %v6466
        %v6589 = vsel %vm1056, %v6586, 0
        %v6592 = vsel %vm1056, %v6587, 0
        %6594 = vmatprep.subr.bf16.mxu0 0
        %6595 = vmatpush1.bf16.xpose.msra.mxu0 0
        %6596 = vmatprep.subr.bf16.mxu0 0
        %6597 = vmatpush1.bf16.xpose.msra.mxu0 0
        %6598 = vmatprep.subr.bf16.mxu0 0
        %6599 = vmatpush1.bf16.xpose.msra.mxu0 0
        %6600 = vmatprep.subr.bf16.mxu0 0
        %6601 = vmatpush1.bf16.xpose.msra.mxu0 0
        %6602 = vmatprep.subr.bf16.mxu0 0
        %6603 = vmatpush1.bf16.xpose.msra.mxu0 0
        %6604 = vmatprep.subr.bf16.mxu0 0
        %6605 = vmatpush1.bf16.xpose.msra.mxu0 0
        %6606 = vmatprep.subr.bf16.mxu0 0
        %6607 = vmatpush1.bf16.xpose.msra.mxu0 0
        %6608 = vmatprep.subr.bf16.mxu0 0
        %6609 = vmatpush1.bf16.xpose.msra.mxu0 %v6592
        %6610 = vmatprep.subr.bf16.mxu0 0
        %6611 = vmatpush2.bf16.xpose.msra.mxu0 0
        %6612 = vmatprep.subr.bf16.mxu0 0
        %6613 = vmatpush2.bf16.xpose.msra.mxu0 0
        %6614 = vmatprep.subr.bf16.mxu0 0
        %6615 = vmatpush2.bf16.xpose.msra.mxu0 0
        %6616 = vmatprep.subr.bf16.mxu0 0
        %6617 = vmatpush2.bf16.xpose.msra.mxu0 0
        %6618 = vmatprep.subr.bf16.mxu0 0
        %6619 = vmatpush2.bf16.xpose.msra.mxu0 0
        %6620 = vmatprep.subr.bf16.mxu0 0
        %6621 = vmatpush2.bf16.xpose.msra.mxu0 0
        %6622 = vmatprep.subr.bf16.mxu0 0
        %6623 = vmatpush2.bf16.xpose.msra.mxu0 0
        %6624 = vmatprep.subr.bf16.mxu0 0
        %6625 = vmatpush2.bf16.xpose.msra.mxu0 0
        %6626 = vmatprep.mubr.bf16.mxu0 0
        %6627 = vmatmul.mubr.bf16.gmra.mxu0 %v6589
        %v6628 = vpop.f32.mrf.mxu0
        %v6629 = vadd.f32 0.0, %v6628
        %v6630 = vpop.f32.mrf.mxu0
        %v6631 = vpop.f32.mrf.mxu0
        %v6632 = vpop.f32.mrf.mxu0
        %6633 = vdwg.mxu0
        %v6634 = vsel %vm1056, %v6629, -inf
        %6635 = vmax.xlane.f32.xlu0 %v6634
        %v6636 = vpop.xlane.xlu0 %6635
        %v6637 = vsub.f32 %v6629, %v6636
        %v6638 = vmul.f32 %v6637, 1.442695
        %v6639 = vpow.pop %v6638
        %v6640 = vsel %vm1056, %v6639, 0.0
        %6641 = vadd.xlane.f32.xlu0 %v6640
        %v6642 = vpop.xlane.xlu0 %6641
        %v6643 = vrcp.pop %v6642
        %v6644 = vmul.f32 %v6639, %v6643
        %v6645 = vpack.c.bf16 %v6644, %v6644
        %v6646 = vpack.c.bf16 %v6583, %v6580
        %v6648 = vsel %vm1056, %v6645, 0
        %6650 = vmatprep.subr.bf16.mxu0 0
        %6651 = vmatpush1.bf16.msra.mxu0 0
        %6652 = vmatprep.subr.bf16.mxu0 0
        %6653 = vmatpush1.bf16.msra.mxu0 0
        %6654 = vmatprep.subr.bf16.mxu0 0
        %6655 = vmatpush1.bf16.msra.mxu0 0
        %6656 = vmatprep.subr.bf16.mxu0 0
        %6657 = vmatpush1.bf16.msra.mxu0 0
        %6658 = vmatprep.subr.bf16.mxu0 0
        %6659 = vmatpush1.bf16.msra.mxu0 0
        %6660 = vmatprep.subr.bf16.mxu0 0
        %6661 = vmatpush1.bf16.msra.mxu0 0
        %6662 = vmatprep.subr.bf16.mxu0 0
        %6663 = vmatpush1.bf16.msra.mxu0 0
        %6664 = vmatprep.subr.bf16.mxu0 0
        %6665 = vmatpush1.bf16.msra.mxu0 %v6646
        %6666 = vmatprep.subr.bf16.mxu0 0
        %6667 = vmatpush2.bf16.msra.mxu0 0
        %6668 = vmatprep.subr.bf16.mxu0 0
        %6669 = vmatpush2.bf16.msra.mxu0 0
        %6670 = vmatprep.subr.bf16.mxu0 0
        %6671 = vmatpush2.bf16.msra.mxu0 0
        %6672 = vmatprep.subr.bf16.mxu0 0
        %6673 = vmatpush2.bf16.msra.mxu0 0
        %6674 = vmatprep.subr.bf16.mxu0 0
        %6675 = vmatpush2.bf16.msra.mxu0 0
        %6676 = vmatprep.subr.bf16.mxu0 0
        %6677 = vmatpush2.bf16.msra.mxu0 0
        %6678 = vmatprep.subr.bf16.mxu0 0
        %6679 = vmatpush2.bf16.msra.mxu0 0
        %6680 = vmatprep.subr.bf16.mxu0 0
        %6681 = vmatpush2.bf16.msra.mxu0 0
        %6682 = vmatprep.mubr.bf16.mxu0 0
        %6683 = vmatmul.mubr.bf16.gmra.mxu0 %v6648
        %v6684 = vpop.f32.mrf.mxu0
        %v6685 = vadd.f32 0.0, %v6684
        %v6686 = vpop.f32.mrf.mxu0
        %v6687 = vpop.f32.mrf.mxu0
        %v6688 = vpop.f32.mrf.mxu0
        %6689 = vdwg.mxu0
        %v6690 = vpack.c.bf16 %v6685, %v6685
        %s6691 = scalar_lea.vmem %s14, 24
        %v6692 = vld [vmem:[%s6691] sm:$0xf]
        %v6693 = vld [vmem:[%s6691 + $0x4] sm:$0xf]
        %v6696 = vunpack.c.l.b16 %v6692
        %v6697 = vunpack.c.l.b16 %v6693
        %v6698 = vpack.c.b16 %v6697, %v6696
        %v6701 = vsel %vm1056, %v6690, 0
        %6703 = vmatprep.subr.bf16.mxu0 0
        %6704 = vmatpush1.bf16.msra.mxu0 0
        %6705 = vmatprep.subr.bf16.mxu0 0
        %6706 = vmatpush1.bf16.msra.mxu0 0
        %6707 = vmatprep.subr.bf16.mxu0 0
        %6708 = vmatpush1.bf16.msra.mxu0 0
        %6709 = vmatprep.subr.bf16.mxu0 0
        %6710 = vmatpush1.bf16.msra.mxu0 0
        %6711 = vmatprep.subr.bf16.mxu0 0
        %6712 = vmatpush1.bf16.msra.mxu0 0
        %6713 = vmatprep.subr.bf16.mxu0 0
        %6714 = vmatpush1.bf16.msra.mxu0 0
        %6715 = vmatprep.subr.bf16.mxu0 0
        %6716 = vmatpush1.bf16.msra.mxu0 0
        %6717 = vmatprep.subr.bf16.mxu0 0
        %6718 = vmatpush1.bf16.msra.mxu0 %v6698
        %6719 = vmatprep.subr.bf16.mxu0 0
        %6720 = vmatpush2.bf16.msra.mxu0 0
        %6721 = vmatprep.subr.bf16.mxu0 0
        %6722 = vmatpush2.bf16.msra.mxu0 0
        %6723 = vmatprep.subr.bf16.mxu0 0
        %6724 = vmatpush2.bf16.msra.mxu0 0
        %6725 = vmatprep.subr.bf16.mxu0 0
        %6726 = vmatpush2.bf16.msra.mxu0 0
        %6727 = vmatprep.subr.bf16.mxu0 0
        %6728 = vmatpush2.bf16.msra.mxu0 0
        %6729 = vmatprep.subr.bf16.mxu0 0
        %6730 = vmatpush2.bf16.msra.mxu0 0
        %6731 = vmatprep.subr.bf16.mxu0 0
        %6732 = vmatpush2.bf16.msra.mxu0 0
        %6733 = vmatprep.subr.bf16.mxu0 0
        %6734 = vmatpush2.bf16.msra.mxu0 0
        %6735 = vmatprep.mubr.bf16.mxu0 0
        %6736 = vmatmul.mubr.bf16.gmra.mxu0 %v6701
        %v6737 = vpop.f32.mrf.mxu0
        %v6738 = vadd.f32 0.0, %v6737
        %v6739 = vpop.f32.mrf.mxu0
        %v6740 = vpop.f32.mrf.mxu0
        %v6741 = vpop.f32.mrf.mxu0
        %6742 = vdwg.mxu0
        %v6743 = vadd.f32 %v6244, %v6738
        %s6744 = scalar_lea.vmem %s12, 256
        %v6745 = vld [vmem:[%s6744] sm:$0xf]
        %v6746 = vld [vmem:[%s6744 + $0x4] sm:$0xf]
        %v6747 = vld [vmem:[%s6744 + $0x8] sm:$0xf]
        %v6748 = vld [vmem:[%s6744 + $0xc] sm:$0xf]
        %v6749 = vld [vmem:[%s6744 + $0x10] sm:$0xf]
        %v6750 = vld [vmem:[%s6744 + $0x14] sm:$0xf]
        %v6751 = vld [vmem:[%s6744 + $0x18] sm:$0xf]
        %v6752 = vld [vmem:[%s6744 + $0x1c] sm:$0xf]
        %v6753 = vld [vmem:[%s6744 + $0x20] sm:$0xf]
        %v6754 = vld [vmem:[%s6744 + $0x24] sm:$0xf]
        %v6755 = vld [vmem:[%s6744 + $0x28] sm:$0xf]
        %v6756 = vld [vmem:[%s6744 + $0x2c] sm:$0xf]
        %v6757 = vld [vmem:[%s6744 + $0x30] sm:$0xf]
        %v6758 = vld [vmem:[%s6744 + $0x34] sm:$0xf]
        %v6759 = vld [vmem:[%s6744 + $0x38] sm:$0xf]
        %v6760 = vld [vmem:[%s6744 + $0x3c] sm:$0xf]
        %s6761 = scalar_lea.vmem %s13, 4
        %v6762 = vld [vmem:[%s6761] sm:$0x1]
        %v6764 = vlaneseq
        %v6765 = vshrl.u32 %v6764, 7
        %v6766 = vsub.s32 0, %v6765
        %v6767 = vrot.slane %v6762, %v6766
        %v6785 = vunpack.c.l.b16 %v6745
        %v6786 = vunpack.c.l.b16 %v6746
        %v6787 = vunpack.c.l.b16 %v6747
        %v6788 = vunpack.c.l.b16 %v6748
        %v6789 = vunpack.c.l.b16 %v6749
        %v6790 = vunpack.c.l.b16 %v6750
        %v6791 = vunpack.c.l.b16 %v6751
        %v6792 = vunpack.c.l.b16 %v6752
        %v6793 = vunpack.c.l.b16 %v6753
        %v6794 = vunpack.c.l.b16 %v6754
        %v6795 = vunpack.c.l.b16 %v6755
        %v6796 = vunpack.c.l.b16 %v6756
        %v6797 = vunpack.c.l.b16 %v6757
        %v6798 = vunpack.c.l.b16 %v6758
        %v6799 = vunpack.c.l.b16 %v6759
        %v6800 = vunpack.c.l.b16 %v6760
        %v6801 = vpack.c.b16 %v6786, %v6785
        %v6802 = vpack.c.b16 %v6788, %v6787
        %v6803 = vpack.c.b16 %v6790, %v6789
        %v6804 = vpack.c.b16 %v6792, %v6791
        %v6805 = vpack.c.b16 %v6794, %v6793
        %v6806 = vpack.c.b16 %v6796, %v6795
        %v6807 = vpack.c.b16 %v6798, %v6797
        %v6808 = vpack.c.b16 %v6800, %v6799
        %6817 = vmatprep.subr.bf16.mxu0 0
        %6818 = vmatpush1.bf16.msra.mxu0 %v6808
        %6819 = vmatprep.subr.bf16.mxu0 0
        %6820 = vmatpush1.bf16.msra.mxu0 %v6807
        %6821 = vmatprep.subr.bf16.mxu0 0
        %6822 = vmatpush1.bf16.msra.mxu0 %v6806
        %6823 = vmatprep.subr.bf16.mxu0 0
        %6824 = vmatpush1.bf16.msra.mxu0 %v6805
        %6825 = vmatprep.subr.bf16.mxu0 0
        %6826 = vmatpush1.bf16.msra.mxu0 %v6804
        %6827 = vmatprep.subr.bf16.mxu0 0
        %6828 = vmatpush1.bf16.msra.mxu0 %v6803
        %6829 = vmatprep.subr.bf16.mxu0 0
        %6830 = vmatpush1.bf16.msra.mxu0 %v6802
        %6831 = vmatprep.subr.bf16.mxu0 0
        %6832 = vmatpush1.bf16.msra.mxu0 %v6801
        %6833 = vmatprep.subr.bf16.mxu0 0
        %6834 = vmatpush2.bf16.msra.mxu0 0
        %6835 = vmatprep.subr.bf16.mxu0 0
        %6836 = vmatpush2.bf16.msra.mxu0 0
        %6837 = vmatprep.subr.bf16.mxu0 0
        %6838 = vmatpush2.bf16.msra.mxu0 0
        %6839 = vmatprep.subr.bf16.mxu0 0
        %6840 = vmatpush2.bf16.msra.mxu0 0
        %6841 = vmatprep.subr.bf16.mxu0 0
        %6842 = vmatpush2.bf16.msra.mxu0 0
        %6843 = vmatprep.subr.bf16.mxu0 0
        %6844 = vmatpush2.bf16.msra.mxu0 0
        %6845 = vmatprep.subr.bf16.mxu0 0
        %6846 = vmatpush2.bf16.msra.mxu0 0
        %6847 = vmatprep.subr.bf16.mxu0 0
        %6848 = vmatpush2.bf16.msra.mxu0 0
        %6849 = vmatprep.mubr.bf16.mxu0 0
        %6850 = vmatmul.mubr.bf16.gmra.mxu0 %v4751
        %v6851 = vpop.f32.mrf.mxu0
        %v6852 = vadd.f32 %v6767, %v6851
        %v6853 = vpop.f32.mrf.mxu0
        %v6854 = vpop.f32.mrf.mxu0
        %v6855 = vpop.f32.mrf.mxu0
        %6856 = vdwg.mxu0
        %s6857 = scalar_lea.vmem %s12, 768
        %v6858 = vld [vmem:[%s6857] sm:$0xf]
        %v6859 = vld [vmem:[%s6857 + $0x4] sm:$0xf]
        %v6860 = vld [vmem:[%s6857 + $0x8] sm:$0xf]
        %v6861 = vld [vmem:[%s6857 + $0xc] sm:$0xf]
        %v6862 = vld [vmem:[%s6857 + $0x10] sm:$0xf]
        %v6863 = vld [vmem:[%s6857 + $0x14] sm:$0xf]
        %v6864 = vld [vmem:[%s6857 + $0x18] sm:$0xf]
        %v6865 = vld [vmem:[%s6857 + $0x1c] sm:$0xf]
        %v6866 = vld [vmem:[%s6857 + $0x20] sm:$0xf]
        %v6867 = vld [vmem:[%s6857 + $0x24] sm:$0xf]
        %v6868 = vld [vmem:[%s6857 + $0x28] sm:$0xf]
        %v6869 = vld [vmem:[%s6857 + $0x2c] sm:$0xf]
        %v6870 = vld [vmem:[%s6857 + $0x30] sm:$0xf]
        %v6871 = vld [vmem:[%s6857 + $0x34] sm:$0xf]
        %v6872 = vld [vmem:[%s6857 + $0x38] sm:$0xf]
        %v6873 = vld [vmem:[%s6857 + $0x3c] sm:$0xf]
        %s6874 = scalar_lea.vmem %s13, 12
        %v6875 = vld [vmem:[%s6874] sm:$0x1]
        %v6877 = vlaneseq
        %v6878 = vshrl.u32 %v6877, 7
        %v6879 = vsub.s32 0, %v6878
        %v6880 = vrot.slane %v6875, %v6879
        %v6898 = vunpack.c.l.b16 %v6858
        %v6899 = vunpack.c.l.b16 %v6859
        %v6900 = vunpack.c.l.b16 %v6860
        %v6901 = vunpack.c.l.b16 %v6861
        %v6902 = vunpack.c.l.b16 %v6862
        %v6903 = vunpack.c.l.b16 %v6863
        %v6904 = vunpack.c.l.b16 %v6864
        %v6905 = vunpack.c.l.b16 %v6865
        %v6906 = vunpack.c.l.b16 %v6866
        %v6907 = vunpack.c.l.b16 %v6867
        %v6908 = vunpack.c.l.b16 %v6868
        %v6909 = vunpack.c.l.b16 %v6869
        %v6910 = vunpack.c.l.b16 %v6870
        %v6911 = vunpack.c.l.b16 %v6871
        %v6912 = vunpack.c.l.b16 %v6872
        %v6913 = vunpack.c.l.b16 %v6873
        %v6914 = vpack.c.b16 %v6899, %v6898
        %v6915 = vpack.c.b16 %v6901, %v6900
        %v6916 = vpack.c.b16 %v6903, %v6902
        %v6917 = vpack.c.b16 %v6905, %v6904
        %v6918 = vpack.c.b16 %v6907, %v6906
        %v6919 = vpack.c.b16 %v6909, %v6908
        %v6920 = vpack.c.b16 %v6911, %v6910
        %v6921 = vpack.c.b16 %v6913, %v6912
        %6930 = vmatprep.subr.bf16.mxu0 0
        %6931 = vmatpush1.bf16.msra.mxu0 %v6921
        %6932 = vmatprep.subr.bf16.mxu0 0
        %6933 = vmatpush1.bf16.msra.mxu0 %v6920
        %6934 = vmatprep.subr.bf16.mxu0 0
        %6935 = vmatpush1.bf16.msra.mxu0 %v6919
        %6936 = vmatprep.subr.bf16.mxu0 0
        %6937 = vmatpush1.bf16.msra.mxu0 %v6918
        %6938 = vmatprep.subr.bf16.mxu0 0
        %6939 = vmatpush1.bf16.msra.mxu0 %v6917
        %6940 = vmatprep.subr.bf16.mxu0 0
        %6941 = vmatpush1.bf16.msra.mxu0 %v6916
        %6942 = vmatprep.subr.bf16.mxu0 0
        %6943 = vmatpush1.bf16.msra.mxu0 %v6915
        %6944 = vmatprep.subr.bf16.mxu0 0
        %6945 = vmatpush1.bf16.msra.mxu0 %v6914
        %6946 = vmatprep.subr.bf16.mxu0 0
        %6947 = vmatpush2.bf16.msra.mxu0 0
        %6948 = vmatprep.subr.bf16.mxu0 0
        %6949 = vmatpush2.bf16.msra.mxu0 0
        %6950 = vmatprep.subr.bf16.mxu0 0
        %6951 = vmatpush2.bf16.msra.mxu0 0
        %6952 = vmatprep.subr.bf16.mxu0 0
        %6953 = vmatpush2.bf16.msra.mxu0 0
        %6954 = vmatprep.subr.bf16.mxu0 0
        %6955 = vmatpush2.bf16.msra.mxu0 0
        %6956 = vmatprep.subr.bf16.mxu0 0
        %6957 = vmatpush2.bf16.msra.mxu0 0
        %6958 = vmatprep.subr.bf16.mxu0 0
        %6959 = vmatpush2.bf16.msra.mxu0 0
        %6960 = vmatprep.subr.bf16.mxu0 0
        %6961 = vmatpush2.bf16.msra.mxu0 0
        %6962 = vmatprep.mubr.bf16.mxu0 0
        %6963 = vmatmul.mubr.bf16.gmra.mxu0 %v4752
        %v6964 = vpop.f32.mrf.mxu0
        %v6965 = vadd.f32 %v6880, %v6964
        %v6966 = vpop.f32.mrf.mxu0
        %v6967 = vpop.f32.mrf.mxu0
        %v6968 = vadd.f32 %v6880, %v6967
        %v6969 = vpop.f32.mrf.mxu0
        %6970 = vdwg.mxu0
        %s6971 = scalar_lea.vmem %s12, 1280
        %v6972 = vld [vmem:[%s6971] sm:$0xf]
        %v6973 = vld [vmem:[%s6971 + $0x4] sm:$0xf]
        %v6974 = vld [vmem:[%s6971 + $0x8] sm:$0xf]
        %v6975 = vld [vmem:[%s6971 + $0xc] sm:$0xf]
        %v6976 = vld [vmem:[%s6971 + $0x10] sm:$0xf]
        %v6977 = vld [vmem:[%s6971 + $0x14] sm:$0xf]
        %v6978 = vld [vmem:[%s6971 + $0x18] sm:$0xf]
        %v6979 = vld [vmem:[%s6971 + $0x1c] sm:$0xf]
        %v6980 = vld [vmem:[%s6971 + $0x20] sm:$0xf]
        %v6981 = vld [vmem:[%s6971 + $0x24] sm:$0xf]
        %v6982 = vld [vmem:[%s6971 + $0x28] sm:$0xf]
        %v6983 = vld [vmem:[%s6971 + $0x2c] sm:$0xf]
        %v6984 = vld [vmem:[%s6971 + $0x30] sm:$0xf]
        %v6985 = vld [vmem:[%s6971 + $0x34] sm:$0xf]
        %v6986 = vld [vmem:[%s6971 + $0x38] sm:$0xf]
        %v6987 = vld [vmem:[%s6971 + $0x3c] sm:$0xf]
        %s6988 = scalar_lea.vmem %s13, 20
        %v6989 = vld [vmem:[%s6988] sm:$0x1]
        %v6991 = vlaneseq
        %v6992 = vshrl.u32 %v6991, 7
        %v6993 = vsub.s32 0, %v6992
        %v6994 = vrot.slane %v6989, %v6993
        %v7012 = vunpack.c.l.b16 %v6972
        %v7013 = vunpack.c.l.b16 %v6973
        %v7014 = vunpack.c.l.b16 %v6974
        %v7015 = vunpack.c.l.b16 %v6975
        %v7016 = vunpack.c.l.b16 %v6976
        %v7017 = vunpack.c.l.b16 %v6977
        %v7018 = vunpack.c.l.b16 %v6978
        %v7019 = vunpack.c.l.b16 %v6979
        %v7020 = vunpack.c.l.b16 %v6980
        %v7021 = vunpack.c.l.b16 %v6981
        %v7022 = vunpack.c.l.b16 %v6982
        %v7023 = vunpack.c.l.b16 %v6983
        %v7024 = vunpack.c.l.b16 %v6984
        %v7025 = vunpack.c.l.b16 %v6985
        %v7026 = vunpack.c.l.b16 %v6986
        %v7027 = vunpack.c.l.b16 %v6987
        %v7028 = vpack.c.b16 %v7013, %v7012
        %v7029 = vpack.c.b16 %v7015, %v7014
        %v7030 = vpack.c.b16 %v7017, %v7016
        %v7031 = vpack.c.b16 %v7019, %v7018
        %v7032 = vpack.c.b16 %v7021, %v7020
        %v7033 = vpack.c.b16 %v7023, %v7022
        %v7034 = vpack.c.b16 %v7025, %v7024
        %v7035 = vpack.c.b16 %v7027, %v7026
        %7044 = vmatprep.subr.bf16.mxu0 0
        %7045 = vmatpush1.bf16.msra.mxu0 %v7035
        %7046 = vmatprep.subr.bf16.mxu0 0
        %7047 = vmatpush1.bf16.msra.mxu0 %v7034
        %7048 = vmatprep.subr.bf16.mxu0 0
        %7049 = vmatpush1.bf16.msra.mxu0 %v7033
        %7050 = vmatprep.subr.bf16.mxu0 0
        %7051 = vmatpush1.bf16.msra.mxu0 %v7032
        %7052 = vmatprep.subr.bf16.mxu0 0
        %7053 = vmatpush1.bf16.msra.mxu0 %v7031
        %7054 = vmatprep.subr.bf16.mxu0 0
        %7055 = vmatpush1.bf16.msra.mxu0 %v7030
        %7056 = vmatprep.subr.bf16.mxu0 0
        %7057 = vmatpush1.bf16.msra.mxu0 %v7029
        %7058 = vmatprep.subr.bf16.mxu0 0
        %7059 = vmatpush1.bf16.msra.mxu0 %v7028
        %7060 = vmatprep.subr.bf16.mxu0 0
        %7061 = vmatpush2.bf16.msra.mxu0 0
        %7062 = vmatprep.subr.bf16.mxu0 0
        %7063 = vmatpush2.bf16.msra.mxu0 0
        %7064 = vmatprep.subr.bf16.mxu0 0
        %7065 = vmatpush2.bf16.msra.mxu0 0
        %7066 = vmatprep.subr.bf16.mxu0 0
        %7067 = vmatpush2.bf16.msra.mxu0 0
        %7068 = vmatprep.subr.bf16.mxu0 0
        %7069 = vmatpush2.bf16.msra.mxu0 0
        %7070 = vmatprep.subr.bf16.mxu0 0
        %7071 = vmatpush2.bf16.msra.mxu0 0
        %7072 = vmatprep.subr.bf16.mxu0 0
        %7073 = vmatpush2.bf16.msra.mxu0 0
        %7074 = vmatprep.subr.bf16.mxu0 0
        %7075 = vmatpush2.bf16.msra.mxu0 0
        %7076 = vmatprep.mubr.bf16.mxu0 0
        %7077 = vmatmul.mubr.bf16.gmra.mxu0 %v4752
        %v7078 = vpop.f32.mrf.mxu0
        %v7079 = vadd.f32 %v6994, %v7078
        %v7080 = vpop.f32.mrf.mxu0
        %v7081 = vpop.f32.mrf.mxu0
        %v7082 = vadd.f32 %v6994, %v7081
        %v7083 = vpop.f32.mrf.mxu0
        %7084 = vdwg.mxu0
        %v7085 = vpack.c.bf16 %v6852, %v6852
        %v7086 = vpack.c.bf16 %v6968, %v6965
        %v7088 = vsel %vm1056, %v7085, 0
        %v7091 = vsel %vm1056, %v7086, 0
        %7093 = vmatprep.subr.bf16.mxu0 0
        %7094 = vmatpush1.bf16.xpose.msra.mxu0 0
        %7095 = vmatprep.subr.bf16.mxu0 0
        %7096 = vmatpush1.bf16.xpose.msra.mxu0 0
        %7097 = vmatprep.subr.bf16.mxu0 0
        %7098 = vmatpush1.bf16.xpose.msra.mxu0 0
        %7099 = vmatprep.subr.bf16.mxu0 0
        %7100 = vmatpush1.bf16.xpose.msra.mxu0 0
        %7101 = vmatprep.subr.bf16.mxu0 0
        %7102 = vmatpush1.bf16.xpose.msra.mxu0 0
        %7103 = vmatprep.subr.bf16.mxu0 0
        %7104 = vmatpush1.bf16.xpose.msra.mxu0 0
        %7105 = vmatprep.subr.bf16.mxu0 0
        %7106 = vmatpush1.bf16.xpose.msra.mxu0 0
        %7107 = vmatprep.subr.bf16.mxu0 0
        %7108 = vmatpush1.bf16.xpose.msra.mxu0 %v7091
        %7109 = vmatprep.subr.bf16.mxu0 0
        %7110 = vmatpush2.bf16.xpose.msra.mxu0 0
        %7111 = vmatprep.subr.bf16.mxu0 0
        %7112 = vmatpush2.bf16.xpose.msra.mxu0 0
        %7113 = vmatprep.subr.bf16.mxu0 0
        %7114 = vmatpush2.bf16.xpose.msra.mxu0 0
        %7115 = vmatprep.subr.bf16.mxu0 0
        %7116 = vmatpush2.bf16.xpose.msra.mxu0 0
        %7117 = vmatprep.subr.bf16.mxu0 0
        %7118 = vmatpush2.bf16.xpose.msra.mxu0 0
        %7119 = vmatprep.subr.bf16.mxu0 0
        %7120 = vmatpush2.bf16.xpose.msra.mxu0 0
        %7121 = vmatprep.subr.bf16.mxu0 0
        %7122 = vmatpush2.bf16.xpose.msra.mxu0 0
        %7123 = vmatprep.subr.bf16.mxu0 0
        %7124 = vmatpush2.bf16.xpose.msra.mxu0 0
        %7125 = vmatprep.mubr.bf16.mxu0 0
        %7126 = vmatmul.mubr.bf16.gmra.mxu0 %v7088
        %v7127 = vpop.f32.mrf.mxu0
        %v7128 = vadd.f32 0.0, %v7127
        %v7129 = vpop.f32.mrf.mxu0
        %v7130 = vpop.f32.mrf.mxu0
        %v7131 = vpop.f32.mrf.mxu0
        %7132 = vdwg.mxu0
        %v7133 = vsel %vm1056, %v7128, -inf
        %7134 = vmax.xlane.f32.xlu0 %v7133
        %v7135 = vpop.xlane.xlu0 %7134
        %v7136 = vsub.f32 %v7128, %v7135
        %v7137 = vmul.f32 %v7136, 1.442695
        %v7138 = vpow.pop %v7137
        %v7139 = vsel %vm1056, %v7138, 0.0
        %7140 = vadd.xlane.f32.xlu0 %v7139
        %v7141 = vpop.xlane.xlu0 %7140
        %v7142 = vrcp.pop %v7141
        %v7143 = vmul.f32 %v7138, %v7142
        %v7144 = vpack.c.bf16 %v7143, %v7143
        %v7145 = vpack.c.bf16 %v7082, %v7079
        %v7147 = vsel %vm1056, %v7144, 0
        %7149 = vmatprep.subr.bf16.mxu0 0
        %7150 = vmatpush1.bf16.msra.mxu0 0
        %7151 = vmatprep.subr.bf16.mxu0 0
        %7152 = vmatpush1.bf16.msra.mxu0 0
        %7153 = vmatprep.subr.bf16.mxu0 0
        %7154 = vmatpush1.bf16.msra.mxu0 0
        %7155 = vmatprep.subr.bf16.mxu0 0
        %7156 = vmatpush1.bf16.msra.mxu0 0
        %7157 = vmatprep.subr.bf16.mxu0 0
        %7158 = vmatpush1.bf16.msra.mxu0 0
        %7159 = vmatprep.subr.bf16.mxu0 0
        %7160 = vmatpush1.bf16.msra.mxu0 0
        %7161 = vmatprep.subr.bf16.mxu0 0
        %7162 = vmatpush1.bf16.msra.mxu0 0
        %7163 = vmatprep.subr.bf16.mxu0 0
        %7164 = vmatpush1.bf16.msra.mxu0 %v7145
        %7165 = vmatprep.subr.bf16.mxu0 0
        %7166 = vmatpush2.bf16.msra.mxu0 0
        %7167 = vmatprep.subr.bf16.mxu0 0
        %7168 = vmatpush2.bf16.msra.mxu0 0
        %7169 = vmatprep.subr.bf16.mxu0 0
        %7170 = vmatpush2.bf16.msra.mxu0 0
        %7171 = vmatprep.subr.bf16.mxu0 0
        %7172 = vmatpush2.bf16.msra.mxu0 0
        %7173 = vmatprep.subr.bf16.mxu0 0
        %7174 = vmatpush2.bf16.msra.mxu0 0
        %7175 = vmatprep.subr.bf16.mxu0 0
        %7176 = vmatpush2.bf16.msra.mxu0 0
        %7177 = vmatprep.subr.bf16.mxu0 0
        %7178 = vmatpush2.bf16.msra.mxu0 0
        %7179 = vmatprep.subr.bf16.mxu0 0
        %7180 = vmatpush2.bf16.msra.mxu0 0
        %7181 = vmatprep.mubr.bf16.mxu0 0
        %7182 = vmatmul.mubr.bf16.gmra.mxu0 %v7147
        %v7183 = vpop.f32.mrf.mxu0
        %v7184 = vadd.f32 0.0, %v7183
        %v7185 = vpop.f32.mrf.mxu0
        %v7186 = vpop.f32.mrf.mxu0
        %v7187 = vpop.f32.mrf.mxu0
        %7188 = vdwg.mxu0
        %v7189 = vpack.c.bf16 %v7184, %v7184
        %s7190 = scalar_lea.vmem %s14, 32
        %v7191 = vld [vmem:[%s7190] sm:$0xf]
        %v7192 = vld [vmem:[%s7190 + $0x4] sm:$0xf]
        %v7195 = vunpack.c.l.b16 %v7191
        %v7196 = vunpack.c.l.b16 %v7192
        %v7197 = vpack.c.b16 %v7196, %v7195
        %v7200 = vsel %vm1056, %v7189, 0
        %7202 = vmatprep.subr.bf16.mxu0 0
        %7203 = vmatpush1.bf16.msra.mxu0 0
        %7204 = vmatprep.subr.bf16.mxu0 0
        %7205 = vmatpush1.bf16.msra.mxu0 0
        %7206 = vmatprep.subr.bf16.mxu0 0
        %7207 = vmatpush1.bf16.msra.mxu0 0
        %7208 = vmatprep.subr.bf16.mxu0 0
        %7209 = vmatpush1.bf16.msra.mxu0 0
        %7210 = vmatprep.subr.bf16.mxu0 0
        %7211 = vmatpush1.bf16.msra.mxu0 0
        %7212 = vmatprep.subr.bf16.mxu0 0
        %7213 = vmatpush1.bf16.msra.mxu0 0
        %7214 = vmatprep.subr.bf16.mxu0 0
        %7215 = vmatpush1.bf16.msra.mxu0 0
        %7216 = vmatprep.subr.bf16.mxu0 0
        %7217 = vmatpush1.bf16.msra.mxu0 %v7197
        %7218 = vmatprep.subr.bf16.mxu0 0
        %7219 = vmatpush2.bf16.msra.mxu0 0
        %7220 = vmatprep.subr.bf16.mxu0 0
        %7221 = vmatpush2.bf16.msra.mxu0 0
        %7222 = vmatprep.subr.bf16.mxu0 0
        %7223 = vmatpush2.bf16.msra.mxu0 0
        %7224 = vmatprep.subr.bf16.mxu0 0
        %7225 = vmatpush2.bf16.msra.mxu0 0
        %7226 = vmatprep.subr.bf16.mxu0 0
        %7227 = vmatpush2.bf16.msra.mxu0 0
        %7228 = vmatprep.subr.bf16.mxu0 0
        %7229 = vmatpush2.bf16.msra.mxu0 0
        %7230 = vmatprep.subr.bf16.mxu0 0
        %7231 = vmatpush2.bf16.msra.mxu0 0
        %7232 = vmatprep.subr.bf16.mxu0 0
        %7233 = vmatpush2.bf16.msra.mxu0 0
        %7234 = vmatprep.mubr.bf16.mxu0 0
        %7235 = vmatmul.mubr.bf16.gmra.mxu0 %v7200
        %v7236 = vpop.f32.mrf.mxu0
        %v7237 = vadd.f32 0.0, %v7236
        %v7238 = vpop.f32.mrf.mxu0
        %v7239 = vpop.f32.mrf.mxu0
        %v7240 = vpop.f32.mrf.mxu0
        %7241 = vdwg.mxu0
        %v7242 = vadd.f32 %v6743, %v7237
        %s7243 = scalar_lea.vmem %s12, 320
        %v7244 = vld [vmem:[%s7243] sm:$0xf]
        %v7245 = vld [vmem:[%s7243 + $0x4] sm:$0xf]
        %v7246 = vld [vmem:[%s7243 + $0x8] sm:$0xf]
        %v7247 = vld [vmem:[%s7243 + $0xc] sm:$0xf]
        %v7248 = vld [vmem:[%s7243 + $0x10] sm:$0xf]
        %v7249 = vld [vmem:[%s7243 + $0x14] sm:$0xf]
        %v7250 = vld [vmem:[%s7243 + $0x18] sm:$0xf]
        %v7251 = vld [vmem:[%s7243 + $0x1c] sm:$0xf]
        %v7252 = vld [vmem:[%s7243 + $0x20] sm:$0xf]
        %v7253 = vld [vmem:[%s7243 + $0x24] sm:$0xf]
        %v7254 = vld [vmem:[%s7243 + $0x28] sm:$0xf]
        %v7255 = vld [vmem:[%s7243 + $0x2c] sm:$0xf]
        %v7256 = vld [vmem:[%s7243 + $0x30] sm:$0xf]
        %v7257 = vld [vmem:[%s7243 + $0x34] sm:$0xf]
        %v7258 = vld [vmem:[%s7243 + $0x38] sm:$0xf]
        %v7259 = vld [vmem:[%s7243 + $0x3c] sm:$0xf]
        %s7260 = scalar_lea.vmem %s13, 5
        %v7261 = vld [vmem:[%s7260] sm:$0x1]
        %v7263 = vlaneseq
        %v7264 = vshrl.u32 %v7263, 7
        %v7265 = vsub.s32 0, %v7264
        %v7266 = vrot.slane %v7261, %v7265
        %v7284 = vunpack.c.l.b16 %v7244
        %v7285 = vunpack.c.l.b16 %v7245
        %v7286 = vunpack.c.l.b16 %v7246
        %v7287 = vunpack.c.l.b16 %v7247
        %v7288 = vunpack.c.l.b16 %v7248
        %v7289 = vunpack.c.l.b16 %v7249
        %v7290 = vunpack.c.l.b16 %v7250
        %v7291 = vunpack.c.l.b16 %v7251
        %v7292 = vunpack.c.l.b16 %v7252
        %v7293 = vunpack.c.l.b16 %v7253
        %v7294 = vunpack.c.l.b16 %v7254
        %v7295 = vunpack.c.l.b16 %v7255
        %v7296 = vunpack.c.l.b16 %v7256
        %v7297 = vunpack.c.l.b16 %v7257
        %v7298 = vunpack.c.l.b16 %v7258
        %v7299 = vunpack.c.l.b16 %v7259
        %v7300 = vpack.c.b16 %v7285, %v7284
        %v7301 = vpack.c.b16 %v7287, %v7286
        %v7302 = vpack.c.b16 %v7289, %v7288
        %v7303 = vpack.c.b16 %v7291, %v7290
        %v7304 = vpack.c.b16 %v7293, %v7292
        %v7305 = vpack.c.b16 %v7295, %v7294
        %v7306 = vpack.c.b16 %v7297, %v7296
        %v7307 = vpack.c.b16 %v7299, %v7298
        %7316 = vmatprep.subr.bf16.mxu0 0
        %7317 = vmatpush1.bf16.msra.mxu0 %v7307
        %7318 = vmatprep.subr.bf16.mxu0 0
        %7319 = vmatpush1.bf16.msra.mxu0 %v7306
        %7320 = vmatprep.subr.bf16.mxu0 0
        %7321 = vmatpush1.bf16.msra.mxu0 %v7305
        %7322 = vmatprep.subr.bf16.mxu0 0
        %7323 = vmatpush1.bf16.msra.mxu0 %v7304
        %7324 = vmatprep.subr.bf16.mxu0 0
        %7325 = vmatpush1.bf16.msra.mxu0 %v7303
        %7326 = vmatprep.subr.bf16.mxu0 0
        %7327 = vmatpush1.bf16.msra.mxu0 %v7302
        %7328 = vmatprep.subr.bf16.mxu0 0
        %7329 = vmatpush1.bf16.msra.mxu0 %v7301
        %7330 = vmatprep.subr.bf16.mxu0 0
        %7331 = vmatpush1.bf16.msra.mxu0 %v7300
        %7332 = vmatprep.subr.bf16.mxu0 0
        %7333 = vmatpush2.bf16.msra.mxu0 0
        %7334 = vmatprep.subr.bf16.mxu0 0
        %7335 = vmatpush2.bf16.msra.mxu0 0
        %7336 = vmatprep.subr.bf16.mxu0 0
        %7337 = vmatpush2.bf16.msra.mxu0 0
        %7338 = vmatprep.subr.bf16.mxu0 0
        %7339 = vmatpush2.bf16.msra.mxu0 0
        %7340 = vmatprep.subr.bf16.mxu0 0
        %7341 = vmatpush2.bf16.msra.mxu0 0
        %7342 = vmatprep.subr.bf16.mxu0 0
        %7343 = vmatpush2.bf16.msra.mxu0 0
        %7344 = vmatprep.subr.bf16.mxu0 0
        %7345 = vmatpush2.bf16.msra.mxu0 0
        %7346 = vmatprep.subr.bf16.mxu0 0
        %7347 = vmatpush2.bf16.msra.mxu0 0
        %7348 = vmatprep.mubr.bf16.mxu0 0
        %7349 = vmatmul.mubr.bf16.gmra.mxu0 %v4751
        %v7350 = vpop.f32.mrf.mxu0
        %v7351 = vadd.f32 %v7266, %v7350
        %v7352 = vpop.f32.mrf.mxu0
        %v7353 = vpop.f32.mrf.mxu0
        %v7354 = vpop.f32.mrf.mxu0
        %7355 = vdwg.mxu0
        %s7356 = scalar_lea.vmem %s12, 832
        %v7357 = vld [vmem:[%s7356] sm:$0xf]
        %v7358 = vld [vmem:[%s7356 + $0x4] sm:$0xf]
        %v7359 = vld [vmem:[%s7356 + $0x8] sm:$0xf]
        %v7360 = vld [vmem:[%s7356 + $0xc] sm:$0xf]
        %v7361 = vld [vmem:[%s7356 + $0x10] sm:$0xf]
        %v7362 = vld [vmem:[%s7356 + $0x14] sm:$0xf]
        %v7363 = vld [vmem:[%s7356 + $0x18] sm:$0xf]
        %v7364 = vld [vmem:[%s7356 + $0x1c] sm:$0xf]
        %v7365 = vld [vmem:[%s7356 + $0x20] sm:$0xf]
        %v7366 = vld [vmem:[%s7356 + $0x24] sm:$0xf]
        %v7367 = vld [vmem:[%s7356 + $0x28] sm:$0xf]
        %v7368 = vld [vmem:[%s7356 + $0x2c] sm:$0xf]
        %v7369 = vld [vmem:[%s7356 + $0x30] sm:$0xf]
        %v7370 = vld [vmem:[%s7356 + $0x34] sm:$0xf]
        %v7371 = vld [vmem:[%s7356 + $0x38] sm:$0xf]
        %v7372 = vld [vmem:[%s7356 + $0x3c] sm:$0xf]
        %s7373 = scalar_lea.vmem %s13, 13
        %v7374 = vld [vmem:[%s7373] sm:$0x1]
        %v7376 = vlaneseq
        %v7377 = vshrl.u32 %v7376, 7
        %v7378 = vsub.s32 0, %v7377
        %v7379 = vrot.slane %v7374, %v7378
        %v7397 = vunpack.c.l.b16 %v7357
        %v7398 = vunpack.c.l.b16 %v7358
        %v7399 = vunpack.c.l.b16 %v7359
        %v7400 = vunpack.c.l.b16 %v7360
        %v7401 = vunpack.c.l.b16 %v7361
        %v7402 = vunpack.c.l.b16 %v7362
        %v7403 = vunpack.c.l.b16 %v7363
        %v7404 = vunpack.c.l.b16 %v7364
        %v7405 = vunpack.c.l.b16 %v7365
        %v7406 = vunpack.c.l.b16 %v7366
        %v7407 = vunpack.c.l.b16 %v7367
        %v7408 = vunpack.c.l.b16 %v7368
        %v7409 = vunpack.c.l.b16 %v7369
        %v7410 = vunpack.c.l.b16 %v7370
        %v7411 = vunpack.c.l.b16 %v7371
        %v7412 = vunpack.c.l.b16 %v7372
        %v7413 = vpack.c.b16 %v7398, %v7397
        %v7414 = vpack.c.b16 %v7400, %v7399
        %v7415 = vpack.c.b16 %v7402, %v7401
        %v7416 = vpack.c.b16 %v7404, %v7403
        %v7417 = vpack.c.b16 %v7406, %v7405
        %v7418 = vpack.c.b16 %v7408, %v7407
        %v7419 = vpack.c.b16 %v7410, %v7409
        %v7420 = vpack.c.b16 %v7412, %v7411
        %7429 = vmatprep.subr.bf16.mxu0 0
        %7430 = vmatpush1.bf16.msra.mxu0 %v7420
        %7431 = vmatprep.subr.bf16.mxu0 0
        %7432 = vmatpush1.bf16.msra.mxu0 %v7419
        %7433 = vmatprep.subr.bf16.mxu0 0
        %7434 = vmatpush1.bf16.msra.mxu0 %v7418
        %7435 = vmatprep.subr.bf16.mxu0 0
        %7436 = vmatpush1.bf16.msra.mxu0 %v7417
        %7437 = vmatprep.subr.bf16.mxu0 0
        %7438 = vmatpush1.bf16.msra.mxu0 %v7416
        %7439 = vmatprep.subr.bf16.mxu0 0
        %7440 = vmatpush1.bf16.msra.mxu0 %v7415
        %7441 = vmatprep.subr.bf16.mxu0 0
        %7442 = vmatpush1.bf16.msra.mxu0 %v7414
        %7443 = vmatprep.subr.bf16.mxu0 0
        %7444 = vmatpush1.bf16.msra.mxu0 %v7413
        %7445 = vmatprep.subr.bf16.mxu0 0
        %7446 = vmatpush2.bf16.msra.mxu0 0
        %7447 = vmatprep.subr.bf16.mxu0 0
        %7448 = vmatpush2.bf16.msra.mxu0 0
        %7449 = vmatprep.subr.bf16.mxu0 0
        %7450 = vmatpush2.bf16.msra.mxu0 0
        %7451 = vmatprep.subr.bf16.mxu0 0
        %7452 = vmatpush2.bf16.msra.mxu0 0
        %7453 = vmatprep.subr.bf16.mxu0 0
        %7454 = vmatpush2.bf16.msra.mxu0 0
        %7455 = vmatprep.subr.bf16.mxu0 0
        %7456 = vmatpush2.bf16.msra.mxu0 0
        %7457 = vmatprep.subr.bf16.mxu0 0
        %7458 = vmatpush2.bf16.msra.mxu0 0
        %7459 = vmatprep.subr.bf16.mxu0 0
        %7460 = vmatpush2.bf16.msra.mxu0 0
        %7461 = vmatprep.mubr.bf16.mxu0 0
        %7462 = vmatmul.mubr.bf16.gmra.mxu0 %v4752
        %v7463 = vpop.f32.mrf.mxu0
        %v7464 = vadd.f32 %v7379, %v7463
        %v7465 = vpop.f32.mrf.mxu0
        %v7466 = vpop.f32.mrf.mxu0
        %v7467 = vadd.f32 %v7379, %v7466
        %v7468 = vpop.f32.mrf.mxu0
        %7469 = vdwg.mxu0
        %s7470 = scalar_lea.vmem %s12, 1344
        %v7471 = vld [vmem:[%s7470] sm:$0xf]
        %v7472 = vld [vmem:[%s7470 + $0x4] sm:$0xf]
        %v7473 = vld [vmem:[%s7470 + $0x8] sm:$0xf]
        %v7474 = vld [vmem:[%s7470 + $0xc] sm:$0xf]
        %v7475 = vld [vmem:[%s7470 + $0x10] sm:$0xf]
        %v7476 = vld [vmem:[%s7470 + $0x14] sm:$0xf]
        %v7477 = vld [vmem:[%s7470 + $0x18] sm:$0xf]
        %v7478 = vld [vmem:[%s7470 + $0x1c] sm:$0xf]
        %v7479 = vld [vmem:[%s7470 + $0x20] sm:$0xf]
        %v7480 = vld [vmem:[%s7470 + $0x24] sm:$0xf]
        %v7481 = vld [vmem:[%s7470 + $0x28] sm:$0xf]
        %v7482 = vld [vmem:[%s7470 + $0x2c] sm:$0xf]
        %v7483 = vld [vmem:[%s7470 + $0x30] sm:$0xf]
        %v7484 = vld [vmem:[%s7470 + $0x34] sm:$0xf]
        %v7485 = vld [vmem:[%s7470 + $0x38] sm:$0xf]
        %v7486 = vld [vmem:[%s7470 + $0x3c] sm:$0xf]
        %s7487 = scalar_lea.vmem %s13, 21
        %v7488 = vld [vmem:[%s7487] sm:$0x1]
        %v7490 = vlaneseq
        %v7491 = vshrl.u32 %v7490, 7
        %v7492 = vsub.s32 0, %v7491
        %v7493 = vrot.slane %v7488, %v7492
        %v7511 = vunpack.c.l.b16 %v7471
        %v7512 = vunpack.c.l.b16 %v7472
        %v7513 = vunpack.c.l.b16 %v7473
        %v7514 = vunpack.c.l.b16 %v7474
        %v7515 = vunpack.c.l.b16 %v7475
        %v7516 = vunpack.c.l.b16 %v7476
        %v7517 = vunpack.c.l.b16 %v7477
        %v7518 = vunpack.c.l.b16 %v7478
        %v7519 = vunpack.c.l.b16 %v7479
        %v7520 = vunpack.c.l.b16 %v7480
        %v7521 = vunpack.c.l.b16 %v7481
        %v7522 = vunpack.c.l.b16 %v7482
        %v7523 = vunpack.c.l.b16 %v7483
        %v7524 = vunpack.c.l.b16 %v7484
        %v7525 = vunpack.c.l.b16 %v7485
        %v7526 = vunpack.c.l.b16 %v7486
        %v7527 = vpack.c.b16 %v7512, %v7511
        %v7528 = vpack.c.b16 %v7514, %v7513
        %v7529 = vpack.c.b16 %v7516, %v7515
        %v7530 = vpack.c.b16 %v7518, %v7517
        %v7531 = vpack.c.b16 %v7520, %v7519
        %v7532 = vpack.c.b16 %v7522, %v7521
        %v7533 = vpack.c.b16 %v7524, %v7523
        %v7534 = vpack.c.b16 %v7526, %v7525
        %7543 = vmatprep.subr.bf16.mxu0 0
        %7544 = vmatpush1.bf16.msra.mxu0 %v7534
        %7545 = vmatprep.subr.bf16.mxu0 0
        %7546 = vmatpush1.bf16.msra.mxu0 %v7533
        %7547 = vmatprep.subr.bf16.mxu0 0
        %7548 = vmatpush1.bf16.msra.mxu0 %v7532
        %7549 = vmatprep.subr.bf16.mxu0 0
        %7550 = vmatpush1.bf16.msra.mxu0 %v7531
        %7551 = vmatprep.subr.bf16.mxu0 0
        %7552 = vmatpush1.bf16.msra.mxu0 %v7530
        %7553 = vmatprep.subr.bf16.mxu0 0
        %7554 = vmatpush1.bf16.msra.mxu0 %v7529
        %7555 = vmatprep.subr.bf16.mxu0 0
        %7556 = vmatpush1.bf16.msra.mxu0 %v7528
        %7557 = vmatprep.subr.bf16.mxu0 0
        %7558 = vmatpush1.bf16.msra.mxu0 %v7527
        %7559 = vmatprep.subr.bf16.mxu0 0
        %7560 = vmatpush2.bf16.msra.mxu0 0
        %7561 = vmatprep.subr.bf16.mxu0 0
        %7562 = vmatpush2.bf16.msra.mxu0 0
        %7563 = vmatprep.subr.bf16.mxu0 0
        %7564 = vmatpush2.bf16.msra.mxu0 0
        %7565 = vmatprep.subr.bf16.mxu0 0
        %7566 = vmatpush2.bf16.msra.mxu0 0
        %7567 = vmatprep.subr.bf16.mxu0 0
        %7568 = vmatpush2.bf16.msra.mxu0 0
        %7569 = vmatprep.subr.bf16.mxu0 0
        %7570 = vmatpush2.bf16.msra.mxu0 0
        %7571 = vmatprep.subr.bf16.mxu0 0
        %7572 = vmatpush2.bf16.msra.mxu0 0
        %7573 = vmatprep.subr.bf16.mxu0 0
        %7574 = vmatpush2.bf16.msra.mxu0 0
        %7575 = vmatprep.mubr.bf16.mxu0 0
        %7576 = vmatmul.mubr.bf16.gmra.mxu0 %v4752
        %v7577 = vpop.f32.mrf.mxu0
        %v7578 = vadd.f32 %v7493, %v7577
        %v7579 = vpop.f32.mrf.mxu0
        %v7580 = vpop.f32.mrf.mxu0
        %v7581 = vadd.f32 %v7493, %v7580
        %v7582 = vpop.f32.mrf.mxu0
        %7583 = vdwg.mxu0
        %v7584 = vpack.c.bf16 %v7351, %v7351
        %v7585 = vpack.c.bf16 %v7467, %v7464
        %v7587 = vsel %vm1056, %v7584, 0
        %v7590 = vsel %vm1056, %v7585, 0
        %7592 = vmatprep.subr.bf16.mxu0 0
        %7593 = vmatpush1.bf16.xpose.msra.mxu0 0
        %7594 = vmatprep.subr.bf16.mxu0 0
        %7595 = vmatpush1.bf16.xpose.msra.mxu0 0
        %7596 = vmatprep.subr.bf16.mxu0 0
        %7597 = vmatpush1.bf16.xpose.msra.mxu0 0
        %7598 = vmatprep.subr.bf16.mxu0 0
        %7599 = vmatpush1.bf16.xpose.msra.mxu0 0
        %7600 = vmatprep.subr.bf16.mxu0 0
        %7601 = vmatpush1.bf16.xpose.msra.mxu0 0
        %7602 = vmatprep.subr.bf16.mxu0 0
        %7603 = vmatpush1.bf16.xpose.msra.mxu0 0
        %7604 = vmatprep.subr.bf16.mxu0 0
        %7605 = vmatpush1.bf16.xpose.msra.mxu0 0
        %7606 = vmatprep.subr.bf16.mxu0 0
        %7607 = vmatpush1.bf16.xpose.msra.mxu0 %v7590
        %7608 = vmatprep.subr.bf16.mxu0 0
        %7609 = vmatpush2.bf16.xpose.msra.mxu0 0
        %7610 = vmatprep.subr.bf16.mxu0 0
        %7611 = vmatpush2.bf16.xpose.msra.mxu0 0
        %7612 = vmatprep.subr.bf16.mxu0 0
        %7613 = vmatpush2.bf16.xpose.msra.mxu0 0
        %7614 = vmatprep.subr.bf16.mxu0 0
        %7615 = vmatpush2.bf16.xpose.msra.mxu0 0
        %7616 = vmatprep.subr.bf16.mxu0 0
        %7617 = vmatpush2.bf16.xpose.msra.mxu0 0
        %7618 = vmatprep.subr.bf16.mxu0 0
        %7619 = vmatpush2.bf16.xpose.msra.mxu0 0
        %7620 = vmatprep.subr.bf16.mxu0 0
        %7621 = vmatpush2.bf16.xpose.msra.mxu0 0
        %7622 = vmatprep.subr.bf16.mxu0 0
        %7623 = vmatpush2.bf16.xpose.msra.mxu0 0
        %7624 = vmatprep.mubr.bf16.mxu0 0
        %7625 = vmatmul.mubr.bf16.gmra.mxu0 %v7587
        %v7626 = vpop.f32.mrf.mxu0
        %v7627 = vadd.f32 0.0, %v7626
        %v7628 = vpop.f32.mrf.mxu0
        %v7629 = vpop.f32.mrf.mxu0
        %v7630 = vpop.f32.mrf.mxu0
        %7631 = vdwg.mxu0
        %v7632 = vsel %vm1056, %v7627, -inf
        %7633 = vmax.xlane.f32.xlu0 %v7632
        %v7634 = vpop.xlane.xlu0 %7633
        %v7635 = vsub.f32 %v7627, %v7634
        %v7636 = vmul.f32 %v7635, 1.442695
        %v7637 = vpow.pop %v7636
        %v7638 = vsel %vm1056, %v7637, 0.0
        %7639 = vadd.xlane.f32.xlu0 %v7638
        %v7640 = vpop.xlane.xlu0 %7639
        %v7641 = vrcp.pop %v7640
        %v7642 = vmul.f32 %v7637, %v7641
        %v7643 = vpack.c.bf16 %v7642, %v7642
        %v7644 = vpack.c.bf16 %v7581, %v7578
        %v7646 = vsel %vm1056, %v7643, 0
        %7648 = vmatprep.subr.bf16.mxu0 0
        %7649 = vmatpush1.bf16.msra.mxu0 0
        %7650 = vmatprep.subr.bf16.mxu0 0
        %7651 = vmatpush1.bf16.msra.mxu0 0
        %7652 = vmatprep.subr.bf16.mxu0 0
        %7653 = vmatpush1.bf16.msra.mxu0 0
        %7654 = vmatprep.subr.bf16.mxu0 0
        %7655 = vmatpush1.bf16.msra.mxu0 0
        %7656 = vmatprep.subr.bf16.mxu0 0
        %7657 = vmatpush1.bf16.msra.mxu0 0
        %7658 = vmatprep.subr.bf16.mxu0 0
        %7659 = vmatpush1.bf16.msra.mxu0 0
        %7660 = vmatprep.subr.bf16.mxu0 0
        %7661 = vmatpush1.bf16.msra.mxu0 0
        %7662 = vmatprep.subr.bf16.mxu0 0
        %7663 = vmatpush1.bf16.msra.mxu0 %v7644
        %7664 = vmatprep.subr.bf16.mxu0 0
        %7665 = vmatpush2.bf16.msra.mxu0 0
        %7666 = vmatprep.subr.bf16.mxu0 0
        %7667 = vmatpush2.bf16.msra.mxu0 0
        %7668 = vmatprep.subr.bf16.mxu0 0
        %7669 = vmatpush2.bf16.msra.mxu0 0
        %7670 = vmatprep.subr.bf16.mxu0 0
        %7671 = vmatpush2.bf16.msra.mxu0 0
        %7672 = vmatprep.subr.bf16.mxu0 0
        %7673 = vmatpush2.bf16.msra.mxu0 0
        %7674 = vmatprep.subr.bf16.mxu0 0
        %7675 = vmatpush2.bf16.msra.mxu0 0
        %7676 = vmatprep.subr.bf16.mxu0 0
        %7677 = vmatpush2.bf16.msra.mxu0 0
        %7678 = vmatprep.subr.bf16.mxu0 0
        %7679 = vmatpush2.bf16.msra.mxu0 0
        %7680 = vmatprep.mubr.bf16.mxu0 0
        %7681 = vmatmul.mubr.bf16.gmra.mxu0 %v7646
        %v7682 = vpop.f32.mrf.mxu0
        %v7683 = vadd.f32 0.0, %v7682
        %v7684 = vpop.f32.mrf.mxu0
        %v7685 = vpop.f32.mrf.mxu0
        %v7686 = vpop.f32.mrf.mxu0
        %7687 = vdwg.mxu0
        %v7688 = vpack.c.bf16 %v7683, %v7683
        %s7689 = scalar_lea.vmem %s14, 40
        %v7690 = vld [vmem:[%s7689] sm:$0xf]
        %v7691 = vld [vmem:[%s7689 + $0x4] sm:$0xf]
        %v7694 = vunpack.c.l.b16 %v7690
        %v7695 = vunpack.c.l.b16 %v7691
        %v7696 = vpack.c.b16 %v7695, %v7694
        %v7699 = vsel %vm1056, %v7688, 0
        %7701 = vmatprep.subr.bf16.mxu0 0
        %7702 = vmatpush1.bf16.msra.mxu0 0
        %7703 = vmatprep.subr.bf16.mxu0 0
        %7704 = vmatpush1.bf16.msra.mxu0 0
        %7705 = vmatprep.subr.bf16.mxu0 0
        %7706 = vmatpush1.bf16.msra.mxu0 0
        %7707 = vmatprep.subr.bf16.mxu0 0
        %7708 = vmatpush1.bf16.msra.mxu0 0
        %7709 = vmatprep.subr.bf16.mxu0 0
        %7710 = vmatpush1.bf16.msra.mxu0 0
        %7711 = vmatprep.subr.bf16.mxu0 0
        %7712 = vmatpush1.bf16.msra.mxu0 0
        %7713 = vmatprep.subr.bf16.mxu0 0
        %7714 = vmatpush1.bf16.msra.mxu0 0
        %7715 = vmatprep.subr.bf16.mxu0 0
        %7716 = vmatpush1.bf16.msra.mxu0 %v7696
        %7717 = vmatprep.subr.bf16.mxu0 0
        %7718 = vmatpush2.bf16.msra.mxu0 0
        %7719 = vmatprep.subr.bf16.mxu0 0
        %7720 = vmatpush2.bf16.msra.mxu0 0
        %7721 = vmatprep.subr.bf16.mxu0 0
        %7722 = vmatpush2.bf16.msra.mxu0 0
        %7723 = vmatprep.subr.bf16.mxu0 0
        %7724 = vmatpush2.bf16.msra.mxu0 0
        %7725 = vmatprep.subr.bf16.mxu0 0
        %7726 = vmatpush2.bf16.msra.mxu0 0
        %7727 = vmatprep.subr.bf16.mxu0 0
        %7728 = vmatpush2.bf16.msra.mxu0 0
        %7729 = vmatprep.subr.bf16.mxu0 0
        %7730 = vmatpush2.bf16.msra.mxu0 0
        %7731 = vmatprep.subr.bf16.mxu0 0
        %7732 = vmatpush2.bf16.msra.mxu0 0
        %7733 = vmatprep.mubr.bf16.mxu0 0
        %7734 = vmatmul.mubr.bf16.gmra.mxu0 %v7699
        %v7735 = vpop.f32.mrf.mxu0
        %v7736 = vadd.f32 0.0, %v7735
        %v7737 = vpop.f32.mrf.mxu0
        %v7738 = vpop.f32.mrf.mxu0
        %v7739 = vpop.f32.mrf.mxu0
        %7740 = vdwg.mxu0
        %v7741 = vadd.f32 %v7242, %v7736
        %s7742 = scalar_lea.vmem %s12, 384
        %v7743 = vld [vmem:[%s7742] sm:$0xf]
        %v7744 = vld [vmem:[%s7742 + $0x4] sm:$0xf]
        %v7745 = vld [vmem:[%s7742 + $0x8] sm:$0xf]
        %v7746 = vld [vmem:[%s7742 + $0xc] sm:$0xf]
        %v7747 = vld [vmem:[%s7742 + $0x10] sm:$0xf]
        %v7748 = vld [vmem:[%s7742 + $0x14] sm:$0xf]
        %v7749 = vld [vmem:[%s7742 + $0x18] sm:$0xf]
        %v7750 = vld [vmem:[%s7742 + $0x1c] sm:$0xf]
        %v7751 = vld [vmem:[%s7742 + $0x20] sm:$0xf]
        %v7752 = vld [vmem:[%s7742 + $0x24] sm:$0xf]
        %v7753 = vld [vmem:[%s7742 + $0x28] sm:$0xf]
        %v7754 = vld [vmem:[%s7742 + $0x2c] sm:$0xf]
        %v7755 = vld [vmem:[%s7742 + $0x30] sm:$0xf]
        %v7756 = vld [vmem:[%s7742 + $0x34] sm:$0xf]
        %v7757 = vld [vmem:[%s7742 + $0x38] sm:$0xf]
        %v7758 = vld [vmem:[%s7742 + $0x3c] sm:$0xf]
        %s7759 = scalar_lea.vmem %s13, 6
        %v7760 = vld [vmem:[%s7759] sm:$0x1]
        %v7762 = vlaneseq
        %v7763 = vshrl.u32 %v7762, 7
        %v7764 = vsub.s32 0, %v7763
        %v7765 = vrot.slane %v7760, %v7764
        %v7783 = vunpack.c.l.b16 %v7743
        %v7784 = vunpack.c.l.b16 %v7744
        %v7785 = vunpack.c.l.b16 %v7745
        %v7786 = vunpack.c.l.b16 %v7746
        %v7787 = vunpack.c.l.b16 %v7747
        %v7788 = vunpack.c.l.b16 %v7748
        %v7789 = vunpack.c.l.b16 %v7749
        %v7790 = vunpack.c.l.b16 %v7750
        %v7791 = vunpack.c.l.b16 %v7751
        %v7792 = vunpack.c.l.b16 %v7752
        %v7793 = vunpack.c.l.b16 %v7753
        %v7794 = vunpack.c.l.b16 %v7754
        %v7795 = vunpack.c.l.b16 %v7755
        %v7796 = vunpack.c.l.b16 %v7756
        %v7797 = vunpack.c.l.b16 %v7757
        %v7798 = vunpack.c.l.b16 %v7758
        %v7799 = vpack.c.b16 %v7784, %v7783
        %v7800 = vpack.c.b16 %v7786, %v7785
        %v7801 = vpack.c.b16 %v7788, %v7787
        %v7802 = vpack.c.b16 %v7790, %v7789
        %v7803 = vpack.c.b16 %v7792, %v7791
        %v7804 = vpack.c.b16 %v7794, %v7793
        %v7805 = vpack.c.b16 %v7796, %v7795
        %v7806 = vpack.c.b16 %v7798, %v7797
        %7815 = vmatprep.subr.bf16.mxu0 0
        %7816 = vmatpush1.bf16.msra.mxu0 %v7806
        %7817 = vmatprep.subr.bf16.mxu0 0
        %7818 = vmatpush1.bf16.msra.mxu0 %v7805
        %7819 = vmatprep.subr.bf16.mxu0 0
        %7820 = vmatpush1.bf16.msra.mxu0 %v7804
        %7821 = vmatprep.subr.bf16.mxu0 0
        %7822 = vmatpush1.bf16.msra.mxu0 %v7803
        %7823 = vmatprep.subr.bf16.mxu0 0
        %7824 = vmatpush1.bf16.msra.mxu0 %v7802
        %7825 = vmatprep.subr.bf16.mxu0 0
        %7826 = vmatpush1.bf16.msra.mxu0 %v7801
        %7827 = vmatprep.subr.bf16.mxu0 0
        %7828 = vmatpush1.bf16.msra.mxu0 %v7800
        %7829 = vmatprep.subr.bf16.mxu0 0
        %7830 = vmatpush1.bf16.msra.mxu0 %v7799
        %7831 = vmatprep.subr.bf16.mxu0 0
        %7832 = vmatpush2.bf16.msra.mxu0 0
        %7833 = vmatprep.subr.bf16.mxu0 0
        %7834 = vmatpush2.bf16.msra.mxu0 0
        %7835 = vmatprep.subr.bf16.mxu0 0
        %7836 = vmatpush2.bf16.msra.mxu0 0
        %7837 = vmatprep.subr.bf16.mxu0 0
        %7838 = vmatpush2.bf16.msra.mxu0 0
        %7839 = vmatprep.subr.bf16.mxu0 0
        %7840 = vmatpush2.bf16.msra.mxu0 0
        %7841 = vmatprep.subr.bf16.mxu0 0
        %7842 = vmatpush2.bf16.msra.mxu0 0
        %7843 = vmatprep.subr.bf16.mxu0 0
        %7844 = vmatpush2.bf16.msra.mxu0 0
        %7845 = vmatprep.subr.bf16.mxu0 0
        %7846 = vmatpush2.bf16.msra.mxu0 0
        %7847 = vmatprep.mubr.bf16.mxu0 0
        %7848 = vmatmul.mubr.bf16.gmra.mxu0 %v4751
        %v7849 = vpop.f32.mrf.mxu0
        %v7850 = vadd.f32 %v7765, %v7849
        %v7851 = vpop.f32.mrf.mxu0
        %v7852 = vpop.f32.mrf.mxu0
        %v7853 = vpop.f32.mrf.mxu0
        %7854 = vdwg.mxu0
        %s7855 = scalar_lea.vmem %s12, 896
        %v7856 = vld [vmem:[%s7855] sm:$0xf]
        %v7857 = vld [vmem:[%s7855 + $0x4] sm:$0xf]
        %v7858 = vld [vmem:[%s7855 + $0x8] sm:$0xf]
        %v7859 = vld [vmem:[%s7855 + $0xc] sm:$0xf]
        %v7860 = vld [vmem:[%s7855 + $0x10] sm:$0xf]
        %v7861 = vld [vmem:[%s7855 + $0x14] sm:$0xf]
        %v7862 = vld [vmem:[%s7855 + $0x18] sm:$0xf]
        %v7863 = vld [vmem:[%s7855 + $0x1c] sm:$0xf]
        %v7864 = vld [vmem:[%s7855 + $0x20] sm:$0xf]
        %v7865 = vld [vmem:[%s7855 + $0x24] sm:$0xf]
        %v7866 = vld [vmem:[%s7855 + $0x28] sm:$0xf]
        %v7867 = vld [vmem:[%s7855 + $0x2c] sm:$0xf]
        %v7868 = vld [vmem:[%s7855 + $0x30] sm:$0xf]
        %v7869 = vld [vmem:[%s7855 + $0x34] sm:$0xf]
        %v7870 = vld [vmem:[%s7855 + $0x38] sm:$0xf]
        %v7871 = vld [vmem:[%s7855 + $0x3c] sm:$0xf]
        %s7872 = scalar_lea.vmem %s13, 14
        %v7873 = vld [vmem:[%s7872] sm:$0x1]
        %v7875 = vlaneseq
        %v7876 = vshrl.u32 %v7875, 7
        %v7877 = vsub.s32 0, %v7876
        %v7878 = vrot.slane %v7873, %v7877
        %v7896 = vunpack.c.l.b16 %v7856
        %v7897 = vunpack.c.l.b16 %v7857
        %v7898 = vunpack.c.l.b16 %v7858
        %v7899 = vunpack.c.l.b16 %v7859
        %v7900 = vunpack.c.l.b16 %v7860
        %v7901 = vunpack.c.l.b16 %v7861
        %v7902 = vunpack.c.l.b16 %v7862
        %v7903 = vunpack.c.l.b16 %v7863
        %v7904 = vunpack.c.l.b16 %v7864
        %v7905 = vunpack.c.l.b16 %v7865
        %v7906 = vunpack.c.l.b16 %v7866
        %v7907 = vunpack.c.l.b16 %v7867
        %v7908 = vunpack.c.l.b16 %v7868
        %v7909 = vunpack.c.l.b16 %v7869
        %v7910 = vunpack.c.l.b16 %v7870
        %v7911 = vunpack.c.l.b16 %v7871
        %v7912 = vpack.c.b16 %v7897, %v7896
        %v7913 = vpack.c.b16 %v7899, %v7898
        %v7914 = vpack.c.b16 %v7901, %v7900
        %v7915 = vpack.c.b16 %v7903, %v7902
        %v7916 = vpack.c.b16 %v7905, %v7904
        %v7917 = vpack.c.b16 %v7907, %v7906
        %v7918 = vpack.c.b16 %v7909, %v7908
        %v7919 = vpack.c.b16 %v7911, %v7910
        %7928 = vmatprep.subr.bf16.mxu0 0
        %7929 = vmatpush1.bf16.msra.mxu0 %v7919
        %7930 = vmatprep.subr.bf16.mxu0 0
        %7931 = vmatpush1.bf16.msra.mxu0 %v7918
        %7932 = vmatprep.subr.bf16.mxu0 0
        %7933 = vmatpush1.bf16.msra.mxu0 %v7917
        %7934 = vmatprep.subr.bf16.mxu0 0
        %7935 = vmatpush1.bf16.msra.mxu0 %v7916
        %7936 = vmatprep.subr.bf16.mxu0 0
        %7937 = vmatpush1.bf16.msra.mxu0 %v7915
        %7938 = vmatprep.subr.bf16.mxu0 0
        %7939 = vmatpush1.bf16.msra.mxu0 %v7914
        %7940 = vmatprep.subr.bf16.mxu0 0
        %7941 = vmatpush1.bf16.msra.mxu0 %v7913
        %7942 = vmatprep.subr.bf16.mxu0 0
        %7943 = vmatpush1.bf16.msra.mxu0 %v7912
        %7944 = vmatprep.subr.bf16.mxu0 0
        %7945 = vmatpush2.bf16.msra.mxu0 0
        %7946 = vmatprep.subr.bf16.mxu0 0
        %7947 = vmatpush2.bf16.msra.mxu0 0
        %7948 = vmatprep.subr.bf16.mxu0 0
        %7949 = vmatpush2.bf16.msra.mxu0 0
        %7950 = vmatprep.subr.bf16.mxu0 0
        %7951 = vmatpush2.bf16.msra.mxu0 0
        %7952 = vmatprep.subr.bf16.mxu0 0
        %7953 = vmatpush2.bf16.msra.mxu0 0
        %7954 = vmatprep.subr.bf16.mxu0 0
        %7955 = vmatpush2.bf16.msra.mxu0 0
        %7956 = vmatprep.subr.bf16.mxu0 0
        %7957 = vmatpush2.bf16.msra.mxu0 0
        %7958 = vmatprep.subr.bf16.mxu0 0
        %7959 = vmatpush2.bf16.msra.mxu0 0
        %7960 = vmatprep.mubr.bf16.mxu0 0
        %7961 = vmatmul.mubr.bf16.gmra.mxu0 %v4752
        %v7962 = vpop.f32.mrf.mxu0
        %v7963 = vadd.f32 %v7878, %v7962
        %v7964 = vpop.f32.mrf.mxu0
        %v7965 = vpop.f32.mrf.mxu0
        %v7966 = vadd.f32 %v7878, %v7965
        %v7967 = vpop.f32.mrf.mxu0
        %7968 = vdwg.mxu0
        %s7969 = scalar_lea.vmem %s12, 1408
        %v7970 = vld [vmem:[%s7969] sm:$0xf]
        %v7971 = vld [vmem:[%s7969 + $0x4] sm:$0xf]
        %v7972 = vld [vmem:[%s7969 + $0x8] sm:$0xf]
        %v7973 = vld [vmem:[%s7969 + $0xc] sm:$0xf]
        %v7974 = vld [vmem:[%s7969 + $0x10] sm:$0xf]
        %v7975 = vld [vmem:[%s7969 + $0x14] sm:$0xf]
        %v7976 = vld [vmem:[%s7969 + $0x18] sm:$0xf]
        %v7977 = vld [vmem:[%s7969 + $0x1c] sm:$0xf]
        %v7978 = vld [vmem:[%s7969 + $0x20] sm:$0xf]
        %v7979 = vld [vmem:[%s7969 + $0x24] sm:$0xf]
        %v7980 = vld [vmem:[%s7969 + $0x28] sm:$0xf]
        %v7981 = vld [vmem:[%s7969 + $0x2c] sm:$0xf]
        %v7982 = vld [vmem:[%s7969 + $0x30] sm:$0xf]
        %v7983 = vld [vmem:[%s7969 + $0x34] sm:$0xf]
        %v7984 = vld [vmem:[%s7969 + $0x38] sm:$0xf]
        %v7985 = vld [vmem:[%s7969 + $0x3c] sm:$0xf]
        %s7986 = scalar_lea.vmem %s13, 22
        %v7987 = vld [vmem:[%s7986] sm:$0x1]
        %v7989 = vlaneseq
        %v7990 = vshrl.u32 %v7989, 7
        %v7991 = vsub.s32 0, %v7990
        %v7992 = vrot.slane %v7987, %v7991
        %v8010 = vunpack.c.l.b16 %v7970
        %v8011 = vunpack.c.l.b16 %v7971
        %v8012 = vunpack.c.l.b16 %v7972
        %v8013 = vunpack.c.l.b16 %v7973
        %v8014 = vunpack.c.l.b16 %v7974
        %v8015 = vunpack.c.l.b16 %v7975
        %v8016 = vunpack.c.l.b16 %v7976
        %v8017 = vunpack.c.l.b16 %v7977
        %v8018 = vunpack.c.l.b16 %v7978
        %v8019 = vunpack.c.l.b16 %v7979
        %v8020 = vunpack.c.l.b16 %v7980
        %v8021 = vunpack.c.l.b16 %v7981
        %v8022 = vunpack.c.l.b16 %v7982
        %v8023 = vunpack.c.l.b16 %v7983
        %v8024 = vunpack.c.l.b16 %v7984
        %v8025 = vunpack.c.l.b16 %v7985
        %v8026 = vpack.c.b16 %v8011, %v8010
        %v8027 = vpack.c.b16 %v8013, %v8012
        %v8028 = vpack.c.b16 %v8015, %v8014
        %v8029 = vpack.c.b16 %v8017, %v8016
        %v8030 = vpack.c.b16 %v8019, %v8018
        %v8031 = vpack.c.b16 %v8021, %v8020
        %v8032 = vpack.c.b16 %v8023, %v8022
        %v8033 = vpack.c.b16 %v8025, %v8024
        %8042 = vmatprep.subr.bf16.mxu0 0
        %8043 = vmatpush1.bf16.msra.mxu0 %v8033
        %8044 = vmatprep.subr.bf16.mxu0 0
        %8045 = vmatpush1.bf16.msra.mxu0 %v8032
        %8046 = vmatprep.subr.bf16.mxu0 0
        %8047 = vmatpush1.bf16.msra.mxu0 %v8031
        %8048 = vmatprep.subr.bf16.mxu0 0
        %8049 = vmatpush1.bf16.msra.mxu0 %v8030
        %8050 = vmatprep.subr.bf16.mxu0 0
        %8051 = vmatpush1.bf16.msra.mxu0 %v8029
        %8052 = vmatprep.subr.bf16.mxu0 0
        %8053 = vmatpush1.bf16.msra.mxu0 %v8028
        %8054 = vmatprep.subr.bf16.mxu0 0
        %8055 = vmatpush1.bf16.msra.mxu0 %v8027
        %8056 = vmatprep.subr.bf16.mxu0 0
        %8057 = vmatpush1.bf16.msra.mxu0 %v8026
        %8058 = vmatprep.subr.bf16.mxu0 0
        %8059 = vmatpush2.bf16.msra.mxu0 0
        %8060 = vmatprep.subr.bf16.mxu0 0
        %8061 = vmatpush2.bf16.msra.mxu0 0
        %8062 = vmatprep.subr.bf16.mxu0 0
        %8063 = vmatpush2.bf16.msra.mxu0 0
        %8064 = vmatprep.subr.bf16.mxu0 0
        %8065 = vmatpush2.bf16.msra.mxu0 0
        %8066 = vmatprep.subr.bf16.mxu0 0
        %8067 = vmatpush2.bf16.msra.mxu0 0
        %8068 = vmatprep.subr.bf16.mxu0 0
        %8069 = vmatpush2.bf16.msra.mxu0 0
        %8070 = vmatprep.subr.bf16.mxu0 0
        %8071 = vmatpush2.bf16.msra.mxu0 0
        %8072 = vmatprep.subr.bf16.mxu0 0
        %8073 = vmatpush2.bf16.msra.mxu0 0
        %8074 = vmatprep.mubr.bf16.mxu0 0
        %8075 = vmatmul.mubr.bf16.gmra.mxu0 %v4752
        %v8076 = vpop.f32.mrf.mxu0
        %v8077 = vadd.f32 %v7992, %v8076
        %v8078 = vpop.f32.mrf.mxu0
        %v8079 = vpop.f32.mrf.mxu0
        %v8080 = vadd.f32 %v7992, %v8079
        %v8081 = vpop.f32.mrf.mxu0
        %8082 = vdwg.mxu0
        %v8083 = vpack.c.bf16 %v7850, %v7850
        %v8084 = vpack.c.bf16 %v7966, %v7963
        %v8086 = vsel %vm1056, %v8083, 0
        %v8089 = vsel %vm1056, %v8084, 0
        %8091 = vmatprep.subr.bf16.mxu0 0
        %8092 = vmatpush1.bf16.xpose.msra.mxu0 0
        %8093 = vmatprep.subr.bf16.mxu0 0
        %8094 = vmatpush1.bf16.xpose.msra.mxu0 0
        %8095 = vmatprep.subr.bf16.mxu0 0
        %8096 = vmatpush1.bf16.xpose.msra.mxu0 0
        %8097 = vmatprep.subr.bf16.mxu0 0
        %8098 = vmatpush1.bf16.xpose.msra.mxu0 0
        %8099 = vmatprep.subr.bf16.mxu0 0
        %8100 = vmatpush1.bf16.xpose.msra.mxu0 0
        %8101 = vmatprep.subr.bf16.mxu0 0
        %8102 = vmatpush1.bf16.xpose.msra.mxu0 0
        %8103 = vmatprep.subr.bf16.mxu0 0
        %8104 = vmatpush1.bf16.xpose.msra.mxu0 0
        %8105 = vmatprep.subr.bf16.mxu0 0
        %8106 = vmatpush1.bf16.xpose.msra.mxu0 %v8089
        %8107 = vmatprep.subr.bf16.mxu0 0
        %8108 = vmatpush2.bf16.xpose.msra.mxu0 0
        %8109 = vmatprep.subr.bf16.mxu0 0
        %8110 = vmatpush2.bf16.xpose.msra.mxu0 0
        %8111 = vmatprep.subr.bf16.mxu0 0
        %8112 = vmatpush2.bf16.xpose.msra.mxu0 0
        %8113 = vmatprep.subr.bf16.mxu0 0
        %8114 = vmatpush2.bf16.xpose.msra.mxu0 0
        %8115 = vmatprep.subr.bf16.mxu0 0
        %8116 = vmatpush2.bf16.xpose.msra.mxu0 0
        %8117 = vmatprep.subr.bf16.mxu0 0
        %8118 = vmatpush2.bf16.xpose.msra.mxu0 0
        %8119 = vmatprep.subr.bf16.mxu0 0
        %8120 = vmatpush2.bf16.xpose.msra.mxu0 0
        %8121 = vmatprep.subr.bf16.mxu0 0
        %8122 = vmatpush2.bf16.xpose.msra.mxu0 0
        %8123 = vmatprep.mubr.bf16.mxu0 0
        %8124 = vmatmul.mubr.bf16.gmra.mxu0 %v8086
        %v8125 = vpop.f32.mrf.mxu0
        %v8126 = vadd.f32 0.0, %v8125
        %v8127 = vpop.f32.mrf.mxu0
        %v8128 = vpop.f32.mrf.mxu0
        %v8129 = vpop.f32.mrf.mxu0
        %8130 = vdwg.mxu0
        %v8131 = vsel %vm1056, %v8126, -inf
        %8132 = vmax.xlane.f32.xlu0 %v8131
        %v8133 = vpop.xlane.xlu0 %8132
        %v8134 = vsub.f32 %v8126, %v8133
        %v8135 = vmul.f32 %v8134, 1.442695
        %v8136 = vpow.pop %v8135
        %v8137 = vsel %vm1056, %v8136, 0.0
        %8138 = vadd.xlane.f32.xlu0 %v8137
        %v8139 = vpop.xlane.xlu0 %8138
        %v8140 = vrcp.pop %v8139
        %v8141 = vmul.f32 %v8136, %v8140
        %v8142 = vpack.c.bf16 %v8141, %v8141
        %v8143 = vpack.c.bf16 %v8080, %v8077
        %v8145 = vsel %vm1056, %v8142, 0
        %8147 = vmatprep.subr.bf16.mxu0 0
        %8148 = vmatpush1.bf16.msra.mxu0 0
        %8149 = vmatprep.subr.bf16.mxu0 0
        %8150 = vmatpush1.bf16.msra.mxu0 0
        %8151 = vmatprep.subr.bf16.mxu0 0
        %8152 = vmatpush1.bf16.msra.mxu0 0
        %8153 = vmatprep.subr.bf16.mxu0 0
        %8154 = vmatpush1.bf16.msra.mxu0 0
        %8155 = vmatprep.subr.bf16.mxu0 0
        %8156 = vmatpush1.bf16.msra.mxu0 0
        %8157 = vmatprep.subr.bf16.mxu0 0
        %8158 = vmatpush1.bf16.msra.mxu0 0
        %8159 = vmatprep.subr.bf16.mxu0 0
        %8160 = vmatpush1.bf16.msra.mxu0 0
        %8161 = vmatprep.subr.bf16.mxu0 0
        %8162 = vmatpush1.bf16.msra.mxu0 %v8143
        %8163 = vmatprep.subr.bf16.mxu0 0
        %8164 = vmatpush2.bf16.msra.mxu0 0
        %8165 = vmatprep.subr.bf16.mxu0 0
        %8166 = vmatpush2.bf16.msra.mxu0 0
        %8167 = vmatprep.subr.bf16.mxu0 0
        %8168 = vmatpush2.bf16.msra.mxu0 0
        %8169 = vmatprep.subr.bf16.mxu0 0
        %8170 = vmatpush2.bf16.msra.mxu0 0
        %8171 = vmatprep.subr.bf16.mxu0 0
        %8172 = vmatpush2.bf16.msra.mxu0 0
        %8173 = vmatprep.subr.bf16.mxu0 0
        %8174 = vmatpush2.bf16.msra.mxu0 0
        %8175 = vmatprep.subr.bf16.mxu0 0
        %8176 = vmatpush2.bf16.msra.mxu0 0
        %8177 = vmatprep.subr.bf16.mxu0 0
        %8178 = vmatpush2.bf16.msra.mxu0 0
        %8179 = vmatprep.mubr.bf16.mxu0 0
        %8180 = vmatmul.mubr.bf16.gmra.mxu0 %v8145
        %v8181 = vpop.f32.mrf.mxu0
        %v8182 = vadd.f32 0.0, %v8181
        %v8183 = vpop.f32.mrf.mxu0
        %v8184 = vpop.f32.mrf.mxu0
        %v8185 = vpop.f32.mrf.mxu0
        %8186 = vdwg.mxu0
        %v8187 = vpack.c.bf16 %v8182, %v8182
        %s8188 = scalar_lea.vmem %s14, 48
        %v8189 = vld [vmem:[%s8188] sm:$0xf]
        %v8190 = vld [vmem:[%s8188 + $0x4] sm:$0xf]
        %v8193 = vunpack.c.l.b16 %v8189
        %v8194 = vunpack.c.l.b16 %v8190
        %v8195 = vpack.c.b16 %v8194, %v8193
        %v8198 = vsel %vm1056, %v8187, 0
        %8200 = vmatprep.subr.bf16.mxu0 0
        %8201 = vmatpush1.bf16.msra.mxu0 0
        %8202 = vmatprep.subr.bf16.mxu0 0
        %8203 = vmatpush1.bf16.msra.mxu0 0
        %8204 = vmatprep.subr.bf16.mxu0 0
        %8205 = vmatpush1.bf16.msra.mxu0 0
        %8206 = vmatprep.subr.bf16.mxu0 0
        %8207 = vmatpush1.bf16.msra.mxu0 0
        %8208 = vmatprep.subr.bf16.mxu0 0
        %8209 = vmatpush1.bf16.msra.mxu0 0
        %8210 = vmatprep.subr.bf16.mxu0 0
        %8211 = vmatpush1.bf16.msra.mxu0 0
        %8212 = vmatprep.subr.bf16.mxu0 0
        %8213 = vmatpush1.bf16.msra.mxu0 0
        %8214 = vmatprep.subr.bf16.mxu0 0
        %8215 = vmatpush1.bf16.msra.mxu0 %v8195
        %8216 = vmatprep.subr.bf16.mxu0 0
        %8217 = vmatpush2.bf16.msra.mxu0 0
        %8218 = vmatprep.subr.bf16.mxu0 0
        %8219 = vmatpush2.bf16.msra.mxu0 0
        %8220 = vmatprep.subr.bf16.mxu0 0
        %8221 = vmatpush2.bf16.msra.mxu0 0
        %8222 = vmatprep.subr.bf16.mxu0 0
        %8223 = vmatpush2.bf16.msra.mxu0 0
        %8224 = vmatprep.subr.bf16.mxu0 0
        %8225 = vmatpush2.bf16.msra.mxu0 0
        %8226 = vmatprep.subr.bf16.mxu0 0
        %8227 = vmatpush2.bf16.msra.mxu0 0
        %8228 = vmatprep.subr.bf16.mxu0 0
        %8229 = vmatpush2.bf16.msra.mxu0 0
        %8230 = vmatprep.subr.bf16.mxu0 0
        %8231 = vmatpush2.bf16.msra.mxu0 0
        %8232 = vmatprep.mubr.bf16.mxu0 0
        %8233 = vmatmul.mubr.bf16.gmra.mxu0 %v8198
        %v8234 = vpop.f32.mrf.mxu0
        %v8235 = vadd.f32 0.0, %v8234
        %v8236 = vpop.f32.mrf.mxu0
        %v8237 = vpop.f32.mrf.mxu0
        %v8238 = vpop.f32.mrf.mxu0
        %8239 = vdwg.mxu0
        %v8240 = vadd.f32 %v7741, %v8235
        %s8241 = scalar_lea.vmem %s12, 448
        %v8242 = vld [vmem:[%s8241] sm:$0xf]
        %v8243 = vld [vmem:[%s8241 + $0x4] sm:$0xf]
        %v8244 = vld [vmem:[%s8241 + $0x8] sm:$0xf]
        %v8245 = vld [vmem:[%s8241 + $0xc] sm:$0xf]
        %v8246 = vld [vmem:[%s8241 + $0x10] sm:$0xf]
        %v8247 = vld [vmem:[%s8241 + $0x14] sm:$0xf]
        %v8248 = vld [vmem:[%s8241 + $0x18] sm:$0xf]
        %v8249 = vld [vmem:[%s8241 + $0x1c] sm:$0xf]
        %v8250 = vld [vmem:[%s8241 + $0x20] sm:$0xf]
        %v8251 = vld [vmem:[%s8241 + $0x24] sm:$0xf]
        %v8252 = vld [vmem:[%s8241 + $0x28] sm:$0xf]
        %v8253 = vld [vmem:[%s8241 + $0x2c] sm:$0xf]
        %v8254 = vld [vmem:[%s8241 + $0x30] sm:$0xf]
        %v8255 = vld [vmem:[%s8241 + $0x34] sm:$0xf]
        %v8256 = vld [vmem:[%s8241 + $0x38] sm:$0xf]
        %v8257 = vld [vmem:[%s8241 + $0x3c] sm:$0xf]
        %s8258 = scalar_lea.vmem %s13, 7
        %v8259 = vld [vmem:[%s8258] sm:$0x1]
        %v8261 = vlaneseq
        %v8262 = vshrl.u32 %v8261, 7
        %v8263 = vsub.s32 0, %v8262
        %v8264 = vrot.slane %v8259, %v8263
        %v8282 = vunpack.c.l.b16 %v8242
        %v8283 = vunpack.c.l.b16 %v8243
        %v8284 = vunpack.c.l.b16 %v8244
        %v8285 = vunpack.c.l.b16 %v8245
        %v8286 = vunpack.c.l.b16 %v8246
        %v8287 = vunpack.c.l.b16 %v8247
        %v8288 = vunpack.c.l.b16 %v8248
        %v8289 = vunpack.c.l.b16 %v8249
        %v8290 = vunpack.c.l.b16 %v8250
        %v8291 = vunpack.c.l.b16 %v8251
        %v8292 = vunpack.c.l.b16 %v8252
        %v8293 = vunpack.c.l.b16 %v8253
        %v8294 = vunpack.c.l.b16 %v8254
        %v8295 = vunpack.c.l.b16 %v8255
        %v8296 = vunpack.c.l.b16 %v8256
        %v8297 = vunpack.c.l.b16 %v8257
        %v8298 = vpack.c.b16 %v8283, %v8282
        %v8299 = vpack.c.b16 %v8285, %v8284
        %v8300 = vpack.c.b16 %v8287, %v8286
        %v8301 = vpack.c.b16 %v8289, %v8288
        %v8302 = vpack.c.b16 %v8291, %v8290
        %v8303 = vpack.c.b16 %v8293, %v8292
        %v8304 = vpack.c.b16 %v8295, %v8294
        %v8305 = vpack.c.b16 %v8297, %v8296
        %8314 = vmatprep.subr.bf16.mxu0 0
        %8315 = vmatpush1.bf16.msra.mxu0 %v8305
        %8316 = vmatprep.subr.bf16.mxu0 0
        %8317 = vmatpush1.bf16.msra.mxu0 %v8304
        %8318 = vmatprep.subr.bf16.mxu0 0
        %8319 = vmatpush1.bf16.msra.mxu0 %v8303
        %8320 = vmatprep.subr.bf16.mxu0 0
        %8321 = vmatpush1.bf16.msra.mxu0 %v8302
        %8322 = vmatprep.subr.bf16.mxu0 0
        %8323 = vmatpush1.bf16.msra.mxu0 %v8301
        %8324 = vmatprep.subr.bf16.mxu0 0
        %8325 = vmatpush1.bf16.msra.mxu0 %v8300
        %8326 = vmatprep.subr.bf16.mxu0 0
        %8327 = vmatpush1.bf16.msra.mxu0 %v8299
        %8328 = vmatprep.subr.bf16.mxu0 0
        %8329 = vmatpush1.bf16.msra.mxu0 %v8298
        %8330 = vmatprep.subr.bf16.mxu0 0
        %8331 = vmatpush2.bf16.msra.mxu0 0
        %8332 = vmatprep.subr.bf16.mxu0 0
        %8333 = vmatpush2.bf16.msra.mxu0 0
        %8334 = vmatprep.subr.bf16.mxu0 0
        %8335 = vmatpush2.bf16.msra.mxu0 0
        %8336 = vmatprep.subr.bf16.mxu0 0
        %8337 = vmatpush2.bf16.msra.mxu0 0
        %8338 = vmatprep.subr.bf16.mxu0 0
        %8339 = vmatpush2.bf16.msra.mxu0 0
        %8340 = vmatprep.subr.bf16.mxu0 0
        %8341 = vmatpush2.bf16.msra.mxu0 0
        %8342 = vmatprep.subr.bf16.mxu0 0
        %8343 = vmatpush2.bf16.msra.mxu0 0
        %8344 = vmatprep.subr.bf16.mxu0 0
        %8345 = vmatpush2.bf16.msra.mxu0 0
        %8346 = vmatprep.mubr.bf16.mxu0 0
        %8347 = vmatmul.mubr.bf16.gmra.mxu0 %v4751
        %v8348 = vpop.f32.mrf.mxu0
        %v8349 = vadd.f32 %v8264, %v8348
        %v8350 = vpop.f32.mrf.mxu0
        %v8351 = vpop.f32.mrf.mxu0
        %v8352 = vpop.f32.mrf.mxu0
        %8353 = vdwg.mxu0
        %s8354 = scalar_lea.vmem %s12, 960
        %v8355 = vld [vmem:[%s8354] sm:$0xf]
        %v8356 = vld [vmem:[%s8354 + $0x4] sm:$0xf]
        %v8357 = vld [vmem:[%s8354 + $0x8] sm:$0xf]
        %v8358 = vld [vmem:[%s8354 + $0xc] sm:$0xf]
        %v8359 = vld [vmem:[%s8354 + $0x10] sm:$0xf]
        %v8360 = vld [vmem:[%s8354 + $0x14] sm:$0xf]
        %v8361 = vld [vmem:[%s8354 + $0x18] sm:$0xf]
        %v8362 = vld [vmem:[%s8354 + $0x1c] sm:$0xf]
        %v8363 = vld [vmem:[%s8354 + $0x20] sm:$0xf]
        %v8364 = vld [vmem:[%s8354 + $0x24] sm:$0xf]
        %v8365 = vld [vmem:[%s8354 + $0x28] sm:$0xf]
        %v8366 = vld [vmem:[%s8354 + $0x2c] sm:$0xf]
        %v8367 = vld [vmem:[%s8354 + $0x30] sm:$0xf]
        %v8368 = vld [vmem:[%s8354 + $0x34] sm:$0xf]
        %v8369 = vld [vmem:[%s8354 + $0x38] sm:$0xf]
        %v8370 = vld [vmem:[%s8354 + $0x3c] sm:$0xf]
        %s8371 = scalar_lea.vmem %s13, 15
        %v8372 = vld [vmem:[%s8371] sm:$0x1]
        %v8374 = vlaneseq
        %v8375 = vshrl.u32 %v8374, 7
        %v8376 = vsub.s32 0, %v8375
        %v8377 = vrot.slane %v8372, %v8376
        %v8395 = vunpack.c.l.b16 %v8355
        %v8396 = vunpack.c.l.b16 %v8356
        %v8397 = vunpack.c.l.b16 %v8357
        %v8398 = vunpack.c.l.b16 %v8358
        %v8399 = vunpack.c.l.b16 %v8359
        %v8400 = vunpack.c.l.b16 %v8360
        %v8401 = vunpack.c.l.b16 %v8361
        %v8402 = vunpack.c.l.b16 %v8362
        %v8403 = vunpack.c.l.b16 %v8363
        %v8404 = vunpack.c.l.b16 %v8364
        %v8405 = vunpack.c.l.b16 %v8365
        %v8406 = vunpack.c.l.b16 %v8366
        %v8407 = vunpack.c.l.b16 %v8367
        %v8408 = vunpack.c.l.b16 %v8368
        %v8409 = vunpack.c.l.b16 %v8369
        %v8410 = vunpack.c.l.b16 %v8370
        %v8411 = vpack.c.b16 %v8396, %v8395
        %v8412 = vpack.c.b16 %v8398, %v8397
        %v8413 = vpack.c.b16 %v8400, %v8399
        %v8414 = vpack.c.b16 %v8402, %v8401
        %v8415 = vpack.c.b16 %v8404, %v8403
        %v8416 = vpack.c.b16 %v8406, %v8405
        %v8417 = vpack.c.b16 %v8408, %v8407
        %v8418 = vpack.c.b16 %v8410, %v8409
        %8427 = vmatprep.subr.bf16.mxu0 0
        %8428 = vmatpush1.bf16.msra.mxu0 %v8418
        %8429 = vmatprep.subr.bf16.mxu0 0
        %8430 = vmatpush1.bf16.msra.mxu0 %v8417
        %8431 = vmatprep.subr.bf16.mxu0 0
        %8432 = vmatpush1.bf16.msra.mxu0 %v8416
        %8433 = vmatprep.subr.bf16.mxu0 0
        %8434 = vmatpush1.bf16.msra.mxu0 %v8415
        %8435 = vmatprep.subr.bf16.mxu0 0
        %8436 = vmatpush1.bf16.msra.mxu0 %v8414
        %8437 = vmatprep.subr.bf16.mxu0 0
        %8438 = vmatpush1.bf16.msra.mxu0 %v8413
        %8439 = vmatprep.subr.bf16.mxu0 0
        %8440 = vmatpush1.bf16.msra.mxu0 %v8412
        %8441 = vmatprep.subr.bf16.mxu0 0
        %8442 = vmatpush1.bf16.msra.mxu0 %v8411
        %8443 = vmatprep.subr.bf16.mxu0 0
        %8444 = vmatpush2.bf16.msra.mxu0 0
        %8445 = vmatprep.subr.bf16.mxu0 0
        %8446 = vmatpush2.bf16.msra.mxu0 0
        %8447 = vmatprep.subr.bf16.mxu0 0
        %8448 = vmatpush2.bf16.msra.mxu0 0
        %8449 = vmatprep.subr.bf16.mxu0 0
        %8450 = vmatpush2.bf16.msra.mxu0 0
        %8451 = vmatprep.subr.bf16.mxu0 0
        %8452 = vmatpush2.bf16.msra.mxu0 0
        %8453 = vmatprep.subr.bf16.mxu0 0
        %8454 = vmatpush2.bf16.msra.mxu0 0
        %8455 = vmatprep.subr.bf16.mxu0 0
        %8456 = vmatpush2.bf16.msra.mxu0 0
        %8457 = vmatprep.subr.bf16.mxu0 0
        %8458 = vmatpush2.bf16.msra.mxu0 0
        %8459 = vmatprep.mubr.bf16.mxu0 0
        %8460 = vmatmul.mubr.bf16.gmra.mxu0 %v4752
        %v8461 = vpop.f32.mrf.mxu0
        %v8462 = vadd.f32 %v8377, %v8461
        %v8463 = vpop.f32.mrf.mxu0
        %v8464 = vpop.f32.mrf.mxu0
        %v8465 = vadd.f32 %v8377, %v8464
        %v8466 = vpop.f32.mrf.mxu0
        %8467 = vdwg.mxu0
        %s8468 = scalar_lea.vmem %s12, 1472
        %v8469 = vld [vmem:[%s8468] sm:$0xf]
        %v8470 = vld [vmem:[%s8468 + $0x4] sm:$0xf]
        %v8471 = vld [vmem:[%s8468 + $0x8] sm:$0xf]
        %v8472 = vld [vmem:[%s8468 + $0xc] sm:$0xf]
        %v8473 = vld [vmem:[%s8468 + $0x10] sm:$0xf]
        %v8474 = vld [vmem:[%s8468 + $0x14] sm:$0xf]
        %v8475 = vld [vmem:[%s8468 + $0x18] sm:$0xf]
        %v8476 = vld [vmem:[%s8468 + $0x1c] sm:$0xf]
        %v8477 = vld [vmem:[%s8468 + $0x20] sm:$0xf]
        %v8478 = vld [vmem:[%s8468 + $0x24] sm:$0xf]
        %v8479 = vld [vmem:[%s8468 + $0x28] sm:$0xf]
        %v8480 = vld [vmem:[%s8468 + $0x2c] sm:$0xf]
        %v8481 = vld [vmem:[%s8468 + $0x30] sm:$0xf]
        %v8482 = vld [vmem:[%s8468 + $0x34] sm:$0xf]
        %v8483 = vld [vmem:[%s8468 + $0x38] sm:$0xf]
        %v8484 = vld [vmem:[%s8468 + $0x3c] sm:$0xf]
        %s8485 = scalar_lea.vmem %s13, 23
        %v8486 = vld [vmem:[%s8485] sm:$0x1]
        %v8488 = vlaneseq
        %v8489 = vshrl.u32 %v8488, 7
        %v8490 = vsub.s32 0, %v8489
        %v8491 = vrot.slane %v8486, %v8490
        %v8509 = vunpack.c.l.b16 %v8469
        %v8510 = vunpack.c.l.b16 %v8470
        %v8511 = vunpack.c.l.b16 %v8471
        %v8512 = vunpack.c.l.b16 %v8472
        %v8513 = vunpack.c.l.b16 %v8473
        %v8514 = vunpack.c.l.b16 %v8474
        %v8515 = vunpack.c.l.b16 %v8475
        %v8516 = vunpack.c.l.b16 %v8476
        %v8517 = vunpack.c.l.b16 %v8477
        %v8518 = vunpack.c.l.b16 %v8478
        %v8519 = vunpack.c.l.b16 %v8479
        %v8520 = vunpack.c.l.b16 %v8480
        %v8521 = vunpack.c.l.b16 %v8481
        %v8522 = vunpack.c.l.b16 %v8482
        %v8523 = vunpack.c.l.b16 %v8483
        %v8524 = vunpack.c.l.b16 %v8484
        %v8525 = vpack.c.b16 %v8510, %v8509
        %v8526 = vpack.c.b16 %v8512, %v8511
        %v8527 = vpack.c.b16 %v8514, %v8513
        %v8528 = vpack.c.b16 %v8516, %v8515
        %v8529 = vpack.c.b16 %v8518, %v8517
        %v8530 = vpack.c.b16 %v8520, %v8519
        %v8531 = vpack.c.b16 %v8522, %v8521
        %v8532 = vpack.c.b16 %v8524, %v8523
        %8541 = vmatprep.subr.bf16.mxu0 0
        %8542 = vmatpush1.bf16.msra.mxu0 %v8532
        %8543 = vmatprep.subr.bf16.mxu0 0
        %8544 = vmatpush1.bf16.msra.mxu0 %v8531
        %8545 = vmatprep.subr.bf16.mxu0 0
        %8546 = vmatpush1.bf16.msra.mxu0 %v8530
        %8547 = vmatprep.subr.bf16.mxu0 0
        %8548 = vmatpush1.bf16.msra.mxu0 %v8529
        %8549 = vmatprep.subr.bf16.mxu0 0
        %8550 = vmatpush1.bf16.msra.mxu0 %v8528
        %8551 = vmatprep.subr.bf16.mxu0 0
        %8552 = vmatpush1.bf16.msra.mxu0 %v8527
        %8553 = vmatprep.subr.bf16.mxu0 0
        %8554 = vmatpush1.bf16.msra.mxu0 %v8526
        %8555 = vmatprep.subr.bf16.mxu0 0
        %8556 = vmatpush1.bf16.msra.mxu0 %v8525
        %8557 = vmatprep.subr.bf16.mxu0 0
        %8558 = vmatpush2.bf16.msra.mxu0 0
        %8559 = vmatprep.subr.bf16.mxu0 0
        %8560 = vmatpush2.bf16.msra.mxu0 0
        %8561 = vmatprep.subr.bf16.mxu0 0
        %8562 = vmatpush2.bf16.msra.mxu0 0
        %8563 = vmatprep.subr.bf16.mxu0 0
        %8564 = vmatpush2.bf16.msra.mxu0 0
        %8565 = vmatprep.subr.bf16.mxu0 0
        %8566 = vmatpush2.bf16.msra.mxu0 0
        %8567 = vmatprep.subr.bf16.mxu0 0
        %8568 = vmatpush2.bf16.msra.mxu0 0
        %8569 = vmatprep.subr.bf16.mxu0 0
        %8570 = vmatpush2.bf16.msra.mxu0 0
        %8571 = vmatprep.subr.bf16.mxu0 0
        %8572 = vmatpush2.bf16.msra.mxu0 0
        %8573 = vmatprep.mubr.bf16.mxu0 0
        %8574 = vmatmul.mubr.bf16.gmra.mxu0 %v4752
        %v8575 = vpop.f32.mrf.mxu0
        %v8576 = vadd.f32 %v8491, %v8575
        %v8577 = vpop.f32.mrf.mxu0
        %v8578 = vpop.f32.mrf.mxu0
        %v8579 = vadd.f32 %v8491, %v8578
        %v8580 = vpop.f32.mrf.mxu0
        %8581 = vdwg.mxu0
        %v8582 = vpack.c.bf16 %v8349, %v8349
        %v8583 = vpack.c.bf16 %v8465, %v8462
        %v8585 = vsel %vm1056, %v8582, 0
        %v8588 = vsel %vm1056, %v8583, 0
        %8590 = vmatprep.subr.bf16.mxu0 0
        %8591 = vmatpush1.bf16.xpose.msra.mxu0 0
        %8592 = vmatprep.subr.bf16.mxu0 0
        %8593 = vmatpush1.bf16.xpose.msra.mxu0 0
        %8594 = vmatprep.subr.bf16.mxu0 0
        %8595 = vmatpush1.bf16.xpose.msra.mxu0 0
        %8596 = vmatprep.subr.bf16.mxu0 0
        %8597 = vmatpush1.bf16.xpose.msra.mxu0 0
        %8598 = vmatprep.subr.bf16.mxu0 0
        %8599 = vmatpush1.bf16.xpose.msra.mxu0 0
        %8600 = vmatprep.subr.bf16.mxu0 0
        %8601 = vmatpush1.bf16.xpose.msra.mxu0 0
        %8602 = vmatprep.subr.bf16.mxu0 0
        %8603 = vmatpush1.bf16.xpose.msra.mxu0 0
        %8604 = vmatprep.subr.bf16.mxu0 0
        %8605 = vmatpush1.bf16.xpose.msra.mxu0 %v8588
        %8606 = vmatprep.subr.bf16.mxu0 0
        %8607 = vmatpush2.bf16.xpose.msra.mxu0 0
        %8608 = vmatprep.subr.bf16.mxu0 0
        %8609 = vmatpush2.bf16.xpose.msra.mxu0 0
        %8610 = vmatprep.subr.bf16.mxu0 0
        %8611 = vmatpush2.bf16.xpose.msra.mxu0 0
        %8612 = vmatprep.subr.bf16.mxu0 0
        %8613 = vmatpush2.bf16.xpose.msra.mxu0 0
        %8614 = vmatprep.subr.bf16.mxu0 0
        %8615 = vmatpush2.bf16.xpose.msra.mxu0 0
        %8616 = vmatprep.subr.bf16.mxu0 0
        %8617 = vmatpush2.bf16.xpose.msra.mxu0 0
        %8618 = vmatprep.subr.bf16.mxu0 0
        %8619 = vmatpush2.bf16.xpose.msra.mxu0 0
        %8620 = vmatprep.subr.bf16.mxu0 0
        %8621 = vmatpush2.bf16.xpose.msra.mxu0 0
        %8622 = vmatprep.mubr.bf16.mxu0 0
        %8623 = vmatmul.mubr.bf16.gmra.mxu0 %v8585
        %v8624 = vpop.f32.mrf.mxu0
        %v8625 = vadd.f32 0.0, %v8624
        %v8626 = vpop.f32.mrf.mxu0
        %v8627 = vpop.f32.mrf.mxu0
        %v8628 = vpop.f32.mrf.mxu0
        %8629 = vdwg.mxu0
        %v8630 = vsel %vm1056, %v8625, -inf
        %8631 = vmax.xlane.f32.xlu0 %v8630
        %v8632 = vpop.xlane.xlu0 %8631
        %v8633 = vsub.f32 %v8625, %v8632
        %v8634 = vmul.f32 %v8633, 1.442695
        %v8635 = vpow.pop %v8634
        %v8636 = vsel %vm1056, %v8635, 0.0
        %8637 = vadd.xlane.f32.xlu0 %v8636
        %v8638 = vpop.xlane.xlu0 %8637
        %v8639 = vrcp.pop %v8638
        %v8640 = vmul.f32 %v8635, %v8639
        %v8641 = vpack.c.bf16 %v8640, %v8640
        %v8642 = vpack.c.bf16 %v8579, %v8576
        %v8644 = vsel %vm1056, %v8641, 0
        %8646 = vmatprep.subr.bf16.mxu0 0
        %8647 = vmatpush1.bf16.msra.mxu0 0
        %8648 = vmatprep.subr.bf16.mxu0 0
        %8649 = vmatpush1.bf16.msra.mxu0 0
        %8650 = vmatprep.subr.bf16.mxu0 0
        %8651 = vmatpush1.bf16.msra.mxu0 0
        %8652 = vmatprep.subr.bf16.mxu0 0
        %8653 = vmatpush1.bf16.msra.mxu0 0
        %8654 = vmatprep.subr.bf16.mxu0 0
        %8655 = vmatpush1.bf16.msra.mxu0 0
        %8656 = vmatprep.subr.bf16.mxu0 0
        %8657 = vmatpush1.bf16.msra.mxu0 0
        %8658 = vmatprep.subr.bf16.mxu0 0
        %8659 = vmatpush1.bf16.msra.mxu0 0
        %8660 = vmatprep.subr.bf16.mxu0 0
        %8661 = vmatpush1.bf16.msra.mxu0 %v8642
        %8662 = vmatprep.subr.bf16.mxu0 0
        %8663 = vmatpush2.bf16.msra.mxu0 0
        %8664 = vmatprep.subr.bf16.mxu0 0
        %8665 = vmatpush2.bf16.msra.mxu0 0
        %8666 = vmatprep.subr.bf16.mxu0 0
        %8667 = vmatpush2.bf16.msra.mxu0 0
        %8668 = vmatprep.subr.bf16.mxu0 0
        %8669 = vmatpush2.bf16.msra.mxu0 0
        %8670 = vmatprep.subr.bf16.mxu0 0
        %8671 = vmatpush2.bf16.msra.mxu0 0
        %8672 = vmatprep.subr.bf16.mxu0 0
        %8673 = vmatpush2.bf16.msra.mxu0 0
        %8674 = vmatprep.subr.bf16.mxu0 0
        %8675 = vmatpush2.bf16.msra.mxu0 0
        %8676 = vmatprep.subr.bf16.mxu0 0
        %8677 = vmatpush2.bf16.msra.mxu0 0
        %8678 = vmatprep.mubr.bf16.mxu0 0
        %8679 = vmatmul.mubr.bf16.gmra.mxu0 %v8644
        %v8680 = vpop.f32.mrf.mxu0
        %v8681 = vadd.f32 0.0, %v8680
        %v8682 = vpop.f32.mrf.mxu0
        %v8683 = vpop.f32.mrf.mxu0
        %v8684 = vpop.f32.mrf.mxu0
        %8685 = vdwg.mxu0
        %v8686 = vpack.c.bf16 %v8681, %v8681
        %s8687 = scalar_lea.vmem %s14, 56
        %v8688 = vld [vmem:[%s8687] sm:$0xf]
        %v8689 = vld [vmem:[%s8687 + $0x4] sm:$0xf]
        %v8692 = vunpack.c.l.b16 %v8688
        %v8693 = vunpack.c.l.b16 %v8689
        %v8694 = vpack.c.b16 %v8693, %v8692
        %v8697 = vsel %vm1056, %v8686, 0
        %8699 = vmatprep.subr.bf16.mxu0 0
        %8700 = vmatpush1.bf16.msra.mxu0 0
        %8701 = vmatprep.subr.bf16.mxu0 0
        %8702 = vmatpush1.bf16.msra.mxu0 0
        %8703 = vmatprep.subr.bf16.mxu0 0
        %8704 = vmatpush1.bf16.msra.mxu0 0
        %8705 = vmatprep.subr.bf16.mxu0 0
        %8706 = vmatpush1.bf16.msra.mxu0 0
        %8707 = vmatprep.subr.bf16.mxu0 0
        %8708 = vmatpush1.bf16.msra.mxu0 0
        %8709 = vmatprep.subr.bf16.mxu0 0
        %8710 = vmatpush1.bf16.msra.mxu0 0
        %8711 = vmatprep.subr.bf16.mxu0 0
        %8712 = vmatpush1.bf16.msra.mxu0 0
        %8713 = vmatprep.subr.bf16.mxu0 0
        %8714 = vmatpush1.bf16.msra.mxu0 %v8694
        %8715 = vmatprep.subr.bf16.mxu0 0
        %8716 = vmatpush2.bf16.msra.mxu0 0
        %8717 = vmatprep.subr.bf16.mxu0 0
        %8718 = vmatpush2.bf16.msra.mxu0 0
        %8719 = vmatprep.subr.bf16.mxu0 0
        %8720 = vmatpush2.bf16.msra.mxu0 0
        %8721 = vmatprep.subr.bf16.mxu0 0
        %8722 = vmatpush2.bf16.msra.mxu0 0
        %8723 = vmatprep.subr.bf16.mxu0 0
        %8724 = vmatpush2.bf16.msra.mxu0 0
        %8725 = vmatprep.subr.bf16.mxu0 0
        %8726 = vmatpush2.bf16.msra.mxu0 0
        %8727 = vmatprep.subr.bf16.mxu0 0
        %8728 = vmatpush2.bf16.msra.mxu0 0
        %8729 = vmatprep.subr.bf16.mxu0 0
        %8730 = vmatpush2.bf16.msra.mxu0 0
        %8731 = vmatprep.mubr.bf16.mxu0 0
        %8732 = vmatmul.mubr.bf16.gmra.mxu0 %v8697
        %v8733 = vpop.f32.mrf.mxu0
        %v8734 = vadd.f32 0.0, %v8733
        %v8735 = vpop.f32.mrf.mxu0
        %v8736 = vpop.f32.mrf.mxu0
        %v8737 = vpop.f32.mrf.mxu0
        %8738 = vdwg.mxu0
        %v8739 = vadd.f32 %v8240, %v8734
        %v8740 = vld [vmem:[%s15] sm:$0x1]
        %v8742 = vlaneseq
        %v8743 = vshrl.u32 %v8742, 7
        %v8744 = vsub.s32 0, %v8743
        %v8745 = vrot.slane %v8740, %v8744
        %v8747 = vadd.f32 %v8739, %v8745
        %v8748 = vadd.f32 %v4723, %v8747
        %v8749 = vld [vmem:[%s6] sm:$0x1]
        %v8750 = vld [vmem:[%s7] sm:$0x1]
        %8751 = vadd.xlane.f32.xlu0 %v8748
        %v8752 = vpop.xlane.xlu0 %8751
        %v8753 = vmul.f32 %v8752, %v692
        %v8754 = vsub.f32 %v8748, %v8753
        %v8755 = vmul.f32 %v8754, %v8754
        %8756 = vadd.xlane.f32.xlu0 %v8755
        %v8757 = vpop.xlane.xlu0 %8756
        %v8758 = vmul.f32 %v8757, %v692
        %v8759 = vadd.f32 %v8758, 1e-05
        %v8760 = vrsqrt.pop %v8759
        %v8761 = vmul.f32 %v8754, %v8760
        %v8763 = vlaneseq
        %v8764 = vshrl.u32 %v8763, 7
        %v8765 = vsub.s32 0, %v8764
        %v8766 = vrot.slane %v8749, %v8765
        %v8768 = vmul.f32 %v8761, %v8766
        %v8770 = vlaneseq
        %v8771 = vshrl.u32 %v8770, 7
        %v8772 = vsub.s32 0, %v8771
        %v8773 = vrot.slane %v8750, %v8772
        %v8775 = vadd.f32 %v8768, %v8773
        %v8776 = vpack.c.bf16 %v8775, %v8775
        %v8777 = vld [vmem:[%s16] sm:$0xff]
        %v8778 = vld [vmem:[%s16 + $0x8] sm:$0xff]
        %v8779 = vld [vmem:[%s16 + $0x10] sm:$0xff]
        %v8780 = vld [vmem:[%s16 + $0x18] sm:$0xff]
        %v8781 = vld [vmem:[%s16 + $0x20] sm:$0xff]
        %v8782 = vld [vmem:[%s16 + $0x28] sm:$0xff]
        %v8783 = vld [vmem:[%s16 + $0x30] sm:$0xff]
        %v8784 = vld [vmem:[%s16 + $0x38] sm:$0xff]
        %v8785 = vld [vmem:[%s16 + $0x40] sm:$0xff]
        %v8786 = vld [vmem:[%s16 + $0x48] sm:$0xff]
        %v8787 = vld [vmem:[%s16 + $0x50] sm:$0xff]
        %v8788 = vld [vmem:[%s16 + $0x58] sm:$0xff]
        %v8789 = vld [vmem:[%s16 + $0x60] sm:$0xff]
        %v8790 = vld [vmem:[%s16 + $0x68] sm:$0xff]
        %v8791 = vld [vmem:[%s16 + $0x70] sm:$0xff]
        %v8792 = vld [vmem:[%s16 + $0x78] sm:$0xff]
        %v8793 = vld [vmem:[%s17] sm:$0x3]
        %v8795 = vlaneseq
        %v8796 = vshrl.u32 %v8795, 7
        %v8797 = vsub.s32 0, %v8796
        %v8798 = vrot.slane %v8793, %v8797
        %v8799 = vlaneseq
        %v8800 = vshrl.u32 %v8799, 7
        %v8801 = vsub.s32 1, %v8800
        %v8802 = vrot.slane %v8793, %v8801
        %v8821 = vunpack.c.l.b16 %v8777
        %v8822 = vunpack.c.h.b16 %v8777
        %v8823 = vunpack.c.l.b16 %v8778
        %v8824 = vunpack.c.h.b16 %v8778
        %v8825 = vunpack.c.l.b16 %v8779
        %v8826 = vunpack.c.h.b16 %v8779
        %v8827 = vunpack.c.l.b16 %v8780
        %v8828 = vunpack.c.h.b16 %v8780
        %v8829 = vunpack.c.l.b16 %v8781
        %v8830 = vunpack.c.h.b16 %v8781
        %v8831 = vunpack.c.l.b16 %v8782
        %v8832 = vunpack.c.h.b16 %v8782
        %v8833 = vunpack.c.l.b16 %v8783
        %v8834 = vunpack.c.h.b16 %v8783
        %v8835 = vunpack.c.l.b16 %v8784
        %v8836 = vunpack.c.h.b16 %v8784
        %v8837 = vunpack.c.l.b16 %v8785
        %v8838 = vunpack.c.h.b16 %v8785
        %v8839 = vunpack.c.l.b16 %v8786
        %v8840 = vunpack.c.h.b16 %v8786
        %v8841 = vunpack.c.l.b16 %v8787
        %v8842 = vunpack.c.h.b16 %v8787
        %v8843 = vunpack.c.l.b16 %v8788
        %v8844 = vunpack.c.h.b16 %v8788
        %v8845 = vunpack.c.l.b16 %v8789
        %v8846 = vunpack.c.h.b16 %v8789
        %v8847 = vunpack.c.l.b16 %v8790
        %v8848 = vunpack.c.h.b16 %v8790
        %v8849 = vunpack.c.l.b16 %v8791
        %v8850 = vunpack.c.h.b16 %v8791
        %v8851 = vunpack.c.l.b16 %v8792
        %v8852 = vunpack.c.h.b16 %v8792
        %v8853 = vpack.c.b16 %v8823, %v8821
        %v8854 = vpack.c.b16 %v8824, %v8822
        %v8855 = vpack.c.b16 %v8827, %v8825
        %v8856 = vpack.c.b16 %v8828, %v8826
        %v8857 = vpack.c.b16 %v8831, %v8829
        %v8858 = vpack.c.b16 %v8832, %v8830
        %v8859 = vpack.c.b16 %v8835, %v8833
        %v8860 = vpack.c.b16 %v8836, %v8834
        %v8861 = vpack.c.b16 %v8839, %v8837
        %v8862 = vpack.c.b16 %v8840, %v8838
        %v8863 = vpack.c.b16 %v8843, %v8841
        %v8864 = vpack.c.b16 %v8844, %v8842
        %v8865 = vpack.c.b16 %v8847, %v8845
        %v8866 = vpack.c.b16 %v8848, %v8846
        %v8867 = vpack.c.b16 %v8851, %v8849
        %v8868 = vpack.c.b16 %v8852, %v8850
        %8885 = vmatprep.subr.bf16.mxu0 %v8868
        %8886 = vmatpush1.bf16.msra.mxu0 %v8867
        %8887 = vmatprep.subr.bf16.mxu0 %v8866
        %8888 = vmatpush1.bf16.msra.mxu0 %v8865
        %8889 = vmatprep.subr.bf16.mxu0 %v8864
        %8890 = vmatpush1.bf16.msra.mxu0 %v8863
        %8891 = vmatprep.subr.bf16.mxu0 %v8862
        %8892 = vmatpush1.bf16.msra.mxu0 %v8861
        %8893 = vmatprep.subr.bf16.mxu0 %v8860
        %8894 = vmatpush1.bf16.msra.mxu0 %v8859
        %8895 = vmatprep.subr.bf16.mxu0 %v8858
        %8896 = vmatpush1.bf16.msra.mxu0 %v8857
        %8897 = vmatprep.subr.bf16.mxu0 %v8856
        %8898 = vmatpush1.bf16.msra.mxu0 %v8855
        %8899 = vmatprep.subr.bf16.mxu0 %v8854
        %8900 = vmatpush1.bf16.msra.mxu0 %v8853
        %8901 = vmatprep.subr.bf16.mxu0 0
        %8902 = vmatpush2.bf16.msra.mxu0 0
        %8903 = vmatprep.subr.bf16.mxu0 0
        %8904 = vmatpush2.bf16.msra.mxu0 0
        %8905 = vmatprep.subr.bf16.mxu0 0
        %8906 = vmatpush2.bf16.msra.mxu0 0
        %8907 = vmatprep.subr.bf16.mxu0 0
        %8908 = vmatpush2.bf16.msra.mxu0 0
        %8909 = vmatprep.subr.bf16.mxu0 0
        %8910 = vmatpush2.bf16.msra.mxu0 0
        %8911 = vmatprep.subr.bf16.mxu0 0
        %8912 = vmatpush2.bf16.msra.mxu0 0
        %8913 = vmatprep.subr.bf16.mxu0 0
        %8914 = vmatpush2.bf16.msra.mxu0 0
        %8915 = vmatprep.subr.bf16.mxu0 0
        %8916 = vmatpush2.bf16.msra.mxu0 0
        %8917 = vmatprep.mubr.bf16.mxu0 0
        %8918 = vmatmul.mubr.bf16.gmra.mxu0 %v8776
        %v8919 = vpop.f32.mrf.mxu0
        %v8920 = vadd.f32 %v8798, %v8919
        %v8921 = vpop.f32.mrf.mxu0
        %v8922 = vadd.f32 %v8802, %v8921
        %v8923 = vpop.f32.mrf.mxu0
        %v8924 = vpop.f32.mrf.mxu0
        %8925 = vdwg.mxu0
        %v8926 = vmax.f32 %v8920, 0.0
        %v8927 = vmax.f32 %v8922, 0.0
        %v8928 = vpack.c.bf16 %v8926, %v8926
        %v8929 = vpack.c.bf16 %v8927, %v8927
        %v8930 = vld [vmem:[%s18] sm:$0xf]
        %v8931 = vld [vmem:[%s18 + $0x4] sm:$0xf]
        %v8932 = vld [vmem:[%s18 + $0x8] sm:$0xf]
        %v8933 = vld [vmem:[%s18 + $0xc] sm:$0xf]
        %v8934 = vld [vmem:[%s18 + $0x10] sm:$0xf]
        %v8935 = vld [vmem:[%s18 + $0x14] sm:$0xf]
        %v8936 = vld [vmem:[%s18 + $0x18] sm:$0xf]
        %v8937 = vld [vmem:[%s18 + $0x1c] sm:$0xf]
        %v8938 = vld [vmem:[%s18 + $0x20] sm:$0xf]
        %v8939 = vld [vmem:[%s18 + $0x24] sm:$0xf]
        %v8940 = vld [vmem:[%s18 + $0x28] sm:$0xf]
        %v8941 = vld [vmem:[%s18 + $0x2c] sm:$0xf]
        %v8942 = vld [vmem:[%s18 + $0x30] sm:$0xf]
        %v8943 = vld [vmem:[%s18 + $0x34] sm:$0xf]
        %v8944 = vld [vmem:[%s18 + $0x38] sm:$0xf]
        %v8945 = vld [vmem:[%s18 + $0x3c] sm:$0xf]
        %v8946 = vld [vmem:[%s18 + $0x40] sm:$0xf]
        %v8947 = vld [vmem:[%s18 + $0x44] sm:$0xf]
        %v8948 = vld [vmem:[%s18 + $0x48] sm:$0xf]
        %v8949 = vld [vmem:[%s18 + $0x4c] sm:$0xf]
        %v8950 = vld [vmem:[%s18 + $0x50] sm:$0xf]
        %v8951 = vld [vmem:[%s18 + $0x54] sm:$0xf]
        %v8952 = vld [vmem:[%s18 + $0x58] sm:$0xf]
        %v8953 = vld [vmem:[%s18 + $0x5c] sm:$0xf]
        %v8954 = vld [vmem:[%s18 + $0x60] sm:$0xf]
        %v8955 = vld [vmem:[%s18 + $0x64] sm:$0xf]
        %v8956 = vld [vmem:[%s18 + $0x68] sm:$0xf]
        %v8957 = vld [vmem:[%s18 + $0x6c] sm:$0xf]
        %v8958 = vld [vmem:[%s18 + $0x70] sm:$0xf]
        %v8959 = vld [vmem:[%s18 + $0x74] sm:$0xf]
        %v8960 = vld [vmem:[%s18 + $0x78] sm:$0xf]
        %v8961 = vld [vmem:[%s18 + $0x7c] sm:$0xf]
        %v8962 = vld [vmem:[%s19] sm:$0x1]
        %v8964 = vlaneseq
        %v8965 = vshrl.u32 %v8964, 7
        %v8966 = vsub.s32 0, %v8965
        %v8967 = vrot.slane %v8962, %v8966
        %v9001 = vunpack.c.l.b16 %v8930
        %v9002 = vunpack.c.l.b16 %v8931
        %v9003 = vunpack.c.l.b16 %v8932
        %v9004 = vunpack.c.l.b16 %v8933
        %v9005 = vunpack.c.l.b16 %v8934
        %v9006 = vunpack.c.l.b16 %v8935
        %v9007 = vunpack.c.l.b16 %v8936
        %v9008 = vunpack.c.l.b16 %v8937
        %v9009 = vunpack.c.l.b16 %v8938
        %v9010 = vunpack.c.l.b16 %v8939
        %v9011 = vunpack.c.l.b16 %v8940
        %v9012 = vunpack.c.l.b16 %v8941
        %v9013 = vunpack.c.l.b16 %v8942
        %v9014 = vunpack.c.l.b16 %v8943
        %v9015 = vunpack.c.l.b16 %v8944
        %v9016 = vunpack.c.l.b16 %v8945
        %v9017 = vunpack.c.l.b16 %v8946
        %v9018 = vunpack.c.l.b16 %v8947
        %v9019 = vunpack.c.l.b16 %v8948
        %v9020 = vunpack.c.l.b16 %v8949
        %v9021 = vunpack.c.l.b16 %v8950
        %v9022 = vunpack.c.l.b16 %v8951
        %v9023 = vunpack.c.l.b16 %v8952
        %v9024 = vunpack.c.l.b16 %v8953
        %v9025 = vunpack.c.l.b16 %v8954
        %v9026 = vunpack.c.l.b16 %v8955
        %v9027 = vunpack.c.l.b16 %v8956
        %v9028 = vunpack.c.l.b16 %v8957
        %v9029 = vunpack.c.l.b16 %v8958
        %v9030 = vunpack.c.l.b16 %v8959
        %v9031 = vunpack.c.l.b16 %v8960
        %v9032 = vunpack.c.l.b16 %v8961
        %v9033 = vpack.c.b16 %v9002, %v9001
        %v9034 = vpack.c.b16 %v9004, %v9003
        %v9035 = vpack.c.b16 %v9006, %v9005
        %v9036 = vpack.c.b16 %v9008, %v9007
        %v9037 = vpack.c.b16 %v9010, %v9009
        %v9038 = vpack.c.b16 %v9012, %v9011
        %v9039 = vpack.c.b16 %v9014, %v9013
        %v9040 = vpack.c.b16 %v9016, %v9015
        %v9041 = vpack.c.b16 %v9018, %v9017
        %v9042 = vpack.c.b16 %v9020, %v9019
        %v9043 = vpack.c.b16 %v9022, %v9021
        %v9044 = vpack.c.b16 %v9024, %v9023
        %v9045 = vpack.c.b16 %v9026, %v9025
        %v9046 = vpack.c.b16 %v9028, %v9027
        %v9047 = vpack.c.b16 %v9030, %v9029
        %v9048 = vpack.c.b16 %v9032, %v9031
        %9065 = vmatprep.subr.bf16.mxu0 0
        %9066 = vmatpush1.bf16.msra.mxu0 %v9040
        %9067 = vmatprep.subr.bf16.mxu0 0
        %9068 = vmatpush1.bf16.msra.mxu0 %v9039
        %9069 = vmatprep.subr.bf16.mxu0 0
        %9070 = vmatpush1.bf16.msra.mxu0 %v9038
        %9071 = vmatprep.subr.bf16.mxu0 0
        %9072 = vmatpush1.bf16.msra.mxu0 %v9037
        %9073 = vmatprep.subr.bf16.mxu0 0
        %9074 = vmatpush1.bf16.msra.mxu0 %v9036
        %9075 = vmatprep.subr.bf16.mxu0 0
        %9076 = vmatpush1.bf16.msra.mxu0 %v9035
        %9077 = vmatprep.subr.bf16.mxu0 0
        %9078 = vmatpush1.bf16.msra.mxu0 %v9034
        %9079 = vmatprep.subr.bf16.mxu0 0
        %9080 = vmatpush1.bf16.msra.mxu0 %v9033
        %9081 = vmatprep.subr.bf16.mxu0 0
        %9082 = vmatpush2.bf16.msra.mxu0 %v9048
        %9083 = vmatprep.subr.bf16.mxu0 0
        %9084 = vmatpush2.bf16.msra.mxu0 %v9047
        %9085 = vmatprep.subr.bf16.mxu0 0
        %9086 = vmatpush2.bf16.msra.mxu0 %v9046
        %9087 = vmatprep.subr.bf16.mxu0 0
        %9088 = vmatpush2.bf16.msra.mxu0 %v9045
        %9089 = vmatprep.subr.bf16.mxu0 0
        %9090 = vmatpush2.bf16.msra.mxu0 %v9044
        %9091 = vmatprep.subr.bf16.mxu0 0
        %9092 = vmatpush2.bf16.msra.mxu0 %v9043
        %9093 = vmatprep.subr.bf16.mxu0 0
        %9094 = vmatpush2.bf16.msra.mxu0 %v9042
        %9095 = vmatprep.subr.bf16.mxu0 0
        %9096 = vmatpush2.bf16.msra.mxu0 %v9041
        %9097 = vmatprep.mubr.bf16.mxu0 %v8929
        %9098 = vmatmul.mubr.bf16.gmra.mxu0 %v8928
        %v9099 = vpop.f32.mrf.mxu0
        %v9100 = vadd.f32 %v8967, %v9099
        %v9101 = vpop.f32.mrf.mxu0
        %v9102 = vpop.f32.mrf.mxu0
        %v9103 = vpop.f32.mrf.mxu0
        %9104 = vdwg.mxu0
        %v9105 = vadd.f32 %v8748, %v9100
        %9106 = vst [vmem:[%s683] sm:$0xff] %v9105
        %p9107 = scmp.lt.s32.totalorder %s31, 1
        %s9108 = scalar_select %p9107, %s31, 1
        %s9109 = smul.addr %s9108, 8
        %s9110 = scalar_lea.vmem %s20, %s9109
        // Predicated region
        $region139: #{transformer_decoder_layer.1} parent=133 // pred_check
          %p9111 = pneg %p479
        $region140: #{transformer_decoder_layer.1} parent=133 // pred_check_branch
          %9113 = sbr.rel (%p9111) target = $region142
        $region141: #{transformer_decoder_layer.1} parent=133 // pred_region
          _
        $region142: #{transformer_decoder_layer.1} parent=133 // pred_fallthru
          _
      $region134: #{transformer_decoder_layer.1} parent=5 // pred_fallthru
        _
      %p9114 = scmp.le.s32.totalorder 2, %s26
      // Predicated region
      $region143: #{transformer_decoder_layer.1} parent=5 // pred_check
        %p9115 = pneg %p9114
      $region144: #{transformer_decoder_layer.1} parent=5 // pred_check_branch
        %9117 = sbr.rel (%p9115) target = $region146
      $region145: #{transformer_decoder_layer.1} parent=5 // pred_region
        %s9118 = ssub.s32 %s26, 2
        // Predicated region
        $region147: #{transformer_decoder_layer.1} parent=145 // pred_check
          %p9119 = pneg %p485
        $region148: #{transformer_decoder_layer.1} parent=145 // pred_check_branch
          %9121 = sbr.rel (%p9119) target = $region150
        $region149: #{transformer_decoder_layer.1} parent=145 // pred_region
          %p9122 = scmp.lt.s32.totalorder %s32, 1
          %s9123 = scalar_select %p9122, %s32, 1
          %s9124 = smul.addr %s9123, 8
          %s9125 = scalar_lea.vmem %s20, %s9124
        $region150: #{transformer_decoder_layer.1} parent=145 // pred_fallthru
          _
      $region146: #{transformer_decoder_layer.1} parent=5 // pred_fallthru
        _
    $region6: #{transformer_decoder_layer.1} parent=1 // loop_footer
      %s30 = sadd.s32 1, %s26
    $region7: #{transformer_decoder_layer.1} parent=1 // loop_footer_branch
      %25 = sbr.rel target = $region3
    $region8: #{transformer_decoder_layer.1} parent=1 // loop_exit
      _

</llo_original>
